<compile_context>
chip_gen: v7x
topology: tpu7x:2x2x1
jax: 0.10.0
libtpu: 0.0.40
codegen_flags: <defaults>
</compile_context>

<pallas_src>
import functools

import jax
import jax.numpy as jnp
import numpy as np
from jax import lax
from jax.experimental import pallas as pl
from jax.experimental.pallas import tpu as pltpu

VOCAB = 50006          # nn.LayerNorm(50006)
LN_EPS = 1e-5          # PyTorch LayerNorm default eps
ARTANH_CLAMP = 1e-5    # clamp sqrt(c)*||x|| away from 1 (geoopt-style)
NORM_MIN = 1e-15       # clamp ||x|| away from 0


def _logsoftmax_hype_kernel(x_ref, w_ref, b_ref, o_ref, *, f_actual, sqrt_c):
    x = x_ref[...]                                  # (TR, F) f32, F = 50006 (lane-unaligned)
    tr, fw = x.shape
    inv_f = jnp.float32(1.0 / f_actual)

    # Valid-lane mask: F is not a multiple of 128, so the trailing lanes of the last
    # vreg column are uninitialized VMEM — keep them out of every row reduction.
    col = lax.broadcasted_iota(jnp.int32, (tr, fw), 1)
    mask = col < f_actual

    # ---- Poincare-ball log map at the origin (row-wise) ----
    xm = jnp.where(mask, x, 0.0)                    # zero the junk lanes once
    sq = jnp.sum(xm * xm, axis=-1, keepdims=True)
    norm = jnp.maximum(jnp.sqrt(sq), NORM_MIN)
    z = jnp.minimum(sqrt_c * norm, 1.0 - ARTANH_CLAMP)
    artanh = 0.5 * jnp.log((1.0 + z) / (1.0 - z))   # per-row (TR,1) scalars: cheap
    scale = artanh / (sqrt_c * norm)                # (TR, 1)
    y = scale * xm                                  # padded lanes stay exactly 0

    # ---- LayerNorm over last dim (one-pass moments; padded lanes of y are 0) ----
    mean = jnp.sum(y, axis=-1, keepdims=True) * inv_f
    var = jnp.sum(y * y, axis=-1, keepdims=True) * inv_f - mean * mean
    inv = lax.rsqrt(jnp.maximum(var, 0.0) + LN_EPS)
    yn = (y - mean) * inv * w_ref[...] + b_ref[...]   # junk lanes of w/b -> junk yn lanes

    # ---- log_softmax over last dim (single -inf mask covers max and exp) ----
    yn_m = jnp.where(mask, yn, -jnp.inf)
    m = jnp.max(yn_m, axis=-1, keepdims=True)
    e = jnp.exp(yn_m - m)                           # padded lanes: exp(-inf) = 0
    lse = jnp.log(jnp.sum(e, axis=-1, keepdims=True))
    # Folded final store: log_softmax = yn - (max + logsumexp).  Junk lanes / junk
    # edge rows are masked out by the partial store.
    o_ref[...] = (yn - (m + lse)).astype(o_ref.dtype)


def _default_tiling():
    """Per-generation (row_tile, vmem_limit_bytes)."""
    try:
        vmem_cap = pltpu.get_tpu_info().vmem_capacity_bytes
    except Exception:
        return 16, 48 << 20                          # conservative: fits every generation
    if vmem_cap <= (64 << 20):                       # v7x: 64 MiB VMEM, 3.2 TB/s HBM
        return 16, 48 << 20
    return 32, 80 << 20                              # v5e / v6e: 128 MiB VMEM


def log_softmax_hype(x, weight, bias, *, c=1.0, dim=-1, row_tile=None,
                     vmem_limit_bytes=None):
    """x: (..., 50006) float32; weight/bias: (50006,) LayerNorm affine params."""
    assert dim in (-1, x.ndim - 1), "kernel implements softmax over the last dim"
    # TODO(synk): for other `dim` values (incl. PyTorch's dim=None heuristic),
    # transpose in the wrapper before calling.
    orig_shape = x.shape
    f = orig_shape[-1]
    r = int(np.prod(orig_shape[:-1]))

    tr_def, vmem_def = _default_tiling()
    if row_tile is None:
        row_tile = tr_def
    if vmem_limit_bytes is None:
        vmem_limit_bytes = vmem_def

    tr = max(8, (int(row_tile) // 8) * 8)            # sublane multiple of 8
    tr = min(tr, max(8, pl.cdiv(r, 8) * 8))          # don't exceed (rounded-up) row count

    # No pre-padding: reshape is layout-preserving (free); last block dim equals the
    # full feature dim (allowed even though 50006 % 128 != 0), and the row grid uses
    # cdiv so edge blocks are handled by Pallas' partial DMA.
    x2 = x.reshape(r, f).astype(jnp.float32)
    w2 = weight.reshape(1, f).astype(jnp.float32)
    b2 = bias.reshape(1, f).astype(jnp.float32)

    kernel = functools.partial(_logsoftmax_hype_kernel,
                               f_actual=f, sqrt_c=float(np.sqrt(c)))

    out = pl.pallas_call(
        kernel,
        out_shape=jax.ShapeDtypeStruct((r, f), jnp.float32),
        grid=(pl.cdiv(r, tr),),
        in_specs=[
            pl.BlockSpec((tr, f), lambda i: (i, 0)),   # x rows
            pl.BlockSpec((1, f), lambda i: (0, 0)),    # layernorm weight (resident)
            pl.BlockSpec((1, f), lambda i: (0, 0)),    # layernorm bias   (resident)
        ],
        out_specs=pl.BlockSpec((tr, f), lambda i: (i, 0)),
        compiler_params=pltpu.CompilerParams(
            dimension_semantics=("parallel",),         # rows split across TCs (v7x megacore)
            vmem_limit_bytes=int(vmem_limit_bytes)),
    )(x2, w2, b2)

    return out.reshape(orig_shape)


def _reference(x, weight, bias, c=1.0):
    sqrt_c = np.sqrt(c)
    norm = jnp.maximum(jnp.sqrt(jnp.sum(x * x, -1, keepdims=True)), NORM_MIN)
    z = jnp.minimum(sqrt_c * norm, 1.0 - ARTANH_CLAMP)
    y = (jnp.arctanh(z) / (sqrt_c * norm)) * x
    mean = jnp.mean(y, -1, keepdims=True)
    var = jnp.mean((y - mean) ** 2, -1, keepdims=True)
    yn = (y - mean) * lax.rsqrt(var + LN_EPS) * weight + bias
    return jax.nn.log_softmax(yn, axis=-1)


if __name__ == "__main__":
    key = jax.random.PRNGKey(0)
    k_x, k_w, k_b = jax.random.split(key, 3)

    batch, seq = 2, 4
    # points inside the unit Poincare ball (c = 1.0)
    x = 0.3 * jax.random.normal(k_x, (batch, seq, VOCAB), dtype=jnp.float32)
    x = x / (1.0 + jnp.linalg.norm(x, axis=-1, keepdims=True))

    # deterministic LayerNorm affine params (PyTorch default is ones/zeros; perturb slightly)
    weight = 1.0 + 0.01 * jax.random.normal(k_w, (VOCAB,), dtype=jnp.float32)
    bias = 0.01 * jax.random.normal(k_b, (VOCAB,), dtype=jnp.float32)

    out = log_softmax_hype(x, weight, bias, c=1.0, dim=-1)
    out = jax.block_until_ready(out)

    ref = _reference(x, weight, bias, c=1.0)
    np.testing.assert_allclose(np.asarray(out), np.asarray(ref), atol=3e-4, rtol=3e-4)

    print("KERNEL_OK")
</pallas_src>

<mosaic_0001>
module attributes {stable_mosaic.version = 11 : i64} {
  func.func @_logsoftmax_hype_kernel(%arg0: i32, %arg1: memref<8x50006xf32, #tpu.memory_space<vmem>>, %arg2: memref<1x50006xf32, #tpu.memory_space<vmem>>, %arg3: memref<1x50006xf32, #tpu.memory_space<vmem>>, %arg4: memref<8x50006xf32, #tpu.memory_space<vmem>>) attributes {dimension_semantics = [#tpu.dimension_semantics<parallel>], iteration_bounds = array<i64: 1>, scalar_prefetch = 0 : i64, scratch_operands = 0 : i64, tpu.core_type = #tpu.core_type<tc>, window_params = [{transform_indices = @transform_0, window_bounds = array<i64: 8, 50006>}, {pipeline_mode = #tpu.pipeline_mode<synchronous>, transform_indices = @transform_1, window_bounds = array<i64: 1, 50006>}, {pipeline_mode = #tpu.pipeline_mode<synchronous>, transform_indices = @transform_2, window_bounds = array<i64: 1, 50006>}, {transform_indices = @transform_3, window_bounds = array<i64: 8, 50006>}]} {
    %c0 = arith.constant 0 : index
    %c0_0 = arith.constant 0 : index
    %0 = vector.load %arg1[%c0, %c0_0] : memref<8x50006xf32, #tpu.memory_space<vmem>>, vector<8x50006xf32>
    %1 = tpu.iota {dimensions = array<i32: 1>} : vector<8x50006xi32>
    %c50006_i32 = arith.constant 50006 : i32
    %2 = vector.broadcast %c50006_i32 : i32 to vector<8x50006xi32>
    %3 = arith.cmpi slt, %1, %2 : vector<8x50006xi32>
    %cst = arith.constant 0.000000e+00 : f32
    %4 = vector.broadcast %cst : f32 to vector<8x50006xf32>
    %5 = arith.select %3, %0, %4 : vector<8x50006xi1>, vector<8x50006xf32>
    %6 = arith.mulf %5, %5 : vector<8x50006xf32>
    %cst_1 = arith.constant dense<0.000000e+00> : vector<8xf32>
    %7 = vector.multi_reduction <add>, %6, %cst_1 [1] : vector<8x50006xf32> to vector<8xf32>
    %8 = vector.shape_cast %7 : vector<8xf32> to vector<8x1xf32>
    %9 = math.sqrt %8 : vector<8x1xf32>
    %cst_2 = arith.constant 1.000000e-15 : f32
    %10 = vector.broadcast %cst_2 : f32 to vector<8x1xf32>
    %11 = arith.maximumf %9, %10 : vector<8x1xf32>
    %cst_3 = arith.constant 1.000000e+00 : f32
    %12 = vector.broadcast %cst_3 : f32 to vector<8x1xf32>
    %13 = arith.mulf %12, %11 : vector<8x1xf32>
    %cst_4 = arith.constant 0.999989986 : f32
    %14 = vector.broadcast %cst_4 : f32 to vector<8x1xf32>
    %15 = arith.minimumf %13, %14 : vector<8x1xf32>
    %cst_5 = arith.constant 1.000000e+00 : f32
    %16 = vector.broadcast %cst_5 : f32 to vector<8x1xf32>
    %17 = arith.addf %16, %15 : vector<8x1xf32>
    %cst_6 = arith.constant 1.000000e+00 : f32
    %18 = vector.broadcast %cst_6 : f32 to vector<8x1xf32>
    %19 = arith.subf %18, %15 : vector<8x1xf32>
    %20 = arith.divf %17, %19 : vector<8x1xf32>
    %21 = math.log %20 : vector<8x1xf32>
    %cst_7 = arith.constant 5.000000e-01 : f32
    %22 = vector.broadcast %cst_7 : f32 to vector<8x1xf32>
    %23 = arith.mulf %22, %21 : vector<8x1xf32>
    %cst_8 = arith.constant 1.000000e+00 : f32
    %24 = vector.broadcast %cst_8 : f32 to vector<8x1xf32>
    %25 = arith.mulf %24, %11 : vector<8x1xf32>
    %26 = arith.divf %23, %25 : vector<8x1xf32>
    %27 = vector.broadcast %26 : vector<8x1xf32> to vector<8x50006xf32>
    %28 = arith.mulf %27, %5 : vector<8x50006xf32>
    %cst_9 = arith.constant dense<0.000000e+00> : vector<8xf32>
    %29 = vector.multi_reduction <add>, %28, %cst_9 [1] : vector<8x50006xf32> to vector<8xf32>
    %30 = vector.shape_cast %29 : vector<8xf32> to vector<8x1xf32>
    %cst_10 = arith.constant 1.999760e-05 : f32
    %31 = vector.broadcast %cst_10 : f32 to vector<8x1xf32>
    %32 = arith.mulf %30, %31 : vector<8x1xf32>
    %33 = arith.mulf %28, %28 : vector<8x50006xf32>
    %cst_11 = arith.constant dense<0.000000e+00> : vector<8xf32>
    %34 = vector.multi_reduction <add>, %33, %cst_11 [1] : vector<8x50006xf32> to vector<8xf32>
    %35 = vector.shape_cast %34 : vector<8xf32> to vector<8x1xf32>
    %cst_12 = arith.constant 1.999760e-05 : f32
    %36 = vector.broadcast %cst_12 : f32 to vector<8x1xf32>
    %37 = arith.mulf %35, %36 : vector<8x1xf32>
    %38 = arith.mulf %32, %32 : vector<8x1xf32>
    %39 = arith.subf %37, %38 : vector<8x1xf32>
    %cst_13 = arith.constant 0.000000e+00 : f32
    %40 = vector.broadcast %cst_13 : f32 to vector<8x1xf32>
    %41 = arith.maximumf %39, %40 : vector<8x1xf32>
    %cst_14 = arith.constant 9.99999974E-6 : f32
    %42 = vector.broadcast %cst_14 : f32 to vector<8x1xf32>
    %43 = arith.addf %41, %42 : vector<8x1xf32>
    %44 = math.rsqrt %43 : vector<8x1xf32>
    %45 = vector.broadcast %32 : vector<8x1xf32> to vector<8x50006xf32>
    %46 = arith.subf %28, %45 : vector<8x50006xf32>
    %47 = vector.broadcast %44 : vector<8x1xf32> to vector<8x50006xf32>
    %48 = arith.mulf %46, %47 : vector<8x50006xf32>
    %c0_15 = arith.constant 0 : index
    %c0_16 = arith.constant 0 : index
    %49 = vector.load %arg2[%c0_15, %c0_16] : memref<1x50006xf32, #tpu.memory_space<vmem>>, vector<1x50006xf32>
    %50 = vector.broadcast %49 : vector<1x50006xf32> to vector<8x50006xf32>
    %51 = arith.mulf %48, %50 : vector<8x50006xf32>
    %c0_17 = arith.constant 0 : index
    %c0_18 = arith.constant 0 : index
    %52 = vector.load %arg3[%c0_17, %c0_18] : memref<1x50006xf32, #tpu.memory_space<vmem>>, vector<1x50006xf32>
    %53 = vector.broadcast %52 : vector<1x50006xf32> to vector<8x50006xf32>
    %54 = arith.addf %51, %53 : vector<8x50006xf32>
    %cst_19 = arith.constant 0xFF800000 : f32
    %55 = vector.broadcast %cst_19 : f32 to vector<8x50006xf32>
    %56 = arith.select %3, %54, %55 : vector<8x50006xi1>, vector<8x50006xf32>
    %cst_20 = arith.constant dense<0xFF800000> : vector<8xf32>
    %57 = vector.multi_reduction <maximumf>, %56, %cst_20 [1] : vector<8x50006xf32> to vector<8xf32>
    %58 = vector.shape_cast %57 : vector<8xf32> to vector<8x1xf32>
    %59 = vector.broadcast %58 : vector<8x1xf32> to vector<8x50006xf32>
    %60 = arith.subf %56, %59 : vector<8x50006xf32>
    %61 = math.exp %60 : vector<8x50006xf32>
    %cst_21 = arith.constant dense<0.000000e+00> : vector<8xf32>
    %62 = vector.multi_reduction <add>, %61, %cst_21 [1] : vector<8x50006xf32> to vector<8xf32>
    %63 = vector.shape_cast %62 : vector<8xf32> to vector<8x1xf32>
    %64 = math.log %63 : vector<8x1xf32>
    %65 = arith.addf %58, %64 : vector<8x1xf32>
    %66 = vector.broadcast %65 : vector<8x1xf32> to vector<8x50006xf32>
    %67 = arith.subf %54, %66 : vector<8x50006xf32>
    %c0_22 = arith.constant 0 : index
    %c0_23 = arith.constant 0 : index
    %68 = vector.load %arg4[%c0_22, %c0_23] : memref<8x50006xf32, #tpu.memory_space<vmem>>, vector<8x50006xf32>
    tpu.vector_store %arg4[%c0_22, %c0_23], %67 {strides = array<i32>} : memref<8x50006xf32, #tpu.memory_space<vmem>>, vector<8x50006xf32>,
    return
  }
  func.func @transform_0(%arg0: i32) -> (i32, i32) {
    %c0_i32 = arith.constant 0 : i32
    %c0_i32_0 = arith.constant 0 : i32
    return %arg0, %c0_i32 : i32, i32
  }
  func.func @transform_1(%arg0: i32) -> (i32, i32) {
    %c0_i32 = arith.constant 0 : i32
    %c0_i32_0 = arith.constant 0 : i32
    %c0_i32_1 = arith.constant 0 : i32
    return %c0_i32, %c0_i32_0 : i32, i32
  }
  func.func @transform_2(%arg0: i32) -> (i32, i32) {
    %c0_i32 = arith.constant 0 : i32
    %c0_i32_0 = arith.constant 0 : i32
    %c0_i32_1 = arith.constant 0 : i32
    return %c0_i32, %c0_i32_0 : i32, i32
  }
  func.func @transform_3(%arg0: i32) -> (i32, i32) {
    %c0_i32 = arith.constant 0 : i32
    %c0_i32_0 = arith.constant 0 : i32
    return %arg0, %c0_i32 : i32, i32
  }
}

</mosaic_0001>

<llo_original>
// kernel: tpu_custom_call.1
$region0: #{tpu_custom_call.1}
  #allocation0 [shape = 'u32[]', space=smem, size = 0x4, offset = 0x4, fixed_abs, tag = 'smem constant byte address 0x4 - core index']
  #allocation1 [shape = 'u32[144,128]{1,0:T(1,128)}', space=vmem, size = 0x12000, scoped, tag = 'internal scratch']
  %s0 = inlined_call_operand.hbm [shape: f32[8,50006], index: 0, kind: input, shape index: {}]
  %s1 = inlined_call_operand.hbm [shape: f32[1,50006], index: 1, kind: input, shape index: {}]
  %s2 = inlined_call_operand.hbm [shape: f32[1,50006], index: 2, kind: input, shape index: {}]
  %s3 = inlined_call_operand.hbm [shape: f32[8,50006], index: 3, kind: output, shape index: {}]
  %s4 = sld [smem:[#allocation0]]
  $region34: #{tpu_custom_call.1} parent=0
    _
  %s6 = ssub.s32 1, %s4
  %s7 = scalar_select 0, %s6, %s4
  $region1: #{tpu_custom_call.1} parent=0
    #allocation2 [shape = 'u8[1601536]{0}', space=vmem, size = 0x187000, scoped, tag = 'input window, operand 0, single buffered']
    #allocation3 [shape = 's32[1]{0}', space=sflag, size = 0x4, scoped, tag = 'scoped memory for tpu_custom_call.1']
    #allocation4 [shape = 's32[1]{0}', space=sflag, size = 0x4, scoped, tag = 'scoped memory for tpu_custom_call.1']
    #allocation5 [shape = 'u8[200192]{0}', space=vmem, size = 0x31000, scoped, tag = 'input window, operand 1, single buffered']
    #allocation6 [shape = 's32[1]{0}', space=sflag, size = 0x4, scoped, tag = 'scoped memory for tpu_custom_call.1']
    #allocation7 [shape = 'u8[200192]{0}', space=vmem, size = 0x31000, scoped, tag = 'input window, operand 2, single buffered']
    #allocation8 [shape = 'u8[1601536]{0}', space=vmem, size = 0x187000, scoped, tag = 'output window, operand 0, single buffered']
    %8 = vsyncpa [#allocation3], 0
    %9 = vsyncpa [#allocation6], 0
    %10 = vsyncpa [#allocation4], 0
    // Predicated region
    $region2: #{tpu_custom_call.1} parent=1 // pred_check
      _
    $region3: #{tpu_custom_call.1} parent=1 // pred_check_branch
      %12 = sbr.rel (0) target = $region5
    $region4: #{tpu_custom_call.1} parent=1 // pred_region
      %s14 = ssub.s32 50048, 50048
      %15 = vsyncadd [#allocation3], %s14
      %s17 = sshll.u32 [#allocation2], 4
      %s18 = int_to_ptr.vmem [resolvable:$true] %s17
      %20 = dma.hbm_to_vmem [thread:$0]  %s0, 50048, %s18, [#allocation3]
    $region5: #{tpu_custom_call.1} parent=1 // pred_fallthru
      _
    // Predicated region
    $region6: #{tpu_custom_call.1} parent=1 // pred_check
      _
    $region7: #{tpu_custom_call.1} parent=1 // pred_check_branch
      %22 = sbr.rel (0) target = $region9
    $region8: #{tpu_custom_call.1} parent=1 // pred_region
      %s24 = ssub.s32 6256, 6256
      %25 = vsyncadd [#allocation6], %s24
      %s27 = sshll.u32 [#allocation5], 4
      %s28 = int_to_ptr.vmem [resolvable:$true] %s27
      %30 = dma.hbm_to_vmem [thread:$0]  %s1, 6256, %s28, [#allocation6]
    $region9: #{tpu_custom_call.1} parent=1 // pred_fallthru
      _
    // Predicated region
    $region10: #{tpu_custom_call.1} parent=1 // pred_check
      _
    $region11: #{tpu_custom_call.1} parent=1 // pred_check_branch
      %32 = sbr.rel (0) target = $region13
    $region12: #{tpu_custom_call.1} parent=1 // pred_region
      %s34 = ssub.s32 6256, 6256
      %35 = vsyncadd [#allocation6], %s34
      %s37 = sshll.u32 [#allocation7], 4
      %s38 = int_to_ptr.vmem [resolvable:$true] %s37
      %40 = dma.hbm_to_vmem [thread:$0]  %s2, 6256, %s38, [#allocation6]
    $region13: #{tpu_custom_call.1} parent=1 // pred_fallthru
      _
    // Predicated region
    $region14: #{tpu_custom_call.1} parent=1 // pred_check
      _
    $region15: #{tpu_custom_call.1} parent=1 // pred_check_branch
      %42 = sbr.rel (0) target = $region17
    $region16: #{tpu_custom_call.1} parent=1 // pred_region
      %43 = dma.done [#allocation3], 50048
    $region17: #{tpu_custom_call.1} parent=1 // pred_fallthru
      _
    // Predicated region
    $region18: #{tpu_custom_call.1} parent=1 // pred_check
      _
    $region19: #{tpu_custom_call.1} parent=1 // pred_check_branch
      %45 = sbr.rel (0) target = $region21
    $region20: #{tpu_custom_call.1} parent=1 // pred_region
      %46 = dma.done [#allocation6], 6256
    $region21: #{tpu_custom_call.1} parent=1 // pred_fallthru
      _
    // Predicated region
    $region22: #{tpu_custom_call.1} parent=1 // pred_check
      _
    $region23: #{tpu_custom_call.1} parent=1 // pred_check_branch
      %48 = sbr.rel (0) target = $region25
    $region24: #{tpu_custom_call.1} parent=1 // pred_region
      %49 = dma.done [#allocation6], 6256
    $region25: #{tpu_custom_call.1} parent=1 // pred_fallthru
      _
    %v50 = vld [vmem:[#allocation2] sm:$0xff]
    %v51 = vld [vmem:[#allocation2 + $0x8] sm:$0xff]
    %v52 = vld [vmem:[#allocation2 + $0x10] sm:$0xff]
    %v53 = vld [vmem:[#allocation2 + $0x18] sm:$0xff]
    %v54 = vld [vmem:[#allocation2 + $0x20] sm:$0xff]
    %v55 = vld [vmem:[#allocation2 + $0x28] sm:$0xff]
    %v56 = vld [vmem:[#allocation2 + $0x30] sm:$0xff]
    %v57 = vld [vmem:[#allocation2 + $0x38] sm:$0xff]
    %v58 = vld [vmem:[#allocation2 + $0x40] sm:$0xff]
    %v59 = vld [vmem:[#allocation2 + $0x48] sm:$0xff]
    %v60 = vld [vmem:[#allocation2 + $0x50] sm:$0xff]
    %v61 = vld [vmem:[#allocation2 + $0x58] sm:$0xff]
    %v62 = vld [vmem:[#allocation2 + $0x60] sm:$0xff]
    %v63 = vld [vmem:[#allocation2 + $0x68] sm:$0xff]
    %v64 = vld [vmem:[#allocation2 + $0x70] sm:$0xff]
    %v65 = vld [vmem:[#allocation2 + $0x78] sm:$0xff]
    %v66 = vld [vmem:[#allocation2 + $0x80] sm:$0xff]
    %v67 = vld [vmem:[#allocation2 + $0x88] sm:$0xff]
    %v68 = vld [vmem:[#allocation2 + $0x90] sm:$0xff]
    %v69 = vld [vmem:[#allocation2 + $0x98] sm:$0xff]
    %v70 = vld [vmem:[#allocation2 + $0xa0] sm:$0xff]
    %v71 = vld [vmem:[#allocation2 + $0xa8] sm:$0xff]
    %v72 = vld [vmem:[#allocation2 + $0xb0] sm:$0xff]
    %v73 = vld [vmem:[#allocation2 + $0xb8] sm:$0xff]
    %v74 = vld [vmem:[#allocation2 + $0xc0] sm:$0xff]
    %v75 = vld [vmem:[#allocation2 + $0xc8] sm:$0xff]
    %v76 = vld [vmem:[#allocation2 + $0xd0] sm:$0xff]
    %v77 = vld [vmem:[#allocation2 + $0xd8] sm:$0xff]
    %v78 = vld [vmem:[#allocation2 + $0xe0] sm:$0xff]
    %v79 = vld [vmem:[#allocation2 + $0xe8] sm:$0xff]
    %v80 = vld [vmem:[#allocation2 + $0xf0] sm:$0xff]
    %v81 = vld [vmem:[#allocation2 + $0xf8] sm:$0xff]
    %v82 = vld [vmem:[#allocation2 + $0x100] sm:$0xff]
    %v83 = vld [vmem:[#allocation2 + $0x108] sm:$0xff]
    %v84 = vld [vmem:[#allocation2 + $0x110] sm:$0xff]
    %v85 = vld [vmem:[#allocation2 + $0x118] sm:$0xff]
    %v86 = vld [vmem:[#allocation2 + $0x120] sm:$0xff]
    %v87 = vld [vmem:[#allocation2 + $0x128] sm:$0xff]
    %v88 = vld [vmem:[#allocation2 + $0x130] sm:$0xff]
    %v89 = vld [vmem:[#allocation2 + $0x138] sm:$0xff]
    %v90 = vld [vmem:[#allocation2 + $0x140] sm:$0xff]
    %v91 = vld [vmem:[#allocation2 + $0x148] sm:$0xff]
    %v92 = vld [vmem:[#allocation2 + $0x150] sm:$0xff]
    %v93 = vld [vmem:[#allocation2 + $0x158] sm:$0xff]
    %v94 = vld [vmem:[#allocation2 + $0x160] sm:$0xff]
    %v95 = vld [vmem:[#allocation2 + $0x168] sm:$0xff]
    %v96 = vld [vmem:[#allocation2 + $0x170] sm:$0xff]
    %v97 = vld [vmem:[#allocation2 + $0x178] sm:$0xff]
    %v98 = vld [vmem:[#allocation2 + $0x180] sm:$0xff]
    %v99 = vld [vmem:[#allocation2 + $0x188] sm:$0xff]
    %v100 = vld [vmem:[#allocation2 + $0x190] sm:$0xff]
    %v101 = vld [vmem:[#allocation2 + $0x198] sm:$0xff]
    %v102 = vld [vmem:[#allocation2 + $0x1a0] sm:$0xff]
    %v103 = vld [vmem:[#allocation2 + $0x1a8] sm:$0xff]
    %v104 = vld [vmem:[#allocation2 + $0x1b0] sm:$0xff]
    %v105 = vld [vmem:[#allocation2 + $0x1b8] sm:$0xff]
    %v106 = vld [vmem:[#allocation2 + $0x1c0] sm:$0xff]
    %v107 = vld [vmem:[#allocation2 + $0x1c8] sm:$0xff]
    %v108 = vld [vmem:[#allocation2 + $0x1d0] sm:$0xff]
    %v109 = vld [vmem:[#allocation2 + $0x1d8] sm:$0xff]
    %v110 = vld [vmem:[#allocation2 + $0x1e0] sm:$0xff]
    %v111 = vld [vmem:[#allocation2 + $0x1e8] sm:$0xff]
    %v112 = vld [vmem:[#allocation2 + $0x1f0] sm:$0xff]
    %v113 = vld [vmem:[#allocation2 + $0x1f8] sm:$0xff]
    %v114 = vld [vmem:[#allocation2 + $0x200] sm:$0xff]
    %v115 = vld [vmem:[#allocation2 + $0x208] sm:$0xff]
    %v116 = vld [vmem:[#allocation2 + $0x210] sm:$0xff]
    %v117 = vld [vmem:[#allocation2 + $0x218] sm:$0xff]
    %v118 = vld [vmem:[#allocation2 + $0x220] sm:$0xff]
    %v119 = vld [vmem:[#allocation2 + $0x228] sm:$0xff]
    %v120 = vld [vmem:[#allocation2 + $0x230] sm:$0xff]
    %v121 = vld [vmem:[#allocation2 + $0x238] sm:$0xff]
    %v122 = vld [vmem:[#allocation2 + $0x240] sm:$0xff]
    %v123 = vld [vmem:[#allocation2 + $0x248] sm:$0xff]
    %v124 = vld [vmem:[#allocation2 + $0x250] sm:$0xff]
    %v125 = vld [vmem:[#allocation2 + $0x258] sm:$0xff]
    %v126 = vld [vmem:[#allocation2 + $0x260] sm:$0xff]
    %v127 = vld [vmem:[#allocation2 + $0x268] sm:$0xff]
    %v128 = vld [vmem:[#allocation2 + $0x270] sm:$0xff]
    %v129 = vld [vmem:[#allocation2 + $0x278] sm:$0xff]
    %v130 = vld [vmem:[#allocation2 + $0x280] sm:$0xff]
    %v131 = vld [vmem:[#allocation2 + $0x288] sm:$0xff]
    %v132 = vld [vmem:[#allocation2 + $0x290] sm:$0xff]
    %v133 = vld [vmem:[#allocation2 + $0x298] sm:$0xff]
    %v134 = vld [vmem:[#allocation2 + $0x2a0] sm:$0xff]
    %v135 = vld [vmem:[#allocation2 + $0x2a8] sm:$0xff]
    %v136 = vld [vmem:[#allocation2 + $0x2b0] sm:$0xff]
    %v137 = vld [vmem:[#allocation2 + $0x2b8] sm:$0xff]
    %v138 = vld [vmem:[#allocation2 + $0x2c0] sm:$0xff]
    %v139 = vld [vmem:[#allocation2 + $0x2c8] sm:$0xff]
    %v140 = vld [vmem:[#allocation2 + $0x2d0] sm:$0xff]
    %v141 = vld [vmem:[#allocation2 + $0x2d8] sm:$0xff]
    %v142 = vld [vmem:[#allocation2 + $0x2e0] sm:$0xff]
    %v143 = vld [vmem:[#allocation2 + $0x2e8] sm:$0xff]
    %v144 = vld [vmem:[#allocation2 + $0x2f0] sm:$0xff]
    %v145 = vld [vmem:[#allocation2 + $0x2f8] sm:$0xff]
    %v146 = vld [vmem:[#allocation2 + $0x300] sm:$0xff]
    %v147 = vld [vmem:[#allocation2 + $0x308] sm:$0xff]
    %v148 = vld [vmem:[#allocation2 + $0x310] sm:$0xff]
    %v149 = vld [vmem:[#allocation2 + $0x318] sm:$0xff]
    %v150 = vld [vmem:[#allocation2 + $0x320] sm:$0xff]
    %v151 = vld [vmem:[#allocation2 + $0x328] sm:$0xff]
    %v152 = vld [vmem:[#allocation2 + $0x330] sm:$0xff]
    %v153 = vld [vmem:[#allocation2 + $0x338] sm:$0xff]
    %v154 = vld [vmem:[#allocation2 + $0x340] sm:$0xff]
    %v155 = vld [vmem:[#allocation2 + $0x348] sm:$0xff]
    %v156 = vld [vmem:[#allocation2 + $0x350] sm:$0xff]
    %v157 = vld [vmem:[#allocation2 + $0x358] sm:$0xff]
    %v158 = vld [vmem:[#allocation2 + $0x360] sm:$0xff]
    %v159 = vld [vmem:[#allocation2 + $0x368] sm:$0xff]
    %v160 = vld [vmem:[#allocation2 + $0x370] sm:$0xff]
    %v161 = vld [vmem:[#allocation2 + $0x378] sm:$0xff]
    %v162 = vld [vmem:[#allocation2 + $0x380] sm:$0xff]
    %v163 = vld [vmem:[#allocation2 + $0x388] sm:$0xff]
    %v164 = vld [vmem:[#allocation2 + $0x390] sm:$0xff]
    %v165 = vld [vmem:[#allocation2 + $0x398] sm:$0xff]
    %v166 = vld [vmem:[#allocation2 + $0x3a0] sm:$0xff]
    %v167 = vld [vmem:[#allocation2 + $0x3a8] sm:$0xff]
    %v168 = vld [vmem:[#allocation2 + $0x3b0] sm:$0xff]
    %v169 = vld [vmem:[#allocation2 + $0x3b8] sm:$0xff]
    %v170 = vld [vmem:[#allocation2 + $0x3c0] sm:$0xff]
    %v171 = vld [vmem:[#allocation2 + $0x3c8] sm:$0xff]
    %v172 = vld [vmem:[#allocation2 + $0x3d0] sm:$0xff]
    %v173 = vld [vmem:[#allocation2 + $0x3d8] sm:$0xff]
    %v174 = vld [vmem:[#allocation2 + $0x3e0] sm:$0xff]
    %v175 = vld [vmem:[#allocation2 + $0x3e8] sm:$0xff]
    %v176 = vld [vmem:[#allocation2 + $0x3f0] sm:$0xff]
    %v177 = vld [vmem:[#allocation2 + $0x3f8] sm:$0xff]
    %v178 = vld [vmem:[#allocation2 + $0x400] sm:$0xff]
    %v179 = vld [vmem:[#allocation2 + $0x408] sm:$0xff]
    %v180 = vld [vmem:[#allocation2 + $0x410] sm:$0xff]
    %v181 = vld [vmem:[#allocation2 + $0x418] sm:$0xff]
    %v182 = vld [vmem:[#allocation2 + $0x420] sm:$0xff]
    %v183 = vld [vmem:[#allocation2 + $0x428] sm:$0xff]
    %v184 = vld [vmem:[#allocation2 + $0x430] sm:$0xff]
    %v185 = vld [vmem:[#allocation2 + $0x438] sm:$0xff]
    %v186 = vld [vmem:[#allocation2 + $0x440] sm:$0xff]
    %v187 = vld [vmem:[#allocation2 + $0x448] sm:$0xff]
    %v188 = vld [vmem:[#allocation2 + $0x450] sm:$0xff]
    %v189 = vld [vmem:[#allocation2 + $0x458] sm:$0xff]
    %v190 = vld [vmem:[#allocation2 + $0x460] sm:$0xff]
    %v191 = vld [vmem:[#allocation2 + $0x468] sm:$0xff]
    %v192 = vld [vmem:[#allocation2 + $0x470] sm:$0xff]
    %v193 = vld [vmem:[#allocation2 + $0x478] sm:$0xff]
    %v194 = vld [vmem:[#allocation2 + $0x480] sm:$0xff]
    %v195 = vld [vmem:[#allocation2 + $0x488] sm:$0xff]
    %v196 = vld [vmem:[#allocation2 + $0x490] sm:$0xff]
    %v197 = vld [vmem:[#allocation2 + $0x498] sm:$0xff]
    %v198 = vld [vmem:[#allocation2 + $0x4a0] sm:$0xff]
    %v199 = vld [vmem:[#allocation2 + $0x4a8] sm:$0xff]
    %v200 = vld [vmem:[#allocation2 + $0x4b0] sm:$0xff]
    %v201 = vld [vmem:[#allocation2 + $0x4b8] sm:$0xff]
    %v202 = vld [vmem:[#allocation2 + $0x4c0] sm:$0xff]
    %v203 = vld [vmem:[#allocation2 + $0x4c8] sm:$0xff]
    %v204 = vld [vmem:[#allocation2 + $0x4d0] sm:$0xff]
    %v205 = vld [vmem:[#allocation2 + $0x4d8] sm:$0xff]
    %v206 = vld [vmem:[#allocation2 + $0x4e0] sm:$0xff]
    %v207 = vld [vmem:[#allocation2 + $0x4e8] sm:$0xff]
    %v208 = vld [vmem:[#allocation2 + $0x4f0] sm:$0xff]
    %v209 = vld [vmem:[#allocation2 + $0x4f8] sm:$0xff]
    %v210 = vld [vmem:[#allocation2 + $0x500] sm:$0xff]
    %v211 = vld [vmem:[#allocation2 + $0x508] sm:$0xff]
    %v212 = vld [vmem:[#allocation2 + $0x510] sm:$0xff]
    %v213 = vld [vmem:[#allocation2 + $0x518] sm:$0xff]
    %v214 = vld [vmem:[#allocation2 + $0x520] sm:$0xff]
    %v215 = vld [vmem:[#allocation2 + $0x528] sm:$0xff]
    %v216 = vld [vmem:[#allocation2 + $0x530] sm:$0xff]
    %v217 = vld [vmem:[#allocation2 + $0x538] sm:$0xff]
    %v218 = vld [vmem:[#allocation2 + $0x540] sm:$0xff]
    %v219 = vld [vmem:[#allocation2 + $0x548] sm:$0xff]
    %v220 = vld [vmem:[#allocation2 + $0x550] sm:$0xff]
    %v221 = vld [vmem:[#allocation2 + $0x558] sm:$0xff]
    %v222 = vld [vmem:[#allocation2 + $0x560] sm:$0xff]
    %v223 = vld [vmem:[#allocation2 + $0x568] sm:$0xff]
    %v224 = vld [vmem:[#allocation2 + $0x570] sm:$0xff]
    %v225 = vld [vmem:[#allocation2 + $0x578] sm:$0xff]
    %v226 = vld [vmem:[#allocation2 + $0x580] sm:$0xff]
    %v227 = vld [vmem:[#allocation2 + $0x588] sm:$0xff]
    %v228 = vld [vmem:[#allocation2 + $0x590] sm:$0xff]
    %v229 = vld [vmem:[#allocation2 + $0x598] sm:$0xff]
    %v230 = vld [vmem:[#allocation2 + $0x5a0] sm:$0xff]
    %v231 = vld [vmem:[#allocation2 + $0x5a8] sm:$0xff]
    %v232 = vld [vmem:[#allocation2 + $0x5b0] sm:$0xff]
    %v233 = vld [vmem:[#allocation2 + $0x5b8] sm:$0xff]
    %v234 = vld [vmem:[#allocation2 + $0x5c0] sm:$0xff]
    %v235 = vld [vmem:[#allocation2 + $0x5c8] sm:$0xff]
    %v236 = vld [vmem:[#allocation2 + $0x5d0] sm:$0xff]
    %v237 = vld [vmem:[#allocation2 + $0x5d8] sm:$0xff]
    %v238 = vld [vmem:[#allocation2 + $0x5e0] sm:$0xff]
    %v239 = vld [vmem:[#allocation2 + $0x5e8] sm:$0xff]
    %v240 = vld [vmem:[#allocation2 + $0x5f0] sm:$0xff]
    %v241 = vld [vmem:[#allocation2 + $0x5f8] sm:$0xff]
    %v242 = vld [vmem:[#allocation2 + $0x600] sm:$0xff]
    %v243 = vld [vmem:[#allocation2 + $0x608] sm:$0xff]
    %v244 = vld [vmem:[#allocation2 + $0x610] sm:$0xff]
    %v245 = vld [vmem:[#allocation2 + $0x618] sm:$0xff]
    %v246 = vld [vmem:[#allocation2 + $0x620] sm:$0xff]
    %v247 = vld [vmem:[#allocation2 + $0x628] sm:$0xff]
    %v248 = vld [vmem:[#allocation2 + $0x630] sm:$0xff]
    %v249 = vld [vmem:[#allocation2 + $0x638] sm:$0xff]
    %v250 = vld [vmem:[#allocation2 + $0x640] sm:$0xff]
    %v251 = vld [vmem:[#allocation2 + $0x648] sm:$0xff]
    %v252 = vld [vmem:[#allocation2 + $0x650] sm:$0xff]
    %v253 = vld [vmem:[#allocation2 + $0x658] sm:$0xff]
    %v254 = vld [vmem:[#allocation2 + $0x660] sm:$0xff]
    %v255 = vld [vmem:[#allocation2 + $0x668] sm:$0xff]
    %v256 = vld [vmem:[#allocation2 + $0x670] sm:$0xff]
    %v257 = vld [vmem:[#allocation2 + $0x678] sm:$0xff]
    %v258 = vld [vmem:[#allocation2 + $0x680] sm:$0xff]
    %v259 = vld [vmem:[#allocation2 + $0x688] sm:$0xff]
    %v260 = vld [vmem:[#allocation2 + $0x690] sm:$0xff]
    %v261 = vld [vmem:[#allocation2 + $0x698] sm:$0xff]
    %v262 = vld [vmem:[#allocation2 + $0x6a0] sm:$0xff]
    %v263 = vld [vmem:[#allocation2 + $0x6a8] sm:$0xff]
    %v264 = vld [vmem:[#allocation2 + $0x6b0] sm:$0xff]
    %v265 = vld [vmem:[#allocation2 + $0x6b8] sm:$0xff]
    %v266 = vld [vmem:[#allocation2 + $0x6c0] sm:$0xff]
    %v267 = vld [vmem:[#allocation2 + $0x6c8] sm:$0xff]
    %v268 = vld [vmem:[#allocation2 + $0x6d0] sm:$0xff]
    %v269 = vld [vmem:[#allocation2 + $0x6d8] sm:$0xff]
    %v270 = vld [vmem:[#allocation2 + $0x6e0] sm:$0xff]
    %v271 = vld [vmem:[#allocation2 + $0x6e8] sm:$0xff]
    %v272 = vld [vmem:[#allocation2 + $0x6f0] sm:$0xff]
    %v273 = vld [vmem:[#allocation2 + $0x6f8] sm:$0xff]
    %v274 = vld [vmem:[#allocation2 + $0x700] sm:$0xff]
    %v275 = vld [vmem:[#allocation2 + $0x708] sm:$0xff]
    %v276 = vld [vmem:[#allocation2 + $0x710] sm:$0xff]
    %v277 = vld [vmem:[#allocation2 + $0x718] sm:$0xff]
    %v278 = vld [vmem:[#allocation2 + $0x720] sm:$0xff]
    %v279 = vld [vmem:[#allocation2 + $0x728] sm:$0xff]
    %v280 = vld [vmem:[#allocation2 + $0x730] sm:$0xff]
    %v281 = vld [vmem:[#allocation2 + $0x738] sm:$0xff]
    %v282 = vld [vmem:[#allocation2 + $0x740] sm:$0xff]
    %v283 = vld [vmem:[#allocation2 + $0x748] sm:$0xff]
    %v284 = vld [vmem:[#allocation2 + $0x750] sm:$0xff]
    %v285 = vld [vmem:[#allocation2 + $0x758] sm:$0xff]
    %v286 = vld [vmem:[#allocation2 + $0x760] sm:$0xff]
    %v287 = vld [vmem:[#allocation2 + $0x768] sm:$0xff]
    %v288 = vld [vmem:[#allocation2 + $0x770] sm:$0xff]
    %v289 = vld [vmem:[#allocation2 + $0x778] sm:$0xff]
    %v290 = vld [vmem:[#allocation2 + $0x780] sm:$0xff]
    %v291 = vld [vmem:[#allocation2 + $0x788] sm:$0xff]
    %v292 = vld [vmem:[#allocation2 + $0x790] sm:$0xff]
    %v293 = vld [vmem:[#allocation2 + $0x798] sm:$0xff]
    %v294 = vld [vmem:[#allocation2 + $0x7a0] sm:$0xff]
    %v295 = vld [vmem:[#allocation2 + $0x7a8] sm:$0xff]
    %v296 = vld [vmem:[#allocation2 + $0x7b0] sm:$0xff]
    %v297 = vld [vmem:[#allocation2 + $0x7b8] sm:$0xff]
    %v298 = vld [vmem:[#allocation2 + $0x7c0] sm:$0xff]
    %v299 = vld [vmem:[#allocation2 + $0x7c8] sm:$0xff]
    %v300 = vld [vmem:[#allocation2 + $0x7d0] sm:$0xff]
    %v301 = vld [vmem:[#allocation2 + $0x7d8] sm:$0xff]
    %v302 = vld [vmem:[#allocation2 + $0x7e0] sm:$0xff]
    %v303 = vld [vmem:[#allocation2 + $0x7e8] sm:$0xff]
    %v304 = vld [vmem:[#allocation2 + $0x7f0] sm:$0xff]
    %v305 = vld [vmem:[#allocation2 + $0x7f8] sm:$0xff]
    %v306 = vld [vmem:[#allocation2 + $0x800] sm:$0xff]
    %v307 = vld [vmem:[#allocation2 + $0x808] sm:$0xff]
    %v308 = vld [vmem:[#allocation2 + $0x810] sm:$0xff]
    %v309 = vld [vmem:[#allocation2 + $0x818] sm:$0xff]
    %v310 = vld [vmem:[#allocation2 + $0x820] sm:$0xff]
    %v311 = vld [vmem:[#allocation2 + $0x828] sm:$0xff]
    %v312 = vld [vmem:[#allocation2 + $0x830] sm:$0xff]
    %v313 = vld [vmem:[#allocation2 + $0x838] sm:$0xff]
    %v314 = vld [vmem:[#allocation2 + $0x840] sm:$0xff]
    %v315 = vld [vmem:[#allocation2 + $0x848] sm:$0xff]
    %v316 = vld [vmem:[#allocation2 + $0x850] sm:$0xff]
    %v317 = vld [vmem:[#allocation2 + $0x858] sm:$0xff]
    %v318 = vld [vmem:[#allocation2 + $0x860] sm:$0xff]
    %v319 = vld [vmem:[#allocation2 + $0x868] sm:$0xff]
    %v320 = vld [vmem:[#allocation2 + $0x870] sm:$0xff]
    %v321 = vld [vmem:[#allocation2 + $0x878] sm:$0xff]
    %v322 = vld [vmem:[#allocation2 + $0x880] sm:$0xff]
    %v323 = vld [vmem:[#allocation2 + $0x888] sm:$0xff]
    %v324 = vld [vmem:[#allocation2 + $0x890] sm:$0xff]
    %v325 = vld [vmem:[#allocation2 + $0x898] sm:$0xff]
    %v326 = vld [vmem:[#allocation2 + $0x8a0] sm:$0xff]
    %v327 = vld [vmem:[#allocation2 + $0x8a8] sm:$0xff]
    %v328 = vld [vmem:[#allocation2 + $0x8b0] sm:$0xff]
    %v329 = vld [vmem:[#allocation2 + $0x8b8] sm:$0xff]
    %v330 = vld [vmem:[#allocation2 + $0x8c0] sm:$0xff]
    %v331 = vld [vmem:[#allocation2 + $0x8c8] sm:$0xff]
    %v332 = vld [vmem:[#allocation2 + $0x8d0] sm:$0xff]
    %v333 = vld [vmem:[#allocation2 + $0x8d8] sm:$0xff]
    %v334 = vld [vmem:[#allocation2 + $0x8e0] sm:$0xff]
    %v335 = vld [vmem:[#allocation2 + $0x8e8] sm:$0xff]
    %v336 = vld [vmem:[#allocation2 + $0x8f0] sm:$0xff]
    %v337 = vld [vmem:[#allocation2 + $0x8f8] sm:$0xff]
    %v338 = vld [vmem:[#allocation2 + $0x900] sm:$0xff]
    %v339 = vld [vmem:[#allocation2 + $0x908] sm:$0xff]
    %v340 = vld [vmem:[#allocation2 + $0x910] sm:$0xff]
    %v341 = vld [vmem:[#allocation2 + $0x918] sm:$0xff]
    %v342 = vld [vmem:[#allocation2 + $0x920] sm:$0xff]
    %v343 = vld [vmem:[#allocation2 + $0x928] sm:$0xff]
    %v344 = vld [vmem:[#allocation2 + $0x930] sm:$0xff]
    %v345 = vld [vmem:[#allocation2 + $0x938] sm:$0xff]
    %v346 = vld [vmem:[#allocation2 + $0x940] sm:$0xff]
    %v347 = vld [vmem:[#allocation2 + $0x948] sm:$0xff]
    %v348 = vld [vmem:[#allocation2 + $0x950] sm:$0xff]
    %v349 = vld [vmem:[#allocation2 + $0x958] sm:$0xff]
    %v350 = vld [vmem:[#allocation2 + $0x960] sm:$0xff]
    %v351 = vld [vmem:[#allocation2 + $0x968] sm:$0xff]
    %v352 = vld [vmem:[#allocation2 + $0x970] sm:$0xff]
    %v353 = vld [vmem:[#allocation2 + $0x978] sm:$0xff]
    %v354 = vld [vmem:[#allocation2 + $0x980] sm:$0xff]
    %v355 = vld [vmem:[#allocation2 + $0x988] sm:$0xff]
    %v356 = vld [vmem:[#allocation2 + $0x990] sm:$0xff]
    %v357 = vld [vmem:[#allocation2 + $0x998] sm:$0xff]
    %v358 = vld [vmem:[#allocation2 + $0x9a0] sm:$0xff]
    %v359 = vld [vmem:[#allocation2 + $0x9a8] sm:$0xff]
    %v360 = vld [vmem:[#allocation2 + $0x9b0] sm:$0xff]
    %v361 = vld [vmem:[#allocation2 + $0x9b8] sm:$0xff]
    %v362 = vld [vmem:[#allocation2 + $0x9c0] sm:$0xff]
    %v363 = vld [vmem:[#allocation2 + $0x9c8] sm:$0xff]
    %v364 = vld [vmem:[#allocation2 + $0x9d0] sm:$0xff]
    %v365 = vld [vmem:[#allocation2 + $0x9d8] sm:$0xff]
    %v366 = vld [vmem:[#allocation2 + $0x9e0] sm:$0xff]
    %v367 = vld [vmem:[#allocation2 + $0x9e8] sm:$0xff]
    %v368 = vld [vmem:[#allocation2 + $0x9f0] sm:$0xff]
    %v369 = vld [vmem:[#allocation2 + $0x9f8] sm:$0xff]
    %v370 = vld [vmem:[#allocation2 + $0xa00] sm:$0xff]
    %v371 = vld [vmem:[#allocation2 + $0xa08] sm:$0xff]
    %v372 = vld [vmem:[#allocation2 + $0xa10] sm:$0xff]
    %v373 = vld [vmem:[#allocation2 + $0xa18] sm:$0xff]
    %v374 = vld [vmem:[#allocation2 + $0xa20] sm:$0xff]
    %v375 = vld [vmem:[#allocation2 + $0xa28] sm:$0xff]
    %v376 = vld [vmem:[#allocation2 + $0xa30] sm:$0xff]
    %v377 = vld [vmem:[#allocation2 + $0xa38] sm:$0xff]
    %v378 = vld [vmem:[#allocation2 + $0xa40] sm:$0xff]
    %v379 = vld [vmem:[#allocation2 + $0xa48] sm:$0xff]
    %v380 = vld [vmem:[#allocation2 + $0xa50] sm:$0xff]
    %v381 = vld [vmem:[#allocation2 + $0xa58] sm:$0xff]
    %v382 = vld [vmem:[#allocation2 + $0xa60] sm:$0xff]
    %v383 = vld [vmem:[#allocation2 + $0xa68] sm:$0xff]
    %v384 = vld [vmem:[#allocation2 + $0xa70] sm:$0xff]
    %v385 = vld [vmem:[#allocation2 + $0xa78] sm:$0xff]
    %v386 = vld [vmem:[#allocation2 + $0xa80] sm:$0xff]
    %v387 = vld [vmem:[#allocation2 + $0xa88] sm:$0xff]
    %v388 = vld [vmem:[#allocation2 + $0xa90] sm:$0xff]
    %v389 = vld [vmem:[#allocation2 + $0xa98] sm:$0xff]
    %v390 = vld [vmem:[#allocation2 + $0xaa0] sm:$0xff]
    %v391 = vld [vmem:[#allocation2 + $0xaa8] sm:$0xff]
    %v392 = vld [vmem:[#allocation2 + $0xab0] sm:$0xff]
    %v393 = vld [vmem:[#allocation2 + $0xab8] sm:$0xff]
    %v394 = vld [vmem:[#allocation2 + $0xac0] sm:$0xff]
    %v395 = vld [vmem:[#allocation2 + $0xac8] sm:$0xff]
    %v396 = vld [vmem:[#allocation2 + $0xad0] sm:$0xff]
    %v397 = vld [vmem:[#allocation2 + $0xad8] sm:$0xff]
    %v398 = vld [vmem:[#allocation2 + $0xae0] sm:$0xff]
    %v399 = vld [vmem:[#allocation2 + $0xae8] sm:$0xff]
    %v400 = vld [vmem:[#allocation2 + $0xaf0] sm:$0xff]
    %v401 = vld [vmem:[#allocation2 + $0xaf8] sm:$0xff]
    %v402 = vld [vmem:[#allocation2 + $0xb00] sm:$0xff]
    %v403 = vld [vmem:[#allocation2 + $0xb08] sm:$0xff]
    %v404 = vld [vmem:[#allocation2 + $0xb10] sm:$0xff]
    %v405 = vld [vmem:[#allocation2 + $0xb18] sm:$0xff]
    %v406 = vld [vmem:[#allocation2 + $0xb20] sm:$0xff]
    %v407 = vld [vmem:[#allocation2 + $0xb28] sm:$0xff]
    %v408 = vld [vmem:[#allocation2 + $0xb30] sm:$0xff]
    %v409 = vld [vmem:[#allocation2 + $0xb38] sm:$0xff]
    %v410 = vld [vmem:[#allocation2 + $0xb40] sm:$0xff]
    %v411 = vld [vmem:[#allocation2 + $0xb48] sm:$0xff]
    %v412 = vld [vmem:[#allocation2 + $0xb50] sm:$0xff]
    %v413 = vld [vmem:[#allocation2 + $0xb58] sm:$0xff]
    %v414 = vld [vmem:[#allocation2 + $0xb60] sm:$0xff]
    %v415 = vld [vmem:[#allocation2 + $0xb68] sm:$0xff]
    %v416 = vld [vmem:[#allocation2 + $0xb70] sm:$0xff]
    %v417 = vld [vmem:[#allocation2 + $0xb78] sm:$0xff]
    %v418 = vld [vmem:[#allocation2 + $0xb80] sm:$0xff]
    %v419 = vld [vmem:[#allocation2 + $0xb88] sm:$0xff]
    %v420 = vld [vmem:[#allocation2 + $0xb90] sm:$0xff]
    %v421 = vld [vmem:[#allocation2 + $0xb98] sm:$0xff]
    %v422 = vld [vmem:[#allocation2 + $0xba0] sm:$0xff]
    %v423 = vld [vmem:[#allocation2 + $0xba8] sm:$0xff]
    %v424 = vld [vmem:[#allocation2 + $0xbb0] sm:$0xff]
    %v425 = vld [vmem:[#allocation2 + $0xbb8] sm:$0xff]
    %v426 = vld [vmem:[#allocation2 + $0xbc0] sm:$0xff]
    %v427 = vld [vmem:[#allocation2 + $0xbc8] sm:$0xff]
    %v428 = vld [vmem:[#allocation2 + $0xbd0] sm:$0xff]
    %v429 = vld [vmem:[#allocation2 + $0xbd8] sm:$0xff]
    %v430 = vld [vmem:[#allocation2 + $0xbe0] sm:$0xff]
    %v431 = vld [vmem:[#allocation2 + $0xbe8] sm:$0xff]
    %v432 = vld [vmem:[#allocation2 + $0xbf0] sm:$0xff]
    %v433 = vld [vmem:[#allocation2 + $0xbf8] sm:$0xff]
    %v434 = vld [vmem:[#allocation2 + $0xc00] sm:$0xff]
    %v435 = vld [vmem:[#allocation2 + $0xc08] sm:$0xff]
    %v436 = vld [vmem:[#allocation2 + $0xc10] sm:$0xff]
    %v437 = vld [vmem:[#allocation2 + $0xc18] sm:$0xff]
    %v438 = vld [vmem:[#allocation2 + $0xc20] sm:$0xff]
    %v439 = vld [vmem:[#allocation2 + $0xc28] sm:$0xff]
    %v440 = vld [vmem:[#allocation2 + $0xc30] sm:$0xff]
    %v441 = vlaneseq
    %v442 = vand.u32 %v441, 127
    %v443 = vadd.s32 %v442, 128
    %v444 = vadd.s32 %v442, 256
    %v445 = vadd.s32 %v442, 384
    %v446 = vadd.s32 %v442, 512
    %v447 = vadd.s32 %v442, 640
    %v448 = vadd.s32 %v442, 768
    %v449 = vadd.s32 %v442, 896
    %v450 = vadd.s32 %v442, 1024
    %v451 = vadd.s32 %v442, 1152
    %v452 = vadd.s32 %v442, 1280
    %v453 = vadd.s32 %v442, 1408
    %v454 = vadd.s32 %v442, 1536
    %v455 = vadd.s32 %v442, 1664
    %v456 = vadd.s32 %v442, 1792
    %v457 = vadd.s32 %v442, 1920
    %v458 = vadd.s32 %v442, 2048
    %v459 = vadd.s32 %v442, 2176
    %v460 = vadd.s32 %v442, 2304
    %v461 = vadd.s32 %v442, 2432
    %v462 = vadd.s32 %v442, 2560
    %v463 = vadd.s32 %v442, 2688
    %v464 = vadd.s32 %v442, 2816
    %v465 = vadd.s32 %v442, 2944
    %v466 = vadd.s32 %v442, 3072
    %v467 = vadd.s32 %v442, 3200
    %v468 = vadd.s32 %v442, 3328
    %v469 = vadd.s32 %v442, 3456
    %v470 = vadd.s32 %v442, 3584
    %v471 = vadd.s32 %v442, 3712
    %v472 = vadd.s32 %v442, 3840
    %v473 = vadd.s32 %v442, 3968
    %v474 = vadd.s32 %v442, 4096
    %v475 = vadd.s32 %v442, 4224
    %v476 = vadd.s32 %v442, 4352
    %v477 = vadd.s32 %v442, 4480
    %v478 = vadd.s32 %v442, 4608
    %v479 = vadd.s32 %v442, 4736
    %v480 = vadd.s32 %v442, 4864
    %v481 = vadd.s32 %v442, 4992
    %v482 = vadd.s32 %v442, 5120
    %v483 = vadd.s32 %v442, 5248
    %v484 = vadd.s32 %v442, 5376
    %v485 = vadd.s32 %v442, 5504
    %v486 = vadd.s32 %v442, 5632
    %v487 = vadd.s32 %v442, 5760
    %v488 = vadd.s32 %v442, 5888
    %v489 = vadd.s32 %v442, 6016
    %v490 = vadd.s32 %v442, 6144
    %v491 = vadd.s32 %v442, 6272
    %v492 = vadd.s32 %v442, 6400
    %v493 = vadd.s32 %v442, 6528
    %v494 = vadd.s32 %v442, 6656
    %v495 = vadd.s32 %v442, 6784
    %v496 = vadd.s32 %v442, 6912
    %v497 = vadd.s32 %v442, 7040
    %v498 = vadd.s32 %v442, 7168
    %v499 = vadd.s32 %v442, 7296
    %v500 = vadd.s32 %v442, 7424
    %v501 = vadd.s32 %v442, 7552
    %v502 = vadd.s32 %v442, 7680
    %v503 = vadd.s32 %v442, 7808
    %v504 = vadd.s32 %v442, 7936
    %v505 = vadd.s32 %v442, 8064
    %v506 = vadd.s32 %v442, 8192
    %v507 = vadd.s32 %v442, 8320
    %v508 = vadd.s32 %v442, 8448
    %v509 = vadd.s32 %v442, 8576
    %v510 = vadd.s32 %v442, 8704
    %v511 = vadd.s32 %v442, 8832
    %v512 = vadd.s32 %v442, 8960
    %v513 = vadd.s32 %v442, 9088
    %v514 = vadd.s32 %v442, 9216
    %v515 = vadd.s32 %v442, 9344
    %v516 = vadd.s32 %v442, 9472
    %v517 = vadd.s32 %v442, 9600
    %v518 = vadd.s32 %v442, 9728
    %v519 = vadd.s32 %v442, 9856
    %v520 = vadd.s32 %v442, 9984
    %v521 = vadd.s32 %v442, 10112
    %v522 = vadd.s32 %v442, 10240
    %v523 = vadd.s32 %v442, 10368
    %v524 = vadd.s32 %v442, 10496
    %v525 = vadd.s32 %v442, 10624
    %v526 = vadd.s32 %v442, 10752
    %v527 = vadd.s32 %v442, 10880
    %v528 = vadd.s32 %v442, 11008
    %v529 = vadd.s32 %v442, 11136
    %v530 = vadd.s32 %v442, 11264
    %v531 = vadd.s32 %v442, 11392
    %v532 = vadd.s32 %v442, 11520
    %v533 = vadd.s32 %v442, 11648
    %v534 = vadd.s32 %v442, 11776
    %v535 = vadd.s32 %v442, 11904
    %v536 = vadd.s32 %v442, 12032
    %v537 = vadd.s32 %v442, 12160
    %v538 = vadd.s32 %v442, 12288
    %v539 = vadd.s32 %v442, 12416
    %v540 = vadd.s32 %v442, 12544
    %v541 = vadd.s32 %v442, 12672
    %v542 = vadd.s32 %v442, 12800
    %v543 = vadd.s32 %v442, 12928
    %v544 = vadd.s32 %v442, 13056
    %v545 = vadd.s32 %v442, 13184
    %v546 = vadd.s32 %v442, 13312
    %v547 = vadd.s32 %v442, 13440
    %v548 = vadd.s32 %v442, 13568
    %v549 = vadd.s32 %v442, 13696
    %v550 = vadd.s32 %v442, 13824
    %v551 = vadd.s32 %v442, 13952
    %v552 = vadd.s32 %v442, 14080
    %v553 = vadd.s32 %v442, 14208
    %v554 = vadd.s32 %v442, 14336
    %v555 = vadd.s32 %v442, 14464
    %v556 = vadd.s32 %v442, 14592
    %v557 = vadd.s32 %v442, 14720
    %v558 = vadd.s32 %v442, 14848
    %v559 = vadd.s32 %v442, 14976
    %v560 = vadd.s32 %v442, 15104
    %v561 = vadd.s32 %v442, 15232
    %v562 = vadd.s32 %v442, 15360
    %v563 = vadd.s32 %v442, 15488
    %v564 = vadd.s32 %v442, 15616
    %v565 = vadd.s32 %v442, 15744
    %v566 = vadd.s32 %v442, 15872
    %v567 = vadd.s32 %v442, 16000
    %v568 = vadd.s32 %v442, 16128
    %v569 = vadd.s32 %v442, 16256
    %v570 = vadd.s32 %v442, 16384
    %v571 = vadd.s32 %v442, 16512
    %v572 = vadd.s32 %v442, 16640
    %v573 = vadd.s32 %v442, 16768
    %v574 = vadd.s32 %v442, 16896
    %v575 = vadd.s32 %v442, 17024
    %v576 = vadd.s32 %v442, 17152
    %v577 = vadd.s32 %v442, 17280
    %v578 = vadd.s32 %v442, 17408
    %v579 = vadd.s32 %v442, 17536
    %v580 = vadd.s32 %v442, 17664
    %v581 = vadd.s32 %v442, 17792
    %v582 = vadd.s32 %v442, 17920
    %v583 = vadd.s32 %v442, 18048
    %v584 = vadd.s32 %v442, 18176
    %v585 = vadd.s32 %v442, 18304
    %v586 = vadd.s32 %v442, 18432
    %v587 = vadd.s32 %v442, 18560
    %v588 = vadd.s32 %v442, 18688
    %v589 = vadd.s32 %v442, 18816
    %v590 = vadd.s32 %v442, 18944
    %v591 = vadd.s32 %v442, 19072
    %v592 = vadd.s32 %v442, 19200
    %v593 = vadd.s32 %v442, 19328
    %v594 = vadd.s32 %v442, 19456
    %v595 = vadd.s32 %v442, 19584
    %v596 = vadd.s32 %v442, 19712
    %v597 = vadd.s32 %v442, 19840
    %v598 = vadd.s32 %v442, 19968
    %v599 = vadd.s32 %v442, 20096
    %v600 = vadd.s32 %v442, 20224
    %v601 = vadd.s32 %v442, 20352
    %v602 = vadd.s32 %v442, 20480
    %v603 = vadd.s32 %v442, 20608
    %v604 = vadd.s32 %v442, 20736
    %v605 = vadd.s32 %v442, 20864
    %v606 = vadd.s32 %v442, 20992
    %v607 = vadd.s32 %v442, 21120
    %v608 = vadd.s32 %v442, 21248
    %v609 = vadd.s32 %v442, 21376
    %v610 = vadd.s32 %v442, 21504
    %v611 = vadd.s32 %v442, 21632
    %v612 = vadd.s32 %v442, 21760
    %v613 = vadd.s32 %v442, 21888
    %v614 = vadd.s32 %v442, 22016
    %v615 = vadd.s32 %v442, 22144
    %v616 = vadd.s32 %v442, 22272
    %v617 = vadd.s32 %v442, 22400
    %v618 = vadd.s32 %v442, 22528
    %v619 = vadd.s32 %v442, 22656
    %v620 = vadd.s32 %v442, 22784
    %v621 = vadd.s32 %v442, 22912
    %v622 = vadd.s32 %v442, 23040
    %v623 = vadd.s32 %v442, 23168
    %v624 = vadd.s32 %v442, 23296
    %v625 = vadd.s32 %v442, 23424
    %v626 = vadd.s32 %v442, 23552
    %v627 = vadd.s32 %v442, 23680
    %v628 = vadd.s32 %v442, 23808
    %v629 = vadd.s32 %v442, 23936
    %v630 = vadd.s32 %v442, 24064
    %v631 = vadd.s32 %v442, 24192
    %v632 = vadd.s32 %v442, 24320
    %v633 = vadd.s32 %v442, 24448
    %v634 = vadd.s32 %v442, 24576
    %v635 = vadd.s32 %v442, 24704
    %v636 = vadd.s32 %v442, 24832
    %v637 = vadd.s32 %v442, 24960
    %v638 = vadd.s32 %v442, 25088
    %v639 = vadd.s32 %v442, 25216
    %v640 = vadd.s32 %v442, 25344
    %v641 = vadd.s32 %v442, 25472
    %v642 = vadd.s32 %v442, 25600
    %v643 = vadd.s32 %v442, 25728
    %v644 = vadd.s32 %v442, 25856
    %v645 = vadd.s32 %v442, 25984
    %v646 = vadd.s32 %v442, 26112
    %v647 = vadd.s32 %v442, 26240
    %v648 = vadd.s32 %v442, 26368
    %v649 = vadd.s32 %v442, 26496
    %v650 = vadd.s32 %v442, 26624
    %v651 = vadd.s32 %v442, 26752
    %v652 = vadd.s32 %v442, 26880
    %v653 = vadd.s32 %v442, 27008
    %v654 = vadd.s32 %v442, 27136
    %v655 = vadd.s32 %v442, 27264
    %v656 = vadd.s32 %v442, 27392
    %v657 = vadd.s32 %v442, 27520
    %v658 = vadd.s32 %v442, 27648
    %v659 = vadd.s32 %v442, 27776
    %v660 = vadd.s32 %v442, 27904
    %v661 = vadd.s32 %v442, 28032
    %v662 = vadd.s32 %v442, 28160
    %v663 = vadd.s32 %v442, 28288
    %v664 = vadd.s32 %v442, 28416
    %v665 = vadd.s32 %v442, 28544
    %v666 = vadd.s32 %v442, 28672
    %v667 = vadd.s32 %v442, 28800
    %v668 = vadd.s32 %v442, 28928
    %v669 = vadd.s32 %v442, 29056
    %v670 = vadd.s32 %v442, 29184
    %v671 = vadd.s32 %v442, 29312
    %v672 = vadd.s32 %v442, 29440
    %v673 = vadd.s32 %v442, 29568
    %v674 = vadd.s32 %v442, 29696
    %v675 = vadd.s32 %v442, 29824
    %v676 = vadd.s32 %v442, 29952
    %v677 = vadd.s32 %v442, 30080
    %v678 = vadd.s32 %v442, 30208
    %v679 = vadd.s32 %v442, 30336
    %v680 = vadd.s32 %v442, 30464
    %v681 = vadd.s32 %v442, 30592
    %v682 = vadd.s32 %v442, 30720
    %v683 = vadd.s32 %v442, 30848
    %v684 = vadd.s32 %v442, 30976
    %v685 = vadd.s32 %v442, 31104
    %v686 = vadd.s32 %v442, 31232
    %v687 = vadd.s32 %v442, 31360
    %v688 = vadd.s32 %v442, 31488
    %v689 = vadd.s32 %v442, 31616
    %v690 = vadd.s32 %v442, 31744
    %v691 = vadd.s32 %v442, 31872
    %v692 = vadd.s32 %v442, 32000
    %v693 = vadd.s32 %v442, 32128
    %v694 = vadd.s32 %v442, 32256
    %v695 = vadd.s32 %v442, 32384
    %v696 = vadd.s32 %v442, 32512
    %v697 = vadd.s32 %v442, 32640
    %v698 = vadd.s32 %v442, 32768
    %v699 = vadd.s32 %v442, 32896
    %v700 = vadd.s32 %v442, 33024
    %v701 = vadd.s32 %v442, 33152
    %v702 = vadd.s32 %v442, 33280
    %v703 = vadd.s32 %v442, 33408
    %v704 = vadd.s32 %v442, 33536
    %v705 = vadd.s32 %v442, 33664
    %v706 = vadd.s32 %v442, 33792
    %v707 = vadd.s32 %v442, 33920
    %v708 = vadd.s32 %v442, 34048
    %v709 = vadd.s32 %v442, 34176
    %v710 = vadd.s32 %v442, 34304
    %v711 = vadd.s32 %v442, 34432
    %v712 = vadd.s32 %v442, 34560
    %v713 = vadd.s32 %v442, 34688
    %v714 = vadd.s32 %v442, 34816
    %v715 = vadd.s32 %v442, 34944
    %v716 = vadd.s32 %v442, 35072
    %v717 = vadd.s32 %v442, 35200
    %v718 = vadd.s32 %v442, 35328
    %v719 = vadd.s32 %v442, 35456
    %v720 = vadd.s32 %v442, 35584
    %v721 = vadd.s32 %v442, 35712
    %v722 = vadd.s32 %v442, 35840
    %v723 = vadd.s32 %v442, 35968
    %v724 = vadd.s32 %v442, 36096
    %v725 = vadd.s32 %v442, 36224
    %v726 = vadd.s32 %v442, 36352
    %v727 = vadd.s32 %v442, 36480
    %v728 = vadd.s32 %v442, 36608
    %v729 = vadd.s32 %v442, 36736
    %v730 = vadd.s32 %v442, 36864
    %v731 = vadd.s32 %v442, 36992
    %v732 = vadd.s32 %v442, 37120
    %v733 = vadd.s32 %v442, 37248
    %v734 = vadd.s32 %v442, 37376
    %v735 = vadd.s32 %v442, 37504
    %v736 = vadd.s32 %v442, 37632
    %v737 = vadd.s32 %v442, 37760
    %v738 = vadd.s32 %v442, 37888
    %v739 = vadd.s32 %v442, 38016
    %v740 = vadd.s32 %v442, 38144
    %v741 = vadd.s32 %v442, 38272
    %v742 = vadd.s32 %v442, 38400
    %v743 = vadd.s32 %v442, 38528
    %v744 = vadd.s32 %v442, 38656
    %v745 = vadd.s32 %v442, 38784
    %v746 = vadd.s32 %v442, 38912
    %v747 = vadd.s32 %v442, 39040
    %v748 = vadd.s32 %v442, 39168
    %v749 = vadd.s32 %v442, 39296
    %v750 = vadd.s32 %v442, 39424
    %v751 = vadd.s32 %v442, 39552
    %v752 = vadd.s32 %v442, 39680
    %v753 = vadd.s32 %v442, 39808
    %v754 = vadd.s32 %v442, 39936
    %v755 = vadd.s32 %v442, 40064
    %v756 = vadd.s32 %v442, 40192
    %v757 = vadd.s32 %v442, 40320
    %v758 = vadd.s32 %v442, 40448
    %v759 = vadd.s32 %v442, 40576
    %v760 = vadd.s32 %v442, 40704
    %v761 = vadd.s32 %v442, 40832
    %v762 = vadd.s32 %v442, 40960
    %v763 = vadd.s32 %v442, 41088
    %v764 = vadd.s32 %v442, 41216
    %v765 = vadd.s32 %v442, 41344
    %v766 = vadd.s32 %v442, 41472
    %v767 = vadd.s32 %v442, 41600
    %v768 = vadd.s32 %v442, 41728
    %v769 = vadd.s32 %v442, 41856
    %v770 = vadd.s32 %v442, 41984
    %v771 = vadd.s32 %v442, 42112
    %v772 = vadd.s32 %v442, 42240
    %v773 = vadd.s32 %v442, 42368
    %v774 = vadd.s32 %v442, 42496
    %v775 = vadd.s32 %v442, 42624
    %v776 = vadd.s32 %v442, 42752
    %v777 = vadd.s32 %v442, 42880
    %v778 = vadd.s32 %v442, 43008
    %v779 = vadd.s32 %v442, 43136
    %v780 = vadd.s32 %v442, 43264
    %v781 = vadd.s32 %v442, 43392
    %v782 = vadd.s32 %v442, 43520
    %v783 = vadd.s32 %v442, 43648
    %v784 = vadd.s32 %v442, 43776
    %v785 = vadd.s32 %v442, 43904
    %v786 = vadd.s32 %v442, 44032
    %v787 = vadd.s32 %v442, 44160
    %v788 = vadd.s32 %v442, 44288
    %v789 = vadd.s32 %v442, 44416
    %v790 = vadd.s32 %v442, 44544
    %v791 = vadd.s32 %v442, 44672
    %v792 = vadd.s32 %v442, 44800
    %v793 = vadd.s32 %v442, 44928
    %v794 = vadd.s32 %v442, 45056
    %v795 = vadd.s32 %v442, 45184
    %v796 = vadd.s32 %v442, 45312
    %v797 = vadd.s32 %v442, 45440
    %v798 = vadd.s32 %v442, 45568
    %v799 = vadd.s32 %v442, 45696
    %v800 = vadd.s32 %v442, 45824
    %v801 = vadd.s32 %v442, 45952
    %v802 = vadd.s32 %v442, 46080
    %v803 = vadd.s32 %v442, 46208
    %v804 = vadd.s32 %v442, 46336
    %v805 = vadd.s32 %v442, 46464
    %v806 = vadd.s32 %v442, 46592
    %v807 = vadd.s32 %v442, 46720
    %v808 = vadd.s32 %v442, 46848
    %v809 = vadd.s32 %v442, 46976
    %v810 = vadd.s32 %v442, 47104
    %v811 = vadd.s32 %v442, 47232
    %v812 = vadd.s32 %v442, 47360
    %v813 = vadd.s32 %v442, 47488
    %v814 = vadd.s32 %v442, 47616
    %v815 = vadd.s32 %v442, 47744
    %v816 = vadd.s32 %v442, 47872
    %v817 = vadd.s32 %v442, 48000
    %v818 = vadd.s32 %v442, 48128
    %v819 = vadd.s32 %v442, 48256
    %v820 = vadd.s32 %v442, 48384
    %v821 = vadd.s32 %v442, 48512
    %v822 = vadd.s32 %v442, 48640
    %v823 = vadd.s32 %v442, 48768
    %v824 = vadd.s32 %v442, 48896
    %v825 = vadd.s32 %v442, 49024
    %v826 = vadd.s32 %v442, 49152
    %v827 = vadd.s32 %v442, 49280
    %v828 = vadd.s32 %v442, 49408
    %v829 = vadd.s32 %v442, 49536
    %v830 = vadd.s32 %v442, 49664
    %v831 = vadd.s32 %v442, 49792
    %v832 = vadd.s32 %v442, 49920
    %vm833 = vcmp.lt.s32.totalorder %v442, 50006
    %vm834 = vcmp.lt.s32.totalorder %v443, 50006
    %vm835 = vcmp.lt.s32.totalorder %v444, 50006
    %vm836 = vcmp.lt.s32.totalorder %v445, 50006
    %vm837 = vcmp.lt.s32.totalorder %v446, 50006
    %vm838 = vcmp.lt.s32.totalorder %v447, 50006
    %vm839 = vcmp.lt.s32.totalorder %v448, 50006
    %vm840 = vcmp.lt.s32.totalorder %v449, 50006
    %vm841 = vcmp.lt.s32.totalorder %v450, 50006
    %vm842 = vcmp.lt.s32.totalorder %v451, 50006
    %vm843 = vcmp.lt.s32.totalorder %v452, 50006
    %vm844 = vcmp.lt.s32.totalorder %v453, 50006
    %vm845 = vcmp.lt.s32.totalorder %v454, 50006
    %vm846 = vcmp.lt.s32.totalorder %v455, 50006
    %vm847 = vcmp.lt.s32.totalorder %v456, 50006
    %vm848 = vcmp.lt.s32.totalorder %v457, 50006
    %vm849 = vcmp.lt.s32.totalorder %v458, 50006
    %vm850 = vcmp.lt.s32.totalorder %v459, 50006
    %vm851 = vcmp.lt.s32.totalorder %v460, 50006
    %vm852 = vcmp.lt.s32.totalorder %v461, 50006
    %vm853 = vcmp.lt.s32.totalorder %v462, 50006
    %vm854 = vcmp.lt.s32.totalorder %v463, 50006
    %vm855 = vcmp.lt.s32.totalorder %v464, 50006
    %vm856 = vcmp.lt.s32.totalorder %v465, 50006
    %vm857 = vcmp.lt.s32.totalorder %v466, 50006
    %vm858 = vcmp.lt.s32.totalorder %v467, 50006
    %vm859 = vcmp.lt.s32.totalorder %v468, 50006
    %vm860 = vcmp.lt.s32.totalorder %v469, 50006
    %vm861 = vcmp.lt.s32.totalorder %v470, 50006
    %vm862 = vcmp.lt.s32.totalorder %v471, 50006
    %vm863 = vcmp.lt.s32.totalorder %v472, 50006
    %vm864 = vcmp.lt.s32.totalorder %v473, 50006
    %vm865 = vcmp.lt.s32.totalorder %v474, 50006
    %vm866 = vcmp.lt.s32.totalorder %v475, 50006
    %vm867 = vcmp.lt.s32.totalorder %v476, 50006
    %vm868 = vcmp.lt.s32.totalorder %v477, 50006
    %vm869 = vcmp.lt.s32.totalorder %v478, 50006
    %vm870 = vcmp.lt.s32.totalorder %v479, 50006
    %vm871 = vcmp.lt.s32.totalorder %v480, 50006
    %vm872 = vcmp.lt.s32.totalorder %v481, 50006
    %vm873 = vcmp.lt.s32.totalorder %v482, 50006
    %vm874 = vcmp.lt.s32.totalorder %v483, 50006
    %vm875 = vcmp.lt.s32.totalorder %v484, 50006
    %vm876 = vcmp.lt.s32.totalorder %v485, 50006
    %vm877 = vcmp.lt.s32.totalorder %v486, 50006
    %vm878 = vcmp.lt.s32.totalorder %v487, 50006
    %vm879 = vcmp.lt.s32.totalorder %v488, 50006
    %vm880 = vcmp.lt.s32.totalorder %v489, 50006
    %vm881 = vcmp.lt.s32.totalorder %v490, 50006
    %vm882 = vcmp.lt.s32.totalorder %v491, 50006
    %vm883 = vcmp.lt.s32.totalorder %v492, 50006
    %vm884 = vcmp.lt.s32.totalorder %v493, 50006
    %vm885 = vcmp.lt.s32.totalorder %v494, 50006
    %vm886 = vcmp.lt.s32.totalorder %v495, 50006
    %vm887 = vcmp.lt.s32.totalorder %v496, 50006
    %vm888 = vcmp.lt.s32.totalorder %v497, 50006
    %vm889 = vcmp.lt.s32.totalorder %v498, 50006
    %vm890 = vcmp.lt.s32.totalorder %v499, 50006
    %vm891 = vcmp.lt.s32.totalorder %v500, 50006
    %vm892 = vcmp.lt.s32.totalorder %v501, 50006
    %vm893 = vcmp.lt.s32.totalorder %v502, 50006
    %vm894 = vcmp.lt.s32.totalorder %v503, 50006
    %vm895 = vcmp.lt.s32.totalorder %v504, 50006
    %vm896 = vcmp.lt.s32.totalorder %v505, 50006
    %vm897 = vcmp.lt.s32.totalorder %v506, 50006
    %vm898 = vcmp.lt.s32.totalorder %v507, 50006
    %vm899 = vcmp.lt.s32.totalorder %v508, 50006
    %vm900 = vcmp.lt.s32.totalorder %v509, 50006
    %vm901 = vcmp.lt.s32.totalorder %v510, 50006
    %vm902 = vcmp.lt.s32.totalorder %v511, 50006
    %vm903 = vcmp.lt.s32.totalorder %v512, 50006
    %vm904 = vcmp.lt.s32.totalorder %v513, 50006
    %vm905 = vcmp.lt.s32.totalorder %v514, 50006
    %vm906 = vcmp.lt.s32.totalorder %v515, 50006
    %vm907 = vcmp.lt.s32.totalorder %v516, 50006
    %vm908 = vcmp.lt.s32.totalorder %v517, 50006
    %vm909 = vcmp.lt.s32.totalorder %v518, 50006
    %vm910 = vcmp.lt.s32.totalorder %v519, 50006
    %vm911 = vcmp.lt.s32.totalorder %v520, 50006
    %vm912 = vcmp.lt.s32.totalorder %v521, 50006
    %vm913 = vcmp.lt.s32.totalorder %v522, 50006
    %vm914 = vcmp.lt.s32.totalorder %v523, 50006
    %vm915 = vcmp.lt.s32.totalorder %v524, 50006
    %vm916 = vcmp.lt.s32.totalorder %v525, 50006
    %vm917 = vcmp.lt.s32.totalorder %v526, 50006
    %vm918 = vcmp.lt.s32.totalorder %v527, 50006
    %vm919 = vcmp.lt.s32.totalorder %v528, 50006
    %vm920 = vcmp.lt.s32.totalorder %v529, 50006
    %vm921 = vcmp.lt.s32.totalorder %v530, 50006
    %vm922 = vcmp.lt.s32.totalorder %v531, 50006
    %vm923 = vcmp.lt.s32.totalorder %v532, 50006
    %vm924 = vcmp.lt.s32.totalorder %v533, 50006
    %vm925 = vcmp.lt.s32.totalorder %v534, 50006
    %vm926 = vcmp.lt.s32.totalorder %v535, 50006
    %vm927 = vcmp.lt.s32.totalorder %v536, 50006
    %vm928 = vcmp.lt.s32.totalorder %v537, 50006
    %vm929 = vcmp.lt.s32.totalorder %v538, 50006
    %vm930 = vcmp.lt.s32.totalorder %v539, 50006
    %vm931 = vcmp.lt.s32.totalorder %v540, 50006
    %vm932 = vcmp.lt.s32.totalorder %v541, 50006
    %vm933 = vcmp.lt.s32.totalorder %v542, 50006
    %vm934 = vcmp.lt.s32.totalorder %v543, 50006
    %vm935 = vcmp.lt.s32.totalorder %v544, 50006
    %vm936 = vcmp.lt.s32.totalorder %v545, 50006
    %vm937 = vcmp.lt.s32.totalorder %v546, 50006
    %vm938 = vcmp.lt.s32.totalorder %v547, 50006
    %vm939 = vcmp.lt.s32.totalorder %v548, 50006
    %vm940 = vcmp.lt.s32.totalorder %v549, 50006
    %vm941 = vcmp.lt.s32.totalorder %v550, 50006
    %vm942 = vcmp.lt.s32.totalorder %v551, 50006
    %vm943 = vcmp.lt.s32.totalorder %v552, 50006
    %vm944 = vcmp.lt.s32.totalorder %v553, 50006
    %vm945 = vcmp.lt.s32.totalorder %v554, 50006
    %vm946 = vcmp.lt.s32.totalorder %v555, 50006
    %vm947 = vcmp.lt.s32.totalorder %v556, 50006
    %vm948 = vcmp.lt.s32.totalorder %v557, 50006
    %vm949 = vcmp.lt.s32.totalorder %v558, 50006
    %vm950 = vcmp.lt.s32.totalorder %v559, 50006
    %vm951 = vcmp.lt.s32.totalorder %v560, 50006
    %vm952 = vcmp.lt.s32.totalorder %v561, 50006
    %vm953 = vcmp.lt.s32.totalorder %v562, 50006
    %vm954 = vcmp.lt.s32.totalorder %v563, 50006
    %vm955 = vcmp.lt.s32.totalorder %v564, 50006
    %vm956 = vcmp.lt.s32.totalorder %v565, 50006
    %vm957 = vcmp.lt.s32.totalorder %v566, 50006
    %vm958 = vcmp.lt.s32.totalorder %v567, 50006
    %vm959 = vcmp.lt.s32.totalorder %v568, 50006
    %vm960 = vcmp.lt.s32.totalorder %v569, 50006
    %vm961 = vcmp.lt.s32.totalorder %v570, 50006
    %vm962 = vcmp.lt.s32.totalorder %v571, 50006
    %vm963 = vcmp.lt.s32.totalorder %v572, 50006
    %vm964 = vcmp.lt.s32.totalorder %v573, 50006
    %vm965 = vcmp.lt.s32.totalorder %v574, 50006
    %vm966 = vcmp.lt.s32.totalorder %v575, 50006
    %vm967 = vcmp.lt.s32.totalorder %v576, 50006
    %vm968 = vcmp.lt.s32.totalorder %v577, 50006
    %vm969 = vcmp.lt.s32.totalorder %v578, 50006
    %vm970 = vcmp.lt.s32.totalorder %v579, 50006
    %vm971 = vcmp.lt.s32.totalorder %v580, 50006
    %vm972 = vcmp.lt.s32.totalorder %v581, 50006
    %vm973 = vcmp.lt.s32.totalorder %v582, 50006
    %vm974 = vcmp.lt.s32.totalorder %v583, 50006
    %vm975 = vcmp.lt.s32.totalorder %v584, 50006
    %vm976 = vcmp.lt.s32.totalorder %v585, 50006
    %vm977 = vcmp.lt.s32.totalorder %v586, 50006
    %vm978 = vcmp.lt.s32.totalorder %v587, 50006
    %vm979 = vcmp.lt.s32.totalorder %v588, 50006
    %vm980 = vcmp.lt.s32.totalorder %v589, 50006
    %vm981 = vcmp.lt.s32.totalorder %v590, 50006
    %vm982 = vcmp.lt.s32.totalorder %v591, 50006
    %vm983 = vcmp.lt.s32.totalorder %v592, 50006
    %vm984 = vcmp.lt.s32.totalorder %v593, 50006
    %vm985 = vcmp.lt.s32.totalorder %v594, 50006
    %vm986 = vcmp.lt.s32.totalorder %v595, 50006
    %vm987 = vcmp.lt.s32.totalorder %v596, 50006
    %vm988 = vcmp.lt.s32.totalorder %v597, 50006
    %vm989 = vcmp.lt.s32.totalorder %v598, 50006
    %vm990 = vcmp.lt.s32.totalorder %v599, 50006
    %vm991 = vcmp.lt.s32.totalorder %v600, 50006
    %vm992 = vcmp.lt.s32.totalorder %v601, 50006
    %vm993 = vcmp.lt.s32.totalorder %v602, 50006
    %vm994 = vcmp.lt.s32.totalorder %v603, 50006
    %vm995 = vcmp.lt.s32.totalorder %v604, 50006
    %vm996 = vcmp.lt.s32.totalorder %v605, 50006
    %vm997 = vcmp.lt.s32.totalorder %v606, 50006
    %vm998 = vcmp.lt.s32.totalorder %v607, 50006
    %vm999 = vcmp.lt.s32.totalorder %v608, 50006
    %vm1000 = vcmp.lt.s32.totalorder %v609, 50006
    %vm1001 = vcmp.lt.s32.totalorder %v610, 50006
    %vm1002 = vcmp.lt.s32.totalorder %v611, 50006
    %vm1003 = vcmp.lt.s32.totalorder %v612, 50006
    %vm1004 = vcmp.lt.s32.totalorder %v613, 50006
    %vm1005 = vcmp.lt.s32.totalorder %v614, 50006
    %vm1006 = vcmp.lt.s32.totalorder %v615, 50006
    %vm1007 = vcmp.lt.s32.totalorder %v616, 50006
    %vm1008 = vcmp.lt.s32.totalorder %v617, 50006
    %vm1009 = vcmp.lt.s32.totalorder %v618, 50006
    %vm1010 = vcmp.lt.s32.totalorder %v619, 50006
    %vm1011 = vcmp.lt.s32.totalorder %v620, 50006
    %vm1012 = vcmp.lt.s32.totalorder %v621, 50006
    %vm1013 = vcmp.lt.s32.totalorder %v622, 50006
    %vm1014 = vcmp.lt.s32.totalorder %v623, 50006
    %vm1015 = vcmp.lt.s32.totalorder %v624, 50006
    %vm1016 = vcmp.lt.s32.totalorder %v625, 50006
    %vm1017 = vcmp.lt.s32.totalorder %v626, 50006
    %vm1018 = vcmp.lt.s32.totalorder %v627, 50006
    %vm1019 = vcmp.lt.s32.totalorder %v628, 50006
    %vm1020 = vcmp.lt.s32.totalorder %v629, 50006
    %vm1021 = vcmp.lt.s32.totalorder %v630, 50006
    %vm1022 = vcmp.lt.s32.totalorder %v631, 50006
    %vm1023 = vcmp.lt.s32.totalorder %v632, 50006
    %vm1024 = vcmp.lt.s32.totalorder %v633, 50006
    %vm1025 = vcmp.lt.s32.totalorder %v634, 50006
    %vm1026 = vcmp.lt.s32.totalorder %v635, 50006
    %vm1027 = vcmp.lt.s32.totalorder %v636, 50006
    %vm1028 = vcmp.lt.s32.totalorder %v637, 50006
    %vm1029 = vcmp.lt.s32.totalorder %v638, 50006
    %vm1030 = vcmp.lt.s32.totalorder %v639, 50006
    %vm1031 = vcmp.lt.s32.totalorder %v640, 50006
    %vm1032 = vcmp.lt.s32.totalorder %v641, 50006
    %vm1033 = vcmp.lt.s32.totalorder %v642, 50006
    %vm1034 = vcmp.lt.s32.totalorder %v643, 50006
    %vm1035 = vcmp.lt.s32.totalorder %v644, 50006
    %vm1036 = vcmp.lt.s32.totalorder %v645, 50006
    %vm1037 = vcmp.lt.s32.totalorder %v646, 50006
    %vm1038 = vcmp.lt.s32.totalorder %v647, 50006
    %vm1039 = vcmp.lt.s32.totalorder %v648, 50006
    %vm1040 = vcmp.lt.s32.totalorder %v649, 50006
    %vm1041 = vcmp.lt.s32.totalorder %v650, 50006
    %vm1042 = vcmp.lt.s32.totalorder %v651, 50006
    %vm1043 = vcmp.lt.s32.totalorder %v652, 50006
    %vm1044 = vcmp.lt.s32.totalorder %v653, 50006
    %vm1045 = vcmp.lt.s32.totalorder %v654, 50006
    %vm1046 = vcmp.lt.s32.totalorder %v655, 50006
    %vm1047 = vcmp.lt.s32.totalorder %v656, 50006
    %vm1048 = vcmp.lt.s32.totalorder %v657, 50006
    %vm1049 = vcmp.lt.s32.totalorder %v658, 50006
    %vm1050 = vcmp.lt.s32.totalorder %v659, 50006
    %vm1051 = vcmp.lt.s32.totalorder %v660, 50006
    %vm1052 = vcmp.lt.s32.totalorder %v661, 50006
    %vm1053 = vcmp.lt.s32.totalorder %v662, 50006
    %vm1054 = vcmp.lt.s32.totalorder %v663, 50006
    %vm1055 = vcmp.lt.s32.totalorder %v664, 50006
    %vm1056 = vcmp.lt.s32.totalorder %v665, 50006
    %vm1057 = vcmp.lt.s32.totalorder %v666, 50006
    %vm1058 = vcmp.lt.s32.totalorder %v667, 50006
    %vm1059 = vcmp.lt.s32.totalorder %v668, 50006
    %vm1060 = vcmp.lt.s32.totalorder %v669, 50006
    %vm1061 = vcmp.lt.s32.totalorder %v670, 50006
    %vm1062 = vcmp.lt.s32.totalorder %v671, 50006
    %vm1063 = vcmp.lt.s32.totalorder %v672, 50006
    %vm1064 = vcmp.lt.s32.totalorder %v673, 50006
    %vm1065 = vcmp.lt.s32.totalorder %v674, 50006
    %vm1066 = vcmp.lt.s32.totalorder %v675, 50006
    %vm1067 = vcmp.lt.s32.totalorder %v676, 50006
    %vm1068 = vcmp.lt.s32.totalorder %v677, 50006
    %vm1069 = vcmp.lt.s32.totalorder %v678, 50006
    %vm1070 = vcmp.lt.s32.totalorder %v679, 50006
    %vm1071 = vcmp.lt.s32.totalorder %v680, 50006
    %vm1072 = vcmp.lt.s32.totalorder %v681, 50006
    %vm1073 = vcmp.lt.s32.totalorder %v682, 50006
    %vm1074 = vcmp.lt.s32.totalorder %v683, 50006
    %vm1075 = vcmp.lt.s32.totalorder %v684, 50006
    %vm1076 = vcmp.lt.s32.totalorder %v685, 50006
    %vm1077 = vcmp.lt.s32.totalorder %v686, 50006
    %vm1078 = vcmp.lt.s32.totalorder %v687, 50006
    %vm1079 = vcmp.lt.s32.totalorder %v688, 50006
    %vm1080 = vcmp.lt.s32.totalorder %v689, 50006
    %vm1081 = vcmp.lt.s32.totalorder %v690, 50006
    %vm1082 = vcmp.lt.s32.totalorder %v691, 50006
    %vm1083 = vcmp.lt.s32.totalorder %v692, 50006
    %vm1084 = vcmp.lt.s32.totalorder %v693, 50006
    %vm1085 = vcmp.lt.s32.totalorder %v694, 50006
    %vm1086 = vcmp.lt.s32.totalorder %v695, 50006
    %vm1087 = vcmp.lt.s32.totalorder %v696, 50006
    %vm1088 = vcmp.lt.s32.totalorder %v697, 50006
    %vm1089 = vcmp.lt.s32.totalorder %v698, 50006
    %vm1090 = vcmp.lt.s32.totalorder %v699, 50006
    %vm1091 = vcmp.lt.s32.totalorder %v700, 50006
    %vm1092 = vcmp.lt.s32.totalorder %v701, 50006
    %vm1093 = vcmp.lt.s32.totalorder %v702, 50006
    %vm1094 = vcmp.lt.s32.totalorder %v703, 50006
    %vm1095 = vcmp.lt.s32.totalorder %v704, 50006
    %vm1096 = vcmp.lt.s32.totalorder %v705, 50006
    %vm1097 = vcmp.lt.s32.totalorder %v706, 50006
    %vm1098 = vcmp.lt.s32.totalorder %v707, 50006
    %vm1099 = vcmp.lt.s32.totalorder %v708, 50006
    %vm1100 = vcmp.lt.s32.totalorder %v709, 50006
    %vm1101 = vcmp.lt.s32.totalorder %v710, 50006
    %vm1102 = vcmp.lt.s32.totalorder %v711, 50006
    %vm1103 = vcmp.lt.s32.totalorder %v712, 50006
    %vm1104 = vcmp.lt.s32.totalorder %v713, 50006
    %vm1105 = vcmp.lt.s32.totalorder %v714, 50006
    %vm1106 = vcmp.lt.s32.totalorder %v715, 50006
    %vm1107 = vcmp.lt.s32.totalorder %v716, 50006
    %vm1108 = vcmp.lt.s32.totalorder %v717, 50006
    %vm1109 = vcmp.lt.s32.totalorder %v718, 50006
    %vm1110 = vcmp.lt.s32.totalorder %v719, 50006
    %vm1111 = vcmp.lt.s32.totalorder %v720, 50006
    %vm1112 = vcmp.lt.s32.totalorder %v721, 50006
    %vm1113 = vcmp.lt.s32.totalorder %v722, 50006
    %vm1114 = vcmp.lt.s32.totalorder %v723, 50006
    %vm1115 = vcmp.lt.s32.totalorder %v724, 50006
    %vm1116 = vcmp.lt.s32.totalorder %v725, 50006
    %vm1117 = vcmp.lt.s32.totalorder %v726, 50006
    %vm1118 = vcmp.lt.s32.totalorder %v727, 50006
    %vm1119 = vcmp.lt.s32.totalorder %v728, 50006
    %vm1120 = vcmp.lt.s32.totalorder %v729, 50006
    %vm1121 = vcmp.lt.s32.totalorder %v730, 50006
    %vm1122 = vcmp.lt.s32.totalorder %v731, 50006
    %vm1123 = vcmp.lt.s32.totalorder %v732, 50006
    %vm1124 = vcmp.lt.s32.totalorder %v733, 50006
    %vm1125 = vcmp.lt.s32.totalorder %v734, 50006
    %vm1126 = vcmp.lt.s32.totalorder %v735, 50006
    %vm1127 = vcmp.lt.s32.totalorder %v736, 50006
    %vm1128 = vcmp.lt.s32.totalorder %v737, 50006
    %vm1129 = vcmp.lt.s32.totalorder %v738, 50006
    %vm1130 = vcmp.lt.s32.totalorder %v739, 50006
    %vm1131 = vcmp.lt.s32.totalorder %v740, 50006
    %vm1132 = vcmp.lt.s32.totalorder %v741, 50006
    %vm1133 = vcmp.lt.s32.totalorder %v742, 50006
    %vm1134 = vcmp.lt.s32.totalorder %v743, 50006
    %vm1135 = vcmp.lt.s32.totalorder %v744, 50006
    %vm1136 = vcmp.lt.s32.totalorder %v745, 50006
    %vm1137 = vcmp.lt.s32.totalorder %v746, 50006
    %vm1138 = vcmp.lt.s32.totalorder %v747, 50006
    %vm1139 = vcmp.lt.s32.totalorder %v748, 50006
    %vm1140 = vcmp.lt.s32.totalorder %v749, 50006
    %vm1141 = vcmp.lt.s32.totalorder %v750, 50006
    %vm1142 = vcmp.lt.s32.totalorder %v751, 50006
    %vm1143 = vcmp.lt.s32.totalorder %v752, 50006
    %vm1144 = vcmp.lt.s32.totalorder %v753, 50006
    %vm1145 = vcmp.lt.s32.totalorder %v754, 50006
    %vm1146 = vcmp.lt.s32.totalorder %v755, 50006
    %vm1147 = vcmp.lt.s32.totalorder %v756, 50006
    %vm1148 = vcmp.lt.s32.totalorder %v757, 50006
    %vm1149 = vcmp.lt.s32.totalorder %v758, 50006
    %vm1150 = vcmp.lt.s32.totalorder %v759, 50006
    %vm1151 = vcmp.lt.s32.totalorder %v760, 50006
    %vm1152 = vcmp.lt.s32.totalorder %v761, 50006
    %vm1153 = vcmp.lt.s32.totalorder %v762, 50006
    %vm1154 = vcmp.lt.s32.totalorder %v763, 50006
    %vm1155 = vcmp.lt.s32.totalorder %v764, 50006
    %vm1156 = vcmp.lt.s32.totalorder %v765, 50006
    %vm1157 = vcmp.lt.s32.totalorder %v766, 50006
    %vm1158 = vcmp.lt.s32.totalorder %v767, 50006
    %vm1159 = vcmp.lt.s32.totalorder %v768, 50006
    %vm1160 = vcmp.lt.s32.totalorder %v769, 50006
    %vm1161 = vcmp.lt.s32.totalorder %v770, 50006
    %vm1162 = vcmp.lt.s32.totalorder %v771, 50006
    %vm1163 = vcmp.lt.s32.totalorder %v772, 50006
    %vm1164 = vcmp.lt.s32.totalorder %v773, 50006
    %vm1165 = vcmp.lt.s32.totalorder %v774, 50006
    %vm1166 = vcmp.lt.s32.totalorder %v775, 50006
    %vm1167 = vcmp.lt.s32.totalorder %v776, 50006
    %vm1168 = vcmp.lt.s32.totalorder %v777, 50006
    %vm1169 = vcmp.lt.s32.totalorder %v778, 50006
    %vm1170 = vcmp.lt.s32.totalorder %v779, 50006
    %vm1171 = vcmp.lt.s32.totalorder %v780, 50006
    %vm1172 = vcmp.lt.s32.totalorder %v781, 50006
    %vm1173 = vcmp.lt.s32.totalorder %v782, 50006
    %vm1174 = vcmp.lt.s32.totalorder %v783, 50006
    %vm1175 = vcmp.lt.s32.totalorder %v784, 50006
    %vm1176 = vcmp.lt.s32.totalorder %v785, 50006
    %vm1177 = vcmp.lt.s32.totalorder %v786, 50006
    %vm1178 = vcmp.lt.s32.totalorder %v787, 50006
    %vm1179 = vcmp.lt.s32.totalorder %v788, 50006
    %vm1180 = vcmp.lt.s32.totalorder %v789, 50006
    %vm1181 = vcmp.lt.s32.totalorder %v790, 50006
    %vm1182 = vcmp.lt.s32.totalorder %v791, 50006
    %vm1183 = vcmp.lt.s32.totalorder %v792, 50006
    %vm1184 = vcmp.lt.s32.totalorder %v793, 50006
    %vm1185 = vcmp.lt.s32.totalorder %v794, 50006
    %vm1186 = vcmp.lt.s32.totalorder %v795, 50006
    %vm1187 = vcmp.lt.s32.totalorder %v796, 50006
    %vm1188 = vcmp.lt.s32.totalorder %v797, 50006
    %vm1189 = vcmp.lt.s32.totalorder %v798, 50006
    %vm1190 = vcmp.lt.s32.totalorder %v799, 50006
    %vm1191 = vcmp.lt.s32.totalorder %v800, 50006
    %vm1192 = vcmp.lt.s32.totalorder %v801, 50006
    %vm1193 = vcmp.lt.s32.totalorder %v802, 50006
    %vm1194 = vcmp.lt.s32.totalorder %v803, 50006
    %vm1195 = vcmp.lt.s32.totalorder %v804, 50006
    %vm1196 = vcmp.lt.s32.totalorder %v805, 50006
    %vm1197 = vcmp.lt.s32.totalorder %v806, 50006
    %vm1198 = vcmp.lt.s32.totalorder %v807, 50006
    %vm1199 = vcmp.lt.s32.totalorder %v808, 50006
    %vm1200 = vcmp.lt.s32.totalorder %v809, 50006
    %vm1201 = vcmp.lt.s32.totalorder %v810, 50006
    %vm1202 = vcmp.lt.s32.totalorder %v811, 50006
    %vm1203 = vcmp.lt.s32.totalorder %v812, 50006
    %vm1204 = vcmp.lt.s32.totalorder %v813, 50006
    %vm1205 = vcmp.lt.s32.totalorder %v814, 50006
    %vm1206 = vcmp.lt.s32.totalorder %v815, 50006
    %vm1207 = vcmp.lt.s32.totalorder %v816, 50006
    %vm1208 = vcmp.lt.s32.totalorder %v817, 50006
    %vm1209 = vcmp.lt.s32.totalorder %v818, 50006
    %vm1210 = vcmp.lt.s32.totalorder %v819, 50006
    %vm1211 = vcmp.lt.s32.totalorder %v820, 50006
    %vm1212 = vcmp.lt.s32.totalorder %v821, 50006
    %vm1213 = vcmp.lt.s32.totalorder %v822, 50006
    %vm1214 = vcmp.lt.s32.totalorder %v823, 50006
    %vm1215 = vcmp.lt.s32.totalorder %v824, 50006
    %vm1216 = vcmp.lt.s32.totalorder %v825, 50006
    %vm1217 = vcmp.lt.s32.totalorder %v826, 50006
    %vm1218 = vcmp.lt.s32.totalorder %v827, 50006
    %vm1219 = vcmp.lt.s32.totalorder %v828, 50006
    %vm1220 = vcmp.lt.s32.totalorder %v829, 50006
    %vm1221 = vcmp.lt.s32.totalorder %v830, 50006
    %vm1222 = vcmp.lt.s32.totalorder %v831, 50006
    %vm1223 = vcmp.lt.s32.totalorder %v832, 50006
    %v1224 = vsel %vm833, %v50, 0.0
    %v1225 = vsel %vm834, %v51, 0.0
    %v1226 = vsel %vm835, %v52, 0.0
    %v1227 = vsel %vm836, %v53, 0.0
    %v1228 = vsel %vm837, %v54, 0.0
    %v1229 = vsel %vm838, %v55, 0.0
    %v1230 = vsel %vm839, %v56, 0.0
    %v1231 = vsel %vm840, %v57, 0.0
    %v1232 = vsel %vm841, %v58, 0.0
    %v1233 = vsel %vm842, %v59, 0.0
    %v1234 = vsel %vm843, %v60, 0.0
    %v1235 = vsel %vm844, %v61, 0.0
    %v1236 = vsel %vm845, %v62, 0.0
    %v1237 = vsel %vm846, %v63, 0.0
    %v1238 = vsel %vm847, %v64, 0.0
    %v1239 = vsel %vm848, %v65, 0.0
    %v1240 = vsel %vm849, %v66, 0.0
    %v1241 = vsel %vm850, %v67, 0.0
    %v1242 = vsel %vm851, %v68, 0.0
    %v1243 = vsel %vm852, %v69, 0.0
    %v1244 = vsel %vm853, %v70, 0.0
    %v1245 = vsel %vm854, %v71, 0.0
    %v1246 = vsel %vm855, %v72, 0.0
    %v1247 = vsel %vm856, %v73, 0.0
    %v1248 = vsel %vm857, %v74, 0.0
    %v1249 = vsel %vm858, %v75, 0.0
    %v1250 = vsel %vm859, %v76, 0.0
    %v1251 = vsel %vm860, %v77, 0.0
    %v1252 = vsel %vm861, %v78, 0.0
    %v1253 = vsel %vm862, %v79, 0.0
    %v1254 = vsel %vm863, %v80, 0.0
    %v1255 = vsel %vm864, %v81, 0.0
    %v1256 = vsel %vm865, %v82, 0.0
    %v1257 = vsel %vm866, %v83, 0.0
    %v1258 = vsel %vm867, %v84, 0.0
    %v1259 = vsel %vm868, %v85, 0.0
    %v1260 = vsel %vm869, %v86, 0.0
    %v1261 = vsel %vm870, %v87, 0.0
    %v1262 = vsel %vm871, %v88, 0.0
    %v1263 = vsel %vm872, %v89, 0.0
    %v1264 = vsel %vm873, %v90, 0.0
    %v1265 = vsel %vm874, %v91, 0.0
    %v1266 = vsel %vm875, %v92, 0.0
    %v1267 = vsel %vm876, %v93, 0.0
    %v1268 = vsel %vm877, %v94, 0.0
    %v1269 = vsel %vm878, %v95, 0.0
    %v1270 = vsel %vm879, %v96, 0.0
    %v1271 = vsel %vm880, %v97, 0.0
    %v1272 = vsel %vm881, %v98, 0.0
    %v1273 = vsel %vm882, %v99, 0.0
    %v1274 = vsel %vm883, %v100, 0.0
    %v1275 = vsel %vm884, %v101, 0.0
    %v1276 = vsel %vm885, %v102, 0.0
    %v1277 = vsel %vm886, %v103, 0.0
    %v1278 = vsel %vm887, %v104, 0.0
    %v1279 = vsel %vm888, %v105, 0.0
    %v1280 = vsel %vm889, %v106, 0.0
    %v1281 = vsel %vm890, %v107, 0.0
    %v1282 = vsel %vm891, %v108, 0.0
    %v1283 = vsel %vm892, %v109, 0.0
    %v1284 = vsel %vm893, %v110, 0.0
    %v1285 = vsel %vm894, %v111, 0.0
    %v1286 = vsel %vm895, %v112, 0.0
    %v1287 = vsel %vm896, %v113, 0.0
    %v1288 = vsel %vm897, %v114, 0.0
    %v1289 = vsel %vm898, %v115, 0.0
    %v1290 = vsel %vm899, %v116, 0.0
    %v1291 = vsel %vm900, %v117, 0.0
    %v1292 = vsel %vm901, %v118, 0.0
    %v1293 = vsel %vm902, %v119, 0.0
    %v1294 = vsel %vm903, %v120, 0.0
    %v1295 = vsel %vm904, %v121, 0.0
    %v1296 = vsel %vm905, %v122, 0.0
    %v1297 = vsel %vm906, %v123, 0.0
    %v1298 = vsel %vm907, %v124, 0.0
    %v1299 = vsel %vm908, %v125, 0.0
    %v1300 = vsel %vm909, %v126, 0.0
    %v1301 = vsel %vm910, %v127, 0.0
    %v1302 = vsel %vm911, %v128, 0.0
    %v1303 = vsel %vm912, %v129, 0.0
    %v1304 = vsel %vm913, %v130, 0.0
    %v1305 = vsel %vm914, %v131, 0.0
    %v1306 = vsel %vm915, %v132, 0.0
    %v1307 = vsel %vm916, %v133, 0.0
    %v1308 = vsel %vm917, %v134, 0.0
    %v1309 = vsel %vm918, %v135, 0.0
    %v1310 = vsel %vm919, %v136, 0.0
    %v1311 = vsel %vm920, %v137, 0.0
    %v1312 = vsel %vm921, %v138, 0.0
    %v1313 = vsel %vm922, %v139, 0.0
    %v1314 = vsel %vm923, %v140, 0.0
    %v1315 = vsel %vm924, %v141, 0.0
    %v1316 = vsel %vm925, %v142, 0.0
    %v1317 = vsel %vm926, %v143, 0.0
    %v1318 = vsel %vm927, %v144, 0.0
    %v1319 = vsel %vm928, %v145, 0.0
    %v1320 = vsel %vm929, %v146, 0.0
    %v1321 = vsel %vm930, %v147, 0.0
    %v1322 = vsel %vm931, %v148, 0.0
    %v1323 = vsel %vm932, %v149, 0.0
    %v1324 = vsel %vm933, %v150, 0.0
    %v1325 = vsel %vm934, %v151, 0.0
    %v1326 = vsel %vm935, %v152, 0.0
    %v1327 = vsel %vm936, %v153, 0.0
    %v1328 = vsel %vm937, %v154, 0.0
    %v1329 = vsel %vm938, %v155, 0.0
    %v1330 = vsel %vm939, %v156, 0.0
    %v1331 = vsel %vm940, %v157, 0.0
    %v1332 = vsel %vm941, %v158, 0.0
    %v1333 = vsel %vm942, %v159, 0.0
    %v1334 = vsel %vm943, %v160, 0.0
    %v1335 = vsel %vm944, %v161, 0.0
    %v1336 = vsel %vm945, %v162, 0.0
    %v1337 = vsel %vm946, %v163, 0.0
    %v1338 = vsel %vm947, %v164, 0.0
    %v1339 = vsel %vm948, %v165, 0.0
    %v1340 = vsel %vm949, %v166, 0.0
    %v1341 = vsel %vm950, %v167, 0.0
    %v1342 = vsel %vm951, %v168, 0.0
    %v1343 = vsel %vm952, %v169, 0.0
    %v1344 = vsel %vm953, %v170, 0.0
    %v1345 = vsel %vm954, %v171, 0.0
    %v1346 = vsel %vm955, %v172, 0.0
    %v1347 = vsel %vm956, %v173, 0.0
    %v1348 = vsel %vm957, %v174, 0.0
    %v1349 = vsel %vm958, %v175, 0.0
    %v1350 = vsel %vm959, %v176, 0.0
    %v1351 = vsel %vm960, %v177, 0.0
    %v1352 = vsel %vm961, %v178, 0.0
    %v1353 = vsel %vm962, %v179, 0.0
    %v1354 = vsel %vm963, %v180, 0.0
    %v1355 = vsel %vm964, %v181, 0.0
    %v1356 = vsel %vm965, %v182, 0.0
    %v1357 = vsel %vm966, %v183, 0.0
    %v1358 = vsel %vm967, %v184, 0.0
    %v1359 = vsel %vm968, %v185, 0.0
    %v1360 = vsel %vm969, %v186, 0.0
    %v1361 = vsel %vm970, %v187, 0.0
    %v1362 = vsel %vm971, %v188, 0.0
    %v1363 = vsel %vm972, %v189, 0.0
    %v1364 = vsel %vm973, %v190, 0.0
    %v1365 = vsel %vm974, %v191, 0.0
    %v1366 = vsel %vm975, %v192, 0.0
    %v1367 = vsel %vm976, %v193, 0.0
    %v1368 = vsel %vm977, %v194, 0.0
    %v1369 = vsel %vm978, %v195, 0.0
    %v1370 = vsel %vm979, %v196, 0.0
    %v1371 = vsel %vm980, %v197, 0.0
    %v1372 = vsel %vm981, %v198, 0.0
    %v1373 = vsel %vm982, %v199, 0.0
    %v1374 = vsel %vm983, %v200, 0.0
    %v1375 = vsel %vm984, %v201, 0.0
    %v1376 = vsel %vm985, %v202, 0.0
    %v1377 = vsel %vm986, %v203, 0.0
    %v1378 = vsel %vm987, %v204, 0.0
    %v1379 = vsel %vm988, %v205, 0.0
    %v1380 = vsel %vm989, %v206, 0.0
    %v1381 = vsel %vm990, %v207, 0.0
    %v1382 = vsel %vm991, %v208, 0.0
    %v1383 = vsel %vm992, %v209, 0.0
    %v1384 = vsel %vm993, %v210, 0.0
    %v1385 = vsel %vm994, %v211, 0.0
    %v1386 = vsel %vm995, %v212, 0.0
    %v1387 = vsel %vm996, %v213, 0.0
    %v1388 = vsel %vm997, %v214, 0.0
    %v1389 = vsel %vm998, %v215, 0.0
    %v1390 = vsel %vm999, %v216, 0.0
    %v1391 = vsel %vm1000, %v217, 0.0
    %v1392 = vsel %vm1001, %v218, 0.0
    %v1393 = vsel %vm1002, %v219, 0.0
    %v1394 = vsel %vm1003, %v220, 0.0
    %v1395 = vsel %vm1004, %v221, 0.0
    %v1396 = vsel %vm1005, %v222, 0.0
    %v1397 = vsel %vm1006, %v223, 0.0
    %v1398 = vsel %vm1007, %v224, 0.0
    %v1399 = vsel %vm1008, %v225, 0.0
    %v1400 = vsel %vm1009, %v226, 0.0
    %v1401 = vsel %vm1010, %v227, 0.0
    %v1402 = vsel %vm1011, %v228, 0.0
    %v1403 = vsel %vm1012, %v229, 0.0
    %v1404 = vsel %vm1013, %v230, 0.0
    %v1405 = vsel %vm1014, %v231, 0.0
    %v1406 = vsel %vm1015, %v232, 0.0
    %v1407 = vsel %vm1016, %v233, 0.0
    %v1408 = vsel %vm1017, %v234, 0.0
    %v1409 = vsel %vm1018, %v235, 0.0
    %v1410 = vsel %vm1019, %v236, 0.0
    %v1411 = vsel %vm1020, %v237, 0.0
    %v1412 = vsel %vm1021, %v238, 0.0
    %v1413 = vsel %vm1022, %v239, 0.0
    %v1414 = vsel %vm1023, %v240, 0.0
    %v1415 = vsel %vm1024, %v241, 0.0
    %v1416 = vsel %vm1025, %v242, 0.0
    %v1417 = vsel %vm1026, %v243, 0.0
    %v1418 = vsel %vm1027, %v244, 0.0
    %v1419 = vsel %vm1028, %v245, 0.0
    %v1420 = vsel %vm1029, %v246, 0.0
    %v1421 = vsel %vm1030, %v247, 0.0
    %v1422 = vsel %vm1031, %v248, 0.0
    %v1423 = vsel %vm1032, %v249, 0.0
    %v1424 = vsel %vm1033, %v250, 0.0
    %v1425 = vsel %vm1034, %v251, 0.0
    %v1426 = vsel %vm1035, %v252, 0.0
    %v1427 = vsel %vm1036, %v253, 0.0
    %v1428 = vsel %vm1037, %v254, 0.0
    %v1429 = vsel %vm1038, %v255, 0.0
    %v1430 = vsel %vm1039, %v256, 0.0
    %v1431 = vsel %vm1040, %v257, 0.0
    %v1432 = vsel %vm1041, %v258, 0.0
    %v1433 = vsel %vm1042, %v259, 0.0
    %v1434 = vsel %vm1043, %v260, 0.0
    %v1435 = vsel %vm1044, %v261, 0.0
    %v1436 = vsel %vm1045, %v262, 0.0
    %v1437 = vsel %vm1046, %v263, 0.0
    %v1438 = vsel %vm1047, %v264, 0.0
    %v1439 = vsel %vm1048, %v265, 0.0
    %v1440 = vsel %vm1049, %v266, 0.0
    %v1441 = vsel %vm1050, %v267, 0.0
    %v1442 = vsel %vm1051, %v268, 0.0
    %v1443 = vsel %vm1052, %v269, 0.0
    %v1444 = vsel %vm1053, %v270, 0.0
    %v1445 = vsel %vm1054, %v271, 0.0
    %v1446 = vsel %vm1055, %v272, 0.0
    %v1447 = vsel %vm1056, %v273, 0.0
    %v1448 = vsel %vm1057, %v274, 0.0
    %v1449 = vsel %vm1058, %v275, 0.0
    %v1450 = vsel %vm1059, %v276, 0.0
    %v1451 = vsel %vm1060, %v277, 0.0
    %v1452 = vsel %vm1061, %v278, 0.0
    %v1453 = vsel %vm1062, %v279, 0.0
    %v1454 = vsel %vm1063, %v280, 0.0
    %v1455 = vsel %vm1064, %v281, 0.0
    %v1456 = vsel %vm1065, %v282, 0.0
    %v1457 = vsel %vm1066, %v283, 0.0
    %v1458 = vsel %vm1067, %v284, 0.0
    %v1459 = vsel %vm1068, %v285, 0.0
    %v1460 = vsel %vm1069, %v286, 0.0
    %v1461 = vsel %vm1070, %v287, 0.0
    %v1462 = vsel %vm1071, %v288, 0.0
    %v1463 = vsel %vm1072, %v289, 0.0
    %v1464 = vsel %vm1073, %v290, 0.0
    %v1465 = vsel %vm1074, %v291, 0.0
    %v1466 = vsel %vm1075, %v292, 0.0
    %v1467 = vsel %vm1076, %v293, 0.0
    %v1468 = vsel %vm1077, %v294, 0.0
    %v1469 = vsel %vm1078, %v295, 0.0
    %v1470 = vsel %vm1079, %v296, 0.0
    %v1471 = vsel %vm1080, %v297, 0.0
    %v1472 = vsel %vm1081, %v298, 0.0
    %v1473 = vsel %vm1082, %v299, 0.0
    %v1474 = vsel %vm1083, %v300, 0.0
    %v1475 = vsel %vm1084, %v301, 0.0
    %v1476 = vsel %vm1085, %v302, 0.0
    %v1477 = vsel %vm1086, %v303, 0.0
    %v1478 = vsel %vm1087, %v304, 0.0
    %v1479 = vsel %vm1088, %v305, 0.0
    %v1480 = vsel %vm1089, %v306, 0.0
    %v1481 = vsel %vm1090, %v307, 0.0
    %v1482 = vsel %vm1091, %v308, 0.0
    %v1483 = vsel %vm1092, %v309, 0.0
    %v1484 = vsel %vm1093, %v310, 0.0
    %v1485 = vsel %vm1094, %v311, 0.0
    %v1486 = vsel %vm1095, %v312, 0.0
    %v1487 = vsel %vm1096, %v313, 0.0
    %v1488 = vsel %vm1097, %v314, 0.0
    %v1489 = vsel %vm1098, %v315, 0.0
    %v1490 = vsel %vm1099, %v316, 0.0
    %v1491 = vsel %vm1100, %v317, 0.0
    %v1492 = vsel %vm1101, %v318, 0.0
    %v1493 = vsel %vm1102, %v319, 0.0
    %v1494 = vsel %vm1103, %v320, 0.0
    %v1495 = vsel %vm1104, %v321, 0.0
    %v1496 = vsel %vm1105, %v322, 0.0
    %v1497 = vsel %vm1106, %v323, 0.0
    %v1498 = vsel %vm1107, %v324, 0.0
    %v1499 = vsel %vm1108, %v325, 0.0
    %v1500 = vsel %vm1109, %v326, 0.0
    %v1501 = vsel %vm1110, %v327, 0.0
    %v1502 = vsel %vm1111, %v328, 0.0
    %v1503 = vsel %vm1112, %v329, 0.0
    %v1504 = vsel %vm1113, %v330, 0.0
    %v1505 = vsel %vm1114, %v331, 0.0
    %v1506 = vsel %vm1115, %v332, 0.0
    %v1507 = vsel %vm1116, %v333, 0.0
    %v1508 = vsel %vm1117, %v334, 0.0
    %v1509 = vsel %vm1118, %v335, 0.0
    %v1510 = vsel %vm1119, %v336, 0.0
    %v1511 = vsel %vm1120, %v337, 0.0
    %v1512 = vsel %vm1121, %v338, 0.0
    %v1513 = vsel %vm1122, %v339, 0.0
    %v1514 = vsel %vm1123, %v340, 0.0
    %v1515 = vsel %vm1124, %v341, 0.0
    %v1516 = vsel %vm1125, %v342, 0.0
    %v1517 = vsel %vm1126, %v343, 0.0
    %v1518 = vsel %vm1127, %v344, 0.0
    %v1519 = vsel %vm1128, %v345, 0.0
    %v1520 = vsel %vm1129, %v346, 0.0
    %v1521 = vsel %vm1130, %v347, 0.0
    %v1522 = vsel %vm1131, %v348, 0.0
    %v1523 = vsel %vm1132, %v349, 0.0
    %v1524 = vsel %vm1133, %v350, 0.0
    %v1525 = vsel %vm1134, %v351, 0.0
    %v1526 = vsel %vm1135, %v352, 0.0
    %v1527 = vsel %vm1136, %v353, 0.0
    %v1528 = vsel %vm1137, %v354, 0.0
    %v1529 = vsel %vm1138, %v355, 0.0
    %v1530 = vsel %vm1139, %v356, 0.0
    %v1531 = vsel %vm1140, %v357, 0.0
    %v1532 = vsel %vm1141, %v358, 0.0
    %v1533 = vsel %vm1142, %v359, 0.0
    %v1534 = vsel %vm1143, %v360, 0.0
    %v1535 = vsel %vm1144, %v361, 0.0
    %v1536 = vsel %vm1145, %v362, 0.0
    %v1537 = vsel %vm1146, %v363, 0.0
    %v1538 = vsel %vm1147, %v364, 0.0
    %v1539 = vsel %vm1148, %v365, 0.0
    %v1540 = vsel %vm1149, %v366, 0.0
    %v1541 = vsel %vm1150, %v367, 0.0
    %v1542 = vsel %vm1151, %v368, 0.0
    %v1543 = vsel %vm1152, %v369, 0.0
    %v1544 = vsel %vm1153, %v370, 0.0
    %v1545 = vsel %vm1154, %v371, 0.0
    %v1546 = vsel %vm1155, %v372, 0.0
    %v1547 = vsel %vm1156, %v373, 0.0
    %v1548 = vsel %vm1157, %v374, 0.0
    %v1549 = vsel %vm1158, %v375, 0.0
    %v1550 = vsel %vm1159, %v376, 0.0
    %v1551 = vsel %vm1160, %v377, 0.0
    %v1552 = vsel %vm1161, %v378, 0.0
    %v1553 = vsel %vm1162, %v379, 0.0
    %v1554 = vsel %vm1163, %v380, 0.0
    %v1555 = vsel %vm1164, %v381, 0.0
    %v1556 = vsel %vm1165, %v382, 0.0
    %v1557 = vsel %vm1166, %v383, 0.0
    %v1558 = vsel %vm1167, %v384, 0.0
    %v1559 = vsel %vm1168, %v385, 0.0
    %v1560 = vsel %vm1169, %v386, 0.0
    %v1561 = vsel %vm1170, %v387, 0.0
    %v1562 = vsel %vm1171, %v388, 0.0
    %v1563 = vsel %vm1172, %v389, 0.0
    %v1564 = vsel %vm1173, %v390, 0.0
    %v1565 = vsel %vm1174, %v391, 0.0
    %v1566 = vsel %vm1175, %v392, 0.0
    %v1567 = vsel %vm1176, %v393, 0.0
    %v1568 = vsel %vm1177, %v394, 0.0
    %v1569 = vsel %vm1178, %v395, 0.0
    %v1570 = vsel %vm1179, %v396, 0.0
    %v1571 = vsel %vm1180, %v397, 0.0
    %v1572 = vsel %vm1181, %v398, 0.0
    %v1573 = vsel %vm1182, %v399, 0.0
    %v1574 = vsel %vm1183, %v400, 0.0
    %v1575 = vsel %vm1184, %v401, 0.0
    %v1576 = vsel %vm1185, %v402, 0.0
    %v1577 = vsel %vm1186, %v403, 0.0
    %v1578 = vsel %vm1187, %v404, 0.0
    %v1579 = vsel %vm1188, %v405, 0.0
    %v1580 = vsel %vm1189, %v406, 0.0
    %v1581 = vsel %vm1190, %v407, 0.0
    %v1582 = vsel %vm1191, %v408, 0.0
    %v1583 = vsel %vm1192, %v409, 0.0
    %v1584 = vsel %vm1193, %v410, 0.0
    %v1585 = vsel %vm1194, %v411, 0.0
    %v1586 = vsel %vm1195, %v412, 0.0
    %v1587 = vsel %vm1196, %v413, 0.0
    %v1588 = vsel %vm1197, %v414, 0.0
    %v1589 = vsel %vm1198, %v415, 0.0
    %v1590 = vsel %vm1199, %v416, 0.0
    %v1591 = vsel %vm1200, %v417, 0.0
    %v1592 = vsel %vm1201, %v418, 0.0
    %v1593 = vsel %vm1202, %v419, 0.0
    %v1594 = vsel %vm1203, %v420, 0.0
    %v1595 = vsel %vm1204, %v421, 0.0
    %v1596 = vsel %vm1205, %v422, 0.0
    %v1597 = vsel %vm1206, %v423, 0.0
    %v1598 = vsel %vm1207, %v424, 0.0
    %v1599 = vsel %vm1208, %v425, 0.0
    %v1600 = vsel %vm1209, %v426, 0.0
    %v1601 = vsel %vm1210, %v427, 0.0
    %v1602 = vsel %vm1211, %v428, 0.0
    %v1603 = vsel %vm1212, %v429, 0.0
    %v1604 = vsel %vm1213, %v430, 0.0
    %v1605 = vsel %vm1214, %v431, 0.0
    %v1606 = vsel %vm1215, %v432, 0.0
    %v1607 = vsel %vm1216, %v433, 0.0
    %v1608 = vsel %vm1217, %v434, 0.0
    %v1609 = vsel %vm1218, %v435, 0.0
    %v1610 = vsel %vm1219, %v436, 0.0
    %v1611 = vsel %vm1220, %v437, 0.0
    %v1612 = vsel %vm1221, %v438, 0.0
    %v1613 = vsel %vm1222, %v439, 0.0
    %v1614 = vsel %vm1223, %v440, 0.0
    %v1615 = vmul.f32 %v1224, %v1224
    %v1616 = vmul.f32 %v1225, %v1225
    %v1617 = vmul.f32 %v1226, %v1226
    %v1618 = vmul.f32 %v1227, %v1227
    %v1619 = vmul.f32 %v1228, %v1228
    %v1620 = vmul.f32 %v1229, %v1229
    %v1621 = vmul.f32 %v1230, %v1230
    %v1622 = vmul.f32 %v1231, %v1231
    %v1623 = vmul.f32 %v1232, %v1232
    %v1624 = vmul.f32 %v1233, %v1233
    %v1625 = vmul.f32 %v1234, %v1234
    %v1626 = vmul.f32 %v1235, %v1235
    %v1627 = vmul.f32 %v1236, %v1236
    %v1628 = vmul.f32 %v1237, %v1237
    %v1629 = vmul.f32 %v1238, %v1238
    %v1630 = vmul.f32 %v1239, %v1239
    %v1631 = vmul.f32 %v1240, %v1240
    %v1632 = vmul.f32 %v1241, %v1241
    %v1633 = vmul.f32 %v1242, %v1242
    %v1634 = vmul.f32 %v1243, %v1243
    %v1635 = vmul.f32 %v1244, %v1244
    %v1636 = vmul.f32 %v1245, %v1245
    %v1637 = vmul.f32 %v1246, %v1246
    %v1638 = vmul.f32 %v1247, %v1247
    %v1639 = vmul.f32 %v1248, %v1248
    %v1640 = vmul.f32 %v1249, %v1249
    %v1641 = vmul.f32 %v1250, %v1250
    %v1642 = vmul.f32 %v1251, %v1251
    %v1643 = vmul.f32 %v1252, %v1252
    %v1644 = vmul.f32 %v1253, %v1253
    %v1645 = vmul.f32 %v1254, %v1254
    %v1646 = vmul.f32 %v1255, %v1255
    %v1647 = vmul.f32 %v1256, %v1256
    %v1648 = vmul.f32 %v1257, %v1257
    %v1649 = vmul.f32 %v1258, %v1258
    %v1650 = vmul.f32 %v1259, %v1259
    %v1651 = vmul.f32 %v1260, %v1260
    %v1652 = vmul.f32 %v1261, %v1261
    %v1653 = vmul.f32 %v1262, %v1262
    %v1654 = vmul.f32 %v1263, %v1263
    %v1655 = vmul.f32 %v1264, %v1264
    %v1656 = vmul.f32 %v1265, %v1265
    %v1657 = vmul.f32 %v1266, %v1266
    %v1658 = vmul.f32 %v1267, %v1267
    %v1659 = vmul.f32 %v1268, %v1268
    %v1660 = vmul.f32 %v1269, %v1269
    %v1661 = vmul.f32 %v1270, %v1270
    %v1662 = vmul.f32 %v1271, %v1271
    %v1663 = vmul.f32 %v1272, %v1272
    %v1664 = vmul.f32 %v1273, %v1273
    %v1665 = vmul.f32 %v1274, %v1274
    %v1666 = vmul.f32 %v1275, %v1275
    %v1667 = vmul.f32 %v1276, %v1276
    %v1668 = vmul.f32 %v1277, %v1277
    %v1669 = vmul.f32 %v1278, %v1278
    %v1670 = vmul.f32 %v1279, %v1279
    %v1671 = vmul.f32 %v1280, %v1280
    %v1672 = vmul.f32 %v1281, %v1281
    %v1673 = vmul.f32 %v1282, %v1282
    %v1674 = vmul.f32 %v1283, %v1283
    %v1675 = vmul.f32 %v1284, %v1284
    %v1676 = vmul.f32 %v1285, %v1285
    %v1677 = vmul.f32 %v1286, %v1286
    %v1678 = vmul.f32 %v1287, %v1287
    %v1679 = vmul.f32 %v1288, %v1288
    %v1680 = vmul.f32 %v1289, %v1289
    %v1681 = vmul.f32 %v1290, %v1290
    %v1682 = vmul.f32 %v1291, %v1291
    %v1683 = vmul.f32 %v1292, %v1292
    %v1684 = vmul.f32 %v1293, %v1293
    %v1685 = vmul.f32 %v1294, %v1294
    %v1686 = vmul.f32 %v1295, %v1295
    %v1687 = vmul.f32 %v1296, %v1296
    %v1688 = vmul.f32 %v1297, %v1297
    %v1689 = vmul.f32 %v1298, %v1298
    %v1690 = vmul.f32 %v1299, %v1299
    %v1691 = vmul.f32 %v1300, %v1300
    %v1692 = vmul.f32 %v1301, %v1301
    %v1693 = vmul.f32 %v1302, %v1302
    %v1694 = vmul.f32 %v1303, %v1303
    %v1695 = vmul.f32 %v1304, %v1304
    %v1696 = vmul.f32 %v1305, %v1305
    %v1697 = vmul.f32 %v1306, %v1306
    %v1698 = vmul.f32 %v1307, %v1307
    %v1699 = vmul.f32 %v1308, %v1308
    %v1700 = vmul.f32 %v1309, %v1309
    %v1701 = vmul.f32 %v1310, %v1310
    %v1702 = vmul.f32 %v1311, %v1311
    %v1703 = vmul.f32 %v1312, %v1312
    %v1704 = vmul.f32 %v1313, %v1313
    %v1705 = vmul.f32 %v1314, %v1314
    %v1706 = vmul.f32 %v1315, %v1315
    %v1707 = vmul.f32 %v1316, %v1316
    %v1708 = vmul.f32 %v1317, %v1317
    %v1709 = vmul.f32 %v1318, %v1318
    %v1710 = vmul.f32 %v1319, %v1319
    %v1711 = vmul.f32 %v1320, %v1320
    %v1712 = vmul.f32 %v1321, %v1321
    %v1713 = vmul.f32 %v1322, %v1322
    %v1714 = vmul.f32 %v1323, %v1323
    %v1715 = vmul.f32 %v1324, %v1324
    %v1716 = vmul.f32 %v1325, %v1325
    %v1717 = vmul.f32 %v1326, %v1326
    %v1718 = vmul.f32 %v1327, %v1327
    %v1719 = vmul.f32 %v1328, %v1328
    %v1720 = vmul.f32 %v1329, %v1329
    %v1721 = vmul.f32 %v1330, %v1330
    %v1722 = vmul.f32 %v1331, %v1331
    %v1723 = vmul.f32 %v1332, %v1332
    %v1724 = vmul.f32 %v1333, %v1333
    %v1725 = vmul.f32 %v1334, %v1334
    %v1726 = vmul.f32 %v1335, %v1335
    %v1727 = vmul.f32 %v1336, %v1336
    %v1728 = vmul.f32 %v1337, %v1337
    %v1729 = vmul.f32 %v1338, %v1338
    %v1730 = vmul.f32 %v1339, %v1339
    %v1731 = vmul.f32 %v1340, %v1340
    %v1732 = vmul.f32 %v1341, %v1341
    %v1733 = vmul.f32 %v1342, %v1342
    %v1734 = vmul.f32 %v1343, %v1343
    %v1735 = vmul.f32 %v1344, %v1344
    %v1736 = vmul.f32 %v1345, %v1345
    %v1737 = vmul.f32 %v1346, %v1346
    %v1738 = vmul.f32 %v1347, %v1347
    %v1739 = vmul.f32 %v1348, %v1348
    %v1740 = vmul.f32 %v1349, %v1349
    %v1741 = vmul.f32 %v1350, %v1350
    %v1742 = vmul.f32 %v1351, %v1351
    %v1743 = vmul.f32 %v1352, %v1352
    %v1744 = vmul.f32 %v1353, %v1353
    %v1745 = vmul.f32 %v1354, %v1354
    %v1746 = vmul.f32 %v1355, %v1355
    %v1747 = vmul.f32 %v1356, %v1356
    %v1748 = vmul.f32 %v1357, %v1357
    %v1749 = vmul.f32 %v1358, %v1358
    %v1750 = vmul.f32 %v1359, %v1359
    %v1751 = vmul.f32 %v1360, %v1360
    %v1752 = vmul.f32 %v1361, %v1361
    %v1753 = vmul.f32 %v1362, %v1362
    %v1754 = vmul.f32 %v1363, %v1363
    %v1755 = vmul.f32 %v1364, %v1364
    %v1756 = vmul.f32 %v1365, %v1365
    %v1757 = vmul.f32 %v1366, %v1366
    %v1758 = vmul.f32 %v1367, %v1367
    %v1759 = vmul.f32 %v1368, %v1368
    %v1760 = vmul.f32 %v1369, %v1369
    %v1761 = vmul.f32 %v1370, %v1370
    %v1762 = vmul.f32 %v1371, %v1371
    %v1763 = vmul.f32 %v1372, %v1372
    %v1764 = vmul.f32 %v1373, %v1373
    %v1765 = vmul.f32 %v1374, %v1374
    %v1766 = vmul.f32 %v1375, %v1375
    %v1767 = vmul.f32 %v1376, %v1376
    %v1768 = vmul.f32 %v1377, %v1377
    %v1769 = vmul.f32 %v1378, %v1378
    %v1770 = vmul.f32 %v1379, %v1379
    %v1771 = vmul.f32 %v1380, %v1380
    %v1772 = vmul.f32 %v1381, %v1381
    %v1773 = vmul.f32 %v1382, %v1382
    %v1774 = vmul.f32 %v1383, %v1383
    %v1775 = vmul.f32 %v1384, %v1384
    %v1776 = vmul.f32 %v1385, %v1385
    %v1777 = vmul.f32 %v1386, %v1386
    %v1778 = vmul.f32 %v1387, %v1387
    %v1779 = vmul.f32 %v1388, %v1388
    %v1780 = vmul.f32 %v1389, %v1389
    %v1781 = vmul.f32 %v1390, %v1390
    %v1782 = vmul.f32 %v1391, %v1391
    %v1783 = vmul.f32 %v1392, %v1392
    %v1784 = vmul.f32 %v1393, %v1393
    %v1785 = vmul.f32 %v1394, %v1394
    %v1786 = vmul.f32 %v1395, %v1395
    %v1787 = vmul.f32 %v1396, %v1396
    %v1788 = vmul.f32 %v1397, %v1397
    %v1789 = vmul.f32 %v1398, %v1398
    %v1790 = vmul.f32 %v1399, %v1399
    %v1791 = vmul.f32 %v1400, %v1400
    %v1792 = vmul.f32 %v1401, %v1401
    %v1793 = vmul.f32 %v1402, %v1402
    %v1794 = vmul.f32 %v1403, %v1403
    %v1795 = vmul.f32 %v1404, %v1404
    %v1796 = vmul.f32 %v1405, %v1405
    %v1797 = vmul.f32 %v1406, %v1406
    %v1798 = vmul.f32 %v1407, %v1407
    %v1799 = vmul.f32 %v1408, %v1408
    %v1800 = vmul.f32 %v1409, %v1409
    %v1801 = vmul.f32 %v1410, %v1410
    %v1802 = vmul.f32 %v1411, %v1411
    %v1803 = vmul.f32 %v1412, %v1412
    %v1804 = vmul.f32 %v1413, %v1413
    %v1805 = vmul.f32 %v1414, %v1414
    %v1806 = vmul.f32 %v1415, %v1415
    %v1807 = vmul.f32 %v1416, %v1416
    %v1808 = vmul.f32 %v1417, %v1417
    %v1809 = vmul.f32 %v1418, %v1418
    %v1810 = vmul.f32 %v1419, %v1419
    %v1811 = vmul.f32 %v1420, %v1420
    %v1812 = vmul.f32 %v1421, %v1421
    %v1813 = vmul.f32 %v1422, %v1422
    %v1814 = vmul.f32 %v1423, %v1423
    %v1815 = vmul.f32 %v1424, %v1424
    %v1816 = vmul.f32 %v1425, %v1425
    %v1817 = vmul.f32 %v1426, %v1426
    %v1818 = vmul.f32 %v1427, %v1427
    %v1819 = vmul.f32 %v1428, %v1428
    %v1820 = vmul.f32 %v1429, %v1429
    %v1821 = vmul.f32 %v1430, %v1430
    %v1822 = vmul.f32 %v1431, %v1431
    %v1823 = vmul.f32 %v1432, %v1432
    %v1824 = vmul.f32 %v1433, %v1433
    %v1825 = vmul.f32 %v1434, %v1434
    %v1826 = vmul.f32 %v1435, %v1435
    %v1827 = vmul.f32 %v1436, %v1436
    %v1828 = vmul.f32 %v1437, %v1437
    %v1829 = vmul.f32 %v1438, %v1438
    %v1830 = vmul.f32 %v1439, %v1439
    %v1831 = vmul.f32 %v1440, %v1440
    %v1832 = vmul.f32 %v1441, %v1441
    %v1833 = vmul.f32 %v1442, %v1442
    %v1834 = vmul.f32 %v1443, %v1443
    %v1835 = vmul.f32 %v1444, %v1444
    %v1836 = vmul.f32 %v1445, %v1445
    %v1837 = vmul.f32 %v1446, %v1446
    %v1838 = vmul.f32 %v1447, %v1447
    %v1839 = vmul.f32 %v1448, %v1448
    %v1840 = vmul.f32 %v1449, %v1449
    %v1841 = vmul.f32 %v1450, %v1450
    %v1842 = vmul.f32 %v1451, %v1451
    %v1843 = vmul.f32 %v1452, %v1452
    %v1844 = vmul.f32 %v1453, %v1453
    %v1845 = vmul.f32 %v1454, %v1454
    %v1846 = vmul.f32 %v1455, %v1455
    %v1847 = vmul.f32 %v1456, %v1456
    %v1848 = vmul.f32 %v1457, %v1457
    %v1849 = vmul.f32 %v1458, %v1458
    %v1850 = vmul.f32 %v1459, %v1459
    %v1851 = vmul.f32 %v1460, %v1460
    %v1852 = vmul.f32 %v1461, %v1461
    %v1853 = vmul.f32 %v1462, %v1462
    %v1854 = vmul.f32 %v1463, %v1463
    %v1855 = vmul.f32 %v1464, %v1464
    %v1856 = vmul.f32 %v1465, %v1465
    %v1857 = vmul.f32 %v1466, %v1466
    %v1858 = vmul.f32 %v1467, %v1467
    %v1859 = vmul.f32 %v1468, %v1468
    %v1860 = vmul.f32 %v1469, %v1469
    %v1861 = vmul.f32 %v1470, %v1470
    %v1862 = vmul.f32 %v1471, %v1471
    %v1863 = vmul.f32 %v1472, %v1472
    %v1864 = vmul.f32 %v1473, %v1473
    %v1865 = vmul.f32 %v1474, %v1474
    %v1866 = vmul.f32 %v1475, %v1475
    %v1867 = vmul.f32 %v1476, %v1476
    %v1868 = vmul.f32 %v1477, %v1477
    %v1869 = vmul.f32 %v1478, %v1478
    %v1870 = vmul.f32 %v1479, %v1479
    %v1871 = vmul.f32 %v1480, %v1480
    %v1872 = vmul.f32 %v1481, %v1481
    %v1873 = vmul.f32 %v1482, %v1482
    %v1874 = vmul.f32 %v1483, %v1483
    %v1875 = vmul.f32 %v1484, %v1484
    %v1876 = vmul.f32 %v1485, %v1485
    %v1877 = vmul.f32 %v1486, %v1486
    %v1878 = vmul.f32 %v1487, %v1487
    %v1879 = vmul.f32 %v1488, %v1488
    %v1880 = vmul.f32 %v1489, %v1489
    %v1881 = vmul.f32 %v1490, %v1490
    %v1882 = vmul.f32 %v1491, %v1491
    %v1883 = vmul.f32 %v1492, %v1492
    %v1884 = vmul.f32 %v1493, %v1493
    %v1885 = vmul.f32 %v1494, %v1494
    %v1886 = vmul.f32 %v1495, %v1495
    %v1887 = vmul.f32 %v1496, %v1496
    %v1888 = vmul.f32 %v1497, %v1497
    %v1889 = vmul.f32 %v1498, %v1498
    %v1890 = vmul.f32 %v1499, %v1499
    %v1891 = vmul.f32 %v1500, %v1500
    %v1892 = vmul.f32 %v1501, %v1501
    %v1893 = vmul.f32 %v1502, %v1502
    %v1894 = vmul.f32 %v1503, %v1503
    %v1895 = vmul.f32 %v1504, %v1504
    %v1896 = vmul.f32 %v1505, %v1505
    %v1897 = vmul.f32 %v1506, %v1506
    %v1898 = vmul.f32 %v1507, %v1507
    %v1899 = vmul.f32 %v1508, %v1508
    %v1900 = vmul.f32 %v1509, %v1509
    %v1901 = vmul.f32 %v1510, %v1510
    %v1902 = vmul.f32 %v1511, %v1511
    %v1903 = vmul.f32 %v1512, %v1512
    %v1904 = vmul.f32 %v1513, %v1513
    %v1905 = vmul.f32 %v1514, %v1514
    %v1906 = vmul.f32 %v1515, %v1515
    %v1907 = vmul.f32 %v1516, %v1516
    %v1908 = vmul.f32 %v1517, %v1517
    %v1909 = vmul.f32 %v1518, %v1518
    %v1910 = vmul.f32 %v1519, %v1519
    %v1911 = vmul.f32 %v1520, %v1520
    %v1912 = vmul.f32 %v1521, %v1521
    %v1913 = vmul.f32 %v1522, %v1522
    %v1914 = vmul.f32 %v1523, %v1523
    %v1915 = vmul.f32 %v1524, %v1524
    %v1916 = vmul.f32 %v1525, %v1525
    %v1917 = vmul.f32 %v1526, %v1526
    %v1918 = vmul.f32 %v1527, %v1527
    %v1919 = vmul.f32 %v1528, %v1528
    %v1920 = vmul.f32 %v1529, %v1529
    %v1921 = vmul.f32 %v1530, %v1530
    %v1922 = vmul.f32 %v1531, %v1531
    %v1923 = vmul.f32 %v1532, %v1532
    %v1924 = vmul.f32 %v1533, %v1533
    %v1925 = vmul.f32 %v1534, %v1534
    %v1926 = vmul.f32 %v1535, %v1535
    %v1927 = vmul.f32 %v1536, %v1536
    %v1928 = vmul.f32 %v1537, %v1537
    %v1929 = vmul.f32 %v1538, %v1538
    %v1930 = vmul.f32 %v1539, %v1539
    %v1931 = vmul.f32 %v1540, %v1540
    %v1932 = vmul.f32 %v1541, %v1541
    %v1933 = vmul.f32 %v1542, %v1542
    %v1934 = vmul.f32 %v1543, %v1543
    %v1935 = vmul.f32 %v1544, %v1544
    %v1936 = vmul.f32 %v1545, %v1545
    %v1937 = vmul.f32 %v1546, %v1546
    %v1938 = vmul.f32 %v1547, %v1547
    %v1939 = vmul.f32 %v1548, %v1548
    %v1940 = vmul.f32 %v1549, %v1549
    %v1941 = vmul.f32 %v1550, %v1550
    %v1942 = vmul.f32 %v1551, %v1551
    %v1943 = vmul.f32 %v1552, %v1552
    %v1944 = vmul.f32 %v1553, %v1553
    %v1945 = vmul.f32 %v1554, %v1554
    %v1946 = vmul.f32 %v1555, %v1555
    %v1947 = vmul.f32 %v1556, %v1556
    %v1948 = vmul.f32 %v1557, %v1557
    %v1949 = vmul.f32 %v1558, %v1558
    %v1950 = vmul.f32 %v1559, %v1559
    %v1951 = vmul.f32 %v1560, %v1560
    %v1952 = vmul.f32 %v1561, %v1561
    %v1953 = vmul.f32 %v1562, %v1562
    %v1954 = vmul.f32 %v1563, %v1563
    %v1955 = vmul.f32 %v1564, %v1564
    %v1956 = vmul.f32 %v1565, %v1565
    %v1957 = vmul.f32 %v1566, %v1566
    %v1958 = vmul.f32 %v1567, %v1567
    %v1959 = vmul.f32 %v1568, %v1568
    %v1960 = vmul.f32 %v1569, %v1569
    %v1961 = vmul.f32 %v1570, %v1570
    %v1962 = vmul.f32 %v1571, %v1571
    %v1963 = vmul.f32 %v1572, %v1572
    %v1964 = vmul.f32 %v1573, %v1573
    %v1965 = vmul.f32 %v1574, %v1574
    %v1966 = vmul.f32 %v1575, %v1575
    %v1967 = vmul.f32 %v1576, %v1576
    %v1968 = vmul.f32 %v1577, %v1577
    %v1969 = vmul.f32 %v1578, %v1578
    %v1970 = vmul.f32 %v1579, %v1579
    %v1971 = vmul.f32 %v1580, %v1580
    %v1972 = vmul.f32 %v1581, %v1581
    %v1973 = vmul.f32 %v1582, %v1582
    %v1974 = vmul.f32 %v1583, %v1583
    %v1975 = vmul.f32 %v1584, %v1584
    %v1976 = vmul.f32 %v1585, %v1585
    %v1977 = vmul.f32 %v1586, %v1586
    %v1978 = vmul.f32 %v1587, %v1587
    %v1979 = vmul.f32 %v1588, %v1588
    %v1980 = vmul.f32 %v1589, %v1589
    %v1981 = vmul.f32 %v1590, %v1590
    %v1982 = vmul.f32 %v1591, %v1591
    %v1983 = vmul.f32 %v1592, %v1592
    %v1984 = vmul.f32 %v1593, %v1593
    %v1985 = vmul.f32 %v1594, %v1594
    %v1986 = vmul.f32 %v1595, %v1595
    %v1987 = vmul.f32 %v1596, %v1596
    %v1988 = vmul.f32 %v1597, %v1597
    %v1989 = vmul.f32 %v1598, %v1598
    %v1990 = vmul.f32 %v1599, %v1599
    %v1991 = vmul.f32 %v1600, %v1600
    %v1992 = vmul.f32 %v1601, %v1601
    %v1993 = vmul.f32 %v1602, %v1602
    %v1994 = vmul.f32 %v1603, %v1603
    %v1995 = vmul.f32 %v1604, %v1604
    %v1996 = vmul.f32 %v1605, %v1605
    %v1997 = vmul.f32 %v1606, %v1606
    %v1998 = vmul.f32 %v1607, %v1607
    %v1999 = vmul.f32 %v1608, %v1608
    %v2000 = vmul.f32 %v1609, %v1609
    %v2001 = vmul.f32 %v1610, %v1610
    %v2002 = vmul.f32 %v1611, %v1611
    %v2003 = vmul.f32 %v1612, %v1612
    %v2004 = vmul.f32 %v1613, %v1613
    %v2005 = vmul.f32 %v1614, %v1614
    %v2006 = vadd.f32 %v1615, %v1616
    %v2007 = vadd.f32 %v2006, %v1617
    %v2008 = vadd.f32 %v2007, %v1618
    %v2009 = vadd.f32 %v2008, %v1619
    %v2010 = vadd.f32 %v2009, %v1620
    %v2011 = vadd.f32 %v2010, %v1621
    %v2012 = vadd.f32 %v2011, %v1622
    %v2013 = vadd.f32 %v2012, %v1623
    %v2014 = vadd.f32 %v2013, %v1624
    %v2015 = vadd.f32 %v2014, %v1625
    %v2016 = vadd.f32 %v2015, %v1626
    %v2017 = vadd.f32 %v2016, %v1627
    %v2018 = vadd.f32 %v2017, %v1628
    %v2019 = vadd.f32 %v2018, %v1629
    %v2020 = vadd.f32 %v2019, %v1630
    %v2021 = vadd.f32 %v2020, %v1631
    %v2022 = vadd.f32 %v2021, %v1632
    %v2023 = vadd.f32 %v2022, %v1633
    %v2024 = vadd.f32 %v2023, %v1634
    %v2025 = vadd.f32 %v2024, %v1635
    %v2026 = vadd.f32 %v2025, %v1636
    %v2027 = vadd.f32 %v2026, %v1637
    %v2028 = vadd.f32 %v2027, %v1638
    %v2029 = vadd.f32 %v2028, %v1639
    %v2030 = vadd.f32 %v2029, %v1640
    %v2031 = vadd.f32 %v2030, %v1641
    %v2032 = vadd.f32 %v2031, %v1642
    %v2033 = vadd.f32 %v2032, %v1643
    %v2034 = vadd.f32 %v2033, %v1644
    %v2035 = vadd.f32 %v2034, %v1645
    %v2036 = vadd.f32 %v2035, %v1646
    %v2037 = vadd.f32 %v2036, %v1647
    %v2038 = vadd.f32 %v2037, %v1648
    %v2039 = vadd.f32 %v2038, %v1649
    %v2040 = vadd.f32 %v2039, %v1650
    %v2041 = vadd.f32 %v2040, %v1651
    %v2042 = vadd.f32 %v2041, %v1652
    %v2043 = vadd.f32 %v2042, %v1653
    %v2044 = vadd.f32 %v2043, %v1654
    %v2045 = vadd.f32 %v2044, %v1655
    %v2046 = vadd.f32 %v2045, %v1656
    %v2047 = vadd.f32 %v2046, %v1657
    %v2048 = vadd.f32 %v2047, %v1658
    %v2049 = vadd.f32 %v2048, %v1659
    %v2050 = vadd.f32 %v2049, %v1660
    %v2051 = vadd.f32 %v2050, %v1661
    %v2052 = vadd.f32 %v2051, %v1662
    %v2053 = vadd.f32 %v2052, %v1663
    %v2054 = vadd.f32 %v2053, %v1664
    %v2055 = vadd.f32 %v2054, %v1665
    %v2056 = vadd.f32 %v2055, %v1666
    %v2057 = vadd.f32 %v2056, %v1667
    %v2058 = vadd.f32 %v2057, %v1668
    %v2059 = vadd.f32 %v2058, %v1669
    %v2060 = vadd.f32 %v2059, %v1670
    %v2061 = vadd.f32 %v2060, %v1671
    %v2062 = vadd.f32 %v2061, %v1672
    %v2063 = vadd.f32 %v2062, %v1673
    %v2064 = vadd.f32 %v2063, %v1674
    %v2065 = vadd.f32 %v2064, %v1675
    %v2066 = vadd.f32 %v2065, %v1676
    %v2067 = vadd.f32 %v2066, %v1677
    %v2068 = vadd.f32 %v2067, %v1678
    %v2069 = vadd.f32 %v2068, %v1679
    %v2070 = vadd.f32 %v2069, %v1680
    %v2071 = vadd.f32 %v2070, %v1681
    %v2072 = vadd.f32 %v2071, %v1682
    %v2073 = vadd.f32 %v2072, %v1683
    %v2074 = vadd.f32 %v2073, %v1684
    %v2075 = vadd.f32 %v2074, %v1685
    %v2076 = vadd.f32 %v2075, %v1686
    %v2077 = vadd.f32 %v2076, %v1687
    %v2078 = vadd.f32 %v2077, %v1688
    %v2079 = vadd.f32 %v2078, %v1689
    %v2080 = vadd.f32 %v2079, %v1690
    %v2081 = vadd.f32 %v2080, %v1691
    %v2082 = vadd.f32 %v2081, %v1692
    %v2083 = vadd.f32 %v2082, %v1693
    %v2084 = vadd.f32 %v2083, %v1694
    %v2085 = vadd.f32 %v2084, %v1695
    %v2086 = vadd.f32 %v2085, %v1696
    %v2087 = vadd.f32 %v2086, %v1697
    %v2088 = vadd.f32 %v2087, %v1698
    %v2089 = vadd.f32 %v2088, %v1699
    %v2090 = vadd.f32 %v2089, %v1700
    %v2091 = vadd.f32 %v2090, %v1701
    %v2092 = vadd.f32 %v2091, %v1702
    %v2093 = vadd.f32 %v2092, %v1703
    %v2094 = vadd.f32 %v2093, %v1704
    %v2095 = vadd.f32 %v2094, %v1705
    %v2096 = vadd.f32 %v2095, %v1706
    %v2097 = vadd.f32 %v2096, %v1707
    %v2098 = vadd.f32 %v2097, %v1708
    %v2099 = vadd.f32 %v2098, %v1709
    %v2100 = vadd.f32 %v2099, %v1710
    %v2101 = vadd.f32 %v2100, %v1711
    %v2102 = vadd.f32 %v2101, %v1712
    %v2103 = vadd.f32 %v2102, %v1713
    %v2104 = vadd.f32 %v2103, %v1714
    %v2105 = vadd.f32 %v2104, %v1715
    %v2106 = vadd.f32 %v2105, %v1716
    %v2107 = vadd.f32 %v2106, %v1717
    %v2108 = vadd.f32 %v2107, %v1718
    %v2109 = vadd.f32 %v2108, %v1719
    %v2110 = vadd.f32 %v2109, %v1720
    %v2111 = vadd.f32 %v2110, %v1721
    %v2112 = vadd.f32 %v2111, %v1722
    %v2113 = vadd.f32 %v2112, %v1723
    %v2114 = vadd.f32 %v2113, %v1724
    %v2115 = vadd.f32 %v2114, %v1725
    %v2116 = vadd.f32 %v2115, %v1726
    %v2117 = vadd.f32 %v2116, %v1727
    %v2118 = vadd.f32 %v2117, %v1728
    %v2119 = vadd.f32 %v2118, %v1729
    %v2120 = vadd.f32 %v2119, %v1730
    %v2121 = vadd.f32 %v2120, %v1731
    %v2122 = vadd.f32 %v2121, %v1732
    %v2123 = vadd.f32 %v2122, %v1733
    %v2124 = vadd.f32 %v2123, %v1734
    %v2125 = vadd.f32 %v2124, %v1735
    %v2126 = vadd.f32 %v2125, %v1736
    %v2127 = vadd.f32 %v2126, %v1737
    %v2128 = vadd.f32 %v2127, %v1738
    %v2129 = vadd.f32 %v2128, %v1739
    %v2130 = vadd.f32 %v2129, %v1740
    %v2131 = vadd.f32 %v2130, %v1741
    %v2132 = vadd.f32 %v2131, %v1742
    %v2133 = vadd.f32 %v2132, %v1743
    %v2134 = vadd.f32 %v2133, %v1744
    %v2135 = vadd.f32 %v2134, %v1745
    %v2136 = vadd.f32 %v2135, %v1746
    %v2137 = vadd.f32 %v2136, %v1747
    %v2138 = vadd.f32 %v2137, %v1748
    %v2139 = vadd.f32 %v2138, %v1749
    %v2140 = vadd.f32 %v2139, %v1750
    %v2141 = vadd.f32 %v2140, %v1751
    %v2142 = vadd.f32 %v2141, %v1752
    %v2143 = vadd.f32 %v2142, %v1753
    %v2144 = vadd.f32 %v2143, %v1754
    %v2145 = vadd.f32 %v2144, %v1755
    %v2146 = vadd.f32 %v2145, %v1756
    %v2147 = vadd.f32 %v2146, %v1757
    %v2148 = vadd.f32 %v2147, %v1758
    %v2149 = vadd.f32 %v2148, %v1759
    %v2150 = vadd.f32 %v2149, %v1760
    %v2151 = vadd.f32 %v2150, %v1761
    %v2152 = vadd.f32 %v2151, %v1762
    %v2153 = vadd.f32 %v2152, %v1763
    %v2154 = vadd.f32 %v2153, %v1764
    %v2155 = vadd.f32 %v2154, %v1765
    %v2156 = vadd.f32 %v2155, %v1766
    %v2157 = vadd.f32 %v2156, %v1767
    %v2158 = vadd.f32 %v2157, %v1768
    %v2159 = vadd.f32 %v2158, %v1769
    %v2160 = vadd.f32 %v2159, %v1770
    %v2161 = vadd.f32 %v2160, %v1771
    %v2162 = vadd.f32 %v2161, %v1772
    %v2163 = vadd.f32 %v2162, %v1773
    %v2164 = vadd.f32 %v2163, %v1774
    %v2165 = vadd.f32 %v2164, %v1775
    %v2166 = vadd.f32 %v2165, %v1776
    %v2167 = vadd.f32 %v2166, %v1777
    %v2168 = vadd.f32 %v2167, %v1778
    %v2169 = vadd.f32 %v2168, %v1779
    %v2170 = vadd.f32 %v2169, %v1780
    %v2171 = vadd.f32 %v2170, %v1781
    %v2172 = vadd.f32 %v2171, %v1782
    %v2173 = vadd.f32 %v2172, %v1783
    %v2174 = vadd.f32 %v2173, %v1784
    %v2175 = vadd.f32 %v2174, %v1785
    %v2176 = vadd.f32 %v2175, %v1786
    %v2177 = vadd.f32 %v2176, %v1787
    %v2178 = vadd.f32 %v2177, %v1788
    %v2179 = vadd.f32 %v2178, %v1789
    %v2180 = vadd.f32 %v2179, %v1790
    %v2181 = vadd.f32 %v2180, %v1791
    %v2182 = vadd.f32 %v2181, %v1792
    %v2183 = vadd.f32 %v2182, %v1793
    %v2184 = vadd.f32 %v2183, %v1794
    %v2185 = vadd.f32 %v2184, %v1795
    %v2186 = vadd.f32 %v2185, %v1796
    %v2187 = vadd.f32 %v2186, %v1797
    %v2188 = vadd.f32 %v2187, %v1798
    %v2189 = vadd.f32 %v2188, %v1799
    %v2190 = vadd.f32 %v2189, %v1800
    %v2191 = vadd.f32 %v2190, %v1801
    %v2192 = vadd.f32 %v2191, %v1802
    %v2193 = vadd.f32 %v2192, %v1803
    %v2194 = vadd.f32 %v2193, %v1804
    %v2195 = vadd.f32 %v2194, %v1805
    %v2196 = vadd.f32 %v2195, %v1806
    %v2197 = vadd.f32 %v2196, %v1807
    %v2198 = vadd.f32 %v2197, %v1808
    %v2199 = vadd.f32 %v2198, %v1809
    %v2200 = vadd.f32 %v2199, %v1810
    %v2201 = vadd.f32 %v2200, %v1811
    %v2202 = vadd.f32 %v2201, %v1812
    %v2203 = vadd.f32 %v2202, %v1813
    %v2204 = vadd.f32 %v2203, %v1814
    %v2205 = vadd.f32 %v2204, %v1815
    %v2206 = vadd.f32 %v2205, %v1816
    %v2207 = vadd.f32 %v2206, %v1817
    %v2208 = vadd.f32 %v2207, %v1818
    %v2209 = vadd.f32 %v2208, %v1819
    %v2210 = vadd.f32 %v2209, %v1820
    %v2211 = vadd.f32 %v2210, %v1821
    %v2212 = vadd.f32 %v2211, %v1822
    %v2213 = vadd.f32 %v2212, %v1823
    %v2214 = vadd.f32 %v2213, %v1824
    %v2215 = vadd.f32 %v2214, %v1825
    %v2216 = vadd.f32 %v2215, %v1826
    %v2217 = vadd.f32 %v2216, %v1827
    %v2218 = vadd.f32 %v2217, %v1828
    %v2219 = vadd.f32 %v2218, %v1829
    %v2220 = vadd.f32 %v2219, %v1830
    %v2221 = vadd.f32 %v2220, %v1831
    %v2222 = vadd.f32 %v2221, %v1832
    %v2223 = vadd.f32 %v2222, %v1833
    %v2224 = vadd.f32 %v2223, %v1834
    %v2225 = vadd.f32 %v2224, %v1835
    %v2226 = vadd.f32 %v2225, %v1836
    %v2227 = vadd.f32 %v2226, %v1837
    %v2228 = vadd.f32 %v2227, %v1838
    %v2229 = vadd.f32 %v2228, %v1839
    %v2230 = vadd.f32 %v2229, %v1840
    %v2231 = vadd.f32 %v2230, %v1841
    %v2232 = vadd.f32 %v2231, %v1842
    %v2233 = vadd.f32 %v2232, %v1843
    %v2234 = vadd.f32 %v2233, %v1844
    %v2235 = vadd.f32 %v2234, %v1845
    %v2236 = vadd.f32 %v2235, %v1846
    %v2237 = vadd.f32 %v2236, %v1847
    %v2238 = vadd.f32 %v2237, %v1848
    %v2239 = vadd.f32 %v2238, %v1849
    %v2240 = vadd.f32 %v2239, %v1850
    %v2241 = vadd.f32 %v2240, %v1851
    %v2242 = vadd.f32 %v2241, %v1852
    %v2243 = vadd.f32 %v2242, %v1853
    %v2244 = vadd.f32 %v2243, %v1854
    %v2245 = vadd.f32 %v2244, %v1855
    %v2246 = vadd.f32 %v2245, %v1856
    %v2247 = vadd.f32 %v2246, %v1857
    %v2248 = vadd.f32 %v2247, %v1858
    %v2249 = vadd.f32 %v2248, %v1859
    %v2250 = vadd.f32 %v2249, %v1860
    %v2251 = vadd.f32 %v2250, %v1861
    %v2252 = vadd.f32 %v2251, %v1862
    %v2253 = vadd.f32 %v2252, %v1863
    %v2254 = vadd.f32 %v2253, %v1864
    %v2255 = vadd.f32 %v2254, %v1865
    %v2256 = vadd.f32 %v2255, %v1866
    %v2257 = vadd.f32 %v2256, %v1867
    %v2258 = vadd.f32 %v2257, %v1868
    %v2259 = vadd.f32 %v2258, %v1869
    %v2260 = vadd.f32 %v2259, %v1870
    %v2261 = vadd.f32 %v2260, %v1871
    %v2262 = vadd.f32 %v2261, %v1872
    %v2263 = vadd.f32 %v2262, %v1873
    %v2264 = vadd.f32 %v2263, %v1874
    %v2265 = vadd.f32 %v2264, %v1875
    %v2266 = vadd.f32 %v2265, %v1876
    %v2267 = vadd.f32 %v2266, %v1877
    %v2268 = vadd.f32 %v2267, %v1878
    %v2269 = vadd.f32 %v2268, %v1879
    %v2270 = vadd.f32 %v2269, %v1880
    %v2271 = vadd.f32 %v2270, %v1881
    %v2272 = vadd.f32 %v2271, %v1882
    %v2273 = vadd.f32 %v2272, %v1883
    %v2274 = vadd.f32 %v2273, %v1884
    %v2275 = vadd.f32 %v2274, %v1885
    %v2276 = vadd.f32 %v2275, %v1886
    %v2277 = vadd.f32 %v2276, %v1887
    %v2278 = vadd.f32 %v2277, %v1888
    %v2279 = vadd.f32 %v2278, %v1889
    %v2280 = vadd.f32 %v2279, %v1890
    %v2281 = vadd.f32 %v2280, %v1891
    %v2282 = vadd.f32 %v2281, %v1892
    %v2283 = vadd.f32 %v2282, %v1893
    %v2284 = vadd.f32 %v2283, %v1894
    %v2285 = vadd.f32 %v2284, %v1895
    %v2286 = vadd.f32 %v2285, %v1896
    %v2287 = vadd.f32 %v2286, %v1897
    %v2288 = vadd.f32 %v2287, %v1898
    %v2289 = vadd.f32 %v2288, %v1899
    %v2290 = vadd.f32 %v2289, %v1900
    %v2291 = vadd.f32 %v2290, %v1901
    %v2292 = vadd.f32 %v2291, %v1902
    %v2293 = vadd.f32 %v2292, %v1903
    %v2294 = vadd.f32 %v2293, %v1904
    %v2295 = vadd.f32 %v2294, %v1905
    %v2296 = vadd.f32 %v2295, %v1906
    %v2297 = vadd.f32 %v2296, %v1907
    %v2298 = vadd.f32 %v2297, %v1908
    %v2299 = vadd.f32 %v2298, %v1909
    %v2300 = vadd.f32 %v2299, %v1910
    %v2301 = vadd.f32 %v2300, %v1911
    %v2302 = vadd.f32 %v2301, %v1912
    %v2303 = vadd.f32 %v2302, %v1913
    %v2304 = vadd.f32 %v2303, %v1914
    %v2305 = vadd.f32 %v2304, %v1915
    %v2306 = vadd.f32 %v2305, %v1916
    %v2307 = vadd.f32 %v2306, %v1917
    %v2308 = vadd.f32 %v2307, %v1918
    %v2309 = vadd.f32 %v2308, %v1919
    %v2310 = vadd.f32 %v2309, %v1920
    %v2311 = vadd.f32 %v2310, %v1921
    %v2312 = vadd.f32 %v2311, %v1922
    %v2313 = vadd.f32 %v2312, %v1923
    %v2314 = vadd.f32 %v2313, %v1924
    %v2315 = vadd.f32 %v2314, %v1925
    %v2316 = vadd.f32 %v2315, %v1926
    %v2317 = vadd.f32 %v2316, %v1927
    %v2318 = vadd.f32 %v2317, %v1928
    %v2319 = vadd.f32 %v2318, %v1929
    %v2320 = vadd.f32 %v2319, %v1930
    %v2321 = vadd.f32 %v2320, %v1931
    %v2322 = vadd.f32 %v2321, %v1932
    %v2323 = vadd.f32 %v2322, %v1933
    %v2324 = vadd.f32 %v2323, %v1934
    %v2325 = vadd.f32 %v2324, %v1935
    %v2326 = vadd.f32 %v2325, %v1936
    %v2327 = vadd.f32 %v2326, %v1937
    %v2328 = vadd.f32 %v2327, %v1938
    %v2329 = vadd.f32 %v2328, %v1939
    %v2330 = vadd.f32 %v2329, %v1940
    %v2331 = vadd.f32 %v2330, %v1941
    %v2332 = vadd.f32 %v2331, %v1942
    %v2333 = vadd.f32 %v2332, %v1943
    %v2334 = vadd.f32 %v2333, %v1944
    %v2335 = vadd.f32 %v2334, %v1945
    %v2336 = vadd.f32 %v2335, %v1946
    %v2337 = vadd.f32 %v2336, %v1947
    %v2338 = vadd.f32 %v2337, %v1948
    %v2339 = vadd.f32 %v2338, %v1949
    %v2340 = vadd.f32 %v2339, %v1950
    %v2341 = vadd.f32 %v2340, %v1951
    %v2342 = vadd.f32 %v2341, %v1952
    %v2343 = vadd.f32 %v2342, %v1953
    %v2344 = vadd.f32 %v2343, %v1954
    %v2345 = vadd.f32 %v2344, %v1955
    %v2346 = vadd.f32 %v2345, %v1956
    %v2347 = vadd.f32 %v2346, %v1957
    %v2348 = vadd.f32 %v2347, %v1958
    %v2349 = vadd.f32 %v2348, %v1959
    %v2350 = vadd.f32 %v2349, %v1960
    %v2351 = vadd.f32 %v2350, %v1961
    %v2352 = vadd.f32 %v2351, %v1962
    %v2353 = vadd.f32 %v2352, %v1963
    %v2354 = vadd.f32 %v2353, %v1964
    %v2355 = vadd.f32 %v2354, %v1965
    %v2356 = vadd.f32 %v2355, %v1966
    %v2357 = vadd.f32 %v2356, %v1967
    %v2358 = vadd.f32 %v2357, %v1968
    %v2359 = vadd.f32 %v2358, %v1969
    %v2360 = vadd.f32 %v2359, %v1970
    %v2361 = vadd.f32 %v2360, %v1971
    %v2362 = vadd.f32 %v2361, %v1972
    %v2363 = vadd.f32 %v2362, %v1973
    %v2364 = vadd.f32 %v2363, %v1974
    %v2365 = vadd.f32 %v2364, %v1975
    %v2366 = vadd.f32 %v2365, %v1976
    %v2367 = vadd.f32 %v2366, %v1977
    %v2368 = vadd.f32 %v2367, %v1978
    %v2369 = vadd.f32 %v2368, %v1979
    %v2370 = vadd.f32 %v2369, %v1980
    %v2371 = vadd.f32 %v2370, %v1981
    %v2372 = vadd.f32 %v2371, %v1982
    %v2373 = vadd.f32 %v2372, %v1983
    %v2374 = vadd.f32 %v2373, %v1984
    %v2375 = vadd.f32 %v2374, %v1985
    %v2376 = vadd.f32 %v2375, %v1986
    %v2377 = vadd.f32 %v2376, %v1987
    %v2378 = vadd.f32 %v2377, %v1988
    %v2379 = vadd.f32 %v2378, %v1989
    %v2380 = vadd.f32 %v2379, %v1990
    %v2381 = vadd.f32 %v2380, %v1991
    %v2382 = vadd.f32 %v2381, %v1992
    %v2383 = vadd.f32 %v2382, %v1993
    %v2384 = vadd.f32 %v2383, %v1994
    %v2385 = vadd.f32 %v2384, %v1995
    %v2386 = vadd.f32 %v2385, %v1996
    %v2387 = vadd.f32 %v2386, %v1997
    %v2388 = vadd.f32 %v2387, %v1998
    %v2389 = vadd.f32 %v2388, %v1999
    %v2390 = vadd.f32 %v2389, %v2000
    %v2391 = vadd.f32 %v2390, %v2001
    %v2392 = vadd.f32 %v2391, %v2002
    %v2393 = vadd.f32 %v2392, %v2003
    %v2394 = vadd.f32 %v2393, %v2004
    %vm2395 = vcmask 703488
    %v2396 = vsel %vm2395, %v2005, 0.0
    %v2397 = vadd.f32 %v2394, %v2396
    %2398 = vadd.xlane.f32.xlu0 %v2397
    %v2399 = vpop.xlane.xlu0 %2398
    %v2400 = vrsqrt.pop %v2399
    %v2401 = vmul.f32 %v2399, %v2400
    %vm2402 = vcmp.eq.f32.partialorder %v2399, inf
    %v2403 = vsel %vm2402, %v2399, %v2401
    %vm2404 = vcmp.eq.f32.partialorder %v2399, 0.0
    %v2405 = vand.u32 %v2399, 2147483648
    %v2406 = vsel %vm2404, %v2405, %v2403
    %v2407 = vmax.f32 %v2406, 1e-15
    %v2408 = vmin.f32 %v2407, 0.99999
    %v2409 = vadd.f32 %v2408, 1.0
    %v2410 = vsub.f32 1.0, %v2408
    %v2411 = vrcp.pop %v2410
    %v2412 = vmul.f32 %v2409, %v2411
    %v2413 = vlog2.pop %v2412
    %v2414 = vmul.f32 %v2413, 0.6931472
    %v2415 = vmul.f32 %v2414, 0.5
    %v2416 = vrcp.pop %v2407
    %v2417 = vmul.f32 %v2415, %v2416
    %v2418 = vmul.f32 %v2417, %v1224
    %v2419 = vmul.f32 %v2417, %v1225
    %v2420 = vmul.f32 %v2417, %v1226
    %v2421 = vmul.f32 %v2417, %v1227
    %v2422 = vmul.f32 %v2417, %v1228
    %v2423 = vmul.f32 %v2417, %v1229
    %v2424 = vmul.f32 %v2417, %v1230
    %v2425 = vmul.f32 %v2417, %v1231
    %v2426 = vmul.f32 %v2417, %v1232
    %v2427 = vmul.f32 %v2417, %v1233
    %v2428 = vmul.f32 %v2417, %v1234
    %v2429 = vmul.f32 %v2417, %v1235
    %v2430 = vmul.f32 %v2417, %v1236
    %v2431 = vmul.f32 %v2417, %v1237
    %v2432 = vmul.f32 %v2417, %v1238
    %v2433 = vmul.f32 %v2417, %v1239
    %v2434 = vmul.f32 %v2417, %v1240
    %v2435 = vmul.f32 %v2417, %v1241
    %v2436 = vmul.f32 %v2417, %v1242
    %v2437 = vmul.f32 %v2417, %v1243
    %v2438 = vmul.f32 %v2417, %v1244
    %v2439 = vmul.f32 %v2417, %v1245
    %v2440 = vmul.f32 %v2417, %v1246
    %v2441 = vmul.f32 %v2417, %v1247
    %v2442 = vmul.f32 %v2417, %v1248
    %v2443 = vmul.f32 %v2417, %v1249
    %v2444 = vmul.f32 %v2417, %v1250
    %v2445 = vmul.f32 %v2417, %v1251
    %v2446 = vmul.f32 %v2417, %v1252
    %v2447 = vmul.f32 %v2417, %v1253
    %v2448 = vmul.f32 %v2417, %v1254
    %v2449 = vmul.f32 %v2417, %v1255
    %v2450 = vmul.f32 %v2417, %v1256
    %v2451 = vmul.f32 %v2417, %v1257
    %v2452 = vmul.f32 %v2417, %v1258
    %v2453 = vmul.f32 %v2417, %v1259
    %v2454 = vmul.f32 %v2417, %v1260
    %v2455 = vmul.f32 %v2417, %v1261
    %v2456 = vmul.f32 %v2417, %v1262
    %v2457 = vmul.f32 %v2417, %v1263
    %v2458 = vmul.f32 %v2417, %v1264
    %v2459 = vmul.f32 %v2417, %v1265
    %v2460 = vmul.f32 %v2417, %v1266
    %v2461 = vmul.f32 %v2417, %v1267
    %v2462 = vmul.f32 %v2417, %v1268
    %v2463 = vmul.f32 %v2417, %v1269
    %v2464 = vmul.f32 %v2417, %v1270
    %v2465 = vmul.f32 %v2417, %v1271
    %v2466 = vmul.f32 %v2417, %v1272
    %v2467 = vmul.f32 %v2417, %v1273
    %v2468 = vmul.f32 %v2417, %v1274
    %v2469 = vmul.f32 %v2417, %v1275
    %v2470 = vmul.f32 %v2417, %v1276
    %v2471 = vmul.f32 %v2417, %v1277
    %v2472 = vmul.f32 %v2417, %v1278
    %v2473 = vmul.f32 %v2417, %v1279
    %v2474 = vmul.f32 %v2417, %v1280
    %v2475 = vmul.f32 %v2417, %v1281
    %v2476 = vmul.f32 %v2417, %v1282
    %v2477 = vmul.f32 %v2417, %v1283
    %v2478 = vmul.f32 %v2417, %v1284
    %v2479 = vmul.f32 %v2417, %v1285
    %v2480 = vmul.f32 %v2417, %v1286
    %v2481 = vmul.f32 %v2417, %v1287
    %v2482 = vmul.f32 %v2417, %v1288
    %v2483 = vmul.f32 %v2417, %v1289
    %v2484 = vmul.f32 %v2417, %v1290
    %v2485 = vmul.f32 %v2417, %v1291
    %v2486 = vmul.f32 %v2417, %v1292
    %v2487 = vmul.f32 %v2417, %v1293
    %v2488 = vmul.f32 %v2417, %v1294
    %v2489 = vmul.f32 %v2417, %v1295
    %v2490 = vmul.f32 %v2417, %v1296
    %v2491 = vmul.f32 %v2417, %v1297
    %v2492 = vmul.f32 %v2417, %v1298
    %v2493 = vmul.f32 %v2417, %v1299
    %v2494 = vmul.f32 %v2417, %v1300
    %v2495 = vmul.f32 %v2417, %v1301
    %v2496 = vmul.f32 %v2417, %v1302
    %v2497 = vmul.f32 %v2417, %v1303
    %v2498 = vmul.f32 %v2417, %v1304
    %v2499 = vmul.f32 %v2417, %v1305
    %v2500 = vmul.f32 %v2417, %v1306
    %v2501 = vmul.f32 %v2417, %v1307
    %v2502 = vmul.f32 %v2417, %v1308
    %v2503 = vmul.f32 %v2417, %v1309
    %v2504 = vmul.f32 %v2417, %v1310
    %v2505 = vmul.f32 %v2417, %v1311
    %v2506 = vmul.f32 %v2417, %v1312
    %v2507 = vmul.f32 %v2417, %v1313
    %v2508 = vmul.f32 %v2417, %v1314
    %v2509 = vmul.f32 %v2417, %v1315
    %v2510 = vmul.f32 %v2417, %v1316
    %v2511 = vmul.f32 %v2417, %v1317
    %v2512 = vmul.f32 %v2417, %v1318
    %v2513 = vmul.f32 %v2417, %v1319
    %v2514 = vmul.f32 %v2417, %v1320
    %v2515 = vmul.f32 %v2417, %v1321
    %v2516 = vmul.f32 %v2417, %v1322
    %v2517 = vmul.f32 %v2417, %v1323
    %v2518 = vmul.f32 %v2417, %v1324
    %v2519 = vmul.f32 %v2417, %v1325
    %v2520 = vmul.f32 %v2417, %v1326
    %v2521 = vmul.f32 %v2417, %v1327
    %v2522 = vmul.f32 %v2417, %v1328
    %v2523 = vmul.f32 %v2417, %v1329
    %v2524 = vmul.f32 %v2417, %v1330
    %v2525 = vmul.f32 %v2417, %v1331
    %v2526 = vmul.f32 %v2417, %v1332
    %v2527 = vmul.f32 %v2417, %v1333
    %v2528 = vmul.f32 %v2417, %v1334
    %v2529 = vmul.f32 %v2417, %v1335
    %v2530 = vmul.f32 %v2417, %v1336
    %v2531 = vmul.f32 %v2417, %v1337
    %v2532 = vmul.f32 %v2417, %v1338
    %v2533 = vmul.f32 %v2417, %v1339
    %v2534 = vmul.f32 %v2417, %v1340
    %v2535 = vmul.f32 %v2417, %v1341
    %v2536 = vmul.f32 %v2417, %v1342
    %v2537 = vmul.f32 %v2417, %v1343
    %v2538 = vmul.f32 %v2417, %v1344
    %v2539 = vmul.f32 %v2417, %v1345
    %v2540 = vmul.f32 %v2417, %v1346
    %v2541 = vmul.f32 %v2417, %v1347
    %v2542 = vmul.f32 %v2417, %v1348
    %v2543 = vmul.f32 %v2417, %v1349
    %v2544 = vmul.f32 %v2417, %v1350
    %v2545 = vmul.f32 %v2417, %v1351
    %v2546 = vmul.f32 %v2417, %v1352
    %v2547 = vmul.f32 %v2417, %v1353
    %v2548 = vmul.f32 %v2417, %v1354
    %v2549 = vmul.f32 %v2417, %v1355
    %v2550 = vmul.f32 %v2417, %v1356
    %v2551 = vmul.f32 %v2417, %v1357
    %v2552 = vmul.f32 %v2417, %v1358
    %v2553 = vmul.f32 %v2417, %v1359
    %v2554 = vmul.f32 %v2417, %v1360
    %v2555 = vmul.f32 %v2417, %v1361
    %v2556 = vmul.f32 %v2417, %v1362
    %v2557 = vmul.f32 %v2417, %v1363
    %v2558 = vmul.f32 %v2417, %v1364
    %v2559 = vmul.f32 %v2417, %v1365
    %v2560 = vmul.f32 %v2417, %v1366
    %v2561 = vmul.f32 %v2417, %v1367
    %v2562 = vmul.f32 %v2417, %v1368
    %v2563 = vmul.f32 %v2417, %v1369
    %v2564 = vmul.f32 %v2417, %v1370
    %v2565 = vmul.f32 %v2417, %v1371
    %v2566 = vmul.f32 %v2417, %v1372
    %v2567 = vmul.f32 %v2417, %v1373
    %v2568 = vmul.f32 %v2417, %v1374
    %v2569 = vmul.f32 %v2417, %v1375
    %v2570 = vmul.f32 %v2417, %v1376
    %v2571 = vmul.f32 %v2417, %v1377
    %v2572 = vmul.f32 %v2417, %v1378
    %v2573 = vmul.f32 %v2417, %v1379
    %v2574 = vmul.f32 %v2417, %v1380
    %v2575 = vmul.f32 %v2417, %v1381
    %v2576 = vmul.f32 %v2417, %v1382
    %v2577 = vmul.f32 %v2417, %v1383
    %v2578 = vmul.f32 %v2417, %v1384
    %v2579 = vmul.f32 %v2417, %v1385
    %v2580 = vmul.f32 %v2417, %v1386
    %v2581 = vmul.f32 %v2417, %v1387
    %v2582 = vmul.f32 %v2417, %v1388
    %v2583 = vmul.f32 %v2417, %v1389
    %v2584 = vmul.f32 %v2417, %v1390
    %v2585 = vmul.f32 %v2417, %v1391
    %v2586 = vmul.f32 %v2417, %v1392
    %v2587 = vmul.f32 %v2417, %v1393
    %v2588 = vmul.f32 %v2417, %v1394
    %v2589 = vmul.f32 %v2417, %v1395
    %v2590 = vmul.f32 %v2417, %v1396
    %v2591 = vmul.f32 %v2417, %v1397
    %v2592 = vmul.f32 %v2417, %v1398
    %v2593 = vmul.f32 %v2417, %v1399
    %v2594 = vmul.f32 %v2417, %v1400
    %v2595 = vmul.f32 %v2417, %v1401
    %v2596 = vmul.f32 %v2417, %v1402
    %v2597 = vmul.f32 %v2417, %v1403
    %v2598 = vmul.f32 %v2417, %v1404
    %v2599 = vmul.f32 %v2417, %v1405
    %v2600 = vmul.f32 %v2417, %v1406
    %v2601 = vmul.f32 %v2417, %v1407
    %v2602 = vmul.f32 %v2417, %v1408
    %v2603 = vmul.f32 %v2417, %v1409
    %v2604 = vmul.f32 %v2417, %v1410
    %v2605 = vmul.f32 %v2417, %v1411
    %v2606 = vmul.f32 %v2417, %v1412
    %v2607 = vmul.f32 %v2417, %v1413
    %v2608 = vmul.f32 %v2417, %v1414
    %v2609 = vmul.f32 %v2417, %v1415
    %v2610 = vmul.f32 %v2417, %v1416
    %v2611 = vmul.f32 %v2417, %v1417
    %v2612 = vmul.f32 %v2417, %v1418
    %v2613 = vmul.f32 %v2417, %v1419
    %v2614 = vmul.f32 %v2417, %v1420
    %v2615 = vmul.f32 %v2417, %v1421
    %v2616 = vmul.f32 %v2417, %v1422
    %v2617 = vmul.f32 %v2417, %v1423
    %v2618 = vmul.f32 %v2417, %v1424
    %v2619 = vmul.f32 %v2417, %v1425
    %v2620 = vmul.f32 %v2417, %v1426
    %v2621 = vmul.f32 %v2417, %v1427
    %v2622 = vmul.f32 %v2417, %v1428
    %v2623 = vmul.f32 %v2417, %v1429
    %v2624 = vmul.f32 %v2417, %v1430
    %v2625 = vmul.f32 %v2417, %v1431
    %v2626 = vmul.f32 %v2417, %v1432
    %v2627 = vmul.f32 %v2417, %v1433
    %v2628 = vmul.f32 %v2417, %v1434
    %v2629 = vmul.f32 %v2417, %v1435
    %v2630 = vmul.f32 %v2417, %v1436
    %v2631 = vmul.f32 %v2417, %v1437
    %v2632 = vmul.f32 %v2417, %v1438
    %v2633 = vmul.f32 %v2417, %v1439
    %v2634 = vmul.f32 %v2417, %v1440
    %v2635 = vmul.f32 %v2417, %v1441
    %v2636 = vmul.f32 %v2417, %v1442
    %v2637 = vmul.f32 %v2417, %v1443
    %v2638 = vmul.f32 %v2417, %v1444
    %v2639 = vmul.f32 %v2417, %v1445
    %v2640 = vmul.f32 %v2417, %v1446
    %v2641 = vmul.f32 %v2417, %v1447
    %v2642 = vmul.f32 %v2417, %v1448
    %v2643 = vmul.f32 %v2417, %v1449
    %v2644 = vmul.f32 %v2417, %v1450
    %v2645 = vmul.f32 %v2417, %v1451
    %v2646 = vmul.f32 %v2417, %v1452
    %v2647 = vmul.f32 %v2417, %v1453
    %v2648 = vmul.f32 %v2417, %v1454
    %v2649 = vmul.f32 %v2417, %v1455
    %v2650 = vmul.f32 %v2417, %v1456
    %v2651 = vmul.f32 %v2417, %v1457
    %v2652 = vmul.f32 %v2417, %v1458
    %v2653 = vmul.f32 %v2417, %v1459
    %v2654 = vmul.f32 %v2417, %v1460
    %v2655 = vmul.f32 %v2417, %v1461
    %v2656 = vmul.f32 %v2417, %v1462
    %v2657 = vmul.f32 %v2417, %v1463
    %v2658 = vmul.f32 %v2417, %v1464
    %v2659 = vmul.f32 %v2417, %v1465
    %v2660 = vmul.f32 %v2417, %v1466
    %v2661 = vmul.f32 %v2417, %v1467
    %v2662 = vmul.f32 %v2417, %v1468
    %v2663 = vmul.f32 %v2417, %v1469
    %v2664 = vmul.f32 %v2417, %v1470
    %v2665 = vmul.f32 %v2417, %v1471
    %v2666 = vmul.f32 %v2417, %v1472
    %v2667 = vmul.f32 %v2417, %v1473
    %v2668 = vmul.f32 %v2417, %v1474
    %v2669 = vmul.f32 %v2417, %v1475
    %v2670 = vmul.f32 %v2417, %v1476
    %v2671 = vmul.f32 %v2417, %v1477
    %v2672 = vmul.f32 %v2417, %v1478
    %v2673 = vmul.f32 %v2417, %v1479
    %v2674 = vmul.f32 %v2417, %v1480
    %v2675 = vmul.f32 %v2417, %v1481
    %v2676 = vmul.f32 %v2417, %v1482
    %v2677 = vmul.f32 %v2417, %v1483
    %v2678 = vmul.f32 %v2417, %v1484
    %v2679 = vmul.f32 %v2417, %v1485
    %v2680 = vmul.f32 %v2417, %v1486
    %v2681 = vmul.f32 %v2417, %v1487
    %v2682 = vmul.f32 %v2417, %v1488
    %v2683 = vmul.f32 %v2417, %v1489
    %v2684 = vmul.f32 %v2417, %v1490
    %v2685 = vmul.f32 %v2417, %v1491
    %v2686 = vmul.f32 %v2417, %v1492
    %v2687 = vmul.f32 %v2417, %v1493
    %v2688 = vmul.f32 %v2417, %v1494
    %v2689 = vmul.f32 %v2417, %v1495
    %v2690 = vmul.f32 %v2417, %v1496
    %v2691 = vmul.f32 %v2417, %v1497
    %v2692 = vmul.f32 %v2417, %v1498
    %v2693 = vmul.f32 %v2417, %v1499
    %v2694 = vmul.f32 %v2417, %v1500
    %v2695 = vmul.f32 %v2417, %v1501
    %v2696 = vmul.f32 %v2417, %v1502
    %v2697 = vmul.f32 %v2417, %v1503
    %v2698 = vmul.f32 %v2417, %v1504
    %v2699 = vmul.f32 %v2417, %v1505
    %v2700 = vmul.f32 %v2417, %v1506
    %v2701 = vmul.f32 %v2417, %v1507
    %v2702 = vmul.f32 %v2417, %v1508
    %v2703 = vmul.f32 %v2417, %v1509
    %v2704 = vmul.f32 %v2417, %v1510
    %v2705 = vmul.f32 %v2417, %v1511
    %v2706 = vmul.f32 %v2417, %v1512
    %v2707 = vmul.f32 %v2417, %v1513
    %v2708 = vmul.f32 %v2417, %v1514
    %v2709 = vmul.f32 %v2417, %v1515
    %v2710 = vmul.f32 %v2417, %v1516
    %v2711 = vmul.f32 %v2417, %v1517
    %v2712 = vmul.f32 %v2417, %v1518
    %v2713 = vmul.f32 %v2417, %v1519
    %v2714 = vmul.f32 %v2417, %v1520
    %v2715 = vmul.f32 %v2417, %v1521
    %v2716 = vmul.f32 %v2417, %v1522
    %v2717 = vmul.f32 %v2417, %v1523
    %v2718 = vmul.f32 %v2417, %v1524
    %v2719 = vmul.f32 %v2417, %v1525
    %v2720 = vmul.f32 %v2417, %v1526
    %v2721 = vmul.f32 %v2417, %v1527
    %v2722 = vmul.f32 %v2417, %v1528
    %v2723 = vmul.f32 %v2417, %v1529
    %v2724 = vmul.f32 %v2417, %v1530
    %v2725 = vmul.f32 %v2417, %v1531
    %v2726 = vmul.f32 %v2417, %v1532
    %v2727 = vmul.f32 %v2417, %v1533
    %v2728 = vmul.f32 %v2417, %v1534
    %v2729 = vmul.f32 %v2417, %v1535
    %v2730 = vmul.f32 %v2417, %v1536
    %v2731 = vmul.f32 %v2417, %v1537
    %v2732 = vmul.f32 %v2417, %v1538
    %v2733 = vmul.f32 %v2417, %v1539
    %v2734 = vmul.f32 %v2417, %v1540
    %v2735 = vmul.f32 %v2417, %v1541
    %v2736 = vmul.f32 %v2417, %v1542
    %v2737 = vmul.f32 %v2417, %v1543
    %v2738 = vmul.f32 %v2417, %v1544
    %v2739 = vmul.f32 %v2417, %v1545
    %v2740 = vmul.f32 %v2417, %v1546
    %v2741 = vmul.f32 %v2417, %v1547
    %v2742 = vmul.f32 %v2417, %v1548
    %v2743 = vmul.f32 %v2417, %v1549
    %v2744 = vmul.f32 %v2417, %v1550
    %v2745 = vmul.f32 %v2417, %v1551
    %v2746 = vmul.f32 %v2417, %v1552
    %v2747 = vmul.f32 %v2417, %v1553
    %v2748 = vmul.f32 %v2417, %v1554
    %v2749 = vmul.f32 %v2417, %v1555
    %v2750 = vmul.f32 %v2417, %v1556
    %v2751 = vmul.f32 %v2417, %v1557
    %v2752 = vmul.f32 %v2417, %v1558
    %v2753 = vmul.f32 %v2417, %v1559
    %v2754 = vmul.f32 %v2417, %v1560
    %v2755 = vmul.f32 %v2417, %v1561
    %v2756 = vmul.f32 %v2417, %v1562
    %v2757 = vmul.f32 %v2417, %v1563
    %v2758 = vmul.f32 %v2417, %v1564
    %v2759 = vmul.f32 %v2417, %v1565
    %v2760 = vmul.f32 %v2417, %v1566
    %v2761 = vmul.f32 %v2417, %v1567
    %v2762 = vmul.f32 %v2417, %v1568
    %v2763 = vmul.f32 %v2417, %v1569
    %v2764 = vmul.f32 %v2417, %v1570
    %v2765 = vmul.f32 %v2417, %v1571
    %v2766 = vmul.f32 %v2417, %v1572
    %v2767 = vmul.f32 %v2417, %v1573
    %v2768 = vmul.f32 %v2417, %v1574
    %v2769 = vmul.f32 %v2417, %v1575
    %v2770 = vmul.f32 %v2417, %v1576
    %v2771 = vmul.f32 %v2417, %v1577
    %v2772 = vmul.f32 %v2417, %v1578
    %v2773 = vmul.f32 %v2417, %v1579
    %v2774 = vmul.f32 %v2417, %v1580
    %v2775 = vmul.f32 %v2417, %v1581
    %v2776 = vmul.f32 %v2417, %v1582
    %v2777 = vmul.f32 %v2417, %v1583
    %v2778 = vmul.f32 %v2417, %v1584
    %v2779 = vmul.f32 %v2417, %v1585
    %v2780 = vmul.f32 %v2417, %v1586
    %v2781 = vmul.f32 %v2417, %v1587
    %v2782 = vmul.f32 %v2417, %v1588
    %v2783 = vmul.f32 %v2417, %v1589
    %v2784 = vmul.f32 %v2417, %v1590
    %v2785 = vmul.f32 %v2417, %v1591
    %v2786 = vmul.f32 %v2417, %v1592
    %v2787 = vmul.f32 %v2417, %v1593
    %v2788 = vmul.f32 %v2417, %v1594
    %v2789 = vmul.f32 %v2417, %v1595
    %v2790 = vmul.f32 %v2417, %v1596
    %v2791 = vmul.f32 %v2417, %v1597
    %v2792 = vmul.f32 %v2417, %v1598
    %v2793 = vmul.f32 %v2417, %v1599
    %v2794 = vmul.f32 %v2417, %v1600
    %v2795 = vmul.f32 %v2417, %v1601
    %v2796 = vmul.f32 %v2417, %v1602
    %v2797 = vmul.f32 %v2417, %v1603
    %v2798 = vmul.f32 %v2417, %v1604
    %v2799 = vmul.f32 %v2417, %v1605
    %v2800 = vmul.f32 %v2417, %v1606
    %v2801 = vmul.f32 %v2417, %v1607
    %v2802 = vmul.f32 %v2417, %v1608
    %v2803 = vmul.f32 %v2417, %v1609
    %v2804 = vmul.f32 %v2417, %v1610
    %v2805 = vmul.f32 %v2417, %v1611
    %v2806 = vmul.f32 %v2417, %v1612
    %v2807 = vmul.f32 %v2417, %v1613
    %v2808 = vmul.f32 %v2417, %v1614
    %v2809 = vadd.f32 %v2418, %v2419
    %v2810 = vadd.f32 %v2809, %v2420
    %v2811 = vadd.f32 %v2810, %v2421
    %v2812 = vadd.f32 %v2811, %v2422
    %v2813 = vadd.f32 %v2812, %v2423
    %v2814 = vadd.f32 %v2813, %v2424
    %v2815 = vadd.f32 %v2814, %v2425
    %v2816 = vadd.f32 %v2815, %v2426
    %v2817 = vadd.f32 %v2816, %v2427
    %v2818 = vadd.f32 %v2817, %v2428
    %v2819 = vadd.f32 %v2818, %v2429
    %v2820 = vadd.f32 %v2819, %v2430
    %v2821 = vadd.f32 %v2820, %v2431
    %v2822 = vadd.f32 %v2821, %v2432
    %v2823 = vadd.f32 %v2822, %v2433
    %v2824 = vadd.f32 %v2823, %v2434
    %v2825 = vadd.f32 %v2824, %v2435
    %v2826 = vadd.f32 %v2825, %v2436
    %v2827 = vadd.f32 %v2826, %v2437
    %v2828 = vadd.f32 %v2827, %v2438
    %v2829 = vadd.f32 %v2828, %v2439
    %v2830 = vadd.f32 %v2829, %v2440
    %v2831 = vadd.f32 %v2830, %v2441
    %v2832 = vadd.f32 %v2831, %v2442
    %v2833 = vadd.f32 %v2832, %v2443
    %v2834 = vadd.f32 %v2833, %v2444
    %v2835 = vadd.f32 %v2834, %v2445
    %v2836 = vadd.f32 %v2835, %v2446
    %v2837 = vadd.f32 %v2836, %v2447
    %v2838 = vadd.f32 %v2837, %v2448
    %v2839 = vadd.f32 %v2838, %v2449
    %v2840 = vadd.f32 %v2839, %v2450
    %v2841 = vadd.f32 %v2840, %v2451
    %v2842 = vadd.f32 %v2841, %v2452
    %v2843 = vadd.f32 %v2842, %v2453
    %v2844 = vadd.f32 %v2843, %v2454
    %v2845 = vadd.f32 %v2844, %v2455
    %v2846 = vadd.f32 %v2845, %v2456
    %v2847 = vadd.f32 %v2846, %v2457
    %v2848 = vadd.f32 %v2847, %v2458
    %v2849 = vadd.f32 %v2848, %v2459
    %v2850 = vadd.f32 %v2849, %v2460
    %v2851 = vadd.f32 %v2850, %v2461
    %v2852 = vadd.f32 %v2851, %v2462
    %v2853 = vadd.f32 %v2852, %v2463
    %v2854 = vadd.f32 %v2853, %v2464
    %v2855 = vadd.f32 %v2854, %v2465
    %v2856 = vadd.f32 %v2855, %v2466
    %v2857 = vadd.f32 %v2856, %v2467
    %v2858 = vadd.f32 %v2857, %v2468
    %v2859 = vadd.f32 %v2858, %v2469
    %v2860 = vadd.f32 %v2859, %v2470
    %v2861 = vadd.f32 %v2860, %v2471
    %v2862 = vadd.f32 %v2861, %v2472
    %v2863 = vadd.f32 %v2862, %v2473
    %v2864 = vadd.f32 %v2863, %v2474
    %v2865 = vadd.f32 %v2864, %v2475
    %v2866 = vadd.f32 %v2865, %v2476
    %v2867 = vadd.f32 %v2866, %v2477
    %v2868 = vadd.f32 %v2867, %v2478
    %v2869 = vadd.f32 %v2868, %v2479
    %v2870 = vadd.f32 %v2869, %v2480
    %v2871 = vadd.f32 %v2870, %v2481
    %v2872 = vadd.f32 %v2871, %v2482
    %v2873 = vadd.f32 %v2872, %v2483
    %v2874 = vadd.f32 %v2873, %v2484
    %v2875 = vadd.f32 %v2874, %v2485
    %v2876 = vadd.f32 %v2875, %v2486
    %v2877 = vadd.f32 %v2876, %v2487
    %v2878 = vadd.f32 %v2877, %v2488
    %v2879 = vadd.f32 %v2878, %v2489
    %v2880 = vadd.f32 %v2879, %v2490
    %v2881 = vadd.f32 %v2880, %v2491
    %v2882 = vadd.f32 %v2881, %v2492
    %v2883 = vadd.f32 %v2882, %v2493
    %v2884 = vadd.f32 %v2883, %v2494
    %v2885 = vadd.f32 %v2884, %v2495
    %v2886 = vadd.f32 %v2885, %v2496
    %v2887 = vadd.f32 %v2886, %v2497
    %v2888 = vadd.f32 %v2887, %v2498
    %v2889 = vadd.f32 %v2888, %v2499
    %v2890 = vadd.f32 %v2889, %v2500
    %v2891 = vadd.f32 %v2890, %v2501
    %v2892 = vadd.f32 %v2891, %v2502
    %v2893 = vadd.f32 %v2892, %v2503
    %v2894 = vadd.f32 %v2893, %v2504
    %v2895 = vadd.f32 %v2894, %v2505
    %v2896 = vadd.f32 %v2895, %v2506
    %v2897 = vadd.f32 %v2896, %v2507
    %v2898 = vadd.f32 %v2897, %v2508
    %v2899 = vadd.f32 %v2898, %v2509
    %v2900 = vadd.f32 %v2899, %v2510
    %v2901 = vadd.f32 %v2900, %v2511
    %v2902 = vadd.f32 %v2901, %v2512
    %v2903 = vadd.f32 %v2902, %v2513
    %v2904 = vadd.f32 %v2903, %v2514
    %v2905 = vadd.f32 %v2904, %v2515
    %v2906 = vadd.f32 %v2905, %v2516
    %v2907 = vadd.f32 %v2906, %v2517
    %v2908 = vadd.f32 %v2907, %v2518
    %v2909 = vadd.f32 %v2908, %v2519
    %v2910 = vadd.f32 %v2909, %v2520
    %v2911 = vadd.f32 %v2910, %v2521
    %v2912 = vadd.f32 %v2911, %v2522
    %v2913 = vadd.f32 %v2912, %v2523
    %v2914 = vadd.f32 %v2913, %v2524
    %v2915 = vadd.f32 %v2914, %v2525
    %v2916 = vadd.f32 %v2915, %v2526
    %v2917 = vadd.f32 %v2916, %v2527
    %v2918 = vadd.f32 %v2917, %v2528
    %v2919 = vadd.f32 %v2918, %v2529
    %v2920 = vadd.f32 %v2919, %v2530
    %v2921 = vadd.f32 %v2920, %v2531
    %v2922 = vadd.f32 %v2921, %v2532
    %v2923 = vadd.f32 %v2922, %v2533
    %v2924 = vadd.f32 %v2923, %v2534
    %v2925 = vadd.f32 %v2924, %v2535
    %v2926 = vadd.f32 %v2925, %v2536
    %v2927 = vadd.f32 %v2926, %v2537
    %v2928 = vadd.f32 %v2927, %v2538
    %v2929 = vadd.f32 %v2928, %v2539
    %v2930 = vadd.f32 %v2929, %v2540
    %v2931 = vadd.f32 %v2930, %v2541
    %v2932 = vadd.f32 %v2931, %v2542
    %v2933 = vadd.f32 %v2932, %v2543
    %v2934 = vadd.f32 %v2933, %v2544
    %v2935 = vadd.f32 %v2934, %v2545
    %v2936 = vadd.f32 %v2935, %v2546
    %v2937 = vadd.f32 %v2936, %v2547
    %v2938 = vadd.f32 %v2937, %v2548
    %v2939 = vadd.f32 %v2938, %v2549
    %v2940 = vadd.f32 %v2939, %v2550
    %v2941 = vadd.f32 %v2940, %v2551
    %v2942 = vadd.f32 %v2941, %v2552
    %v2943 = vadd.f32 %v2942, %v2553
    %v2944 = vadd.f32 %v2943, %v2554
    %v2945 = vadd.f32 %v2944, %v2555
    %v2946 = vadd.f32 %v2945, %v2556
    %v2947 = vadd.f32 %v2946, %v2557
    %v2948 = vadd.f32 %v2947, %v2558
    %v2949 = vadd.f32 %v2948, %v2559
    %v2950 = vadd.f32 %v2949, %v2560
    %v2951 = vadd.f32 %v2950, %v2561
    %v2952 = vadd.f32 %v2951, %v2562
    %v2953 = vadd.f32 %v2952, %v2563
    %v2954 = vadd.f32 %v2953, %v2564
    %v2955 = vadd.f32 %v2954, %v2565
    %v2956 = vadd.f32 %v2955, %v2566
    %v2957 = vadd.f32 %v2956, %v2567
    %v2958 = vadd.f32 %v2957, %v2568
    %v2959 = vadd.f32 %v2958, %v2569
    %v2960 = vadd.f32 %v2959, %v2570
    %v2961 = vadd.f32 %v2960, %v2571
    %v2962 = vadd.f32 %v2961, %v2572
    %v2963 = vadd.f32 %v2962, %v2573
    %v2964 = vadd.f32 %v2963, %v2574
    %v2965 = vadd.f32 %v2964, %v2575
    %v2966 = vadd.f32 %v2965, %v2576
    %v2967 = vadd.f32 %v2966, %v2577
    %v2968 = vadd.f32 %v2967, %v2578
    %v2969 = vadd.f32 %v2968, %v2579
    %v2970 = vadd.f32 %v2969, %v2580
    %v2971 = vadd.f32 %v2970, %v2581
    %v2972 = vadd.f32 %v2971, %v2582
    %v2973 = vadd.f32 %v2972, %v2583
    %v2974 = vadd.f32 %v2973, %v2584
    %v2975 = vadd.f32 %v2974, %v2585
    %v2976 = vadd.f32 %v2975, %v2586
    %v2977 = vadd.f32 %v2976, %v2587
    %v2978 = vadd.f32 %v2977, %v2588
    %v2979 = vadd.f32 %v2978, %v2589
    %v2980 = vadd.f32 %v2979, %v2590
    %v2981 = vadd.f32 %v2980, %v2591
    %v2982 = vadd.f32 %v2981, %v2592
    %v2983 = vadd.f32 %v2982, %v2593
    %v2984 = vadd.f32 %v2983, %v2594
    %v2985 = vadd.f32 %v2984, %v2595
    %v2986 = vadd.f32 %v2985, %v2596
    %v2987 = vadd.f32 %v2986, %v2597
    %v2988 = vadd.f32 %v2987, %v2598
    %v2989 = vadd.f32 %v2988, %v2599
    %v2990 = vadd.f32 %v2989, %v2600
    %v2991 = vadd.f32 %v2990, %v2601
    %v2992 = vadd.f32 %v2991, %v2602
    %v2993 = vadd.f32 %v2992, %v2603
    %v2994 = vadd.f32 %v2993, %v2604
    %v2995 = vadd.f32 %v2994, %v2605
    %v2996 = vadd.f32 %v2995, %v2606
    %v2997 = vadd.f32 %v2996, %v2607
    %v2998 = vadd.f32 %v2997, %v2608
    %v2999 = vadd.f32 %v2998, %v2609
    %v3000 = vadd.f32 %v2999, %v2610
    %v3001 = vadd.f32 %v3000, %v2611
    %v3002 = vadd.f32 %v3001, %v2612
    %v3003 = vadd.f32 %v3002, %v2613
    %v3004 = vadd.f32 %v3003, %v2614
    %v3005 = vadd.f32 %v3004, %v2615
    %v3006 = vadd.f32 %v3005, %v2616
    %v3007 = vadd.f32 %v3006, %v2617
    %v3008 = vadd.f32 %v3007, %v2618
    %v3009 = vadd.f32 %v3008, %v2619
    %v3010 = vadd.f32 %v3009, %v2620
    %v3011 = vadd.f32 %v3010, %v2621
    %v3012 = vadd.f32 %v3011, %v2622
    %v3013 = vadd.f32 %v3012, %v2623
    %v3014 = vadd.f32 %v3013, %v2624
    %v3015 = vadd.f32 %v3014, %v2625
    %v3016 = vadd.f32 %v3015, %v2626
    %v3017 = vadd.f32 %v3016, %v2627
    %v3018 = vadd.f32 %v3017, %v2628
    %v3019 = vadd.f32 %v3018, %v2629
    %v3020 = vadd.f32 %v3019, %v2630
    %v3021 = vadd.f32 %v3020, %v2631
    %v3022 = vadd.f32 %v3021, %v2632
    %v3023 = vadd.f32 %v3022, %v2633
    %v3024 = vadd.f32 %v3023, %v2634
    %v3025 = vadd.f32 %v3024, %v2635
    %v3026 = vadd.f32 %v3025, %v2636
    %v3027 = vadd.f32 %v3026, %v2637
    %v3028 = vadd.f32 %v3027, %v2638
    %v3029 = vadd.f32 %v3028, %v2639
    %v3030 = vadd.f32 %v3029, %v2640
    %v3031 = vadd.f32 %v3030, %v2641
    %v3032 = vadd.f32 %v3031, %v2642
    %v3033 = vadd.f32 %v3032, %v2643
    %v3034 = vadd.f32 %v3033, %v2644
    %v3035 = vadd.f32 %v3034, %v2645
    %v3036 = vadd.f32 %v3035, %v2646
    %v3037 = vadd.f32 %v3036, %v2647
    %v3038 = vadd.f32 %v3037, %v2648
    %v3039 = vadd.f32 %v3038, %v2649
    %v3040 = vadd.f32 %v3039, %v2650
    %v3041 = vadd.f32 %v3040, %v2651
    %v3042 = vadd.f32 %v3041, %v2652
    %v3043 = vadd.f32 %v3042, %v2653
    %v3044 = vadd.f32 %v3043, %v2654
    %v3045 = vadd.f32 %v3044, %v2655
    %v3046 = vadd.f32 %v3045, %v2656
    %v3047 = vadd.f32 %v3046, %v2657
    %v3048 = vadd.f32 %v3047, %v2658
    %v3049 = vadd.f32 %v3048, %v2659
    %v3050 = vadd.f32 %v3049, %v2660
    %v3051 = vadd.f32 %v3050, %v2661
    %v3052 = vadd.f32 %v3051, %v2662
    %v3053 = vadd.f32 %v3052, %v2663
    %v3054 = vadd.f32 %v3053, %v2664
    %v3055 = vadd.f32 %v3054, %v2665
    %v3056 = vadd.f32 %v3055, %v2666
    %v3057 = vadd.f32 %v3056, %v2667
    %v3058 = vadd.f32 %v3057, %v2668
    %v3059 = vadd.f32 %v3058, %v2669
    %v3060 = vadd.f32 %v3059, %v2670
    %v3061 = vadd.f32 %v3060, %v2671
    %v3062 = vadd.f32 %v3061, %v2672
    %v3063 = vadd.f32 %v3062, %v2673
    %v3064 = vadd.f32 %v3063, %v2674
    %v3065 = vadd.f32 %v3064, %v2675
    %v3066 = vadd.f32 %v3065, %v2676
    %v3067 = vadd.f32 %v3066, %v2677
    %v3068 = vadd.f32 %v3067, %v2678
    %v3069 = vadd.f32 %v3068, %v2679
    %v3070 = vadd.f32 %v3069, %v2680
    %v3071 = vadd.f32 %v3070, %v2681
    %v3072 = vadd.f32 %v3071, %v2682
    %v3073 = vadd.f32 %v3072, %v2683
    %v3074 = vadd.f32 %v3073, %v2684
    %v3075 = vadd.f32 %v3074, %v2685
    %v3076 = vadd.f32 %v3075, %v2686
    %v3077 = vadd.f32 %v3076, %v2687
    %v3078 = vadd.f32 %v3077, %v2688
    %v3079 = vadd.f32 %v3078, %v2689
    %v3080 = vadd.f32 %v3079, %v2690
    %v3081 = vadd.f32 %v3080, %v2691
    %v3082 = vadd.f32 %v3081, %v2692
    %v3083 = vadd.f32 %v3082, %v2693
    %v3084 = vadd.f32 %v3083, %v2694
    %v3085 = vadd.f32 %v3084, %v2695
    %v3086 = vadd.f32 %v3085, %v2696
    %v3087 = vadd.f32 %v3086, %v2697
    %v3088 = vadd.f32 %v3087, %v2698
    %v3089 = vadd.f32 %v3088, %v2699
    %v3090 = vadd.f32 %v3089, %v2700
    %v3091 = vadd.f32 %v3090, %v2701
    %v3092 = vadd.f32 %v3091, %v2702
    %v3093 = vadd.f32 %v3092, %v2703
    %v3094 = vadd.f32 %v3093, %v2704
    %v3095 = vadd.f32 %v3094, %v2705
    %v3096 = vadd.f32 %v3095, %v2706
    %v3097 = vadd.f32 %v3096, %v2707
    %v3098 = vadd.f32 %v3097, %v2708
    %v3099 = vadd.f32 %v3098, %v2709
    %v3100 = vadd.f32 %v3099, %v2710
    %v3101 = vadd.f32 %v3100, %v2711
    %v3102 = vadd.f32 %v3101, %v2712
    %v3103 = vadd.f32 %v3102, %v2713
    %v3104 = vadd.f32 %v3103, %v2714
    %v3105 = vadd.f32 %v3104, %v2715
    %v3106 = vadd.f32 %v3105, %v2716
    %v3107 = vadd.f32 %v3106, %v2717
    %v3108 = vadd.f32 %v3107, %v2718
    %v3109 = vadd.f32 %v3108, %v2719
    %v3110 = vadd.f32 %v3109, %v2720
    %v3111 = vadd.f32 %v3110, %v2721
    %v3112 = vadd.f32 %v3111, %v2722
    %v3113 = vadd.f32 %v3112, %v2723
    %v3114 = vadd.f32 %v3113, %v2724
    %v3115 = vadd.f32 %v3114, %v2725
    %v3116 = vadd.f32 %v3115, %v2726
    %v3117 = vadd.f32 %v3116, %v2727
    %v3118 = vadd.f32 %v3117, %v2728
    %v3119 = vadd.f32 %v3118, %v2729
    %v3120 = vadd.f32 %v3119, %v2730
    %v3121 = vadd.f32 %v3120, %v2731
    %v3122 = vadd.f32 %v3121, %v2732
    %v3123 = vadd.f32 %v3122, %v2733
    %v3124 = vadd.f32 %v3123, %v2734
    %v3125 = vadd.f32 %v3124, %v2735
    %v3126 = vadd.f32 %v3125, %v2736
    %v3127 = vadd.f32 %v3126, %v2737
    %v3128 = vadd.f32 %v3127, %v2738
    %v3129 = vadd.f32 %v3128, %v2739
    %v3130 = vadd.f32 %v3129, %v2740
    %v3131 = vadd.f32 %v3130, %v2741
    %v3132 = vadd.f32 %v3131, %v2742
    %v3133 = vadd.f32 %v3132, %v2743
    %v3134 = vadd.f32 %v3133, %v2744
    %v3135 = vadd.f32 %v3134, %v2745
    %v3136 = vadd.f32 %v3135, %v2746
    %v3137 = vadd.f32 %v3136, %v2747
    %v3138 = vadd.f32 %v3137, %v2748
    %v3139 = vadd.f32 %v3138, %v2749
    %v3140 = vadd.f32 %v3139, %v2750
    %v3141 = vadd.f32 %v3140, %v2751
    %v3142 = vadd.f32 %v3141, %v2752
    %v3143 = vadd.f32 %v3142, %v2753
    %v3144 = vadd.f32 %v3143, %v2754
    %v3145 = vadd.f32 %v3144, %v2755
    %v3146 = vadd.f32 %v3145, %v2756
    %v3147 = vadd.f32 %v3146, %v2757
    %v3148 = vadd.f32 %v3147, %v2758
    %v3149 = vadd.f32 %v3148, %v2759
    %v3150 = vadd.f32 %v3149, %v2760
    %v3151 = vadd.f32 %v3150, %v2761
    %v3152 = vadd.f32 %v3151, %v2762
    %v3153 = vadd.f32 %v3152, %v2763
    %v3154 = vadd.f32 %v3153, %v2764
    %v3155 = vadd.f32 %v3154, %v2765
    %v3156 = vadd.f32 %v3155, %v2766
    %v3157 = vadd.f32 %v3156, %v2767
    %v3158 = vadd.f32 %v3157, %v2768
    %v3159 = vadd.f32 %v3158, %v2769
    %v3160 = vadd.f32 %v3159, %v2770
    %v3161 = vadd.f32 %v3160, %v2771
    %v3162 = vadd.f32 %v3161, %v2772
    %v3163 = vadd.f32 %v3162, %v2773
    %v3164 = vadd.f32 %v3163, %v2774
    %v3165 = vadd.f32 %v3164, %v2775
    %v3166 = vadd.f32 %v3165, %v2776
    %v3167 = vadd.f32 %v3166, %v2777
    %v3168 = vadd.f32 %v3167, %v2778
    %v3169 = vadd.f32 %v3168, %v2779
    %v3170 = vadd.f32 %v3169, %v2780
    %v3171 = vadd.f32 %v3170, %v2781
    %v3172 = vadd.f32 %v3171, %v2782
    %v3173 = vadd.f32 %v3172, %v2783
    %v3174 = vadd.f32 %v3173, %v2784
    %v3175 = vadd.f32 %v3174, %v2785
    %v3176 = vadd.f32 %v3175, %v2786
    %v3177 = vadd.f32 %v3176, %v2787
    %v3178 = vadd.f32 %v3177, %v2788
    %v3179 = vadd.f32 %v3178, %v2789
    %v3180 = vadd.f32 %v3179, %v2790
    %v3181 = vadd.f32 %v3180, %v2791
    %v3182 = vadd.f32 %v3181, %v2792
    %v3183 = vadd.f32 %v3182, %v2793
    %v3184 = vadd.f32 %v3183, %v2794
    %v3185 = vadd.f32 %v3184, %v2795
    %v3186 = vadd.f32 %v3185, %v2796
    %v3187 = vadd.f32 %v3186, %v2797
    %v3188 = vadd.f32 %v3187, %v2798
    %v3189 = vadd.f32 %v3188, %v2799
    %v3190 = vadd.f32 %v3189, %v2800
    %v3191 = vadd.f32 %v3190, %v2801
    %v3192 = vadd.f32 %v3191, %v2802
    %v3193 = vadd.f32 %v3192, %v2803
    %v3194 = vadd.f32 %v3193, %v2804
    %v3195 = vadd.f32 %v3194, %v2805
    %v3196 = vadd.f32 %v3195, %v2806
    %v3197 = vadd.f32 %v3196, %v2807
    %v3198 = vsel %vm2395, %v2808, 0.0
    %v3199 = vadd.f32 %v3197, %v3198
    %3200 = vadd.xlane.f32.xlu0 %v3199
    %v3201 = vpop.xlane.xlu0 %3200
    %v3202 = vmul.f32 %v3201, 1.99976e-05
    %v3203 = vmul.f32 %v2418, %v2418
    %v3204 = vmul.f32 %v2419, %v2419
    %v3205 = vmul.f32 %v2420, %v2420
    %v3206 = vmul.f32 %v2421, %v2421
    %v3207 = vmul.f32 %v2422, %v2422
    %v3208 = vmul.f32 %v2423, %v2423
    %v3209 = vmul.f32 %v2424, %v2424
    %v3210 = vmul.f32 %v2425, %v2425
    %v3211 = vmul.f32 %v2426, %v2426
    %v3212 = vmul.f32 %v2427, %v2427
    %v3213 = vmul.f32 %v2428, %v2428
    %v3214 = vmul.f32 %v2429, %v2429
    %v3215 = vmul.f32 %v2430, %v2430
    %v3216 = vmul.f32 %v2431, %v2431
    %v3217 = vmul.f32 %v2432, %v2432
    %v3218 = vmul.f32 %v2433, %v2433
    %v3219 = vmul.f32 %v2434, %v2434
    %v3220 = vmul.f32 %v2435, %v2435
    %v3221 = vmul.f32 %v2436, %v2436
    %v3222 = vmul.f32 %v2437, %v2437
    %v3223 = vmul.f32 %v2438, %v2438
    %v3224 = vmul.f32 %v2439, %v2439
    %v3225 = vmul.f32 %v2440, %v2440
    %v3226 = vmul.f32 %v2441, %v2441
    %v3227 = vmul.f32 %v2442, %v2442
    %v3228 = vmul.f32 %v2443, %v2443
    %v3229 = vmul.f32 %v2444, %v2444
    %v3230 = vmul.f32 %v2445, %v2445
    %v3231 = vmul.f32 %v2446, %v2446
    %v3232 = vmul.f32 %v2447, %v2447
    %v3233 = vmul.f32 %v2448, %v2448
    %v3234 = vmul.f32 %v2449, %v2449
    %v3235 = vmul.f32 %v2450, %v2450
    %v3236 = vmul.f32 %v2451, %v2451
    %v3237 = vmul.f32 %v2452, %v2452
    %v3238 = vmul.f32 %v2453, %v2453
    %v3239 = vmul.f32 %v2454, %v2454
    %v3240 = vmul.f32 %v2455, %v2455
    %v3241 = vmul.f32 %v2456, %v2456
    %v3242 = vmul.f32 %v2457, %v2457
    %v3243 = vmul.f32 %v2458, %v2458
    %v3244 = vmul.f32 %v2459, %v2459
    %v3245 = vmul.f32 %v2460, %v2460
    %v3246 = vmul.f32 %v2461, %v2461
    %v3247 = vmul.f32 %v2462, %v2462
    %v3248 = vmul.f32 %v2463, %v2463
    %v3249 = vmul.f32 %v2464, %v2464
    %v3250 = vmul.f32 %v2465, %v2465
    %v3251 = vmul.f32 %v2466, %v2466
    %v3252 = vmul.f32 %v2467, %v2467
    %v3253 = vmul.f32 %v2468, %v2468
    %v3254 = vmul.f32 %v2469, %v2469
    %v3255 = vmul.f32 %v2470, %v2470
    %v3256 = vmul.f32 %v2471, %v2471
    %v3257 = vmul.f32 %v2472, %v2472
    %v3258 = vmul.f32 %v2473, %v2473
    %v3259 = vmul.f32 %v2474, %v2474
    %v3260 = vmul.f32 %v2475, %v2475
    %v3261 = vmul.f32 %v2476, %v2476
    %v3262 = vmul.f32 %v2477, %v2477
    %v3263 = vmul.f32 %v2478, %v2478
    %v3264 = vmul.f32 %v2479, %v2479
    %v3265 = vmul.f32 %v2480, %v2480
    %v3266 = vmul.f32 %v2481, %v2481
    %v3267 = vmul.f32 %v2482, %v2482
    %v3268 = vmul.f32 %v2483, %v2483
    %v3269 = vmul.f32 %v2484, %v2484
    %v3270 = vmul.f32 %v2485, %v2485
    %v3271 = vmul.f32 %v2486, %v2486
    %v3272 = vmul.f32 %v2487, %v2487
    %v3273 = vmul.f32 %v2488, %v2488
    %v3274 = vmul.f32 %v2489, %v2489
    %v3275 = vmul.f32 %v2490, %v2490
    %v3276 = vmul.f32 %v2491, %v2491
    %v3277 = vmul.f32 %v2492, %v2492
    %v3278 = vmul.f32 %v2493, %v2493
    %v3279 = vmul.f32 %v2494, %v2494
    %v3280 = vmul.f32 %v2495, %v2495
    %v3281 = vmul.f32 %v2496, %v2496
    %v3282 = vmul.f32 %v2497, %v2497
    %v3283 = vmul.f32 %v2498, %v2498
    %v3284 = vmul.f32 %v2499, %v2499
    %v3285 = vmul.f32 %v2500, %v2500
    %v3286 = vmul.f32 %v2501, %v2501
    %v3287 = vmul.f32 %v2502, %v2502
    %v3288 = vmul.f32 %v2503, %v2503
    %v3289 = vmul.f32 %v2504, %v2504
    %v3290 = vmul.f32 %v2505, %v2505
    %v3291 = vmul.f32 %v2506, %v2506
    %v3292 = vmul.f32 %v2507, %v2507
    %v3293 = vmul.f32 %v2508, %v2508
    %v3294 = vmul.f32 %v2509, %v2509
    %v3295 = vmul.f32 %v2510, %v2510
    %v3296 = vmul.f32 %v2511, %v2511
    %v3297 = vmul.f32 %v2512, %v2512
    %v3298 = vmul.f32 %v2513, %v2513
    %v3299 = vmul.f32 %v2514, %v2514
    %v3300 = vmul.f32 %v2515, %v2515
    %v3301 = vmul.f32 %v2516, %v2516
    %v3302 = vmul.f32 %v2517, %v2517
    %v3303 = vmul.f32 %v2518, %v2518
    %v3304 = vmul.f32 %v2519, %v2519
    %v3305 = vmul.f32 %v2520, %v2520
    %v3306 = vmul.f32 %v2521, %v2521
    %v3307 = vmul.f32 %v2522, %v2522
    %v3308 = vmul.f32 %v2523, %v2523
    %v3309 = vmul.f32 %v2524, %v2524
    %v3310 = vmul.f32 %v2525, %v2525
    %v3311 = vmul.f32 %v2526, %v2526
    %v3312 = vmul.f32 %v2527, %v2527
    %v3313 = vmul.f32 %v2528, %v2528
    %v3314 = vmul.f32 %v2529, %v2529
    %v3315 = vmul.f32 %v2530, %v2530
    %v3316 = vmul.f32 %v2531, %v2531
    %v3317 = vmul.f32 %v2532, %v2532
    %v3318 = vmul.f32 %v2533, %v2533
    %v3319 = vmul.f32 %v2534, %v2534
    %v3320 = vmul.f32 %v2535, %v2535
    %v3321 = vmul.f32 %v2536, %v2536
    %v3322 = vmul.f32 %v2537, %v2537
    %v3323 = vmul.f32 %v2538, %v2538
    %v3324 = vmul.f32 %v2539, %v2539
    %v3325 = vmul.f32 %v2540, %v2540
    %v3326 = vmul.f32 %v2541, %v2541
    %v3327 = vmul.f32 %v2542, %v2542
    %v3328 = vmul.f32 %v2543, %v2543
    %v3329 = vmul.f32 %v2544, %v2544
    %v3330 = vmul.f32 %v2545, %v2545
    %v3331 = vmul.f32 %v2546, %v2546
    %v3332 = vmul.f32 %v2547, %v2547
    %v3333 = vmul.f32 %v2548, %v2548
    %v3334 = vmul.f32 %v2549, %v2549
    %v3335 = vmul.f32 %v2550, %v2550
    %v3336 = vmul.f32 %v2551, %v2551
    %v3337 = vmul.f32 %v2552, %v2552
    %v3338 = vmul.f32 %v2553, %v2553
    %v3339 = vmul.f32 %v2554, %v2554
    %v3340 = vmul.f32 %v2555, %v2555
    %v3341 = vmul.f32 %v2556, %v2556
    %v3342 = vmul.f32 %v2557, %v2557
    %v3343 = vmul.f32 %v2558, %v2558
    %v3344 = vmul.f32 %v2559, %v2559
    %v3345 = vmul.f32 %v2560, %v2560
    %v3346 = vmul.f32 %v2561, %v2561
    %v3347 = vmul.f32 %v2562, %v2562
    %v3348 = vmul.f32 %v2563, %v2563
    %v3349 = vmul.f32 %v2564, %v2564
    %v3350 = vmul.f32 %v2565, %v2565
    %v3351 = vmul.f32 %v2566, %v2566
    %v3352 = vmul.f32 %v2567, %v2567
    %v3353 = vmul.f32 %v2568, %v2568
    %v3354 = vmul.f32 %v2569, %v2569
    %v3355 = vmul.f32 %v2570, %v2570
    %v3356 = vmul.f32 %v2571, %v2571
    %v3357 = vmul.f32 %v2572, %v2572
    %v3358 = vmul.f32 %v2573, %v2573
    %v3359 = vmul.f32 %v2574, %v2574
    %v3360 = vmul.f32 %v2575, %v2575
    %v3361 = vmul.f32 %v2576, %v2576
    %v3362 = vmul.f32 %v2577, %v2577
    %v3363 = vmul.f32 %v2578, %v2578
    %v3364 = vmul.f32 %v2579, %v2579
    %v3365 = vmul.f32 %v2580, %v2580
    %v3366 = vmul.f32 %v2581, %v2581
    %v3367 = vmul.f32 %v2582, %v2582
    %v3368 = vmul.f32 %v2583, %v2583
    %v3369 = vmul.f32 %v2584, %v2584
    %v3370 = vmul.f32 %v2585, %v2585
    %v3371 = vmul.f32 %v2586, %v2586
    %v3372 = vmul.f32 %v2587, %v2587
    %v3373 = vmul.f32 %v2588, %v2588
    %v3374 = vmul.f32 %v2589, %v2589
    %v3375 = vmul.f32 %v2590, %v2590
    %v3376 = vmul.f32 %v2591, %v2591
    %v3377 = vmul.f32 %v2592, %v2592
    %v3378 = vmul.f32 %v2593, %v2593
    %v3379 = vmul.f32 %v2594, %v2594
    %v3380 = vmul.f32 %v2595, %v2595
    %v3381 = vmul.f32 %v2596, %v2596
    %v3382 = vmul.f32 %v2597, %v2597
    %v3383 = vmul.f32 %v2598, %v2598
    %v3384 = vmul.f32 %v2599, %v2599
    %v3385 = vmul.f32 %v2600, %v2600
    %v3386 = vmul.f32 %v2601, %v2601
    %v3387 = vmul.f32 %v2602, %v2602
    %v3388 = vmul.f32 %v2603, %v2603
    %v3389 = vmul.f32 %v2604, %v2604
    %v3390 = vmul.f32 %v2605, %v2605
    %v3391 = vmul.f32 %v2606, %v2606
    %v3392 = vmul.f32 %v2607, %v2607
    %v3393 = vmul.f32 %v2608, %v2608
    %v3394 = vmul.f32 %v2609, %v2609
    %v3395 = vmul.f32 %v2610, %v2610
    %v3396 = vmul.f32 %v2611, %v2611
    %v3397 = vmul.f32 %v2612, %v2612
    %v3398 = vmul.f32 %v2613, %v2613
    %v3399 = vmul.f32 %v2614, %v2614
    %v3400 = vmul.f32 %v2615, %v2615
    %v3401 = vmul.f32 %v2616, %v2616
    %v3402 = vmul.f32 %v2617, %v2617
    %v3403 = vmul.f32 %v2618, %v2618
    %v3404 = vmul.f32 %v2619, %v2619
    %v3405 = vmul.f32 %v2620, %v2620
    %v3406 = vmul.f32 %v2621, %v2621
    %v3407 = vmul.f32 %v2622, %v2622
    %v3408 = vmul.f32 %v2623, %v2623
    %v3409 = vmul.f32 %v2624, %v2624
    %v3410 = vmul.f32 %v2625, %v2625
    %v3411 = vmul.f32 %v2626, %v2626
    %v3412 = vmul.f32 %v2627, %v2627
    %v3413 = vmul.f32 %v2628, %v2628
    %v3414 = vmul.f32 %v2629, %v2629
    %v3415 = vmul.f32 %v2630, %v2630
    %v3416 = vmul.f32 %v2631, %v2631
    %v3417 = vmul.f32 %v2632, %v2632
    %v3418 = vmul.f32 %v2633, %v2633
    %v3419 = vmul.f32 %v2634, %v2634
    %v3420 = vmul.f32 %v2635, %v2635
    %v3421 = vmul.f32 %v2636, %v2636
    %v3422 = vmul.f32 %v2637, %v2637
    %v3423 = vmul.f32 %v2638, %v2638
    %v3424 = vmul.f32 %v2639, %v2639
    %v3425 = vmul.f32 %v2640, %v2640
    %v3426 = vmul.f32 %v2641, %v2641
    %v3427 = vmul.f32 %v2642, %v2642
    %v3428 = vmul.f32 %v2643, %v2643
    %v3429 = vmul.f32 %v2644, %v2644
    %v3430 = vmul.f32 %v2645, %v2645
    %v3431 = vmul.f32 %v2646, %v2646
    %v3432 = vmul.f32 %v2647, %v2647
    %v3433 = vmul.f32 %v2648, %v2648
    %v3434 = vmul.f32 %v2649, %v2649
    %v3435 = vmul.f32 %v2650, %v2650
    %v3436 = vmul.f32 %v2651, %v2651
    %v3437 = vmul.f32 %v2652, %v2652
    %v3438 = vmul.f32 %v2653, %v2653
    %v3439 = vmul.f32 %v2654, %v2654
    %v3440 = vmul.f32 %v2655, %v2655
    %v3441 = vmul.f32 %v2656, %v2656
    %v3442 = vmul.f32 %v2657, %v2657
    %v3443 = vmul.f32 %v2658, %v2658
    %v3444 = vmul.f32 %v2659, %v2659
    %v3445 = vmul.f32 %v2660, %v2660
    %v3446 = vmul.f32 %v2661, %v2661
    %v3447 = vmul.f32 %v2662, %v2662
    %v3448 = vmul.f32 %v2663, %v2663
    %v3449 = vmul.f32 %v2664, %v2664
    %v3450 = vmul.f32 %v2665, %v2665
    %v3451 = vmul.f32 %v2666, %v2666
    %v3452 = vmul.f32 %v2667, %v2667
    %v3453 = vmul.f32 %v2668, %v2668
    %v3454 = vmul.f32 %v2669, %v2669
    %v3455 = vmul.f32 %v2670, %v2670
    %v3456 = vmul.f32 %v2671, %v2671
    %v3457 = vmul.f32 %v2672, %v2672
    %v3458 = vmul.f32 %v2673, %v2673
    %v3459 = vmul.f32 %v2674, %v2674
    %v3460 = vmul.f32 %v2675, %v2675
    %v3461 = vmul.f32 %v2676, %v2676
    %v3462 = vmul.f32 %v2677, %v2677
    %v3463 = vmul.f32 %v2678, %v2678
    %v3464 = vmul.f32 %v2679, %v2679
    %v3465 = vmul.f32 %v2680, %v2680
    %v3466 = vmul.f32 %v2681, %v2681
    %v3467 = vmul.f32 %v2682, %v2682
    %v3468 = vmul.f32 %v2683, %v2683
    %v3469 = vmul.f32 %v2684, %v2684
    %v3470 = vmul.f32 %v2685, %v2685
    %v3471 = vmul.f32 %v2686, %v2686
    %v3472 = vmul.f32 %v2687, %v2687
    %v3473 = vmul.f32 %v2688, %v2688
    %v3474 = vmul.f32 %v2689, %v2689
    %v3475 = vmul.f32 %v2690, %v2690
    %v3476 = vmul.f32 %v2691, %v2691
    %v3477 = vmul.f32 %v2692, %v2692
    %v3478 = vmul.f32 %v2693, %v2693
    %v3479 = vmul.f32 %v2694, %v2694
    %v3480 = vmul.f32 %v2695, %v2695
    %v3481 = vmul.f32 %v2696, %v2696
    %v3482 = vmul.f32 %v2697, %v2697
    %v3483 = vmul.f32 %v2698, %v2698
    %v3484 = vmul.f32 %v2699, %v2699
    %v3485 = vmul.f32 %v2700, %v2700
    %v3486 = vmul.f32 %v2701, %v2701
    %v3487 = vmul.f32 %v2702, %v2702
    %v3488 = vmul.f32 %v2703, %v2703
    %v3489 = vmul.f32 %v2704, %v2704
    %v3490 = vmul.f32 %v2705, %v2705
    %v3491 = vmul.f32 %v2706, %v2706
    %v3492 = vmul.f32 %v2707, %v2707
    %v3493 = vmul.f32 %v2708, %v2708
    %v3494 = vmul.f32 %v2709, %v2709
    %v3495 = vmul.f32 %v2710, %v2710
    %v3496 = vmul.f32 %v2711, %v2711
    %v3497 = vmul.f32 %v2712, %v2712
    %v3498 = vmul.f32 %v2713, %v2713
    %v3499 = vmul.f32 %v2714, %v2714
    %v3500 = vmul.f32 %v2715, %v2715
    %v3501 = vmul.f32 %v2716, %v2716
    %v3502 = vmul.f32 %v2717, %v2717
    %v3503 = vmul.f32 %v2718, %v2718
    %v3504 = vmul.f32 %v2719, %v2719
    %v3505 = vmul.f32 %v2720, %v2720
    %v3506 = vmul.f32 %v2721, %v2721
    %v3507 = vmul.f32 %v2722, %v2722
    %v3508 = vmul.f32 %v2723, %v2723
    %v3509 = vmul.f32 %v2724, %v2724
    %v3510 = vmul.f32 %v2725, %v2725
    %v3511 = vmul.f32 %v2726, %v2726
    %v3512 = vmul.f32 %v2727, %v2727
    %v3513 = vmul.f32 %v2728, %v2728
    %v3514 = vmul.f32 %v2729, %v2729
    %v3515 = vmul.f32 %v2730, %v2730
    %v3516 = vmul.f32 %v2731, %v2731
    %v3517 = vmul.f32 %v2732, %v2732
    %v3518 = vmul.f32 %v2733, %v2733
    %v3519 = vmul.f32 %v2734, %v2734
    %v3520 = vmul.f32 %v2735, %v2735
    %v3521 = vmul.f32 %v2736, %v2736
    %v3522 = vmul.f32 %v2737, %v2737
    %v3523 = vmul.f32 %v2738, %v2738
    %v3524 = vmul.f32 %v2739, %v2739
    %v3525 = vmul.f32 %v2740, %v2740
    %v3526 = vmul.f32 %v2741, %v2741
    %v3527 = vmul.f32 %v2742, %v2742
    %v3528 = vmul.f32 %v2743, %v2743
    %v3529 = vmul.f32 %v2744, %v2744
    %v3530 = vmul.f32 %v2745, %v2745
    %v3531 = vmul.f32 %v2746, %v2746
    %v3532 = vmul.f32 %v2747, %v2747
    %v3533 = vmul.f32 %v2748, %v2748
    %v3534 = vmul.f32 %v2749, %v2749
    %v3535 = vmul.f32 %v2750, %v2750
    %v3536 = vmul.f32 %v2751, %v2751
    %v3537 = vmul.f32 %v2752, %v2752
    %v3538 = vmul.f32 %v2753, %v2753
    %v3539 = vmul.f32 %v2754, %v2754
    %v3540 = vmul.f32 %v2755, %v2755
    %v3541 = vmul.f32 %v2756, %v2756
    %v3542 = vmul.f32 %v2757, %v2757
    %v3543 = vmul.f32 %v2758, %v2758
    %v3544 = vmul.f32 %v2759, %v2759
    %v3545 = vmul.f32 %v2760, %v2760
    %v3546 = vmul.f32 %v2761, %v2761
    %v3547 = vmul.f32 %v2762, %v2762
    %v3548 = vmul.f32 %v2763, %v2763
    %v3549 = vmul.f32 %v2764, %v2764
    %v3550 = vmul.f32 %v2765, %v2765
    %v3551 = vmul.f32 %v2766, %v2766
    %v3552 = vmul.f32 %v2767, %v2767
    %v3553 = vmul.f32 %v2768, %v2768
    %v3554 = vmul.f32 %v2769, %v2769
    %v3555 = vmul.f32 %v2770, %v2770
    %v3556 = vmul.f32 %v2771, %v2771
    %v3557 = vmul.f32 %v2772, %v2772
    %v3558 = vmul.f32 %v2773, %v2773
    %v3559 = vmul.f32 %v2774, %v2774
    %v3560 = vmul.f32 %v2775, %v2775
    %v3561 = vmul.f32 %v2776, %v2776
    %v3562 = vmul.f32 %v2777, %v2777
    %v3563 = vmul.f32 %v2778, %v2778
    %v3564 = vmul.f32 %v2779, %v2779
    %v3565 = vmul.f32 %v2780, %v2780
    %v3566 = vmul.f32 %v2781, %v2781
    %v3567 = vmul.f32 %v2782, %v2782
    %v3568 = vmul.f32 %v2783, %v2783
    %v3569 = vmul.f32 %v2784, %v2784
    %v3570 = vmul.f32 %v2785, %v2785
    %v3571 = vmul.f32 %v2786, %v2786
    %v3572 = vmul.f32 %v2787, %v2787
    %v3573 = vmul.f32 %v2788, %v2788
    %v3574 = vmul.f32 %v2789, %v2789
    %v3575 = vmul.f32 %v2790, %v2790
    %v3576 = vmul.f32 %v2791, %v2791
    %v3577 = vmul.f32 %v2792, %v2792
    %v3578 = vmul.f32 %v2793, %v2793
    %v3579 = vmul.f32 %v2794, %v2794
    %v3580 = vmul.f32 %v2795, %v2795
    %v3581 = vmul.f32 %v2796, %v2796
    %v3582 = vmul.f32 %v2797, %v2797
    %v3583 = vmul.f32 %v2798, %v2798
    %v3584 = vmul.f32 %v2799, %v2799
    %v3585 = vmul.f32 %v2800, %v2800
    %v3586 = vmul.f32 %v2801, %v2801
    %v3587 = vmul.f32 %v2802, %v2802
    %v3588 = vmul.f32 %v2803, %v2803
    %v3589 = vmul.f32 %v2804, %v2804
    %v3590 = vmul.f32 %v2805, %v2805
    %v3591 = vmul.f32 %v2806, %v2806
    %v3592 = vmul.f32 %v2807, %v2807
    %v3593 = vmul.f32 %v2808, %v2808
    %v3594 = vadd.f32 %v3203, %v3204
    %v3595 = vadd.f32 %v3594, %v3205
    %v3596 = vadd.f32 %v3595, %v3206
    %v3597 = vadd.f32 %v3596, %v3207
    %v3598 = vadd.f32 %v3597, %v3208
    %v3599 = vadd.f32 %v3598, %v3209
    %v3600 = vadd.f32 %v3599, %v3210
    %v3601 = vadd.f32 %v3600, %v3211
    %v3602 = vadd.f32 %v3601, %v3212
    %v3603 = vadd.f32 %v3602, %v3213
    %v3604 = vadd.f32 %v3603, %v3214
    %v3605 = vadd.f32 %v3604, %v3215
    %v3606 = vadd.f32 %v3605, %v3216
    %v3607 = vadd.f32 %v3606, %v3217
    %v3608 = vadd.f32 %v3607, %v3218
    %v3609 = vadd.f32 %v3608, %v3219
    %v3610 = vadd.f32 %v3609, %v3220
    %v3611 = vadd.f32 %v3610, %v3221
    %v3612 = vadd.f32 %v3611, %v3222
    %v3613 = vadd.f32 %v3612, %v3223
    %v3614 = vadd.f32 %v3613, %v3224
    %v3615 = vadd.f32 %v3614, %v3225
    %v3616 = vadd.f32 %v3615, %v3226
    %v3617 = vadd.f32 %v3616, %v3227
    %v3618 = vadd.f32 %v3617, %v3228
    %v3619 = vadd.f32 %v3618, %v3229
    %v3620 = vadd.f32 %v3619, %v3230
    %v3621 = vadd.f32 %v3620, %v3231
    %v3622 = vadd.f32 %v3621, %v3232
    %v3623 = vadd.f32 %v3622, %v3233
    %v3624 = vadd.f32 %v3623, %v3234
    %v3625 = vadd.f32 %v3624, %v3235
    %v3626 = vadd.f32 %v3625, %v3236
    %v3627 = vadd.f32 %v3626, %v3237
    %v3628 = vadd.f32 %v3627, %v3238
    %v3629 = vadd.f32 %v3628, %v3239
    %v3630 = vadd.f32 %v3629, %v3240
    %v3631 = vadd.f32 %v3630, %v3241
    %v3632 = vadd.f32 %v3631, %v3242
    %v3633 = vadd.f32 %v3632, %v3243
    %v3634 = vadd.f32 %v3633, %v3244
    %v3635 = vadd.f32 %v3634, %v3245
    %v3636 = vadd.f32 %v3635, %v3246
    %v3637 = vadd.f32 %v3636, %v3247
    %v3638 = vadd.f32 %v3637, %v3248
    %v3639 = vadd.f32 %v3638, %v3249
    %v3640 = vadd.f32 %v3639, %v3250
    %v3641 = vadd.f32 %v3640, %v3251
    %v3642 = vadd.f32 %v3641, %v3252
    %v3643 = vadd.f32 %v3642, %v3253
    %v3644 = vadd.f32 %v3643, %v3254
    %v3645 = vadd.f32 %v3644, %v3255
    %v3646 = vadd.f32 %v3645, %v3256
    %v3647 = vadd.f32 %v3646, %v3257
    %v3648 = vadd.f32 %v3647, %v3258
    %v3649 = vadd.f32 %v3648, %v3259
    %v3650 = vadd.f32 %v3649, %v3260
    %v3651 = vadd.f32 %v3650, %v3261
    %v3652 = vadd.f32 %v3651, %v3262
    %v3653 = vadd.f32 %v3652, %v3263
    %v3654 = vadd.f32 %v3653, %v3264
    %v3655 = vadd.f32 %v3654, %v3265
    %v3656 = vadd.f32 %v3655, %v3266
    %v3657 = vadd.f32 %v3656, %v3267
    %v3658 = vadd.f32 %v3657, %v3268
    %v3659 = vadd.f32 %v3658, %v3269
    %v3660 = vadd.f32 %v3659, %v3270
    %v3661 = vadd.f32 %v3660, %v3271
    %v3662 = vadd.f32 %v3661, %v3272
    %v3663 = vadd.f32 %v3662, %v3273
    %v3664 = vadd.f32 %v3663, %v3274
    %v3665 = vadd.f32 %v3664, %v3275
    %v3666 = vadd.f32 %v3665, %v3276
    %v3667 = vadd.f32 %v3666, %v3277
    %v3668 = vadd.f32 %v3667, %v3278
    %v3669 = vadd.f32 %v3668, %v3279
    %v3670 = vadd.f32 %v3669, %v3280
    %v3671 = vadd.f32 %v3670, %v3281
    %v3672 = vadd.f32 %v3671, %v3282
    %v3673 = vadd.f32 %v3672, %v3283
    %v3674 = vadd.f32 %v3673, %v3284
    %v3675 = vadd.f32 %v3674, %v3285
    %v3676 = vadd.f32 %v3675, %v3286
    %v3677 = vadd.f32 %v3676, %v3287
    %v3678 = vadd.f32 %v3677, %v3288
    %v3679 = vadd.f32 %v3678, %v3289
    %v3680 = vadd.f32 %v3679, %v3290
    %v3681 = vadd.f32 %v3680, %v3291
    %v3682 = vadd.f32 %v3681, %v3292
    %v3683 = vadd.f32 %v3682, %v3293
    %v3684 = vadd.f32 %v3683, %v3294
    %v3685 = vadd.f32 %v3684, %v3295
    %v3686 = vadd.f32 %v3685, %v3296
    %v3687 = vadd.f32 %v3686, %v3297
    %v3688 = vadd.f32 %v3687, %v3298
    %v3689 = vadd.f32 %v3688, %v3299
    %v3690 = vadd.f32 %v3689, %v3300
    %v3691 = vadd.f32 %v3690, %v3301
    %v3692 = vadd.f32 %v3691, %v3302
    %v3693 = vadd.f32 %v3692, %v3303
    %v3694 = vadd.f32 %v3693, %v3304
    %v3695 = vadd.f32 %v3694, %v3305
    %v3696 = vadd.f32 %v3695, %v3306
    %v3697 = vadd.f32 %v3696, %v3307
    %v3698 = vadd.f32 %v3697, %v3308
    %v3699 = vadd.f32 %v3698, %v3309
    %v3700 = vadd.f32 %v3699, %v3310
    %v3701 = vadd.f32 %v3700, %v3311
    %v3702 = vadd.f32 %v3701, %v3312
    %v3703 = vadd.f32 %v3702, %v3313
    %v3704 = vadd.f32 %v3703, %v3314
    %v3705 = vadd.f32 %v3704, %v3315
    %v3706 = vadd.f32 %v3705, %v3316
    %v3707 = vadd.f32 %v3706, %v3317
    %v3708 = vadd.f32 %v3707, %v3318
    %v3709 = vadd.f32 %v3708, %v3319
    %v3710 = vadd.f32 %v3709, %v3320
    %v3711 = vadd.f32 %v3710, %v3321
    %v3712 = vadd.f32 %v3711, %v3322
    %v3713 = vadd.f32 %v3712, %v3323
    %v3714 = vadd.f32 %v3713, %v3324
    %v3715 = vadd.f32 %v3714, %v3325
    %v3716 = vadd.f32 %v3715, %v3326
    %v3717 = vadd.f32 %v3716, %v3327
    %v3718 = vadd.f32 %v3717, %v3328
    %v3719 = vadd.f32 %v3718, %v3329
    %v3720 = vadd.f32 %v3719, %v3330
    %v3721 = vadd.f32 %v3720, %v3331
    %v3722 = vadd.f32 %v3721, %v3332
    %v3723 = vadd.f32 %v3722, %v3333
    %v3724 = vadd.f32 %v3723, %v3334
    %v3725 = vadd.f32 %v3724, %v3335
    %v3726 = vadd.f32 %v3725, %v3336
    %v3727 = vadd.f32 %v3726, %v3337
    %v3728 = vadd.f32 %v3727, %v3338
    %v3729 = vadd.f32 %v3728, %v3339
    %v3730 = vadd.f32 %v3729, %v3340
    %v3731 = vadd.f32 %v3730, %v3341
    %v3732 = vadd.f32 %v3731, %v3342
    %v3733 = vadd.f32 %v3732, %v3343
    %v3734 = vadd.f32 %v3733, %v3344
    %v3735 = vadd.f32 %v3734, %v3345
    %v3736 = vadd.f32 %v3735, %v3346
    %v3737 = vadd.f32 %v3736, %v3347
    %v3738 = vadd.f32 %v3737, %v3348
    %v3739 = vadd.f32 %v3738, %v3349
    %v3740 = vadd.f32 %v3739, %v3350
    %v3741 = vadd.f32 %v3740, %v3351
    %v3742 = vadd.f32 %v3741, %v3352
    %v3743 = vadd.f32 %v3742, %v3353
    %v3744 = vadd.f32 %v3743, %v3354
    %v3745 = vadd.f32 %v3744, %v3355
    %v3746 = vadd.f32 %v3745, %v3356
    %v3747 = vadd.f32 %v3746, %v3357
    %v3748 = vadd.f32 %v3747, %v3358
    %v3749 = vadd.f32 %v3748, %v3359
    %v3750 = vadd.f32 %v3749, %v3360
    %v3751 = vadd.f32 %v3750, %v3361
    %v3752 = vadd.f32 %v3751, %v3362
    %v3753 = vadd.f32 %v3752, %v3363
    %v3754 = vadd.f32 %v3753, %v3364
    %v3755 = vadd.f32 %v3754, %v3365
    %v3756 = vadd.f32 %v3755, %v3366
    %v3757 = vadd.f32 %v3756, %v3367
    %v3758 = vadd.f32 %v3757, %v3368
    %v3759 = vadd.f32 %v3758, %v3369
    %v3760 = vadd.f32 %v3759, %v3370
    %v3761 = vadd.f32 %v3760, %v3371
    %v3762 = vadd.f32 %v3761, %v3372
    %v3763 = vadd.f32 %v3762, %v3373
    %v3764 = vadd.f32 %v3763, %v3374
    %v3765 = vadd.f32 %v3764, %v3375
    %v3766 = vadd.f32 %v3765, %v3376
    %v3767 = vadd.f32 %v3766, %v3377
    %v3768 = vadd.f32 %v3767, %v3378
    %v3769 = vadd.f32 %v3768, %v3379
    %v3770 = vadd.f32 %v3769, %v3380
    %v3771 = vadd.f32 %v3770, %v3381
    %v3772 = vadd.f32 %v3771, %v3382
    %v3773 = vadd.f32 %v3772, %v3383
    %v3774 = vadd.f32 %v3773, %v3384
    %v3775 = vadd.f32 %v3774, %v3385
    %v3776 = vadd.f32 %v3775, %v3386
    %v3777 = vadd.f32 %v3776, %v3387
    %v3778 = vadd.f32 %v3777, %v3388
    %v3779 = vadd.f32 %v3778, %v3389
    %v3780 = vadd.f32 %v3779, %v3390
    %v3781 = vadd.f32 %v3780, %v3391
    %v3782 = vadd.f32 %v3781, %v3392
    %v3783 = vadd.f32 %v3782, %v3393
    %v3784 = vadd.f32 %v3783, %v3394
    %v3785 = vadd.f32 %v3784, %v3395
    %v3786 = vadd.f32 %v3785, %v3396
    %v3787 = vadd.f32 %v3786, %v3397
    %v3788 = vadd.f32 %v3787, %v3398
    %v3789 = vadd.f32 %v3788, %v3399
    %v3790 = vadd.f32 %v3789, %v3400
    %v3791 = vadd.f32 %v3790, %v3401
    %v3792 = vadd.f32 %v3791, %v3402
    %v3793 = vadd.f32 %v3792, %v3403
    %v3794 = vadd.f32 %v3793, %v3404
    %v3795 = vadd.f32 %v3794, %v3405
    %v3796 = vadd.f32 %v3795, %v3406
    %v3797 = vadd.f32 %v3796, %v3407
    %v3798 = vadd.f32 %v3797, %v3408
    %v3799 = vadd.f32 %v3798, %v3409
    %v3800 = vadd.f32 %v3799, %v3410
    %v3801 = vadd.f32 %v3800, %v3411
    %v3802 = vadd.f32 %v3801, %v3412
    %v3803 = vadd.f32 %v3802, %v3413
    %v3804 = vadd.f32 %v3803, %v3414
    %v3805 = vadd.f32 %v3804, %v3415
    %v3806 = vadd.f32 %v3805, %v3416
    %v3807 = vadd.f32 %v3806, %v3417
    %v3808 = vadd.f32 %v3807, %v3418
    %v3809 = vadd.f32 %v3808, %v3419
    %v3810 = vadd.f32 %v3809, %v3420
    %v3811 = vadd.f32 %v3810, %v3421
    %v3812 = vadd.f32 %v3811, %v3422
    %v3813 = vadd.f32 %v3812, %v3423
    %v3814 = vadd.f32 %v3813, %v3424
    %v3815 = vadd.f32 %v3814, %v3425
    %v3816 = vadd.f32 %v3815, %v3426
    %v3817 = vadd.f32 %v3816, %v3427
    %v3818 = vadd.f32 %v3817, %v3428
    %v3819 = vadd.f32 %v3818, %v3429
    %v3820 = vadd.f32 %v3819, %v3430
    %v3821 = vadd.f32 %v3820, %v3431
    %v3822 = vadd.f32 %v3821, %v3432
    %v3823 = vadd.f32 %v3822, %v3433
    %v3824 = vadd.f32 %v3823, %v3434
    %v3825 = vadd.f32 %v3824, %v3435
    %v3826 = vadd.f32 %v3825, %v3436
    %v3827 = vadd.f32 %v3826, %v3437
    %v3828 = vadd.f32 %v3827, %v3438
    %v3829 = vadd.f32 %v3828, %v3439
    %v3830 = vadd.f32 %v3829, %v3440
    %v3831 = vadd.f32 %v3830, %v3441
    %v3832 = vadd.f32 %v3831, %v3442
    %v3833 = vadd.f32 %v3832, %v3443
    %v3834 = vadd.f32 %v3833, %v3444
    %v3835 = vadd.f32 %v3834, %v3445
    %v3836 = vadd.f32 %v3835, %v3446
    %v3837 = vadd.f32 %v3836, %v3447
    %v3838 = vadd.f32 %v3837, %v3448
    %v3839 = vadd.f32 %v3838, %v3449
    %v3840 = vadd.f32 %v3839, %v3450
    %v3841 = vadd.f32 %v3840, %v3451
    %v3842 = vadd.f32 %v3841, %v3452
    %v3843 = vadd.f32 %v3842, %v3453
    %v3844 = vadd.f32 %v3843, %v3454
    %v3845 = vadd.f32 %v3844, %v3455
    %v3846 = vadd.f32 %v3845, %v3456
    %v3847 = vadd.f32 %v3846, %v3457
    %v3848 = vadd.f32 %v3847, %v3458
    %v3849 = vadd.f32 %v3848, %v3459
    %v3850 = vadd.f32 %v3849, %v3460
    %v3851 = vadd.f32 %v3850, %v3461
    %v3852 = vadd.f32 %v3851, %v3462
    %v3853 = vadd.f32 %v3852, %v3463
    %v3854 = vadd.f32 %v3853, %v3464
    %v3855 = vadd.f32 %v3854, %v3465
    %v3856 = vadd.f32 %v3855, %v3466
    %v3857 = vadd.f32 %v3856, %v3467
    %v3858 = vadd.f32 %v3857, %v3468
    %v3859 = vadd.f32 %v3858, %v3469
    %v3860 = vadd.f32 %v3859, %v3470
    %v3861 = vadd.f32 %v3860, %v3471
    %v3862 = vadd.f32 %v3861, %v3472
    %v3863 = vadd.f32 %v3862, %v3473
    %v3864 = vadd.f32 %v3863, %v3474
    %v3865 = vadd.f32 %v3864, %v3475
    %v3866 = vadd.f32 %v3865, %v3476
    %v3867 = vadd.f32 %v3866, %v3477
    %v3868 = vadd.f32 %v3867, %v3478
    %v3869 = vadd.f32 %v3868, %v3479
    %v3870 = vadd.f32 %v3869, %v3480
    %v3871 = vadd.f32 %v3870, %v3481
    %v3872 = vadd.f32 %v3871, %v3482
    %v3873 = vadd.f32 %v3872, %v3483
    %v3874 = vadd.f32 %v3873, %v3484
    %v3875 = vadd.f32 %v3874, %v3485
    %v3876 = vadd.f32 %v3875, %v3486
    %v3877 = vadd.f32 %v3876, %v3487
    %v3878 = vadd.f32 %v3877, %v3488
    %v3879 = vadd.f32 %v3878, %v3489
    %v3880 = vadd.f32 %v3879, %v3490
    %v3881 = vadd.f32 %v3880, %v3491
    %v3882 = vadd.f32 %v3881, %v3492
    %v3883 = vadd.f32 %v3882, %v3493
    %v3884 = vadd.f32 %v3883, %v3494
    %v3885 = vadd.f32 %v3884, %v3495
    %v3886 = vadd.f32 %v3885, %v3496
    %v3887 = vadd.f32 %v3886, %v3497
    %v3888 = vadd.f32 %v3887, %v3498
    %v3889 = vadd.f32 %v3888, %v3499
    %v3890 = vadd.f32 %v3889, %v3500
    %v3891 = vadd.f32 %v3890, %v3501
    %v3892 = vadd.f32 %v3891, %v3502
    %v3893 = vadd.f32 %v3892, %v3503
    %v3894 = vadd.f32 %v3893, %v3504
    %v3895 = vadd.f32 %v3894, %v3505
    %v3896 = vadd.f32 %v3895, %v3506
    %v3897 = vadd.f32 %v3896, %v3507
    %v3898 = vadd.f32 %v3897, %v3508
    %v3899 = vadd.f32 %v3898, %v3509
    %v3900 = vadd.f32 %v3899, %v3510
    %v3901 = vadd.f32 %v3900, %v3511
    %v3902 = vadd.f32 %v3901, %v3512
    %v3903 = vadd.f32 %v3902, %v3513
    %v3904 = vadd.f32 %v3903, %v3514
    %v3905 = vadd.f32 %v3904, %v3515
    %v3906 = vadd.f32 %v3905, %v3516
    %v3907 = vadd.f32 %v3906, %v3517
    %v3908 = vadd.f32 %v3907, %v3518
    %v3909 = vadd.f32 %v3908, %v3519
    %v3910 = vadd.f32 %v3909, %v3520
    %v3911 = vadd.f32 %v3910, %v3521
    %v3912 = vadd.f32 %v3911, %v3522
    %v3913 = vadd.f32 %v3912, %v3523
    %v3914 = vadd.f32 %v3913, %v3524
    %v3915 = vadd.f32 %v3914, %v3525
    %v3916 = vadd.f32 %v3915, %v3526
    %v3917 = vadd.f32 %v3916, %v3527
    %v3918 = vadd.f32 %v3917, %v3528
    %v3919 = vadd.f32 %v3918, %v3529
    %v3920 = vadd.f32 %v3919, %v3530
    %v3921 = vadd.f32 %v3920, %v3531
    %v3922 = vadd.f32 %v3921, %v3532
    %v3923 = vadd.f32 %v3922, %v3533
    %v3924 = vadd.f32 %v3923, %v3534
    %v3925 = vadd.f32 %v3924, %v3535
    %v3926 = vadd.f32 %v3925, %v3536
    %v3927 = vadd.f32 %v3926, %v3537
    %v3928 = vadd.f32 %v3927, %v3538
    %v3929 = vadd.f32 %v3928, %v3539
    %v3930 = vadd.f32 %v3929, %v3540
    %v3931 = vadd.f32 %v3930, %v3541
    %v3932 = vadd.f32 %v3931, %v3542
    %v3933 = vadd.f32 %v3932, %v3543
    %v3934 = vadd.f32 %v3933, %v3544
    %v3935 = vadd.f32 %v3934, %v3545
    %v3936 = vadd.f32 %v3935, %v3546
    %v3937 = vadd.f32 %v3936, %v3547
    %v3938 = vadd.f32 %v3937, %v3548
    %v3939 = vadd.f32 %v3938, %v3549
    %v3940 = vadd.f32 %v3939, %v3550
    %v3941 = vadd.f32 %v3940, %v3551
    %v3942 = vadd.f32 %v3941, %v3552
    %v3943 = vadd.f32 %v3942, %v3553
    %v3944 = vadd.f32 %v3943, %v3554
    %v3945 = vadd.f32 %v3944, %v3555
    %v3946 = vadd.f32 %v3945, %v3556
    %v3947 = vadd.f32 %v3946, %v3557
    %v3948 = vadd.f32 %v3947, %v3558
    %v3949 = vadd.f32 %v3948, %v3559
    %v3950 = vadd.f32 %v3949, %v3560
    %v3951 = vadd.f32 %v3950, %v3561
    %v3952 = vadd.f32 %v3951, %v3562
    %v3953 = vadd.f32 %v3952, %v3563
    %v3954 = vadd.f32 %v3953, %v3564
    %v3955 = vadd.f32 %v3954, %v3565
    %v3956 = vadd.f32 %v3955, %v3566
    %v3957 = vadd.f32 %v3956, %v3567
    %v3958 = vadd.f32 %v3957, %v3568
    %v3959 = vadd.f32 %v3958, %v3569
    %v3960 = vadd.f32 %v3959, %v3570
    %v3961 = vadd.f32 %v3960, %v3571
    %v3962 = vadd.f32 %v3961, %v3572
    %v3963 = vadd.f32 %v3962, %v3573
    %v3964 = vadd.f32 %v3963, %v3574
    %v3965 = vadd.f32 %v3964, %v3575
    %v3966 = vadd.f32 %v3965, %v3576
    %v3967 = vadd.f32 %v3966, %v3577
    %v3968 = vadd.f32 %v3967, %v3578
    %v3969 = vadd.f32 %v3968, %v3579
    %v3970 = vadd.f32 %v3969, %v3580
    %v3971 = vadd.f32 %v3970, %v3581
    %v3972 = vadd.f32 %v3971, %v3582
    %v3973 = vadd.f32 %v3972, %v3583
    %v3974 = vadd.f32 %v3973, %v3584
    %v3975 = vadd.f32 %v3974, %v3585
    %v3976 = vadd.f32 %v3975, %v3586
    %v3977 = vadd.f32 %v3976, %v3587
    %v3978 = vadd.f32 %v3977, %v3588
    %v3979 = vadd.f32 %v3978, %v3589
    %v3980 = vadd.f32 %v3979, %v3590
    %v3981 = vadd.f32 %v3980, %v3591
    %v3982 = vadd.f32 %v3981, %v3592
    %v3983 = vsel %vm2395, %v3593, 0.0
    %v3984 = vadd.f32 %v3982, %v3983
    %3985 = vadd.xlane.f32.xlu0 %v3984
    %v3986 = vpop.xlane.xlu0 %3985
    %v3987 = vmul.f32 %v3986, 1.99976e-05
    %v3988 = vmul.f32 %v3202, %v3202
    %v3989 = vsub.f32 %v3987, %v3988
    %v3990 = vmax.f32 %v3989, 0.0
    %v3991 = vadd.f32 %v3990, 1e-05
    %v3992 = vrsqrt.pop %v3991
    %v3993 = vsub.f32 %v2418, %v3202
    %v3994 = vsub.f32 %v2419, %v3202
    %v3995 = vsub.f32 %v2420, %v3202
    %v3996 = vsub.f32 %v2421, %v3202
    %v3997 = vsub.f32 %v2422, %v3202
    %v3998 = vsub.f32 %v2423, %v3202
    %v3999 = vsub.f32 %v2424, %v3202
    %v4000 = vsub.f32 %v2425, %v3202
    %v4001 = vsub.f32 %v2426, %v3202
    %v4002 = vsub.f32 %v2427, %v3202
    %v4003 = vsub.f32 %v2428, %v3202
    %v4004 = vsub.f32 %v2429, %v3202
    %v4005 = vsub.f32 %v2430, %v3202
    %v4006 = vsub.f32 %v2431, %v3202
    %v4007 = vsub.f32 %v2432, %v3202
    %v4008 = vsub.f32 %v2433, %v3202
    %v4009 = vsub.f32 %v2434, %v3202
    %v4010 = vsub.f32 %v2435, %v3202
    %v4011 = vsub.f32 %v2436, %v3202
    %v4012 = vsub.f32 %v2437, %v3202
    %v4013 = vsub.f32 %v2438, %v3202
    %v4014 = vsub.f32 %v2439, %v3202
    %v4015 = vsub.f32 %v2440, %v3202
    %v4016 = vsub.f32 %v2441, %v3202
    %v4017 = vsub.f32 %v2442, %v3202
    %v4018 = vsub.f32 %v2443, %v3202
    %v4019 = vsub.f32 %v2444, %v3202
    %v4020 = vsub.f32 %v2445, %v3202
    %v4021 = vsub.f32 %v2446, %v3202
    %v4022 = vsub.f32 %v2447, %v3202
    %v4023 = vsub.f32 %v2448, %v3202
    %v4024 = vsub.f32 %v2449, %v3202
    %v4025 = vsub.f32 %v2450, %v3202
    %v4026 = vsub.f32 %v2451, %v3202
    %v4027 = vsub.f32 %v2452, %v3202
    %v4028 = vsub.f32 %v2453, %v3202
    %v4029 = vsub.f32 %v2454, %v3202
    %v4030 = vsub.f32 %v2455, %v3202
    %v4031 = vsub.f32 %v2456, %v3202
    %v4032 = vsub.f32 %v2457, %v3202
    %v4033 = vsub.f32 %v2458, %v3202
    %v4034 = vsub.f32 %v2459, %v3202
    %v4035 = vsub.f32 %v2460, %v3202
    %v4036 = vsub.f32 %v2461, %v3202
    %v4037 = vsub.f32 %v2462, %v3202
    %v4038 = vsub.f32 %v2463, %v3202
    %v4039 = vsub.f32 %v2464, %v3202
    %v4040 = vsub.f32 %v2465, %v3202
    %v4041 = vsub.f32 %v2466, %v3202
    %v4042 = vsub.f32 %v2467, %v3202
    %v4043 = vsub.f32 %v2468, %v3202
    %v4044 = vsub.f32 %v2469, %v3202
    %v4045 = vsub.f32 %v2470, %v3202
    %v4046 = vsub.f32 %v2471, %v3202
    %v4047 = vsub.f32 %v2472, %v3202
    %v4048 = vsub.f32 %v2473, %v3202
    %v4049 = vsub.f32 %v2474, %v3202
    %v4050 = vsub.f32 %v2475, %v3202
    %v4051 = vsub.f32 %v2476, %v3202
    %v4052 = vsub.f32 %v2477, %v3202
    %v4053 = vsub.f32 %v2478, %v3202
    %v4054 = vsub.f32 %v2479, %v3202
    %v4055 = vsub.f32 %v2480, %v3202
    %v4056 = vsub.f32 %v2481, %v3202
    %v4057 = vsub.f32 %v2482, %v3202
    %v4058 = vsub.f32 %v2483, %v3202
    %v4059 = vsub.f32 %v2484, %v3202
    %v4060 = vsub.f32 %v2485, %v3202
    %v4061 = vsub.f32 %v2486, %v3202
    %v4062 = vsub.f32 %v2487, %v3202
    %v4063 = vsub.f32 %v2488, %v3202
    %v4064 = vsub.f32 %v2489, %v3202
    %v4065 = vsub.f32 %v2490, %v3202
    %v4066 = vsub.f32 %v2491, %v3202
    %v4067 = vsub.f32 %v2492, %v3202
    %v4068 = vsub.f32 %v2493, %v3202
    %v4069 = vsub.f32 %v2494, %v3202
    %v4070 = vsub.f32 %v2495, %v3202
    %v4071 = vsub.f32 %v2496, %v3202
    %v4072 = vsub.f32 %v2497, %v3202
    %v4073 = vsub.f32 %v2498, %v3202
    %v4074 = vsub.f32 %v2499, %v3202
    %v4075 = vsub.f32 %v2500, %v3202
    %v4076 = vsub.f32 %v2501, %v3202
    %v4077 = vsub.f32 %v2502, %v3202
    %v4078 = vsub.f32 %v2503, %v3202
    %v4079 = vsub.f32 %v2504, %v3202
    %v4080 = vsub.f32 %v2505, %v3202
    %v4081 = vsub.f32 %v2506, %v3202
    %v4082 = vsub.f32 %v2507, %v3202
    %v4083 = vsub.f32 %v2508, %v3202
    %v4084 = vsub.f32 %v2509, %v3202
    %v4085 = vsub.f32 %v2510, %v3202
    %v4086 = vsub.f32 %v2511, %v3202
    %v4087 = vsub.f32 %v2512, %v3202
    %v4088 = vsub.f32 %v2513, %v3202
    %v4089 = vsub.f32 %v2514, %v3202
    %v4090 = vsub.f32 %v2515, %v3202
    %v4091 = vsub.f32 %v2516, %v3202
    %v4092 = vsub.f32 %v2517, %v3202
    %v4093 = vsub.f32 %v2518, %v3202
    %v4094 = vsub.f32 %v2519, %v3202
    %v4095 = vsub.f32 %v2520, %v3202
    %v4096 = vsub.f32 %v2521, %v3202
    %v4097 = vsub.f32 %v2522, %v3202
    %v4098 = vsub.f32 %v2523, %v3202
    %v4099 = vsub.f32 %v2524, %v3202
    %v4100 = vsub.f32 %v2525, %v3202
    %v4101 = vsub.f32 %v2526, %v3202
    %v4102 = vsub.f32 %v2527, %v3202
    %v4103 = vsub.f32 %v2528, %v3202
    %v4104 = vsub.f32 %v2529, %v3202
    %v4105 = vsub.f32 %v2530, %v3202
    %v4106 = vsub.f32 %v2531, %v3202
    %v4107 = vsub.f32 %v2532, %v3202
    %v4108 = vsub.f32 %v2533, %v3202
    %v4109 = vsub.f32 %v2534, %v3202
    %v4110 = vsub.f32 %v2535, %v3202
    %v4111 = vsub.f32 %v2536, %v3202
    %v4112 = vsub.f32 %v2537, %v3202
    %v4113 = vsub.f32 %v2538, %v3202
    %v4114 = vsub.f32 %v2539, %v3202
    %v4115 = vsub.f32 %v2540, %v3202
    %v4116 = vsub.f32 %v2541, %v3202
    %v4117 = vsub.f32 %v2542, %v3202
    %v4118 = vsub.f32 %v2543, %v3202
    %v4119 = vsub.f32 %v2544, %v3202
    %v4120 = vsub.f32 %v2545, %v3202
    %v4121 = vsub.f32 %v2546, %v3202
    %v4122 = vsub.f32 %v2547, %v3202
    %v4123 = vsub.f32 %v2548, %v3202
    %v4124 = vsub.f32 %v2549, %v3202
    %v4125 = vsub.f32 %v2550, %v3202
    %v4126 = vsub.f32 %v2551, %v3202
    %v4127 = vsub.f32 %v2552, %v3202
    %v4128 = vsub.f32 %v2553, %v3202
    %v4129 = vsub.f32 %v2554, %v3202
    %v4130 = vsub.f32 %v2555, %v3202
    %v4131 = vsub.f32 %v2556, %v3202
    %v4132 = vsub.f32 %v2557, %v3202
    %v4133 = vsub.f32 %v2558, %v3202
    %v4134 = vsub.f32 %v2559, %v3202
    %v4135 = vsub.f32 %v2560, %v3202
    %v4136 = vsub.f32 %v2561, %v3202
    %v4137 = vsub.f32 %v2562, %v3202
    %v4138 = vsub.f32 %v2563, %v3202
    %v4139 = vsub.f32 %v2564, %v3202
    %v4140 = vsub.f32 %v2565, %v3202
    %v4141 = vsub.f32 %v2566, %v3202
    %v4142 = vsub.f32 %v2567, %v3202
    %v4143 = vsub.f32 %v2568, %v3202
    %v4144 = vsub.f32 %v2569, %v3202
    %v4145 = vsub.f32 %v2570, %v3202
    %v4146 = vsub.f32 %v2571, %v3202
    %v4147 = vsub.f32 %v2572, %v3202
    %v4148 = vsub.f32 %v2573, %v3202
    %v4149 = vsub.f32 %v2574, %v3202
    %v4150 = vsub.f32 %v2575, %v3202
    %v4151 = vsub.f32 %v2576, %v3202
    %v4152 = vsub.f32 %v2577, %v3202
    %v4153 = vsub.f32 %v2578, %v3202
    %v4154 = vsub.f32 %v2579, %v3202
    %v4155 = vsub.f32 %v2580, %v3202
    %v4156 = vsub.f32 %v2581, %v3202
    %v4157 = vsub.f32 %v2582, %v3202
    %v4158 = vsub.f32 %v2583, %v3202
    %v4159 = vsub.f32 %v2584, %v3202
    %v4160 = vsub.f32 %v2585, %v3202
    %v4161 = vsub.f32 %v2586, %v3202
    %v4162 = vsub.f32 %v2587, %v3202
    %v4163 = vsub.f32 %v2588, %v3202
    %v4164 = vsub.f32 %v2589, %v3202
    %v4165 = vsub.f32 %v2590, %v3202
    %v4166 = vsub.f32 %v2591, %v3202
    %v4167 = vsub.f32 %v2592, %v3202
    %v4168 = vsub.f32 %v2593, %v3202
    %v4169 = vsub.f32 %v2594, %v3202
    %v4170 = vsub.f32 %v2595, %v3202
    %v4171 = vsub.f32 %v2596, %v3202
    %v4172 = vsub.f32 %v2597, %v3202
    %v4173 = vsub.f32 %v2598, %v3202
    %v4174 = vsub.f32 %v2599, %v3202
    %v4175 = vsub.f32 %v2600, %v3202
    %v4176 = vsub.f32 %v2601, %v3202
    %v4177 = vsub.f32 %v2602, %v3202
    %v4178 = vsub.f32 %v2603, %v3202
    %v4179 = vsub.f32 %v2604, %v3202
    %v4180 = vsub.f32 %v2605, %v3202
    %v4181 = vsub.f32 %v2606, %v3202
    %v4182 = vsub.f32 %v2607, %v3202
    %v4183 = vsub.f32 %v2608, %v3202
    %v4184 = vsub.f32 %v2609, %v3202
    %v4185 = vsub.f32 %v2610, %v3202
    %v4186 = vsub.f32 %v2611, %v3202
    %v4187 = vsub.f32 %v2612, %v3202
    %v4188 = vsub.f32 %v2613, %v3202
    %v4189 = vsub.f32 %v2614, %v3202
    %v4190 = vsub.f32 %v2615, %v3202
    %v4191 = vsub.f32 %v2616, %v3202
    %v4192 = vsub.f32 %v2617, %v3202
    %v4193 = vsub.f32 %v2618, %v3202
    %v4194 = vsub.f32 %v2619, %v3202
    %v4195 = vsub.f32 %v2620, %v3202
    %v4196 = vsub.f32 %v2621, %v3202
    %v4197 = vsub.f32 %v2622, %v3202
    %v4198 = vsub.f32 %v2623, %v3202
    %v4199 = vsub.f32 %v2624, %v3202
    %v4200 = vsub.f32 %v2625, %v3202
    %v4201 = vsub.f32 %v2626, %v3202
    %v4202 = vsub.f32 %v2627, %v3202
    %v4203 = vsub.f32 %v2628, %v3202
    %v4204 = vsub.f32 %v2629, %v3202
    %v4205 = vsub.f32 %v2630, %v3202
    %v4206 = vsub.f32 %v2631, %v3202
    %v4207 = vsub.f32 %v2632, %v3202
    %v4208 = vsub.f32 %v2633, %v3202
    %v4209 = vsub.f32 %v2634, %v3202
    %v4210 = vsub.f32 %v2635, %v3202
    %v4211 = vsub.f32 %v2636, %v3202
    %v4212 = vsub.f32 %v2637, %v3202
    %v4213 = vsub.f32 %v2638, %v3202
    %v4214 = vsub.f32 %v2639, %v3202
    %v4215 = vsub.f32 %v2640, %v3202
    %v4216 = vsub.f32 %v2641, %v3202
    %v4217 = vsub.f32 %v2642, %v3202
    %v4218 = vsub.f32 %v2643, %v3202
    %v4219 = vsub.f32 %v2644, %v3202
    %v4220 = vsub.f32 %v2645, %v3202
    %v4221 = vsub.f32 %v2646, %v3202
    %v4222 = vsub.f32 %v2647, %v3202
    %v4223 = vsub.f32 %v2648, %v3202
    %v4224 = vsub.f32 %v2649, %v3202
    %v4225 = vsub.f32 %v2650, %v3202
    %v4226 = vsub.f32 %v2651, %v3202
    %v4227 = vsub.f32 %v2652, %v3202
    %v4228 = vsub.f32 %v2653, %v3202
    %v4229 = vsub.f32 %v2654, %v3202
    %v4230 = vsub.f32 %v2655, %v3202
    %v4231 = vsub.f32 %v2656, %v3202
    %v4232 = vsub.f32 %v2657, %v3202
    %v4233 = vsub.f32 %v2658, %v3202
    %v4234 = vsub.f32 %v2659, %v3202
    %v4235 = vsub.f32 %v2660, %v3202
    %v4236 = vsub.f32 %v2661, %v3202
    %v4237 = vsub.f32 %v2662, %v3202
    %v4238 = vsub.f32 %v2663, %v3202
    %v4239 = vsub.f32 %v2664, %v3202
    %v4240 = vsub.f32 %v2665, %v3202
    %v4241 = vsub.f32 %v2666, %v3202
    %v4242 = vsub.f32 %v2667, %v3202
    %v4243 = vsub.f32 %v2668, %v3202
    %v4244 = vsub.f32 %v2669, %v3202
    %v4245 = vsub.f32 %v2670, %v3202
    %v4246 = vsub.f32 %v2671, %v3202
    %v4247 = vsub.f32 %v2672, %v3202
    %v4248 = vsub.f32 %v2673, %v3202
    %v4249 = vsub.f32 %v2674, %v3202
    %v4250 = vsub.f32 %v2675, %v3202
    %v4251 = vsub.f32 %v2676, %v3202
    %v4252 = vsub.f32 %v2677, %v3202
    %v4253 = vsub.f32 %v2678, %v3202
    %v4254 = vsub.f32 %v2679, %v3202
    %v4255 = vsub.f32 %v2680, %v3202
    %v4256 = vsub.f32 %v2681, %v3202
    %v4257 = vsub.f32 %v2682, %v3202
    %v4258 = vsub.f32 %v2683, %v3202
    %v4259 = vsub.f32 %v2684, %v3202
    %v4260 = vsub.f32 %v2685, %v3202
    %v4261 = vsub.f32 %v2686, %v3202
    %v4262 = vsub.f32 %v2687, %v3202
    %v4263 = vsub.f32 %v2688, %v3202
    %v4264 = vsub.f32 %v2689, %v3202
    %v4265 = vsub.f32 %v2690, %v3202
    %v4266 = vsub.f32 %v2691, %v3202
    %v4267 = vsub.f32 %v2692, %v3202
    %v4268 = vsub.f32 %v2693, %v3202
    %v4269 = vsub.f32 %v2694, %v3202
    %v4270 = vsub.f32 %v2695, %v3202
    %v4271 = vsub.f32 %v2696, %v3202
    %v4272 = vsub.f32 %v2697, %v3202
    %v4273 = vsub.f32 %v2698, %v3202
    %v4274 = vsub.f32 %v2699, %v3202
    %v4275 = vsub.f32 %v2700, %v3202
    %v4276 = vsub.f32 %v2701, %v3202
    %v4277 = vsub.f32 %v2702, %v3202
    %v4278 = vsub.f32 %v2703, %v3202
    %v4279 = vsub.f32 %v2704, %v3202
    %v4280 = vsub.f32 %v2705, %v3202
    %v4281 = vsub.f32 %v2706, %v3202
    %v4282 = vsub.f32 %v2707, %v3202
    %v4283 = vsub.f32 %v2708, %v3202
    %v4284 = vsub.f32 %v2709, %v3202
    %v4285 = vsub.f32 %v2710, %v3202
    %v4286 = vsub.f32 %v2711, %v3202
    %v4287 = vsub.f32 %v2712, %v3202
    %v4288 = vsub.f32 %v2713, %v3202
    %v4289 = vsub.f32 %v2714, %v3202
    %v4290 = vsub.f32 %v2715, %v3202
    %v4291 = vsub.f32 %v2716, %v3202
    %v4292 = vsub.f32 %v2717, %v3202
    %v4293 = vsub.f32 %v2718, %v3202
    %v4294 = vsub.f32 %v2719, %v3202
    %v4295 = vsub.f32 %v2720, %v3202
    %v4296 = vsub.f32 %v2721, %v3202
    %v4297 = vsub.f32 %v2722, %v3202
    %v4298 = vsub.f32 %v2723, %v3202
    %v4299 = vsub.f32 %v2724, %v3202
    %v4300 = vsub.f32 %v2725, %v3202
    %v4301 = vsub.f32 %v2726, %v3202
    %v4302 = vsub.f32 %v2727, %v3202
    %v4303 = vsub.f32 %v2728, %v3202
    %v4304 = vsub.f32 %v2729, %v3202
    %v4305 = vsub.f32 %v2730, %v3202
    %v4306 = vsub.f32 %v2731, %v3202
    %v4307 = vsub.f32 %v2732, %v3202
    %v4308 = vsub.f32 %v2733, %v3202
    %v4309 = vsub.f32 %v2734, %v3202
    %v4310 = vsub.f32 %v2735, %v3202
    %v4311 = vsub.f32 %v2736, %v3202
    %v4312 = vsub.f32 %v2737, %v3202
    %v4313 = vsub.f32 %v2738, %v3202
    %v4314 = vsub.f32 %v2739, %v3202
    %v4315 = vsub.f32 %v2740, %v3202
    %v4316 = vsub.f32 %v2741, %v3202
    %v4317 = vsub.f32 %v2742, %v3202
    %v4318 = vsub.f32 %v2743, %v3202
    %v4319 = vsub.f32 %v2744, %v3202
    %v4320 = vsub.f32 %v2745, %v3202
    %v4321 = vsub.f32 %v2746, %v3202
    %v4322 = vsub.f32 %v2747, %v3202
    %v4323 = vsub.f32 %v2748, %v3202
    %v4324 = vsub.f32 %v2749, %v3202
    %v4325 = vsub.f32 %v2750, %v3202
    %v4326 = vsub.f32 %v2751, %v3202
    %v4327 = vsub.f32 %v2752, %v3202
    %v4328 = vsub.f32 %v2753, %v3202
    %v4329 = vsub.f32 %v2754, %v3202
    %v4330 = vsub.f32 %v2755, %v3202
    %v4331 = vsub.f32 %v2756, %v3202
    %v4332 = vsub.f32 %v2757, %v3202
    %v4333 = vsub.f32 %v2758, %v3202
    %v4334 = vsub.f32 %v2759, %v3202
    %v4335 = vsub.f32 %v2760, %v3202
    %v4336 = vsub.f32 %v2761, %v3202
    %v4337 = vsub.f32 %v2762, %v3202
    %v4338 = vsub.f32 %v2763, %v3202
    %v4339 = vsub.f32 %v2764, %v3202
    %v4340 = vsub.f32 %v2765, %v3202
    %v4341 = vsub.f32 %v2766, %v3202
    %v4342 = vsub.f32 %v2767, %v3202
    %v4343 = vsub.f32 %v2768, %v3202
    %v4344 = vsub.f32 %v2769, %v3202
    %v4345 = vsub.f32 %v2770, %v3202
    %v4346 = vsub.f32 %v2771, %v3202
    %v4347 = vsub.f32 %v2772, %v3202
    %v4348 = vsub.f32 %v2773, %v3202
    %v4349 = vsub.f32 %v2774, %v3202
    %v4350 = vsub.f32 %v2775, %v3202
    %v4351 = vsub.f32 %v2776, %v3202
    %v4352 = vsub.f32 %v2777, %v3202
    %v4353 = vsub.f32 %v2778, %v3202
    %v4354 = vsub.f32 %v2779, %v3202
    %v4355 = vsub.f32 %v2780, %v3202
    %v4356 = vsub.f32 %v2781, %v3202
    %v4357 = vsub.f32 %v2782, %v3202
    %v4358 = vsub.f32 %v2783, %v3202
    %v4359 = vsub.f32 %v2784, %v3202
    %v4360 = vsub.f32 %v2785, %v3202
    %v4361 = vsub.f32 %v2786, %v3202
    %v4362 = vsub.f32 %v2787, %v3202
    %v4363 = vsub.f32 %v2788, %v3202
    %v4364 = vsub.f32 %v2789, %v3202
    %v4365 = vsub.f32 %v2790, %v3202
    %v4366 = vsub.f32 %v2791, %v3202
    %v4367 = vsub.f32 %v2792, %v3202
    %v4368 = vsub.f32 %v2793, %v3202
    %v4369 = vsub.f32 %v2794, %v3202
    %v4370 = vsub.f32 %v2795, %v3202
    %v4371 = vsub.f32 %v2796, %v3202
    %v4372 = vsub.f32 %v2797, %v3202
    %v4373 = vsub.f32 %v2798, %v3202
    %v4374 = vsub.f32 %v2799, %v3202
    %v4375 = vsub.f32 %v2800, %v3202
    %v4376 = vsub.f32 %v2801, %v3202
    %v4377 = vsub.f32 %v2802, %v3202
    %v4378 = vsub.f32 %v2803, %v3202
    %v4379 = vsub.f32 %v2804, %v3202
    %v4380 = vsub.f32 %v2805, %v3202
    %v4381 = vsub.f32 %v2806, %v3202
    %v4382 = vsub.f32 %v2807, %v3202
    %v4383 = vsub.f32 %v2808, %v3202
    %v4384 = vmul.f32 %v3993, %v3992
    %v4385 = vmul.f32 %v3994, %v3992
    %v4386 = vmul.f32 %v3995, %v3992
    %v4387 = vmul.f32 %v3996, %v3992
    %v4388 = vmul.f32 %v3997, %v3992
    %v4389 = vmul.f32 %v3998, %v3992
    %v4390 = vmul.f32 %v3999, %v3992
    %v4391 = vmul.f32 %v4000, %v3992
    %v4392 = vmul.f32 %v4001, %v3992
    %v4393 = vmul.f32 %v4002, %v3992
    %v4394 = vmul.f32 %v4003, %v3992
    %v4395 = vmul.f32 %v4004, %v3992
    %v4396 = vmul.f32 %v4005, %v3992
    %v4397 = vmul.f32 %v4006, %v3992
    %v4398 = vmul.f32 %v4007, %v3992
    %v4399 = vmul.f32 %v4008, %v3992
    %v4400 = vmul.f32 %v4009, %v3992
    %v4401 = vmul.f32 %v4010, %v3992
    %v4402 = vmul.f32 %v4011, %v3992
    %v4403 = vmul.f32 %v4012, %v3992
    %v4404 = vmul.f32 %v4013, %v3992
    %v4405 = vmul.f32 %v4014, %v3992
    %v4406 = vmul.f32 %v4015, %v3992
    %v4407 = vmul.f32 %v4016, %v3992
    %v4408 = vmul.f32 %v4017, %v3992
    %v4409 = vmul.f32 %v4018, %v3992
    %v4410 = vmul.f32 %v4019, %v3992
    %v4411 = vmul.f32 %v4020, %v3992
    %v4412 = vmul.f32 %v4021, %v3992
    %v4413 = vmul.f32 %v4022, %v3992
    %v4414 = vmul.f32 %v4023, %v3992
    %v4415 = vmul.f32 %v4024, %v3992
    %v4416 = vmul.f32 %v4025, %v3992
    %v4417 = vmul.f32 %v4026, %v3992
    %v4418 = vmul.f32 %v4027, %v3992
    %v4419 = vmul.f32 %v4028, %v3992
    %v4420 = vmul.f32 %v4029, %v3992
    %v4421 = vmul.f32 %v4030, %v3992
    %v4422 = vmul.f32 %v4031, %v3992
    %v4423 = vmul.f32 %v4032, %v3992
    %v4424 = vmul.f32 %v4033, %v3992
    %v4425 = vmul.f32 %v4034, %v3992
    %v4426 = vmul.f32 %v4035, %v3992
    %v4427 = vmul.f32 %v4036, %v3992
    %v4428 = vmul.f32 %v4037, %v3992
    %v4429 = vmul.f32 %v4038, %v3992
    %v4430 = vmul.f32 %v4039, %v3992
    %v4431 = vmul.f32 %v4040, %v3992
    %v4432 = vmul.f32 %v4041, %v3992
    %v4433 = vmul.f32 %v4042, %v3992
    %v4434 = vmul.f32 %v4043, %v3992
    %v4435 = vmul.f32 %v4044, %v3992
    %v4436 = vmul.f32 %v4045, %v3992
    %v4437 = vmul.f32 %v4046, %v3992
    %v4438 = vmul.f32 %v4047, %v3992
    %v4439 = vmul.f32 %v4048, %v3992
    %v4440 = vmul.f32 %v4049, %v3992
    %v4441 = vmul.f32 %v4050, %v3992
    %v4442 = vmul.f32 %v4051, %v3992
    %v4443 = vmul.f32 %v4052, %v3992
    %v4444 = vmul.f32 %v4053, %v3992
    %v4445 = vmul.f32 %v4054, %v3992
    %v4446 = vmul.f32 %v4055, %v3992
    %v4447 = vmul.f32 %v4056, %v3992
    %v4448 = vmul.f32 %v4057, %v3992
    %v4449 = vmul.f32 %v4058, %v3992
    %v4450 = vmul.f32 %v4059, %v3992
    %v4451 = vmul.f32 %v4060, %v3992
    %v4452 = vmul.f32 %v4061, %v3992
    %v4453 = vmul.f32 %v4062, %v3992
    %v4454 = vmul.f32 %v4063, %v3992
    %v4455 = vmul.f32 %v4064, %v3992
    %v4456 = vmul.f32 %v4065, %v3992
    %v4457 = vmul.f32 %v4066, %v3992
    %v4458 = vmul.f32 %v4067, %v3992
    %v4459 = vmul.f32 %v4068, %v3992
    %v4460 = vmul.f32 %v4069, %v3992
    %v4461 = vmul.f32 %v4070, %v3992
    %v4462 = vmul.f32 %v4071, %v3992
    %v4463 = vmul.f32 %v4072, %v3992
    %v4464 = vmul.f32 %v4073, %v3992
    %v4465 = vmul.f32 %v4074, %v3992
    %v4466 = vmul.f32 %v4075, %v3992
    %v4467 = vmul.f32 %v4076, %v3992
    %v4468 = vmul.f32 %v4077, %v3992
    %v4469 = vmul.f32 %v4078, %v3992
    %v4470 = vmul.f32 %v4079, %v3992
    %v4471 = vmul.f32 %v4080, %v3992
    %v4472 = vmul.f32 %v4081, %v3992
    %v4473 = vmul.f32 %v4082, %v3992
    %v4474 = vmul.f32 %v4083, %v3992
    %v4475 = vmul.f32 %v4084, %v3992
    %v4476 = vmul.f32 %v4085, %v3992
    %v4477 = vmul.f32 %v4086, %v3992
    %v4478 = vmul.f32 %v4087, %v3992
    %v4479 = vmul.f32 %v4088, %v3992
    %v4480 = vmul.f32 %v4089, %v3992
    %v4481 = vmul.f32 %v4090, %v3992
    %v4482 = vmul.f32 %v4091, %v3992
    %v4483 = vmul.f32 %v4092, %v3992
    %v4484 = vmul.f32 %v4093, %v3992
    %v4485 = vmul.f32 %v4094, %v3992
    %v4486 = vmul.f32 %v4095, %v3992
    %v4487 = vmul.f32 %v4096, %v3992
    %v4488 = vmul.f32 %v4097, %v3992
    %v4489 = vmul.f32 %v4098, %v3992
    %v4490 = vmul.f32 %v4099, %v3992
    %v4491 = vmul.f32 %v4100, %v3992
    %v4492 = vmul.f32 %v4101, %v3992
    %v4493 = vmul.f32 %v4102, %v3992
    %v4494 = vmul.f32 %v4103, %v3992
    %v4495 = vmul.f32 %v4104, %v3992
    %v4496 = vmul.f32 %v4105, %v3992
    %v4497 = vmul.f32 %v4106, %v3992
    %v4498 = vmul.f32 %v4107, %v3992
    %v4499 = vmul.f32 %v4108, %v3992
    %v4500 = vmul.f32 %v4109, %v3992
    %v4501 = vmul.f32 %v4110, %v3992
    %v4502 = vmul.f32 %v4111, %v3992
    %v4503 = vmul.f32 %v4112, %v3992
    %v4504 = vmul.f32 %v4113, %v3992
    %v4505 = vmul.f32 %v4114, %v3992
    %v4506 = vmul.f32 %v4115, %v3992
    %v4507 = vmul.f32 %v4116, %v3992
    %v4508 = vmul.f32 %v4117, %v3992
    %v4509 = vmul.f32 %v4118, %v3992
    %v4510 = vmul.f32 %v4119, %v3992
    %v4511 = vmul.f32 %v4120, %v3992
    %v4512 = vmul.f32 %v4121, %v3992
    %v4513 = vmul.f32 %v4122, %v3992
    %v4514 = vmul.f32 %v4123, %v3992
    %v4515 = vmul.f32 %v4124, %v3992
    %v4516 = vmul.f32 %v4125, %v3992
    %v4517 = vmul.f32 %v4126, %v3992
    %v4518 = vmul.f32 %v4127, %v3992
    %v4519 = vmul.f32 %v4128, %v3992
    %v4520 = vmul.f32 %v4129, %v3992
    %v4521 = vmul.f32 %v4130, %v3992
    %v4522 = vmul.f32 %v4131, %v3992
    %v4523 = vmul.f32 %v4132, %v3992
    %v4524 = vmul.f32 %v4133, %v3992
    %v4525 = vmul.f32 %v4134, %v3992
    %v4526 = vmul.f32 %v4135, %v3992
    %v4527 = vmul.f32 %v4136, %v3992
    %v4528 = vmul.f32 %v4137, %v3992
    %v4529 = vmul.f32 %v4138, %v3992
    %v4530 = vmul.f32 %v4139, %v3992
    %v4531 = vmul.f32 %v4140, %v3992
    %v4532 = vmul.f32 %v4141, %v3992
    %v4533 = vmul.f32 %v4142, %v3992
    %v4534 = vmul.f32 %v4143, %v3992
    %v4535 = vmul.f32 %v4144, %v3992
    %v4536 = vmul.f32 %v4145, %v3992
    %v4537 = vmul.f32 %v4146, %v3992
    %v4538 = vmul.f32 %v4147, %v3992
    %v4539 = vmul.f32 %v4148, %v3992
    %v4540 = vmul.f32 %v4149, %v3992
    %v4541 = vmul.f32 %v4150, %v3992
    %v4542 = vmul.f32 %v4151, %v3992
    %v4543 = vmul.f32 %v4152, %v3992
    %v4544 = vmul.f32 %v4153, %v3992
    %v4545 = vmul.f32 %v4154, %v3992
    %v4546 = vmul.f32 %v4155, %v3992
    %v4547 = vmul.f32 %v4156, %v3992
    %v4548 = vmul.f32 %v4157, %v3992
    %v4549 = vmul.f32 %v4158, %v3992
    %v4550 = vmul.f32 %v4159, %v3992
    %v4551 = vmul.f32 %v4160, %v3992
    %v4552 = vmul.f32 %v4161, %v3992
    %v4553 = vmul.f32 %v4162, %v3992
    %v4554 = vmul.f32 %v4163, %v3992
    %v4555 = vmul.f32 %v4164, %v3992
    %v4556 = vmul.f32 %v4165, %v3992
    %v4557 = vmul.f32 %v4166, %v3992
    %v4558 = vmul.f32 %v4167, %v3992
    %v4559 = vmul.f32 %v4168, %v3992
    %v4560 = vmul.f32 %v4169, %v3992
    %v4561 = vmul.f32 %v4170, %v3992
    %v4562 = vmul.f32 %v4171, %v3992
    %v4563 = vmul.f32 %v4172, %v3992
    %v4564 = vmul.f32 %v4173, %v3992
    %v4565 = vmul.f32 %v4174, %v3992
    %v4566 = vmul.f32 %v4175, %v3992
    %v4567 = vmul.f32 %v4176, %v3992
    %v4568 = vmul.f32 %v4177, %v3992
    %v4569 = vmul.f32 %v4178, %v3992
    %v4570 = vmul.f32 %v4179, %v3992
    %v4571 = vmul.f32 %v4180, %v3992
    %v4572 = vmul.f32 %v4181, %v3992
    %v4573 = vmul.f32 %v4182, %v3992
    %v4574 = vmul.f32 %v4183, %v3992
    %v4575 = vmul.f32 %v4184, %v3992
    %v4576 = vmul.f32 %v4185, %v3992
    %v4577 = vmul.f32 %v4186, %v3992
    %v4578 = vmul.f32 %v4187, %v3992
    %v4579 = vmul.f32 %v4188, %v3992
    %v4580 = vmul.f32 %v4189, %v3992
    %v4581 = vmul.f32 %v4190, %v3992
    %v4582 = vmul.f32 %v4191, %v3992
    %v4583 = vmul.f32 %v4192, %v3992
    %v4584 = vmul.f32 %v4193, %v3992
    %v4585 = vmul.f32 %v4194, %v3992
    %v4586 = vmul.f32 %v4195, %v3992
    %v4587 = vmul.f32 %v4196, %v3992
    %v4588 = vmul.f32 %v4197, %v3992
    %v4589 = vmul.f32 %v4198, %v3992
    %v4590 = vmul.f32 %v4199, %v3992
    %v4591 = vmul.f32 %v4200, %v3992
    %v4592 = vmul.f32 %v4201, %v3992
    %v4593 = vmul.f32 %v4202, %v3992
    %v4594 = vmul.f32 %v4203, %v3992
    %v4595 = vmul.f32 %v4204, %v3992
    %v4596 = vmul.f32 %v4205, %v3992
    %v4597 = vmul.f32 %v4206, %v3992
    %v4598 = vmul.f32 %v4207, %v3992
    %v4599 = vmul.f32 %v4208, %v3992
    %v4600 = vmul.f32 %v4209, %v3992
    %v4601 = vmul.f32 %v4210, %v3992
    %v4602 = vmul.f32 %v4211, %v3992
    %v4603 = vmul.f32 %v4212, %v3992
    %v4604 = vmul.f32 %v4213, %v3992
    %v4605 = vmul.f32 %v4214, %v3992
    %v4606 = vmul.f32 %v4215, %v3992
    %v4607 = vmul.f32 %v4216, %v3992
    %v4608 = vmul.f32 %v4217, %v3992
    %v4609 = vmul.f32 %v4218, %v3992
    %v4610 = vmul.f32 %v4219, %v3992
    %v4611 = vmul.f32 %v4220, %v3992
    %v4612 = vmul.f32 %v4221, %v3992
    %v4613 = vmul.f32 %v4222, %v3992
    %v4614 = vmul.f32 %v4223, %v3992
    %v4615 = vmul.f32 %v4224, %v3992
    %v4616 = vmul.f32 %v4225, %v3992
    %v4617 = vmul.f32 %v4226, %v3992
    %v4618 = vmul.f32 %v4227, %v3992
    %v4619 = vmul.f32 %v4228, %v3992
    %v4620 = vmul.f32 %v4229, %v3992
    %v4621 = vmul.f32 %v4230, %v3992
    %v4622 = vmul.f32 %v4231, %v3992
    %v4623 = vmul.f32 %v4232, %v3992
    %v4624 = vmul.f32 %v4233, %v3992
    %v4625 = vmul.f32 %v4234, %v3992
    %v4626 = vmul.f32 %v4235, %v3992
    %v4627 = vmul.f32 %v4236, %v3992
    %v4628 = vmul.f32 %v4237, %v3992
    %v4629 = vmul.f32 %v4238, %v3992
    %v4630 = vmul.f32 %v4239, %v3992
    %v4631 = vmul.f32 %v4240, %v3992
    %v4632 = vmul.f32 %v4241, %v3992
    %v4633 = vmul.f32 %v4242, %v3992
    %v4634 = vmul.f32 %v4243, %v3992
    %v4635 = vmul.f32 %v4244, %v3992
    %v4636 = vmul.f32 %v4245, %v3992
    %v4637 = vmul.f32 %v4246, %v3992
    %v4638 = vmul.f32 %v4247, %v3992
    %v4639 = vmul.f32 %v4248, %v3992
    %v4640 = vmul.f32 %v4249, %v3992
    %v4641 = vmul.f32 %v4250, %v3992
    %v4642 = vmul.f32 %v4251, %v3992
    %v4643 = vmul.f32 %v4252, %v3992
    %v4644 = vmul.f32 %v4253, %v3992
    %v4645 = vmul.f32 %v4254, %v3992
    %v4646 = vmul.f32 %v4255, %v3992
    %v4647 = vmul.f32 %v4256, %v3992
    %v4648 = vmul.f32 %v4257, %v3992
    %v4649 = vmul.f32 %v4258, %v3992
    %v4650 = vmul.f32 %v4259, %v3992
    %v4651 = vmul.f32 %v4260, %v3992
    %v4652 = vmul.f32 %v4261, %v3992
    %v4653 = vmul.f32 %v4262, %v3992
    %v4654 = vmul.f32 %v4263, %v3992
    %v4655 = vmul.f32 %v4264, %v3992
    %v4656 = vmul.f32 %v4265, %v3992
    %v4657 = vmul.f32 %v4266, %v3992
    %v4658 = vmul.f32 %v4267, %v3992
    %v4659 = vmul.f32 %v4268, %v3992
    %v4660 = vmul.f32 %v4269, %v3992
    %v4661 = vmul.f32 %v4270, %v3992
    %v4662 = vmul.f32 %v4271, %v3992
    %v4663 = vmul.f32 %v4272, %v3992
    %v4664 = vmul.f32 %v4273, %v3992
    %v4665 = vmul.f32 %v4274, %v3992
    %v4666 = vmul.f32 %v4275, %v3992
    %v4667 = vmul.f32 %v4276, %v3992
    %v4668 = vmul.f32 %v4277, %v3992
    %v4669 = vmul.f32 %v4278, %v3992
    %v4670 = vmul.f32 %v4279, %v3992
    %v4671 = vmul.f32 %v4280, %v3992
    %v4672 = vmul.f32 %v4281, %v3992
    %v4673 = vmul.f32 %v4282, %v3992
    %v4674 = vmul.f32 %v4283, %v3992
    %v4675 = vmul.f32 %v4284, %v3992
    %v4676 = vmul.f32 %v4285, %v3992
    %v4677 = vmul.f32 %v4286, %v3992
    %v4678 = vmul.f32 %v4287, %v3992
    %v4679 = vmul.f32 %v4288, %v3992
    %v4680 = vmul.f32 %v4289, %v3992
    %v4681 = vmul.f32 %v4290, %v3992
    %v4682 = vmul.f32 %v4291, %v3992
    %v4683 = vmul.f32 %v4292, %v3992
    %v4684 = vmul.f32 %v4293, %v3992
    %v4685 = vmul.f32 %v4294, %v3992
    %v4686 = vmul.f32 %v4295, %v3992
    %v4687 = vmul.f32 %v4296, %v3992
    %v4688 = vmul.f32 %v4297, %v3992
    %v4689 = vmul.f32 %v4298, %v3992
    %v4690 = vmul.f32 %v4299, %v3992
    %v4691 = vmul.f32 %v4300, %v3992
    %v4692 = vmul.f32 %v4301, %v3992
    %v4693 = vmul.f32 %v4302, %v3992
    %v4694 = vmul.f32 %v4303, %v3992
    %v4695 = vmul.f32 %v4304, %v3992
    %v4696 = vmul.f32 %v4305, %v3992
    %v4697 = vmul.f32 %v4306, %v3992
    %v4698 = vmul.f32 %v4307, %v3992
    %v4699 = vmul.f32 %v4308, %v3992
    %v4700 = vmul.f32 %v4309, %v3992
    %v4701 = vmul.f32 %v4310, %v3992
    %v4702 = vmul.f32 %v4311, %v3992
    %v4703 = vmul.f32 %v4312, %v3992
    %v4704 = vmul.f32 %v4313, %v3992
    %v4705 = vmul.f32 %v4314, %v3992
    %v4706 = vmul.f32 %v4315, %v3992
    %v4707 = vmul.f32 %v4316, %v3992
    %v4708 = vmul.f32 %v4317, %v3992
    %v4709 = vmul.f32 %v4318, %v3992
    %v4710 = vmul.f32 %v4319, %v3992
    %v4711 = vmul.f32 %v4320, %v3992
    %v4712 = vmul.f32 %v4321, %v3992
    %v4713 = vmul.f32 %v4322, %v3992
    %v4714 = vmul.f32 %v4323, %v3992
    %v4715 = vmul.f32 %v4324, %v3992
    %v4716 = vmul.f32 %v4325, %v3992
    %v4717 = vmul.f32 %v4326, %v3992
    %v4718 = vmul.f32 %v4327, %v3992
    %v4719 = vmul.f32 %v4328, %v3992
    %v4720 = vmul.f32 %v4329, %v3992
    %v4721 = vmul.f32 %v4330, %v3992
    %v4722 = vmul.f32 %v4331, %v3992
    %v4723 = vmul.f32 %v4332, %v3992
    %v4724 = vmul.f32 %v4333, %v3992
    %v4725 = vmul.f32 %v4334, %v3992
    %v4726 = vmul.f32 %v4335, %v3992
    %v4727 = vmul.f32 %v4336, %v3992
    %v4728 = vmul.f32 %v4337, %v3992
    %v4729 = vmul.f32 %v4338, %v3992
    %v4730 = vmul.f32 %v4339, %v3992
    %v4731 = vmul.f32 %v4340, %v3992
    %v4732 = vmul.f32 %v4341, %v3992
    %v4733 = vmul.f32 %v4342, %v3992
    %v4734 = vmul.f32 %v4343, %v3992
    %v4735 = vmul.f32 %v4344, %v3992
    %v4736 = vmul.f32 %v4345, %v3992
    %v4737 = vmul.f32 %v4346, %v3992
    %v4738 = vmul.f32 %v4347, %v3992
    %v4739 = vmul.f32 %v4348, %v3992
    %v4740 = vmul.f32 %v4349, %v3992
    %v4741 = vmul.f32 %v4350, %v3992
    %v4742 = vmul.f32 %v4351, %v3992
    %v4743 = vmul.f32 %v4352, %v3992
    %v4744 = vmul.f32 %v4353, %v3992
    %v4745 = vmul.f32 %v4354, %v3992
    %v4746 = vmul.f32 %v4355, %v3992
    %v4747 = vmul.f32 %v4356, %v3992
    %v4748 = vmul.f32 %v4357, %v3992
    %v4749 = vmul.f32 %v4358, %v3992
    %v4750 = vmul.f32 %v4359, %v3992
    %v4751 = vmul.f32 %v4360, %v3992
    %v4752 = vmul.f32 %v4361, %v3992
    %v4753 = vmul.f32 %v4362, %v3992
    %v4754 = vmul.f32 %v4363, %v3992
    %v4755 = vmul.f32 %v4364, %v3992
    %v4756 = vmul.f32 %v4365, %v3992
    %v4757 = vmul.f32 %v4366, %v3992
    %v4758 = vmul.f32 %v4367, %v3992
    %v4759 = vmul.f32 %v4368, %v3992
    %v4760 = vmul.f32 %v4369, %v3992
    %v4761 = vmul.f32 %v4370, %v3992
    %v4762 = vmul.f32 %v4371, %v3992
    %v4763 = vmul.f32 %v4372, %v3992
    %v4764 = vmul.f32 %v4373, %v3992
    %v4765 = vmul.f32 %v4374, %v3992
    %v4766 = vmul.f32 %v4375, %v3992
    %v4767 = vmul.f32 %v4376, %v3992
    %v4768 = vmul.f32 %v4377, %v3992
    %v4769 = vmul.f32 %v4378, %v3992
    %v4770 = vmul.f32 %v4379, %v3992
    %v4771 = vmul.f32 %v4380, %v3992
    %v4772 = vmul.f32 %v4381, %v3992
    %v4773 = vmul.f32 %v4382, %v3992
    %v4774 = vmul.f32 %v4383, %v3992
    %v4775 = vld [vmem:[#allocation5] sm:$0xff]
    %v4776 = vld [vmem:[#allocation5 + $0x8] sm:$0xff]
    %v4777 = vld [vmem:[#allocation5 + $0x10] sm:$0xff]
    %v4778 = vld [vmem:[#allocation5 + $0x18] sm:$0xff]
    %v4779 = vld [vmem:[#allocation5 + $0x20] sm:$0xff]
    %v4780 = vld [vmem:[#allocation5 + $0x28] sm:$0xff]
    %v4781 = vld [vmem:[#allocation5 + $0x30] sm:$0xff]
    %v4782 = vld [vmem:[#allocation5 + $0x38] sm:$0xff]
    %v4783 = vld [vmem:[#allocation5 + $0x40] sm:$0xff]
    %v4784 = vld [vmem:[#allocation5 + $0x48] sm:$0xff]
    %v4785 = vld [vmem:[#allocation5 + $0x50] sm:$0xff]
    %v4786 = vld [vmem:[#allocation5 + $0x58] sm:$0xff]
    %v4787 = vld [vmem:[#allocation5 + $0x60] sm:$0xff]
    %v4788 = vld [vmem:[#allocation5 + $0x68] sm:$0xff]
    %v4789 = vld [vmem:[#allocation5 + $0x70] sm:$0xff]
    %v4790 = vld [vmem:[#allocation5 + $0x78] sm:$0xff]
    %v4791 = vld [vmem:[#allocation5 + $0x80] sm:$0xff]
    %v4792 = vld [vmem:[#allocation5 + $0x88] sm:$0xff]
    %v4793 = vld [vmem:[#allocation5 + $0x90] sm:$0xff]
    %v4794 = vld [vmem:[#allocation5 + $0x98] sm:$0xff]
    %v4795 = vld [vmem:[#allocation5 + $0xa0] sm:$0xff]
    %v4796 = vld [vmem:[#allocation5 + $0xa8] sm:$0xff]
    %v4797 = vld [vmem:[#allocation5 + $0xb0] sm:$0xff]
    %v4798 = vld [vmem:[#allocation5 + $0xb8] sm:$0xff]
    %v4799 = vld [vmem:[#allocation5 + $0xc0] sm:$0xff]
    %v4800 = vld [vmem:[#allocation5 + $0xc8] sm:$0xff]
    %v4801 = vld [vmem:[#allocation5 + $0xd0] sm:$0xff]
    %v4802 = vld [vmem:[#allocation5 + $0xd8] sm:$0xff]
    %v4803 = vld [vmem:[#allocation5 + $0xe0] sm:$0xff]
    %v4804 = vld [vmem:[#allocation5 + $0xe8] sm:$0xff]
    %v4805 = vld [vmem:[#allocation5 + $0xf0] sm:$0xff]
    %v4806 = vld [vmem:[#allocation5 + $0xf8] sm:$0xff]
    %v4807 = vld [vmem:[#allocation5 + $0x100] sm:$0xff]
    %v4808 = vld [vmem:[#allocation5 + $0x108] sm:$0xff]
    %v4809 = vld [vmem:[#allocation5 + $0x110] sm:$0xff]
    %v4810 = vld [vmem:[#allocation5 + $0x118] sm:$0xff]
    %v4811 = vld [vmem:[#allocation5 + $0x120] sm:$0xff]
    %v4812 = vld [vmem:[#allocation5 + $0x128] sm:$0xff]
    %v4813 = vld [vmem:[#allocation5 + $0x130] sm:$0xff]
    %v4814 = vld [vmem:[#allocation5 + $0x138] sm:$0xff]
    %v4815 = vld [vmem:[#allocation5 + $0x140] sm:$0xff]
    %v4816 = vld [vmem:[#allocation5 + $0x148] sm:$0xff]
    %v4817 = vld [vmem:[#allocation5 + $0x150] sm:$0xff]
    %v4818 = vld [vmem:[#allocation5 + $0x158] sm:$0xff]
    %v4819 = vld [vmem:[#allocation5 + $0x160] sm:$0xff]
    %v4820 = vld [vmem:[#allocation5 + $0x168] sm:$0xff]
    %v4821 = vld [vmem:[#allocation5 + $0x170] sm:$0xff]
    %v4822 = vld [vmem:[#allocation5 + $0x178] sm:$0xff]
    %v4823 = vld [vmem:[#allocation5 + $0x180] sm:$0x7f]
    %v4873 = vlaneseq
    %v4874 = vshrl.u32 %v4873, 7
    %v4875 = vsub.s32 0, %v4874
    %v4876 = vrot.slane %v4775, %v4875
    %v4877 = vlaneseq
    %v4878 = vshrl.u32 %v4877, 7
    %v4879 = vsub.s32 1, %v4878
    %v4880 = vrot.slane %v4775, %v4879
    %v4881 = vlaneseq
    %v4882 = vshrl.u32 %v4881, 7
    %v4883 = vsub.s32 2, %v4882
    %v4884 = vrot.slane %v4775, %v4883
    %v4885 = vlaneseq
    %v4886 = vshrl.u32 %v4885, 7
    %v4887 = vsub.s32 3, %v4886
    %v4888 = vrot.slane %v4775, %v4887
    %v4889 = vlaneseq
    %v4890 = vshrl.u32 %v4889, 7
    %v4891 = vsub.s32 4, %v4890
    %v4892 = vrot.slane %v4775, %v4891
    %v4893 = vlaneseq
    %v4894 = vshrl.u32 %v4893, 7
    %v4895 = vsub.s32 5, %v4894
    %v4896 = vrot.slane %v4775, %v4895
    %v4897 = vlaneseq
    %v4898 = vshrl.u32 %v4897, 7
    %v4899 = vsub.s32 6, %v4898
    %v4900 = vrot.slane %v4775, %v4899
    %v4901 = vlaneseq
    %v4902 = vshrl.u32 %v4901, 7
    %v4903 = vsub.s32 7, %v4902
    %v4904 = vrot.slane %v4775, %v4903
    %v4905 = vlaneseq
    %v4906 = vshrl.u32 %v4905, 7
    %v4907 = vsub.s32 0, %v4906
    %v4908 = vrot.slane %v4776, %v4907
    %v4909 = vlaneseq
    %v4910 = vshrl.u32 %v4909, 7
    %v4911 = vsub.s32 1, %v4910
    %v4912 = vrot.slane %v4776, %v4911
    %v4913 = vlaneseq
    %v4914 = vshrl.u32 %v4913, 7
    %v4915 = vsub.s32 2, %v4914
    %v4916 = vrot.slane %v4776, %v4915
    %v4917 = vlaneseq
    %v4918 = vshrl.u32 %v4917, 7
    %v4919 = vsub.s32 3, %v4918
    %v4920 = vrot.slane %v4776, %v4919
    %v4921 = vlaneseq
    %v4922 = vshrl.u32 %v4921, 7
    %v4923 = vsub.s32 4, %v4922
    %v4924 = vrot.slane %v4776, %v4923
    %v4925 = vlaneseq
    %v4926 = vshrl.u32 %v4925, 7
    %v4927 = vsub.s32 5, %v4926
    %v4928 = vrot.slane %v4776, %v4927
    %v4929 = vlaneseq
    %v4930 = vshrl.u32 %v4929, 7
    %v4931 = vsub.s32 6, %v4930
    %v4932 = vrot.slane %v4776, %v4931
    %v4933 = vlaneseq
    %v4934 = vshrl.u32 %v4933, 7
    %v4935 = vsub.s32 7, %v4934
    %v4936 = vrot.slane %v4776, %v4935
    %v4937 = vlaneseq
    %v4938 = vshrl.u32 %v4937, 7
    %v4939 = vsub.s32 0, %v4938
    %v4940 = vrot.slane %v4777, %v4939
    %v4941 = vlaneseq
    %v4942 = vshrl.u32 %v4941, 7
    %v4943 = vsub.s32 1, %v4942
    %v4944 = vrot.slane %v4777, %v4943
    %v4945 = vlaneseq
    %v4946 = vshrl.u32 %v4945, 7
    %v4947 = vsub.s32 2, %v4946
    %v4948 = vrot.slane %v4777, %v4947
    %v4949 = vlaneseq
    %v4950 = vshrl.u32 %v4949, 7
    %v4951 = vsub.s32 3, %v4950
    %v4952 = vrot.slane %v4777, %v4951
    %v4953 = vlaneseq
    %v4954 = vshrl.u32 %v4953, 7
    %v4955 = vsub.s32 4, %v4954
    %v4956 = vrot.slane %v4777, %v4955
    %v4957 = vlaneseq
    %v4958 = vshrl.u32 %v4957, 7
    %v4959 = vsub.s32 5, %v4958
    %v4960 = vrot.slane %v4777, %v4959
    %v4961 = vlaneseq
    %v4962 = vshrl.u32 %v4961, 7
    %v4963 = vsub.s32 6, %v4962
    %v4964 = vrot.slane %v4777, %v4963
    %v4965 = vlaneseq
    %v4966 = vshrl.u32 %v4965, 7
    %v4967 = vsub.s32 7, %v4966
    %v4968 = vrot.slane %v4777, %v4967
    %v4969 = vlaneseq
    %v4970 = vshrl.u32 %v4969, 7
    %v4971 = vsub.s32 0, %v4970
    %v4972 = vrot.slane %v4778, %v4971
    %v4973 = vlaneseq
    %v4974 = vshrl.u32 %v4973, 7
    %v4975 = vsub.s32 1, %v4974
    %v4976 = vrot.slane %v4778, %v4975
    %v4977 = vlaneseq
    %v4978 = vshrl.u32 %v4977, 7
    %v4979 = vsub.s32 2, %v4978
    %v4980 = vrot.slane %v4778, %v4979
    %v4981 = vlaneseq
    %v4982 = vshrl.u32 %v4981, 7
    %v4983 = vsub.s32 3, %v4982
    %v4984 = vrot.slane %v4778, %v4983
    %v4985 = vlaneseq
    %v4986 = vshrl.u32 %v4985, 7
    %v4987 = vsub.s32 4, %v4986
    %v4988 = vrot.slane %v4778, %v4987
    %v4989 = vlaneseq
    %v4990 = vshrl.u32 %v4989, 7
    %v4991 = vsub.s32 5, %v4990
    %v4992 = vrot.slane %v4778, %v4991
    %v4993 = vlaneseq
    %v4994 = vshrl.u32 %v4993, 7
    %v4995 = vsub.s32 6, %v4994
    %v4996 = vrot.slane %v4778, %v4995
    %v4997 = vlaneseq
    %v4998 = vshrl.u32 %v4997, 7
    %v4999 = vsub.s32 7, %v4998
    %v5000 = vrot.slane %v4778, %v4999
    %v5001 = vlaneseq
    %v5002 = vshrl.u32 %v5001, 7
    %v5003 = vsub.s32 0, %v5002
    %v5004 = vrot.slane %v4779, %v5003
    %v5005 = vlaneseq
    %v5006 = vshrl.u32 %v5005, 7
    %v5007 = vsub.s32 1, %v5006
    %v5008 = vrot.slane %v4779, %v5007
    %v5009 = vlaneseq
    %v5010 = vshrl.u32 %v5009, 7
    %v5011 = vsub.s32 2, %v5010
    %v5012 = vrot.slane %v4779, %v5011
    %v5013 = vlaneseq
    %v5014 = vshrl.u32 %v5013, 7
    %v5015 = vsub.s32 3, %v5014
    %v5016 = vrot.slane %v4779, %v5015
    %v5017 = vlaneseq
    %v5018 = vshrl.u32 %v5017, 7
    %v5019 = vsub.s32 4, %v5018
    %v5020 = vrot.slane %v4779, %v5019
    %v5021 = vlaneseq
    %v5022 = vshrl.u32 %v5021, 7
    %v5023 = vsub.s32 5, %v5022
    %v5024 = vrot.slane %v4779, %v5023
    %v5025 = vlaneseq
    %v5026 = vshrl.u32 %v5025, 7
    %v5027 = vsub.s32 6, %v5026
    %v5028 = vrot.slane %v4779, %v5027
    %v5029 = vlaneseq
    %v5030 = vshrl.u32 %v5029, 7
    %v5031 = vsub.s32 7, %v5030
    %v5032 = vrot.slane %v4779, %v5031
    %v5033 = vlaneseq
    %v5034 = vshrl.u32 %v5033, 7
    %v5035 = vsub.s32 0, %v5034
    %v5036 = vrot.slane %v4780, %v5035
    %v5037 = vlaneseq
    %v5038 = vshrl.u32 %v5037, 7
    %v5039 = vsub.s32 1, %v5038
    %v5040 = vrot.slane %v4780, %v5039
    %v5041 = vlaneseq
    %v5042 = vshrl.u32 %v5041, 7
    %v5043 = vsub.s32 2, %v5042
    %v5044 = vrot.slane %v4780, %v5043
    %v5045 = vlaneseq
    %v5046 = vshrl.u32 %v5045, 7
    %v5047 = vsub.s32 3, %v5046
    %v5048 = vrot.slane %v4780, %v5047
    %v5049 = vlaneseq
    %v5050 = vshrl.u32 %v5049, 7
    %v5051 = vsub.s32 4, %v5050
    %v5052 = vrot.slane %v4780, %v5051
    %v5053 = vlaneseq
    %v5054 = vshrl.u32 %v5053, 7
    %v5055 = vsub.s32 5, %v5054
    %v5056 = vrot.slane %v4780, %v5055
    %v5057 = vlaneseq
    %v5058 = vshrl.u32 %v5057, 7
    %v5059 = vsub.s32 6, %v5058
    %v5060 = vrot.slane %v4780, %v5059
    %v5061 = vlaneseq
    %v5062 = vshrl.u32 %v5061, 7
    %v5063 = vsub.s32 7, %v5062
    %v5064 = vrot.slane %v4780, %v5063
    %v5065 = vlaneseq
    %v5066 = vshrl.u32 %v5065, 7
    %v5067 = vsub.s32 0, %v5066
    %v5068 = vrot.slane %v4781, %v5067
    %v5069 = vlaneseq
    %v5070 = vshrl.u32 %v5069, 7
    %v5071 = vsub.s32 1, %v5070
    %v5072 = vrot.slane %v4781, %v5071
    %v5073 = vlaneseq
    %v5074 = vshrl.u32 %v5073, 7
    %v5075 = vsub.s32 2, %v5074
    %v5076 = vrot.slane %v4781, %v5075
    %v5077 = vlaneseq
    %v5078 = vshrl.u32 %v5077, 7
    %v5079 = vsub.s32 3, %v5078
    %v5080 = vrot.slane %v4781, %v5079
    %v5081 = vlaneseq
    %v5082 = vshrl.u32 %v5081, 7
    %v5083 = vsub.s32 4, %v5082
    %v5084 = vrot.slane %v4781, %v5083
    %v5085 = vlaneseq
    %v5086 = vshrl.u32 %v5085, 7
    %v5087 = vsub.s32 5, %v5086
    %v5088 = vrot.slane %v4781, %v5087
    %v5089 = vlaneseq
    %v5090 = vshrl.u32 %v5089, 7
    %v5091 = vsub.s32 6, %v5090
    %v5092 = vrot.slane %v4781, %v5091
    %v5093 = vlaneseq
    %v5094 = vshrl.u32 %v5093, 7
    %v5095 = vsub.s32 7, %v5094
    %v5096 = vrot.slane %v4781, %v5095
    %v5097 = vlaneseq
    %v5098 = vshrl.u32 %v5097, 7
    %v5099 = vsub.s32 0, %v5098
    %v5100 = vrot.slane %v4782, %v5099
    %v5101 = vlaneseq
    %v5102 = vshrl.u32 %v5101, 7
    %v5103 = vsub.s32 1, %v5102
    %v5104 = vrot.slane %v4782, %v5103
    %v5105 = vlaneseq
    %v5106 = vshrl.u32 %v5105, 7
    %v5107 = vsub.s32 2, %v5106
    %v5108 = vrot.slane %v4782, %v5107
    %v5109 = vlaneseq
    %v5110 = vshrl.u32 %v5109, 7
    %v5111 = vsub.s32 3, %v5110
    %v5112 = vrot.slane %v4782, %v5111
    %v5113 = vlaneseq
    %v5114 = vshrl.u32 %v5113, 7
    %v5115 = vsub.s32 4, %v5114
    %v5116 = vrot.slane %v4782, %v5115
    %v5117 = vlaneseq
    %v5118 = vshrl.u32 %v5117, 7
    %v5119 = vsub.s32 5, %v5118
    %v5120 = vrot.slane %v4782, %v5119
    %v5121 = vlaneseq
    %v5122 = vshrl.u32 %v5121, 7
    %v5123 = vsub.s32 6, %v5122
    %v5124 = vrot.slane %v4782, %v5123
    %v5125 = vlaneseq
    %v5126 = vshrl.u32 %v5125, 7
    %v5127 = vsub.s32 7, %v5126
    %v5128 = vrot.slane %v4782, %v5127
    %v5129 = vlaneseq
    %v5130 = vshrl.u32 %v5129, 7
    %v5131 = vsub.s32 0, %v5130
    %v5132 = vrot.slane %v4783, %v5131
    %v5133 = vlaneseq
    %v5134 = vshrl.u32 %v5133, 7
    %v5135 = vsub.s32 1, %v5134
    %v5136 = vrot.slane %v4783, %v5135
    %v5137 = vlaneseq
    %v5138 = vshrl.u32 %v5137, 7
    %v5139 = vsub.s32 2, %v5138
    %v5140 = vrot.slane %v4783, %v5139
    %v5141 = vlaneseq
    %v5142 = vshrl.u32 %v5141, 7
    %v5143 = vsub.s32 3, %v5142
    %v5144 = vrot.slane %v4783, %v5143
    %v5145 = vlaneseq
    %v5146 = vshrl.u32 %v5145, 7
    %v5147 = vsub.s32 4, %v5146
    %v5148 = vrot.slane %v4783, %v5147
    %v5149 = vlaneseq
    %v5150 = vshrl.u32 %v5149, 7
    %v5151 = vsub.s32 5, %v5150
    %v5152 = vrot.slane %v4783, %v5151
    %v5153 = vlaneseq
    %v5154 = vshrl.u32 %v5153, 7
    %v5155 = vsub.s32 6, %v5154
    %v5156 = vrot.slane %v4783, %v5155
    %v5157 = vlaneseq
    %v5158 = vshrl.u32 %v5157, 7
    %v5159 = vsub.s32 7, %v5158
    %v5160 = vrot.slane %v4783, %v5159
    %v5161 = vlaneseq
    %v5162 = vshrl.u32 %v5161, 7
    %v5163 = vsub.s32 0, %v5162
    %v5164 = vrot.slane %v4784, %v5163
    %v5165 = vlaneseq
    %v5166 = vshrl.u32 %v5165, 7
    %v5167 = vsub.s32 1, %v5166
    %v5168 = vrot.slane %v4784, %v5167
    %v5169 = vlaneseq
    %v5170 = vshrl.u32 %v5169, 7
    %v5171 = vsub.s32 2, %v5170
    %v5172 = vrot.slane %v4784, %v5171
    %v5173 = vlaneseq
    %v5174 = vshrl.u32 %v5173, 7
    %v5175 = vsub.s32 3, %v5174
    %v5176 = vrot.slane %v4784, %v5175
    %v5177 = vlaneseq
    %v5178 = vshrl.u32 %v5177, 7
    %v5179 = vsub.s32 4, %v5178
    %v5180 = vrot.slane %v4784, %v5179
    %v5181 = vlaneseq
    %v5182 = vshrl.u32 %v5181, 7
    %v5183 = vsub.s32 5, %v5182
    %v5184 = vrot.slane %v4784, %v5183
    %v5185 = vlaneseq
    %v5186 = vshrl.u32 %v5185, 7
    %v5187 = vsub.s32 6, %v5186
    %v5188 = vrot.slane %v4784, %v5187
    %v5189 = vlaneseq
    %v5190 = vshrl.u32 %v5189, 7
    %v5191 = vsub.s32 7, %v5190
    %v5192 = vrot.slane %v4784, %v5191
    %v5193 = vlaneseq
    %v5194 = vshrl.u32 %v5193, 7
    %v5195 = vsub.s32 0, %v5194
    %v5196 = vrot.slane %v4785, %v5195
    %v5197 = vlaneseq
    %v5198 = vshrl.u32 %v5197, 7
    %v5199 = vsub.s32 1, %v5198
    %v5200 = vrot.slane %v4785, %v5199
    %v5201 = vlaneseq
    %v5202 = vshrl.u32 %v5201, 7
    %v5203 = vsub.s32 2, %v5202
    %v5204 = vrot.slane %v4785, %v5203
    %v5205 = vlaneseq
    %v5206 = vshrl.u32 %v5205, 7
    %v5207 = vsub.s32 3, %v5206
    %v5208 = vrot.slane %v4785, %v5207
    %v5209 = vlaneseq
    %v5210 = vshrl.u32 %v5209, 7
    %v5211 = vsub.s32 4, %v5210
    %v5212 = vrot.slane %v4785, %v5211
    %v5213 = vlaneseq
    %v5214 = vshrl.u32 %v5213, 7
    %v5215 = vsub.s32 5, %v5214
    %v5216 = vrot.slane %v4785, %v5215
    %v5217 = vlaneseq
    %v5218 = vshrl.u32 %v5217, 7
    %v5219 = vsub.s32 6, %v5218
    %v5220 = vrot.slane %v4785, %v5219
    %v5221 = vlaneseq
    %v5222 = vshrl.u32 %v5221, 7
    %v5223 = vsub.s32 7, %v5222
    %v5224 = vrot.slane %v4785, %v5223
    %v5225 = vlaneseq
    %v5226 = vshrl.u32 %v5225, 7
    %v5227 = vsub.s32 0, %v5226
    %v5228 = vrot.slane %v4786, %v5227
    %v5229 = vlaneseq
    %v5230 = vshrl.u32 %v5229, 7
    %v5231 = vsub.s32 1, %v5230
    %v5232 = vrot.slane %v4786, %v5231
    %v5233 = vlaneseq
    %v5234 = vshrl.u32 %v5233, 7
    %v5235 = vsub.s32 2, %v5234
    %v5236 = vrot.slane %v4786, %v5235
    %v5237 = vlaneseq
    %v5238 = vshrl.u32 %v5237, 7
    %v5239 = vsub.s32 3, %v5238
    %v5240 = vrot.slane %v4786, %v5239
    %v5241 = vlaneseq
    %v5242 = vshrl.u32 %v5241, 7
    %v5243 = vsub.s32 4, %v5242
    %v5244 = vrot.slane %v4786, %v5243
    %v5245 = vlaneseq
    %v5246 = vshrl.u32 %v5245, 7
    %v5247 = vsub.s32 5, %v5246
    %v5248 = vrot.slane %v4786, %v5247
    %v5249 = vlaneseq
    %v5250 = vshrl.u32 %v5249, 7
    %v5251 = vsub.s32 6, %v5250
    %v5252 = vrot.slane %v4786, %v5251
    %v5253 = vlaneseq
    %v5254 = vshrl.u32 %v5253, 7
    %v5255 = vsub.s32 7, %v5254
    %v5256 = vrot.slane %v4786, %v5255
    %v5257 = vlaneseq
    %v5258 = vshrl.u32 %v5257, 7
    %v5259 = vsub.s32 0, %v5258
    %v5260 = vrot.slane %v4787, %v5259
    %v5261 = vlaneseq
    %v5262 = vshrl.u32 %v5261, 7
    %v5263 = vsub.s32 1, %v5262
    %v5264 = vrot.slane %v4787, %v5263
    %v5265 = vlaneseq
    %v5266 = vshrl.u32 %v5265, 7
    %v5267 = vsub.s32 2, %v5266
    %v5268 = vrot.slane %v4787, %v5267
    %v5269 = vlaneseq
    %v5270 = vshrl.u32 %v5269, 7
    %v5271 = vsub.s32 3, %v5270
    %v5272 = vrot.slane %v4787, %v5271
    %v5273 = vlaneseq
    %v5274 = vshrl.u32 %v5273, 7
    %v5275 = vsub.s32 4, %v5274
    %v5276 = vrot.slane %v4787, %v5275
    %v5277 = vlaneseq
    %v5278 = vshrl.u32 %v5277, 7
    %v5279 = vsub.s32 5, %v5278
    %v5280 = vrot.slane %v4787, %v5279
    %v5281 = vlaneseq
    %v5282 = vshrl.u32 %v5281, 7
    %v5283 = vsub.s32 6, %v5282
    %v5284 = vrot.slane %v4787, %v5283
    %v5285 = vlaneseq
    %v5286 = vshrl.u32 %v5285, 7
    %v5287 = vsub.s32 7, %v5286
    %v5288 = vrot.slane %v4787, %v5287
    %v5289 = vlaneseq
    %v5290 = vshrl.u32 %v5289, 7
    %v5291 = vsub.s32 0, %v5290
    %v5292 = vrot.slane %v4788, %v5291
    %v5293 = vlaneseq
    %v5294 = vshrl.u32 %v5293, 7
    %v5295 = vsub.s32 1, %v5294
    %v5296 = vrot.slane %v4788, %v5295
    %v5297 = vlaneseq
    %v5298 = vshrl.u32 %v5297, 7
    %v5299 = vsub.s32 2, %v5298
    %v5300 = vrot.slane %v4788, %v5299
    %v5301 = vlaneseq
    %v5302 = vshrl.u32 %v5301, 7
    %v5303 = vsub.s32 3, %v5302
    %v5304 = vrot.slane %v4788, %v5303
    %v5305 = vlaneseq
    %v5306 = vshrl.u32 %v5305, 7
    %v5307 = vsub.s32 4, %v5306
    %v5308 = vrot.slane %v4788, %v5307
    %v5309 = vlaneseq
    %v5310 = vshrl.u32 %v5309, 7
    %v5311 = vsub.s32 5, %v5310
    %v5312 = vrot.slane %v4788, %v5311
    %v5313 = vlaneseq
    %v5314 = vshrl.u32 %v5313, 7
    %v5315 = vsub.s32 6, %v5314
    %v5316 = vrot.slane %v4788, %v5315
    %v5317 = vlaneseq
    %v5318 = vshrl.u32 %v5317, 7
    %v5319 = vsub.s32 7, %v5318
    %v5320 = vrot.slane %v4788, %v5319
    %v5321 = vlaneseq
    %v5322 = vshrl.u32 %v5321, 7
    %v5323 = vsub.s32 0, %v5322
    %v5324 = vrot.slane %v4789, %v5323
    %v5325 = vlaneseq
    %v5326 = vshrl.u32 %v5325, 7
    %v5327 = vsub.s32 1, %v5326
    %v5328 = vrot.slane %v4789, %v5327
    %v5329 = vlaneseq
    %v5330 = vshrl.u32 %v5329, 7
    %v5331 = vsub.s32 2, %v5330
    %v5332 = vrot.slane %v4789, %v5331
    %v5333 = vlaneseq
    %v5334 = vshrl.u32 %v5333, 7
    %v5335 = vsub.s32 3, %v5334
    %v5336 = vrot.slane %v4789, %v5335
    %v5337 = vlaneseq
    %v5338 = vshrl.u32 %v5337, 7
    %v5339 = vsub.s32 4, %v5338
    %v5340 = vrot.slane %v4789, %v5339
    %v5341 = vlaneseq
    %v5342 = vshrl.u32 %v5341, 7
    %v5343 = vsub.s32 5, %v5342
    %v5344 = vrot.slane %v4789, %v5343
    %v5345 = vlaneseq
    %v5346 = vshrl.u32 %v5345, 7
    %v5347 = vsub.s32 6, %v5346
    %v5348 = vrot.slane %v4789, %v5347
    %v5349 = vlaneseq
    %v5350 = vshrl.u32 %v5349, 7
    %v5351 = vsub.s32 7, %v5350
    %v5352 = vrot.slane %v4789, %v5351
    %v5353 = vlaneseq
    %v5354 = vshrl.u32 %v5353, 7
    %v5355 = vsub.s32 0, %v5354
    %v5356 = vrot.slane %v4790, %v5355
    %v5357 = vlaneseq
    %v5358 = vshrl.u32 %v5357, 7
    %v5359 = vsub.s32 1, %v5358
    %v5360 = vrot.slane %v4790, %v5359
    %v5361 = vlaneseq
    %v5362 = vshrl.u32 %v5361, 7
    %v5363 = vsub.s32 2, %v5362
    %v5364 = vrot.slane %v4790, %v5363
    %v5365 = vlaneseq
    %v5366 = vshrl.u32 %v5365, 7
    %v5367 = vsub.s32 3, %v5366
    %v5368 = vrot.slane %v4790, %v5367
    %v5369 = vlaneseq
    %v5370 = vshrl.u32 %v5369, 7
    %v5371 = vsub.s32 4, %v5370
    %v5372 = vrot.slane %v4790, %v5371
    %v5373 = vlaneseq
    %v5374 = vshrl.u32 %v5373, 7
    %v5375 = vsub.s32 5, %v5374
    %v5376 = vrot.slane %v4790, %v5375
    %v5377 = vlaneseq
    %v5378 = vshrl.u32 %v5377, 7
    %v5379 = vsub.s32 6, %v5378
    %v5380 = vrot.slane %v4790, %v5379
    %v5381 = vlaneseq
    %v5382 = vshrl.u32 %v5381, 7
    %v5383 = vsub.s32 7, %v5382
    %v5384 = vrot.slane %v4790, %v5383
    %v5385 = vlaneseq
    %v5386 = vshrl.u32 %v5385, 7
    %v5387 = vsub.s32 0, %v5386
    %v5388 = vrot.slane %v4791, %v5387
    %v5389 = vlaneseq
    %v5390 = vshrl.u32 %v5389, 7
    %v5391 = vsub.s32 1, %v5390
    %v5392 = vrot.slane %v4791, %v5391
    %v5393 = vlaneseq
    %v5394 = vshrl.u32 %v5393, 7
    %v5395 = vsub.s32 2, %v5394
    %v5396 = vrot.slane %v4791, %v5395
    %v5397 = vlaneseq
    %v5398 = vshrl.u32 %v5397, 7
    %v5399 = vsub.s32 3, %v5398
    %v5400 = vrot.slane %v4791, %v5399
    %v5401 = vlaneseq
    %v5402 = vshrl.u32 %v5401, 7
    %v5403 = vsub.s32 4, %v5402
    %v5404 = vrot.slane %v4791, %v5403
    %v5405 = vlaneseq
    %v5406 = vshrl.u32 %v5405, 7
    %v5407 = vsub.s32 5, %v5406
    %v5408 = vrot.slane %v4791, %v5407
    %v5409 = vlaneseq
    %v5410 = vshrl.u32 %v5409, 7
    %v5411 = vsub.s32 6, %v5410
    %v5412 = vrot.slane %v4791, %v5411
    %v5413 = vlaneseq
    %v5414 = vshrl.u32 %v5413, 7
    %v5415 = vsub.s32 7, %v5414
    %v5416 = vrot.slane %v4791, %v5415
    %v5417 = vlaneseq
    %v5418 = vshrl.u32 %v5417, 7
    %v5419 = vsub.s32 0, %v5418
    %v5420 = vrot.slane %v4792, %v5419
    %v5421 = vlaneseq
    %v5422 = vshrl.u32 %v5421, 7
    %v5423 = vsub.s32 1, %v5422
    %v5424 = vrot.slane %v4792, %v5423
    %v5425 = vlaneseq
    %v5426 = vshrl.u32 %v5425, 7
    %v5427 = vsub.s32 2, %v5426
    %v5428 = vrot.slane %v4792, %v5427
    %v5429 = vlaneseq
    %v5430 = vshrl.u32 %v5429, 7
    %v5431 = vsub.s32 3, %v5430
    %v5432 = vrot.slane %v4792, %v5431
    %v5433 = vlaneseq
    %v5434 = vshrl.u32 %v5433, 7
    %v5435 = vsub.s32 4, %v5434
    %v5436 = vrot.slane %v4792, %v5435
    %v5437 = vlaneseq
    %v5438 = vshrl.u32 %v5437, 7
    %v5439 = vsub.s32 5, %v5438
    %v5440 = vrot.slane %v4792, %v5439
    %v5441 = vlaneseq
    %v5442 = vshrl.u32 %v5441, 7
    %v5443 = vsub.s32 6, %v5442
    %v5444 = vrot.slane %v4792, %v5443
    %v5445 = vlaneseq
    %v5446 = vshrl.u32 %v5445, 7
    %v5447 = vsub.s32 7, %v5446
    %v5448 = vrot.slane %v4792, %v5447
    %v5449 = vlaneseq
    %v5450 = vshrl.u32 %v5449, 7
    %v5451 = vsub.s32 0, %v5450
    %v5452 = vrot.slane %v4793, %v5451
    %v5453 = vlaneseq
    %v5454 = vshrl.u32 %v5453, 7
    %v5455 = vsub.s32 1, %v5454
    %v5456 = vrot.slane %v4793, %v5455
    %v5457 = vlaneseq
    %v5458 = vshrl.u32 %v5457, 7
    %v5459 = vsub.s32 2, %v5458
    %v5460 = vrot.slane %v4793, %v5459
    %v5461 = vlaneseq
    %v5462 = vshrl.u32 %v5461, 7
    %v5463 = vsub.s32 3, %v5462
    %v5464 = vrot.slane %v4793, %v5463
    %v5465 = vlaneseq
    %v5466 = vshrl.u32 %v5465, 7
    %v5467 = vsub.s32 4, %v5466
    %v5468 = vrot.slane %v4793, %v5467
    %v5469 = vlaneseq
    %v5470 = vshrl.u32 %v5469, 7
    %v5471 = vsub.s32 5, %v5470
    %v5472 = vrot.slane %v4793, %v5471
    %v5473 = vlaneseq
    %v5474 = vshrl.u32 %v5473, 7
    %v5475 = vsub.s32 6, %v5474
    %v5476 = vrot.slane %v4793, %v5475
    %v5477 = vlaneseq
    %v5478 = vshrl.u32 %v5477, 7
    %v5479 = vsub.s32 7, %v5478
    %v5480 = vrot.slane %v4793, %v5479
    %v5481 = vlaneseq
    %v5482 = vshrl.u32 %v5481, 7
    %v5483 = vsub.s32 0, %v5482
    %v5484 = vrot.slane %v4794, %v5483
    %v5485 = vlaneseq
    %v5486 = vshrl.u32 %v5485, 7
    %v5487 = vsub.s32 1, %v5486
    %v5488 = vrot.slane %v4794, %v5487
    %v5489 = vlaneseq
    %v5490 = vshrl.u32 %v5489, 7
    %v5491 = vsub.s32 2, %v5490
    %v5492 = vrot.slane %v4794, %v5491
    %v5493 = vlaneseq
    %v5494 = vshrl.u32 %v5493, 7
    %v5495 = vsub.s32 3, %v5494
    %v5496 = vrot.slane %v4794, %v5495
    %v5497 = vlaneseq
    %v5498 = vshrl.u32 %v5497, 7
    %v5499 = vsub.s32 4, %v5498
    %v5500 = vrot.slane %v4794, %v5499
    %v5501 = vlaneseq
    %v5502 = vshrl.u32 %v5501, 7
    %v5503 = vsub.s32 5, %v5502
    %v5504 = vrot.slane %v4794, %v5503
    %v5505 = vlaneseq
    %v5506 = vshrl.u32 %v5505, 7
    %v5507 = vsub.s32 6, %v5506
    %v5508 = vrot.slane %v4794, %v5507
    %v5509 = vlaneseq
    %v5510 = vshrl.u32 %v5509, 7
    %v5511 = vsub.s32 7, %v5510
    %v5512 = vrot.slane %v4794, %v5511
    %v5513 = vlaneseq
    %v5514 = vshrl.u32 %v5513, 7
    %v5515 = vsub.s32 0, %v5514
    %v5516 = vrot.slane %v4795, %v5515
    %v5517 = vlaneseq
    %v5518 = vshrl.u32 %v5517, 7
    %v5519 = vsub.s32 1, %v5518
    %v5520 = vrot.slane %v4795, %v5519
    %v5521 = vlaneseq
    %v5522 = vshrl.u32 %v5521, 7
    %v5523 = vsub.s32 2, %v5522
    %v5524 = vrot.slane %v4795, %v5523
    %v5525 = vlaneseq
    %v5526 = vshrl.u32 %v5525, 7
    %v5527 = vsub.s32 3, %v5526
    %v5528 = vrot.slane %v4795, %v5527
    %v5529 = vlaneseq
    %v5530 = vshrl.u32 %v5529, 7
    %v5531 = vsub.s32 4, %v5530
    %v5532 = vrot.slane %v4795, %v5531
    %v5533 = vlaneseq
    %v5534 = vshrl.u32 %v5533, 7
    %v5535 = vsub.s32 5, %v5534
    %v5536 = vrot.slane %v4795, %v5535
    %v5537 = vlaneseq
    %v5538 = vshrl.u32 %v5537, 7
    %v5539 = vsub.s32 6, %v5538
    %v5540 = vrot.slane %v4795, %v5539
    %v5541 = vlaneseq
    %v5542 = vshrl.u32 %v5541, 7
    %v5543 = vsub.s32 7, %v5542
    %v5544 = vrot.slane %v4795, %v5543
    %v5545 = vlaneseq
    %v5546 = vshrl.u32 %v5545, 7
    %v5547 = vsub.s32 0, %v5546
    %v5548 = vrot.slane %v4796, %v5547
    %v5549 = vlaneseq
    %v5550 = vshrl.u32 %v5549, 7
    %v5551 = vsub.s32 1, %v5550
    %v5552 = vrot.slane %v4796, %v5551
    %v5553 = vlaneseq
    %v5554 = vshrl.u32 %v5553, 7
    %v5555 = vsub.s32 2, %v5554
    %v5556 = vrot.slane %v4796, %v5555
    %v5557 = vlaneseq
    %v5558 = vshrl.u32 %v5557, 7
    %v5559 = vsub.s32 3, %v5558
    %v5560 = vrot.slane %v4796, %v5559
    %v5561 = vlaneseq
    %v5562 = vshrl.u32 %v5561, 7
    %v5563 = vsub.s32 4, %v5562
    %v5564 = vrot.slane %v4796, %v5563
    %v5565 = vlaneseq
    %v5566 = vshrl.u32 %v5565, 7
    %v5567 = vsub.s32 5, %v5566
    %v5568 = vrot.slane %v4796, %v5567
    %v5569 = vlaneseq
    %v5570 = vshrl.u32 %v5569, 7
    %v5571 = vsub.s32 6, %v5570
    %v5572 = vrot.slane %v4796, %v5571
    %v5573 = vlaneseq
    %v5574 = vshrl.u32 %v5573, 7
    %v5575 = vsub.s32 7, %v5574
    %v5576 = vrot.slane %v4796, %v5575
    %v5577 = vlaneseq
    %v5578 = vshrl.u32 %v5577, 7
    %v5579 = vsub.s32 0, %v5578
    %v5580 = vrot.slane %v4797, %v5579
    %v5581 = vlaneseq
    %v5582 = vshrl.u32 %v5581, 7
    %v5583 = vsub.s32 1, %v5582
    %v5584 = vrot.slane %v4797, %v5583
    %v5585 = vlaneseq
    %v5586 = vshrl.u32 %v5585, 7
    %v5587 = vsub.s32 2, %v5586
    %v5588 = vrot.slane %v4797, %v5587
    %v5589 = vlaneseq
    %v5590 = vshrl.u32 %v5589, 7
    %v5591 = vsub.s32 3, %v5590
    %v5592 = vrot.slane %v4797, %v5591
    %v5593 = vlaneseq
    %v5594 = vshrl.u32 %v5593, 7
    %v5595 = vsub.s32 4, %v5594
    %v5596 = vrot.slane %v4797, %v5595
    %v5597 = vlaneseq
    %v5598 = vshrl.u32 %v5597, 7
    %v5599 = vsub.s32 5, %v5598
    %v5600 = vrot.slane %v4797, %v5599
    %v5601 = vlaneseq
    %v5602 = vshrl.u32 %v5601, 7
    %v5603 = vsub.s32 6, %v5602
    %v5604 = vrot.slane %v4797, %v5603
    %v5605 = vlaneseq
    %v5606 = vshrl.u32 %v5605, 7
    %v5607 = vsub.s32 7, %v5606
    %v5608 = vrot.slane %v4797, %v5607
    %v5609 = vlaneseq
    %v5610 = vshrl.u32 %v5609, 7
    %v5611 = vsub.s32 0, %v5610
    %v5612 = vrot.slane %v4798, %v5611
    %v5613 = vlaneseq
    %v5614 = vshrl.u32 %v5613, 7
    %v5615 = vsub.s32 1, %v5614
    %v5616 = vrot.slane %v4798, %v5615
    %v5617 = vlaneseq
    %v5618 = vshrl.u32 %v5617, 7
    %v5619 = vsub.s32 2, %v5618
    %v5620 = vrot.slane %v4798, %v5619
    %v5621 = vlaneseq
    %v5622 = vshrl.u32 %v5621, 7
    %v5623 = vsub.s32 3, %v5622
    %v5624 = vrot.slane %v4798, %v5623
    %v5625 = vlaneseq
    %v5626 = vshrl.u32 %v5625, 7
    %v5627 = vsub.s32 4, %v5626
    %v5628 = vrot.slane %v4798, %v5627
    %v5629 = vlaneseq
    %v5630 = vshrl.u32 %v5629, 7
    %v5631 = vsub.s32 5, %v5630
    %v5632 = vrot.slane %v4798, %v5631
    %v5633 = vlaneseq
    %v5634 = vshrl.u32 %v5633, 7
    %v5635 = vsub.s32 6, %v5634
    %v5636 = vrot.slane %v4798, %v5635
    %v5637 = vlaneseq
    %v5638 = vshrl.u32 %v5637, 7
    %v5639 = vsub.s32 7, %v5638
    %v5640 = vrot.slane %v4798, %v5639
    %v5641 = vlaneseq
    %v5642 = vshrl.u32 %v5641, 7
    %v5643 = vsub.s32 0, %v5642
    %v5644 = vrot.slane %v4799, %v5643
    %v5645 = vlaneseq
    %v5646 = vshrl.u32 %v5645, 7
    %v5647 = vsub.s32 1, %v5646
    %v5648 = vrot.slane %v4799, %v5647
    %v5649 = vlaneseq
    %v5650 = vshrl.u32 %v5649, 7
    %v5651 = vsub.s32 2, %v5650
    %v5652 = vrot.slane %v4799, %v5651
    %v5653 = vlaneseq
    %v5654 = vshrl.u32 %v5653, 7
    %v5655 = vsub.s32 3, %v5654
    %v5656 = vrot.slane %v4799, %v5655
    %v5657 = vlaneseq
    %v5658 = vshrl.u32 %v5657, 7
    %v5659 = vsub.s32 4, %v5658
    %v5660 = vrot.slane %v4799, %v5659
    %v5661 = vlaneseq
    %v5662 = vshrl.u32 %v5661, 7
    %v5663 = vsub.s32 5, %v5662
    %v5664 = vrot.slane %v4799, %v5663
    %v5665 = vlaneseq
    %v5666 = vshrl.u32 %v5665, 7
    %v5667 = vsub.s32 6, %v5666
    %v5668 = vrot.slane %v4799, %v5667
    %v5669 = vlaneseq
    %v5670 = vshrl.u32 %v5669, 7
    %v5671 = vsub.s32 7, %v5670
    %v5672 = vrot.slane %v4799, %v5671
    %v5673 = vlaneseq
    %v5674 = vshrl.u32 %v5673, 7
    %v5675 = vsub.s32 0, %v5674
    %v5676 = vrot.slane %v4800, %v5675
    %v5677 = vlaneseq
    %v5678 = vshrl.u32 %v5677, 7
    %v5679 = vsub.s32 1, %v5678
    %v5680 = vrot.slane %v4800, %v5679
    %v5681 = vlaneseq
    %v5682 = vshrl.u32 %v5681, 7
    %v5683 = vsub.s32 2, %v5682
    %v5684 = vrot.slane %v4800, %v5683
    %v5685 = vlaneseq
    %v5686 = vshrl.u32 %v5685, 7
    %v5687 = vsub.s32 3, %v5686
    %v5688 = vrot.slane %v4800, %v5687
    %v5689 = vlaneseq
    %v5690 = vshrl.u32 %v5689, 7
    %v5691 = vsub.s32 4, %v5690
    %v5692 = vrot.slane %v4800, %v5691
    %v5693 = vlaneseq
    %v5694 = vshrl.u32 %v5693, 7
    %v5695 = vsub.s32 5, %v5694
    %v5696 = vrot.slane %v4800, %v5695
    %v5697 = vlaneseq
    %v5698 = vshrl.u32 %v5697, 7
    %v5699 = vsub.s32 6, %v5698
    %v5700 = vrot.slane %v4800, %v5699
    %v5701 = vlaneseq
    %v5702 = vshrl.u32 %v5701, 7
    %v5703 = vsub.s32 7, %v5702
    %v5704 = vrot.slane %v4800, %v5703
    %v5705 = vlaneseq
    %v5706 = vshrl.u32 %v5705, 7
    %v5707 = vsub.s32 0, %v5706
    %v5708 = vrot.slane %v4801, %v5707
    %v5709 = vlaneseq
    %v5710 = vshrl.u32 %v5709, 7
    %v5711 = vsub.s32 1, %v5710
    %v5712 = vrot.slane %v4801, %v5711
    %v5713 = vlaneseq
    %v5714 = vshrl.u32 %v5713, 7
    %v5715 = vsub.s32 2, %v5714
    %v5716 = vrot.slane %v4801, %v5715
    %v5717 = vlaneseq
    %v5718 = vshrl.u32 %v5717, 7
    %v5719 = vsub.s32 3, %v5718
    %v5720 = vrot.slane %v4801, %v5719
    %v5721 = vlaneseq
    %v5722 = vshrl.u32 %v5721, 7
    %v5723 = vsub.s32 4, %v5722
    %v5724 = vrot.slane %v4801, %v5723
    %v5725 = vlaneseq
    %v5726 = vshrl.u32 %v5725, 7
    %v5727 = vsub.s32 5, %v5726
    %v5728 = vrot.slane %v4801, %v5727
    %v5729 = vlaneseq
    %v5730 = vshrl.u32 %v5729, 7
    %v5731 = vsub.s32 6, %v5730
    %v5732 = vrot.slane %v4801, %v5731
    %v5733 = vlaneseq
    %v5734 = vshrl.u32 %v5733, 7
    %v5735 = vsub.s32 7, %v5734
    %v5736 = vrot.slane %v4801, %v5735
    %v5737 = vlaneseq
    %v5738 = vshrl.u32 %v5737, 7
    %v5739 = vsub.s32 0, %v5738
    %v5740 = vrot.slane %v4802, %v5739
    %v5741 = vlaneseq
    %v5742 = vshrl.u32 %v5741, 7
    %v5743 = vsub.s32 1, %v5742
    %v5744 = vrot.slane %v4802, %v5743
    %v5745 = vlaneseq
    %v5746 = vshrl.u32 %v5745, 7
    %v5747 = vsub.s32 2, %v5746
    %v5748 = vrot.slane %v4802, %v5747
    %v5749 = vlaneseq
    %v5750 = vshrl.u32 %v5749, 7
    %v5751 = vsub.s32 3, %v5750
    %v5752 = vrot.slane %v4802, %v5751
    %v5753 = vlaneseq
    %v5754 = vshrl.u32 %v5753, 7
    %v5755 = vsub.s32 4, %v5754
    %v5756 = vrot.slane %v4802, %v5755
    %v5757 = vlaneseq
    %v5758 = vshrl.u32 %v5757, 7
    %v5759 = vsub.s32 5, %v5758
    %v5760 = vrot.slane %v4802, %v5759
    %v5761 = vlaneseq
    %v5762 = vshrl.u32 %v5761, 7
    %v5763 = vsub.s32 6, %v5762
    %v5764 = vrot.slane %v4802, %v5763
    %v5765 = vlaneseq
    %v5766 = vshrl.u32 %v5765, 7
    %v5767 = vsub.s32 7, %v5766
    %v5768 = vrot.slane %v4802, %v5767
    %v5769 = vlaneseq
    %v5770 = vshrl.u32 %v5769, 7
    %v5771 = vsub.s32 0, %v5770
    %v5772 = vrot.slane %v4803, %v5771
    %v5773 = vlaneseq
    %v5774 = vshrl.u32 %v5773, 7
    %v5775 = vsub.s32 1, %v5774
    %v5776 = vrot.slane %v4803, %v5775
    %v5777 = vlaneseq
    %v5778 = vshrl.u32 %v5777, 7
    %v5779 = vsub.s32 2, %v5778
    %v5780 = vrot.slane %v4803, %v5779
    %v5781 = vlaneseq
    %v5782 = vshrl.u32 %v5781, 7
    %v5783 = vsub.s32 3, %v5782
    %v5784 = vrot.slane %v4803, %v5783
    %v5785 = vlaneseq
    %v5786 = vshrl.u32 %v5785, 7
    %v5787 = vsub.s32 4, %v5786
    %v5788 = vrot.slane %v4803, %v5787
    %v5789 = vlaneseq
    %v5790 = vshrl.u32 %v5789, 7
    %v5791 = vsub.s32 5, %v5790
    %v5792 = vrot.slane %v4803, %v5791
    %v5793 = vlaneseq
    %v5794 = vshrl.u32 %v5793, 7
    %v5795 = vsub.s32 6, %v5794
    %v5796 = vrot.slane %v4803, %v5795
    %v5797 = vlaneseq
    %v5798 = vshrl.u32 %v5797, 7
    %v5799 = vsub.s32 7, %v5798
    %v5800 = vrot.slane %v4803, %v5799
    %v5801 = vlaneseq
    %v5802 = vshrl.u32 %v5801, 7
    %v5803 = vsub.s32 0, %v5802
    %v5804 = vrot.slane %v4804, %v5803
    %v5805 = vlaneseq
    %v5806 = vshrl.u32 %v5805, 7
    %v5807 = vsub.s32 1, %v5806
    %v5808 = vrot.slane %v4804, %v5807
    %v5809 = vlaneseq
    %v5810 = vshrl.u32 %v5809, 7
    %v5811 = vsub.s32 2, %v5810
    %v5812 = vrot.slane %v4804, %v5811
    %v5813 = vlaneseq
    %v5814 = vshrl.u32 %v5813, 7
    %v5815 = vsub.s32 3, %v5814
    %v5816 = vrot.slane %v4804, %v5815
    %v5817 = vlaneseq
    %v5818 = vshrl.u32 %v5817, 7
    %v5819 = vsub.s32 4, %v5818
    %v5820 = vrot.slane %v4804, %v5819
    %v5821 = vlaneseq
    %v5822 = vshrl.u32 %v5821, 7
    %v5823 = vsub.s32 5, %v5822
    %v5824 = vrot.slane %v4804, %v5823
    %v5825 = vlaneseq
    %v5826 = vshrl.u32 %v5825, 7
    %v5827 = vsub.s32 6, %v5826
    %v5828 = vrot.slane %v4804, %v5827
    %v5829 = vlaneseq
    %v5830 = vshrl.u32 %v5829, 7
    %v5831 = vsub.s32 7, %v5830
    %v5832 = vrot.slane %v4804, %v5831
    %v5833 = vlaneseq
    %v5834 = vshrl.u32 %v5833, 7
    %v5835 = vsub.s32 0, %v5834
    %v5836 = vrot.slane %v4805, %v5835
    %v5837 = vlaneseq
    %v5838 = vshrl.u32 %v5837, 7
    %v5839 = vsub.s32 1, %v5838
    %v5840 = vrot.slane %v4805, %v5839
    %v5841 = vlaneseq
    %v5842 = vshrl.u32 %v5841, 7
    %v5843 = vsub.s32 2, %v5842
    %v5844 = vrot.slane %v4805, %v5843
    %v5845 = vlaneseq
    %v5846 = vshrl.u32 %v5845, 7
    %v5847 = vsub.s32 3, %v5846
    %v5848 = vrot.slane %v4805, %v5847
    %v5849 = vlaneseq
    %v5850 = vshrl.u32 %v5849, 7
    %v5851 = vsub.s32 4, %v5850
    %v5852 = vrot.slane %v4805, %v5851
    %v5853 = vlaneseq
    %v5854 = vshrl.u32 %v5853, 7
    %v5855 = vsub.s32 5, %v5854
    %v5856 = vrot.slane %v4805, %v5855
    %v5857 = vlaneseq
    %v5858 = vshrl.u32 %v5857, 7
    %v5859 = vsub.s32 6, %v5858
    %v5860 = vrot.slane %v4805, %v5859
    %v5861 = vlaneseq
    %v5862 = vshrl.u32 %v5861, 7
    %v5863 = vsub.s32 7, %v5862
    %v5864 = vrot.slane %v4805, %v5863
    %v5865 = vlaneseq
    %v5866 = vshrl.u32 %v5865, 7
    %v5867 = vsub.s32 0, %v5866
    %v5868 = vrot.slane %v4806, %v5867
    %v5869 = vlaneseq
    %v5870 = vshrl.u32 %v5869, 7
    %v5871 = vsub.s32 1, %v5870
    %v5872 = vrot.slane %v4806, %v5871
    %v5873 = vlaneseq
    %v5874 = vshrl.u32 %v5873, 7
    %v5875 = vsub.s32 2, %v5874
    %v5876 = vrot.slane %v4806, %v5875
    %v5877 = vlaneseq
    %v5878 = vshrl.u32 %v5877, 7
    %v5879 = vsub.s32 3, %v5878
    %v5880 = vrot.slane %v4806, %v5879
    %v5881 = vlaneseq
    %v5882 = vshrl.u32 %v5881, 7
    %v5883 = vsub.s32 4, %v5882
    %v5884 = vrot.slane %v4806, %v5883
    %v5885 = vlaneseq
    %v5886 = vshrl.u32 %v5885, 7
    %v5887 = vsub.s32 5, %v5886
    %v5888 = vrot.slane %v4806, %v5887
    %v5889 = vlaneseq
    %v5890 = vshrl.u32 %v5889, 7
    %v5891 = vsub.s32 6, %v5890
    %v5892 = vrot.slane %v4806, %v5891
    %v5893 = vlaneseq
    %v5894 = vshrl.u32 %v5893, 7
    %v5895 = vsub.s32 7, %v5894
    %v5896 = vrot.slane %v4806, %v5895
    %v5897 = vlaneseq
    %v5898 = vshrl.u32 %v5897, 7
    %v5899 = vsub.s32 0, %v5898
    %v5900 = vrot.slane %v4807, %v5899
    %v5901 = vlaneseq
    %v5902 = vshrl.u32 %v5901, 7
    %v5903 = vsub.s32 1, %v5902
    %v5904 = vrot.slane %v4807, %v5903
    %v5905 = vlaneseq
    %v5906 = vshrl.u32 %v5905, 7
    %v5907 = vsub.s32 2, %v5906
    %v5908 = vrot.slane %v4807, %v5907
    %v5909 = vlaneseq
    %v5910 = vshrl.u32 %v5909, 7
    %v5911 = vsub.s32 3, %v5910
    %v5912 = vrot.slane %v4807, %v5911
    %v5913 = vlaneseq
    %v5914 = vshrl.u32 %v5913, 7
    %v5915 = vsub.s32 4, %v5914
    %v5916 = vrot.slane %v4807, %v5915
    %v5917 = vlaneseq
    %v5918 = vshrl.u32 %v5917, 7
    %v5919 = vsub.s32 5, %v5918
    %v5920 = vrot.slane %v4807, %v5919
    %v5921 = vlaneseq
    %v5922 = vshrl.u32 %v5921, 7
    %v5923 = vsub.s32 6, %v5922
    %v5924 = vrot.slane %v4807, %v5923
    %v5925 = vlaneseq
    %v5926 = vshrl.u32 %v5925, 7
    %v5927 = vsub.s32 7, %v5926
    %v5928 = vrot.slane %v4807, %v5927
    %v5929 = vlaneseq
    %v5930 = vshrl.u32 %v5929, 7
    %v5931 = vsub.s32 0, %v5930
    %v5932 = vrot.slane %v4808, %v5931
    %v5933 = vlaneseq
    %v5934 = vshrl.u32 %v5933, 7
    %v5935 = vsub.s32 1, %v5934
    %v5936 = vrot.slane %v4808, %v5935
    %v5937 = vlaneseq
    %v5938 = vshrl.u32 %v5937, 7
    %v5939 = vsub.s32 2, %v5938
    %v5940 = vrot.slane %v4808, %v5939
    %v5941 = vlaneseq
    %v5942 = vshrl.u32 %v5941, 7
    %v5943 = vsub.s32 3, %v5942
    %v5944 = vrot.slane %v4808, %v5943
    %v5945 = vlaneseq
    %v5946 = vshrl.u32 %v5945, 7
    %v5947 = vsub.s32 4, %v5946
    %v5948 = vrot.slane %v4808, %v5947
    %v5949 = vlaneseq
    %v5950 = vshrl.u32 %v5949, 7
    %v5951 = vsub.s32 5, %v5950
    %v5952 = vrot.slane %v4808, %v5951
    %v5953 = vlaneseq
    %v5954 = vshrl.u32 %v5953, 7
    %v5955 = vsub.s32 6, %v5954
    %v5956 = vrot.slane %v4808, %v5955
    %v5957 = vlaneseq
    %v5958 = vshrl.u32 %v5957, 7
    %v5959 = vsub.s32 7, %v5958
    %v5960 = vrot.slane %v4808, %v5959
    %v5961 = vlaneseq
    %v5962 = vshrl.u32 %v5961, 7
    %v5963 = vsub.s32 0, %v5962
    %v5964 = vrot.slane %v4809, %v5963
    %v5965 = vlaneseq
    %v5966 = vshrl.u32 %v5965, 7
    %v5967 = vsub.s32 1, %v5966
    %v5968 = vrot.slane %v4809, %v5967
    %v5969 = vlaneseq
    %v5970 = vshrl.u32 %v5969, 7
    %v5971 = vsub.s32 2, %v5970
    %v5972 = vrot.slane %v4809, %v5971
    %v5973 = vlaneseq
    %v5974 = vshrl.u32 %v5973, 7
    %v5975 = vsub.s32 3, %v5974
    %v5976 = vrot.slane %v4809, %v5975
    %v5977 = vlaneseq
    %v5978 = vshrl.u32 %v5977, 7
    %v5979 = vsub.s32 4, %v5978
    %v5980 = vrot.slane %v4809, %v5979
    %v5981 = vlaneseq
    %v5982 = vshrl.u32 %v5981, 7
    %v5983 = vsub.s32 5, %v5982
    %v5984 = vrot.slane %v4809, %v5983
    %v5985 = vlaneseq
    %v5986 = vshrl.u32 %v5985, 7
    %v5987 = vsub.s32 6, %v5986
    %v5988 = vrot.slane %v4809, %v5987
    %v5989 = vlaneseq
    %v5990 = vshrl.u32 %v5989, 7
    %v5991 = vsub.s32 7, %v5990
    %v5992 = vrot.slane %v4809, %v5991
    %v5993 = vlaneseq
    %v5994 = vshrl.u32 %v5993, 7
    %v5995 = vsub.s32 0, %v5994
    %v5996 = vrot.slane %v4810, %v5995
    %v5997 = vlaneseq
    %v5998 = vshrl.u32 %v5997, 7
    %v5999 = vsub.s32 1, %v5998
    %v6000 = vrot.slane %v4810, %v5999
    %v6001 = vlaneseq
    %v6002 = vshrl.u32 %v6001, 7
    %v6003 = vsub.s32 2, %v6002
    %v6004 = vrot.slane %v4810, %v6003
    %v6005 = vlaneseq
    %v6006 = vshrl.u32 %v6005, 7
    %v6007 = vsub.s32 3, %v6006
    %v6008 = vrot.slane %v4810, %v6007
    %v6009 = vlaneseq
    %v6010 = vshrl.u32 %v6009, 7
    %v6011 = vsub.s32 4, %v6010
    %v6012 = vrot.slane %v4810, %v6011
    %v6013 = vlaneseq
    %v6014 = vshrl.u32 %v6013, 7
    %v6015 = vsub.s32 5, %v6014
    %v6016 = vrot.slane %v4810, %v6015
    %v6017 = vlaneseq
    %v6018 = vshrl.u32 %v6017, 7
    %v6019 = vsub.s32 6, %v6018
    %v6020 = vrot.slane %v4810, %v6019
    %v6021 = vlaneseq
    %v6022 = vshrl.u32 %v6021, 7
    %v6023 = vsub.s32 7, %v6022
    %v6024 = vrot.slane %v4810, %v6023
    %v6025 = vlaneseq
    %v6026 = vshrl.u32 %v6025, 7
    %v6027 = vsub.s32 0, %v6026
    %v6028 = vrot.slane %v4811, %v6027
    %v6029 = vlaneseq
    %v6030 = vshrl.u32 %v6029, 7
    %v6031 = vsub.s32 1, %v6030
    %v6032 = vrot.slane %v4811, %v6031
    %v6033 = vlaneseq
    %v6034 = vshrl.u32 %v6033, 7
    %v6035 = vsub.s32 2, %v6034
    %v6036 = vrot.slane %v4811, %v6035
    %v6037 = vlaneseq
    %v6038 = vshrl.u32 %v6037, 7
    %v6039 = vsub.s32 3, %v6038
    %v6040 = vrot.slane %v4811, %v6039
    %v6041 = vlaneseq
    %v6042 = vshrl.u32 %v6041, 7
    %v6043 = vsub.s32 4, %v6042
    %v6044 = vrot.slane %v4811, %v6043
    %v6045 = vlaneseq
    %v6046 = vshrl.u32 %v6045, 7
    %v6047 = vsub.s32 5, %v6046
    %v6048 = vrot.slane %v4811, %v6047
    %v6049 = vlaneseq
    %v6050 = vshrl.u32 %v6049, 7
    %v6051 = vsub.s32 6, %v6050
    %v6052 = vrot.slane %v4811, %v6051
    %v6053 = vlaneseq
    %v6054 = vshrl.u32 %v6053, 7
    %v6055 = vsub.s32 7, %v6054
    %v6056 = vrot.slane %v4811, %v6055
    %v6057 = vlaneseq
    %v6058 = vshrl.u32 %v6057, 7
    %v6059 = vsub.s32 0, %v6058
    %v6060 = vrot.slane %v4812, %v6059
    %v6061 = vlaneseq
    %v6062 = vshrl.u32 %v6061, 7
    %v6063 = vsub.s32 1, %v6062
    %v6064 = vrot.slane %v4812, %v6063
    %v6065 = vlaneseq
    %v6066 = vshrl.u32 %v6065, 7
    %v6067 = vsub.s32 2, %v6066
    %v6068 = vrot.slane %v4812, %v6067
    %v6069 = vlaneseq
    %v6070 = vshrl.u32 %v6069, 7
    %v6071 = vsub.s32 3, %v6070
    %v6072 = vrot.slane %v4812, %v6071
    %v6073 = vlaneseq
    %v6074 = vshrl.u32 %v6073, 7
    %v6075 = vsub.s32 4, %v6074
    %v6076 = vrot.slane %v4812, %v6075
    %v6077 = vlaneseq
    %v6078 = vshrl.u32 %v6077, 7
    %v6079 = vsub.s32 5, %v6078
    %v6080 = vrot.slane %v4812, %v6079
    %v6081 = vlaneseq
    %v6082 = vshrl.u32 %v6081, 7
    %v6083 = vsub.s32 6, %v6082
    %v6084 = vrot.slane %v4812, %v6083
    %v6085 = vlaneseq
    %v6086 = vshrl.u32 %v6085, 7
    %v6087 = vsub.s32 7, %v6086
    %v6088 = vrot.slane %v4812, %v6087
    %v6089 = vlaneseq
    %v6090 = vshrl.u32 %v6089, 7
    %v6091 = vsub.s32 0, %v6090
    %v6092 = vrot.slane %v4813, %v6091
    %v6093 = vlaneseq
    %v6094 = vshrl.u32 %v6093, 7
    %v6095 = vsub.s32 1, %v6094
    %v6096 = vrot.slane %v4813, %v6095
    %v6097 = vlaneseq
    %v6098 = vshrl.u32 %v6097, 7
    %v6099 = vsub.s32 2, %v6098
    %v6100 = vrot.slane %v4813, %v6099
    %v6101 = vlaneseq
    %v6102 = vshrl.u32 %v6101, 7
    %v6103 = vsub.s32 3, %v6102
    %v6104 = vrot.slane %v4813, %v6103
    %v6105 = vlaneseq
    %v6106 = vshrl.u32 %v6105, 7
    %v6107 = vsub.s32 4, %v6106
    %v6108 = vrot.slane %v4813, %v6107
    %v6109 = vlaneseq
    %v6110 = vshrl.u32 %v6109, 7
    %v6111 = vsub.s32 5, %v6110
    %v6112 = vrot.slane %v4813, %v6111
    %v6113 = vlaneseq
    %v6114 = vshrl.u32 %v6113, 7
    %v6115 = vsub.s32 6, %v6114
    %v6116 = vrot.slane %v4813, %v6115
    %v6117 = vlaneseq
    %v6118 = vshrl.u32 %v6117, 7
    %v6119 = vsub.s32 7, %v6118
    %v6120 = vrot.slane %v4813, %v6119
    %v6121 = vlaneseq
    %v6122 = vshrl.u32 %v6121, 7
    %v6123 = vsub.s32 0, %v6122
    %v6124 = vrot.slane %v4814, %v6123
    %v6125 = vlaneseq
    %v6126 = vshrl.u32 %v6125, 7
    %v6127 = vsub.s32 1, %v6126
    %v6128 = vrot.slane %v4814, %v6127
    %v6129 = vlaneseq
    %v6130 = vshrl.u32 %v6129, 7
    %v6131 = vsub.s32 2, %v6130
    %v6132 = vrot.slane %v4814, %v6131
    %v6133 = vlaneseq
    %v6134 = vshrl.u32 %v6133, 7
    %v6135 = vsub.s32 3, %v6134
    %v6136 = vrot.slane %v4814, %v6135
    %v6137 = vlaneseq
    %v6138 = vshrl.u32 %v6137, 7
    %v6139 = vsub.s32 4, %v6138
    %v6140 = vrot.slane %v4814, %v6139
    %v6141 = vlaneseq
    %v6142 = vshrl.u32 %v6141, 7
    %v6143 = vsub.s32 5, %v6142
    %v6144 = vrot.slane %v4814, %v6143
    %v6145 = vlaneseq
    %v6146 = vshrl.u32 %v6145, 7
    %v6147 = vsub.s32 6, %v6146
    %v6148 = vrot.slane %v4814, %v6147
    %v6149 = vlaneseq
    %v6150 = vshrl.u32 %v6149, 7
    %v6151 = vsub.s32 7, %v6150
    %v6152 = vrot.slane %v4814, %v6151
    %v6153 = vlaneseq
    %v6154 = vshrl.u32 %v6153, 7
    %v6155 = vsub.s32 0, %v6154
    %v6156 = vrot.slane %v4815, %v6155
    %v6157 = vlaneseq
    %v6158 = vshrl.u32 %v6157, 7
    %v6159 = vsub.s32 1, %v6158
    %v6160 = vrot.slane %v4815, %v6159
    %v6161 = vlaneseq
    %v6162 = vshrl.u32 %v6161, 7
    %v6163 = vsub.s32 2, %v6162
    %v6164 = vrot.slane %v4815, %v6163
    %v6165 = vlaneseq
    %v6166 = vshrl.u32 %v6165, 7
    %v6167 = vsub.s32 3, %v6166
    %v6168 = vrot.slane %v4815, %v6167
    %v6169 = vlaneseq
    %v6170 = vshrl.u32 %v6169, 7
    %v6171 = vsub.s32 4, %v6170
    %v6172 = vrot.slane %v4815, %v6171
    %v6173 = vlaneseq
    %v6174 = vshrl.u32 %v6173, 7
    %v6175 = vsub.s32 5, %v6174
    %v6176 = vrot.slane %v4815, %v6175
    %v6177 = vlaneseq
    %v6178 = vshrl.u32 %v6177, 7
    %v6179 = vsub.s32 6, %v6178
    %v6180 = vrot.slane %v4815, %v6179
    %v6181 = vlaneseq
    %v6182 = vshrl.u32 %v6181, 7
    %v6183 = vsub.s32 7, %v6182
    %v6184 = vrot.slane %v4815, %v6183
    %v6185 = vlaneseq
    %v6186 = vshrl.u32 %v6185, 7
    %v6187 = vsub.s32 0, %v6186
    %v6188 = vrot.slane %v4816, %v6187
    %v6189 = vlaneseq
    %v6190 = vshrl.u32 %v6189, 7
    %v6191 = vsub.s32 1, %v6190
    %v6192 = vrot.slane %v4816, %v6191
    %v6193 = vlaneseq
    %v6194 = vshrl.u32 %v6193, 7
    %v6195 = vsub.s32 2, %v6194
    %v6196 = vrot.slane %v4816, %v6195
    %v6197 = vlaneseq
    %v6198 = vshrl.u32 %v6197, 7
    %v6199 = vsub.s32 3, %v6198
    %v6200 = vrot.slane %v4816, %v6199
    %v6201 = vlaneseq
    %v6202 = vshrl.u32 %v6201, 7
    %v6203 = vsub.s32 4, %v6202
    %v6204 = vrot.slane %v4816, %v6203
    %v6205 = vlaneseq
    %v6206 = vshrl.u32 %v6205, 7
    %v6207 = vsub.s32 5, %v6206
    %v6208 = vrot.slane %v4816, %v6207
    %v6209 = vlaneseq
    %v6210 = vshrl.u32 %v6209, 7
    %v6211 = vsub.s32 6, %v6210
    %v6212 = vrot.slane %v4816, %v6211
    %v6213 = vlaneseq
    %v6214 = vshrl.u32 %v6213, 7
    %v6215 = vsub.s32 7, %v6214
    %v6216 = vrot.slane %v4816, %v6215
    %v6217 = vlaneseq
    %v6218 = vshrl.u32 %v6217, 7
    %v6219 = vsub.s32 0, %v6218
    %v6220 = vrot.slane %v4817, %v6219
    %v6221 = vlaneseq
    %v6222 = vshrl.u32 %v6221, 7
    %v6223 = vsub.s32 1, %v6222
    %v6224 = vrot.slane %v4817, %v6223
    %v6225 = vlaneseq
    %v6226 = vshrl.u32 %v6225, 7
    %v6227 = vsub.s32 2, %v6226
    %v6228 = vrot.slane %v4817, %v6227
    %v6229 = vlaneseq
    %v6230 = vshrl.u32 %v6229, 7
    %v6231 = vsub.s32 3, %v6230
    %v6232 = vrot.slane %v4817, %v6231
    %v6233 = vlaneseq
    %v6234 = vshrl.u32 %v6233, 7
    %v6235 = vsub.s32 4, %v6234
    %v6236 = vrot.slane %v4817, %v6235
    %v6237 = vlaneseq
    %v6238 = vshrl.u32 %v6237, 7
    %v6239 = vsub.s32 5, %v6238
    %v6240 = vrot.slane %v4817, %v6239
    %v6241 = vlaneseq
    %v6242 = vshrl.u32 %v6241, 7
    %v6243 = vsub.s32 6, %v6242
    %v6244 = vrot.slane %v4817, %v6243
    %v6245 = vlaneseq
    %v6246 = vshrl.u32 %v6245, 7
    %v6247 = vsub.s32 7, %v6246
    %v6248 = vrot.slane %v4817, %v6247
    %v6249 = vlaneseq
    %v6250 = vshrl.u32 %v6249, 7
    %v6251 = vsub.s32 0, %v6250
    %v6252 = vrot.slane %v4818, %v6251
    %v6253 = vlaneseq
    %v6254 = vshrl.u32 %v6253, 7
    %v6255 = vsub.s32 1, %v6254
    %v6256 = vrot.slane %v4818, %v6255
    %v6257 = vlaneseq
    %v6258 = vshrl.u32 %v6257, 7
    %v6259 = vsub.s32 2, %v6258
    %v6260 = vrot.slane %v4818, %v6259
    %v6261 = vlaneseq
    %v6262 = vshrl.u32 %v6261, 7
    %v6263 = vsub.s32 3, %v6262
    %v6264 = vrot.slane %v4818, %v6263
    %v6265 = vlaneseq
    %v6266 = vshrl.u32 %v6265, 7
    %v6267 = vsub.s32 4, %v6266
    %v6268 = vrot.slane %v4818, %v6267
    %v6269 = vlaneseq
    %v6270 = vshrl.u32 %v6269, 7
    %v6271 = vsub.s32 5, %v6270
    %v6272 = vrot.slane %v4818, %v6271
    %v6273 = vlaneseq
    %v6274 = vshrl.u32 %v6273, 7
    %v6275 = vsub.s32 6, %v6274
    %v6276 = vrot.slane %v4818, %v6275
    %v6277 = vlaneseq
    %v6278 = vshrl.u32 %v6277, 7
    %v6279 = vsub.s32 7, %v6278
    %v6280 = vrot.slane %v4818, %v6279
    %v6281 = vlaneseq
    %v6282 = vshrl.u32 %v6281, 7
    %v6283 = vsub.s32 0, %v6282
    %v6284 = vrot.slane %v4819, %v6283
    %v6285 = vlaneseq
    %v6286 = vshrl.u32 %v6285, 7
    %v6287 = vsub.s32 1, %v6286
    %v6288 = vrot.slane %v4819, %v6287
    %v6289 = vlaneseq
    %v6290 = vshrl.u32 %v6289, 7
    %v6291 = vsub.s32 2, %v6290
    %v6292 = vrot.slane %v4819, %v6291
    %v6293 = vlaneseq
    %v6294 = vshrl.u32 %v6293, 7
    %v6295 = vsub.s32 3, %v6294
    %v6296 = vrot.slane %v4819, %v6295
    %v6297 = vlaneseq
    %v6298 = vshrl.u32 %v6297, 7
    %v6299 = vsub.s32 4, %v6298
    %v6300 = vrot.slane %v4819, %v6299
    %v6301 = vlaneseq
    %v6302 = vshrl.u32 %v6301, 7
    %v6303 = vsub.s32 5, %v6302
    %v6304 = vrot.slane %v4819, %v6303
    %v6305 = vlaneseq
    %v6306 = vshrl.u32 %v6305, 7
    %v6307 = vsub.s32 6, %v6306
    %v6308 = vrot.slane %v4819, %v6307
    %v6309 = vlaneseq
    %v6310 = vshrl.u32 %v6309, 7
    %v6311 = vsub.s32 7, %v6310
    %v6312 = vrot.slane %v4819, %v6311
    %v6313 = vlaneseq
    %v6314 = vshrl.u32 %v6313, 7
    %v6315 = vsub.s32 0, %v6314
    %v6316 = vrot.slane %v4820, %v6315
    %v6317 = vlaneseq
    %v6318 = vshrl.u32 %v6317, 7
    %v6319 = vsub.s32 1, %v6318
    %v6320 = vrot.slane %v4820, %v6319
    %v6321 = vlaneseq
    %v6322 = vshrl.u32 %v6321, 7
    %v6323 = vsub.s32 2, %v6322
    %v6324 = vrot.slane %v4820, %v6323
    %v6325 = vlaneseq
    %v6326 = vshrl.u32 %v6325, 7
    %v6327 = vsub.s32 3, %v6326
    %v6328 = vrot.slane %v4820, %v6327
    %v6329 = vlaneseq
    %v6330 = vshrl.u32 %v6329, 7
    %v6331 = vsub.s32 4, %v6330
    %v6332 = vrot.slane %v4820, %v6331
    %v6333 = vlaneseq
    %v6334 = vshrl.u32 %v6333, 7
    %v6335 = vsub.s32 5, %v6334
    %v6336 = vrot.slane %v4820, %v6335
    %v6337 = vlaneseq
    %v6338 = vshrl.u32 %v6337, 7
    %v6339 = vsub.s32 6, %v6338
    %v6340 = vrot.slane %v4820, %v6339
    %v6341 = vlaneseq
    %v6342 = vshrl.u32 %v6341, 7
    %v6343 = vsub.s32 7, %v6342
    %v6344 = vrot.slane %v4820, %v6343
    %v6345 = vlaneseq
    %v6346 = vshrl.u32 %v6345, 7
    %v6347 = vsub.s32 0, %v6346
    %v6348 = vrot.slane %v4821, %v6347
    %v6349 = vlaneseq
    %v6350 = vshrl.u32 %v6349, 7
    %v6351 = vsub.s32 1, %v6350
    %v6352 = vrot.slane %v4821, %v6351
    %v6353 = vlaneseq
    %v6354 = vshrl.u32 %v6353, 7
    %v6355 = vsub.s32 2, %v6354
    %v6356 = vrot.slane %v4821, %v6355
    %v6357 = vlaneseq
    %v6358 = vshrl.u32 %v6357, 7
    %v6359 = vsub.s32 3, %v6358
    %v6360 = vrot.slane %v4821, %v6359
    %v6361 = vlaneseq
    %v6362 = vshrl.u32 %v6361, 7
    %v6363 = vsub.s32 4, %v6362
    %v6364 = vrot.slane %v4821, %v6363
    %v6365 = vlaneseq
    %v6366 = vshrl.u32 %v6365, 7
    %v6367 = vsub.s32 5, %v6366
    %v6368 = vrot.slane %v4821, %v6367
    %v6369 = vlaneseq
    %v6370 = vshrl.u32 %v6369, 7
    %v6371 = vsub.s32 6, %v6370
    %v6372 = vrot.slane %v4821, %v6371
    %v6373 = vlaneseq
    %v6374 = vshrl.u32 %v6373, 7
    %v6375 = vsub.s32 7, %v6374
    %v6376 = vrot.slane %v4821, %v6375
    %v6377 = vlaneseq
    %v6378 = vshrl.u32 %v6377, 7
    %v6379 = vsub.s32 0, %v6378
    %v6380 = vrot.slane %v4822, %v6379
    %v6381 = vlaneseq
    %v6382 = vshrl.u32 %v6381, 7
    %v6383 = vsub.s32 1, %v6382
    %v6384 = vrot.slane %v4822, %v6383
    %v6385 = vlaneseq
    %v6386 = vshrl.u32 %v6385, 7
    %v6387 = vsub.s32 2, %v6386
    %v6388 = vrot.slane %v4822, %v6387
    %v6389 = vlaneseq
    %v6390 = vshrl.u32 %v6389, 7
    %v6391 = vsub.s32 3, %v6390
    %v6392 = vrot.slane %v4822, %v6391
    %v6393 = vlaneseq
    %v6394 = vshrl.u32 %v6393, 7
    %v6395 = vsub.s32 4, %v6394
    %v6396 = vrot.slane %v4822, %v6395
    %v6397 = vlaneseq
    %v6398 = vshrl.u32 %v6397, 7
    %v6399 = vsub.s32 5, %v6398
    %v6400 = vrot.slane %v4822, %v6399
    %v6401 = vlaneseq
    %v6402 = vshrl.u32 %v6401, 7
    %v6403 = vsub.s32 6, %v6402
    %v6404 = vrot.slane %v4822, %v6403
    %v6405 = vlaneseq
    %v6406 = vshrl.u32 %v6405, 7
    %v6407 = vsub.s32 7, %v6406
    %v6408 = vrot.slane %v4822, %v6407
    %v6409 = vlaneseq
    %v6410 = vshrl.u32 %v6409, 7
    %v6411 = vsub.s32 0, %v6410
    %v6412 = vrot.slane %v4823, %v6411
    %v6413 = vlaneseq
    %v6414 = vshrl.u32 %v6413, 7
    %v6415 = vsub.s32 1, %v6414
    %v6416 = vrot.slane %v4823, %v6415
    %v6417 = vlaneseq
    %v6418 = vshrl.u32 %v6417, 7
    %v6419 = vsub.s32 2, %v6418
    %v6420 = vrot.slane %v4823, %v6419
    %v6421 = vlaneseq
    %v6422 = vshrl.u32 %v6421, 7
    %v6423 = vsub.s32 3, %v6422
    %v6424 = vrot.slane %v4823, %v6423
    %v6425 = vlaneseq
    %v6426 = vshrl.u32 %v6425, 7
    %v6427 = vsub.s32 4, %v6426
    %v6428 = vrot.slane %v4823, %v6427
    %v6429 = vlaneseq
    %v6430 = vshrl.u32 %v6429, 7
    %v6431 = vsub.s32 5, %v6430
    %v6432 = vrot.slane %v4823, %v6431
    %v6433 = vlaneseq
    %v6434 = vshrl.u32 %v6433, 7
    %v6435 = vsub.s32 6, %v6434
    %v6436 = vrot.slane %v4823, %v6435
    %v6828 = vmul.f32 %v4384, %v4876
    %v6829 = vmul.f32 %v4385, %v4880
    %v6830 = vmul.f32 %v4386, %v4884
    %v6831 = vmul.f32 %v4387, %v4888
    %v6832 = vmul.f32 %v4388, %v4892
    %v6833 = vmul.f32 %v4389, %v4896
    %v6834 = vmul.f32 %v4390, %v4900
    %v6835 = vmul.f32 %v4391, %v4904
    %v6836 = vmul.f32 %v4392, %v4908
    %v6837 = vmul.f32 %v4393, %v4912
    %v6838 = vmul.f32 %v4394, %v4916
    %v6839 = vmul.f32 %v4395, %v4920
    %v6840 = vmul.f32 %v4396, %v4924
    %v6841 = vmul.f32 %v4397, %v4928
    %v6842 = vmul.f32 %v4398, %v4932
    %v6843 = vmul.f32 %v4399, %v4936
    %v6844 = vmul.f32 %v4400, %v4940
    %v6845 = vmul.f32 %v4401, %v4944
    %v6846 = vmul.f32 %v4402, %v4948
    %v6847 = vmul.f32 %v4403, %v4952
    %v6848 = vmul.f32 %v4404, %v4956
    %v6849 = vmul.f32 %v4405, %v4960
    %v6850 = vmul.f32 %v4406, %v4964
    %v6851 = vmul.f32 %v4407, %v4968
    %v6852 = vmul.f32 %v4408, %v4972
    %v6853 = vmul.f32 %v4409, %v4976
    %v6854 = vmul.f32 %v4410, %v4980
    %v6855 = vmul.f32 %v4411, %v4984
    %v6856 = vmul.f32 %v4412, %v4988
    %v6857 = vmul.f32 %v4413, %v4992
    %v6858 = vmul.f32 %v4414, %v4996
    %v6859 = vmul.f32 %v4415, %v5000
    %v6860 = vmul.f32 %v4416, %v5004
    %v6861 = vmul.f32 %v4417, %v5008
    %v6862 = vmul.f32 %v4418, %v5012
    %v6863 = vmul.f32 %v4419, %v5016
    %v6864 = vmul.f32 %v4420, %v5020
    %v6865 = vmul.f32 %v4421, %v5024
    %v6866 = vmul.f32 %v4422, %v5028
    %v6867 = vmul.f32 %v4423, %v5032
    %v6868 = vmul.f32 %v4424, %v5036
    %v6869 = vmul.f32 %v4425, %v5040
    %v6870 = vmul.f32 %v4426, %v5044
    %v6871 = vmul.f32 %v4427, %v5048
    %v6872 = vmul.f32 %v4428, %v5052
    %v6873 = vmul.f32 %v4429, %v5056
    %v6874 = vmul.f32 %v4430, %v5060
    %v6875 = vmul.f32 %v4431, %v5064
    %v6876 = vmul.f32 %v4432, %v5068
    %v6877 = vmul.f32 %v4433, %v5072
    %v6878 = vmul.f32 %v4434, %v5076
    %v6879 = vmul.f32 %v4435, %v5080
    %v6880 = vmul.f32 %v4436, %v5084
    %v6881 = vmul.f32 %v4437, %v5088
    %v6882 = vmul.f32 %v4438, %v5092
    %v6883 = vmul.f32 %v4439, %v5096
    %v6884 = vmul.f32 %v4440, %v5100
    %v6885 = vmul.f32 %v4441, %v5104
    %v6886 = vmul.f32 %v4442, %v5108
    %v6887 = vmul.f32 %v4443, %v5112
    %v6888 = vmul.f32 %v4444, %v5116
    %v6889 = vmul.f32 %v4445, %v5120
    %v6890 = vmul.f32 %v4446, %v5124
    %v6891 = vmul.f32 %v4447, %v5128
    %v6892 = vmul.f32 %v4448, %v5132
    %v6893 = vmul.f32 %v4449, %v5136
    %v6894 = vmul.f32 %v4450, %v5140
    %v6895 = vmul.f32 %v4451, %v5144
    %v6896 = vmul.f32 %v4452, %v5148
    %v6897 = vmul.f32 %v4453, %v5152
    %v6898 = vmul.f32 %v4454, %v5156
    %v6899 = vmul.f32 %v4455, %v5160
    %v6900 = vmul.f32 %v4456, %v5164
    %v6901 = vmul.f32 %v4457, %v5168
    %v6902 = vmul.f32 %v4458, %v5172
    %v6903 = vmul.f32 %v4459, %v5176
    %v6904 = vmul.f32 %v4460, %v5180
    %v6905 = vmul.f32 %v4461, %v5184
    %v6906 = vmul.f32 %v4462, %v5188
    %v6907 = vmul.f32 %v4463, %v5192
    %v6908 = vmul.f32 %v4464, %v5196
    %v6909 = vmul.f32 %v4465, %v5200
    %v6910 = vmul.f32 %v4466, %v5204
    %v6911 = vmul.f32 %v4467, %v5208
    %v6912 = vmul.f32 %v4468, %v5212
    %v6913 = vmul.f32 %v4469, %v5216
    %v6914 = vmul.f32 %v4470, %v5220
    %v6915 = vmul.f32 %v4471, %v5224
    %v6916 = vmul.f32 %v4472, %v5228
    %v6917 = vmul.f32 %v4473, %v5232
    %v6918 = vmul.f32 %v4474, %v5236
    %v6919 = vmul.f32 %v4475, %v5240
    %v6920 = vmul.f32 %v4476, %v5244
    %v6921 = vmul.f32 %v4477, %v5248
    %v6922 = vmul.f32 %v4478, %v5252
    %v6923 = vmul.f32 %v4479, %v5256
    %v6924 = vmul.f32 %v4480, %v5260
    %v6925 = vmul.f32 %v4481, %v5264
    %v6926 = vmul.f32 %v4482, %v5268
    %v6927 = vmul.f32 %v4483, %v5272
    %v6928 = vmul.f32 %v4484, %v5276
    %v6929 = vmul.f32 %v4485, %v5280
    %v6930 = vmul.f32 %v4486, %v5284
    %v6931 = vmul.f32 %v4487, %v5288
    %v6932 = vmul.f32 %v4488, %v5292
    %v6933 = vmul.f32 %v4489, %v5296
    %v6934 = vmul.f32 %v4490, %v5300
    %v6935 = vmul.f32 %v4491, %v5304
    %v6936 = vmul.f32 %v4492, %v5308
    %v6937 = vmul.f32 %v4493, %v5312
    %v6938 = vmul.f32 %v4494, %v5316
    %v6939 = vmul.f32 %v4495, %v5320
    %v6940 = vmul.f32 %v4496, %v5324
    %v6941 = vmul.f32 %v4497, %v5328
    %v6942 = vmul.f32 %v4498, %v5332
    %v6943 = vmul.f32 %v4499, %v5336
    %v6944 = vmul.f32 %v4500, %v5340
    %v6945 = vmul.f32 %v4501, %v5344
    %v6946 = vmul.f32 %v4502, %v5348
    %v6947 = vmul.f32 %v4503, %v5352
    %v6948 = vmul.f32 %v4504, %v5356
    %v6949 = vmul.f32 %v4505, %v5360
    %v6950 = vmul.f32 %v4506, %v5364
    %v6951 = vmul.f32 %v4507, %v5368
    %v6952 = vmul.f32 %v4508, %v5372
    %v6953 = vmul.f32 %v4509, %v5376
    %v6954 = vmul.f32 %v4510, %v5380
    %v6955 = vmul.f32 %v4511, %v5384
    %v6956 = vmul.f32 %v4512, %v5388
    %v6957 = vmul.f32 %v4513, %v5392
    %v6958 = vmul.f32 %v4514, %v5396
    %v6959 = vmul.f32 %v4515, %v5400
    %v6960 = vmul.f32 %v4516, %v5404
    %v6961 = vmul.f32 %v4517, %v5408
    %v6962 = vmul.f32 %v4518, %v5412
    %v6963 = vmul.f32 %v4519, %v5416
    %v6964 = vmul.f32 %v4520, %v5420
    %v6965 = vmul.f32 %v4521, %v5424
    %v6966 = vmul.f32 %v4522, %v5428
    %v6967 = vmul.f32 %v4523, %v5432
    %v6968 = vmul.f32 %v4524, %v5436
    %v6969 = vmul.f32 %v4525, %v5440
    %v6970 = vmul.f32 %v4526, %v5444
    %v6971 = vmul.f32 %v4527, %v5448
    %v6972 = vmul.f32 %v4528, %v5452
    %v6973 = vmul.f32 %v4529, %v5456
    %v6974 = vmul.f32 %v4530, %v5460
    %v6975 = vmul.f32 %v4531, %v5464
    %v6976 = vmul.f32 %v4532, %v5468
    %v6977 = vmul.f32 %v4533, %v5472
    %v6978 = vmul.f32 %v4534, %v5476
    %v6979 = vmul.f32 %v4535, %v5480
    %v6980 = vmul.f32 %v4536, %v5484
    %v6981 = vmul.f32 %v4537, %v5488
    %v6982 = vmul.f32 %v4538, %v5492
    %v6983 = vmul.f32 %v4539, %v5496
    %v6984 = vmul.f32 %v4540, %v5500
    %v6985 = vmul.f32 %v4541, %v5504
    %v6986 = vmul.f32 %v4542, %v5508
    %v6987 = vmul.f32 %v4543, %v5512
    %v6988 = vmul.f32 %v4544, %v5516
    %v6989 = vmul.f32 %v4545, %v5520
    %v6990 = vmul.f32 %v4546, %v5524
    %v6991 = vmul.f32 %v4547, %v5528
    %v6992 = vmul.f32 %v4548, %v5532
    %v6993 = vmul.f32 %v4549, %v5536
    %v6994 = vmul.f32 %v4550, %v5540
    %v6995 = vmul.f32 %v4551, %v5544
    %v6996 = vmul.f32 %v4552, %v5548
    %v6997 = vmul.f32 %v4553, %v5552
    %v6998 = vmul.f32 %v4554, %v5556
    %v6999 = vmul.f32 %v4555, %v5560
    %v7000 = vmul.f32 %v4556, %v5564
    %v7001 = vmul.f32 %v4557, %v5568
    %v7002 = vmul.f32 %v4558, %v5572
    %v7003 = vmul.f32 %v4559, %v5576
    %v7004 = vmul.f32 %v4560, %v5580
    %v7005 = vmul.f32 %v4561, %v5584
    %v7006 = vmul.f32 %v4562, %v5588
    %v7007 = vmul.f32 %v4563, %v5592
    %v7008 = vmul.f32 %v4564, %v5596
    %v7009 = vmul.f32 %v4565, %v5600
    %v7010 = vmul.f32 %v4566, %v5604
    %v7011 = vmul.f32 %v4567, %v5608
    %v7012 = vmul.f32 %v4568, %v5612
    %v7013 = vmul.f32 %v4569, %v5616
    %v7014 = vmul.f32 %v4570, %v5620
    %v7015 = vmul.f32 %v4571, %v5624
    %v7016 = vmul.f32 %v4572, %v5628
    %v7017 = vmul.f32 %v4573, %v5632
    %v7018 = vmul.f32 %v4574, %v5636
    %v7019 = vmul.f32 %v4575, %v5640
    %v7020 = vmul.f32 %v4576, %v5644
    %v7021 = vmul.f32 %v4577, %v5648
    %v7022 = vmul.f32 %v4578, %v5652
    %v7023 = vmul.f32 %v4579, %v5656
    %v7024 = vmul.f32 %v4580, %v5660
    %v7025 = vmul.f32 %v4581, %v5664
    %v7026 = vmul.f32 %v4582, %v5668
    %v7027 = vmul.f32 %v4583, %v5672
    %v7028 = vmul.f32 %v4584, %v5676
    %v7029 = vmul.f32 %v4585, %v5680
    %v7030 = vmul.f32 %v4586, %v5684
    %v7031 = vmul.f32 %v4587, %v5688
    %v7032 = vmul.f32 %v4588, %v5692
    %v7033 = vmul.f32 %v4589, %v5696
    %v7034 = vmul.f32 %v4590, %v5700
    %v7035 = vmul.f32 %v4591, %v5704
    %v7036 = vmul.f32 %v4592, %v5708
    %v7037 = vmul.f32 %v4593, %v5712
    %v7038 = vmul.f32 %v4594, %v5716
    %v7039 = vmul.f32 %v4595, %v5720
    %v7040 = vmul.f32 %v4596, %v5724
    %v7041 = vmul.f32 %v4597, %v5728
    %v7042 = vmul.f32 %v4598, %v5732
    %v7043 = vmul.f32 %v4599, %v5736
    %v7044 = vmul.f32 %v4600, %v5740
    %v7045 = vmul.f32 %v4601, %v5744
    %v7046 = vmul.f32 %v4602, %v5748
    %v7047 = vmul.f32 %v4603, %v5752
    %v7048 = vmul.f32 %v4604, %v5756
    %v7049 = vmul.f32 %v4605, %v5760
    %v7050 = vmul.f32 %v4606, %v5764
    %v7051 = vmul.f32 %v4607, %v5768
    %v7052 = vmul.f32 %v4608, %v5772
    %v7053 = vmul.f32 %v4609, %v5776
    %v7054 = vmul.f32 %v4610, %v5780
    %v7055 = vmul.f32 %v4611, %v5784
    %v7056 = vmul.f32 %v4612, %v5788
    %v7057 = vmul.f32 %v4613, %v5792
    %v7058 = vmul.f32 %v4614, %v5796
    %v7059 = vmul.f32 %v4615, %v5800
    %v7060 = vmul.f32 %v4616, %v5804
    %v7061 = vmul.f32 %v4617, %v5808
    %v7062 = vmul.f32 %v4618, %v5812
    %v7063 = vmul.f32 %v4619, %v5816
    %v7064 = vmul.f32 %v4620, %v5820
    %v7065 = vmul.f32 %v4621, %v5824
    %v7066 = vmul.f32 %v4622, %v5828
    %v7067 = vmul.f32 %v4623, %v5832
    %v7068 = vmul.f32 %v4624, %v5836
    %v7069 = vmul.f32 %v4625, %v5840
    %v7070 = vmul.f32 %v4626, %v5844
    %v7071 = vmul.f32 %v4627, %v5848
    %v7072 = vmul.f32 %v4628, %v5852
    %v7073 = vmul.f32 %v4629, %v5856
    %v7074 = vmul.f32 %v4630, %v5860
    %v7075 = vmul.f32 %v4631, %v5864
    %v7076 = vmul.f32 %v4632, %v5868
    %v7077 = vmul.f32 %v4633, %v5872
    %v7078 = vmul.f32 %v4634, %v5876
    %v7079 = vmul.f32 %v4635, %v5880
    %v7080 = vmul.f32 %v4636, %v5884
    %v7081 = vmul.f32 %v4637, %v5888
    %v7082 = vmul.f32 %v4638, %v5892
    %v7083 = vmul.f32 %v4639, %v5896
    %v7084 = vmul.f32 %v4640, %v5900
    %v7085 = vmul.f32 %v4641, %v5904
    %v7086 = vmul.f32 %v4642, %v5908
    %v7087 = vmul.f32 %v4643, %v5912
    %v7088 = vmul.f32 %v4644, %v5916
    %v7089 = vmul.f32 %v4645, %v5920
    %v7090 = vmul.f32 %v4646, %v5924
    %v7091 = vmul.f32 %v4647, %v5928
    %v7092 = vmul.f32 %v4648, %v5932
    %v7093 = vmul.f32 %v4649, %v5936
    %v7094 = vmul.f32 %v4650, %v5940
    %v7095 = vmul.f32 %v4651, %v5944
    %v7096 = vmul.f32 %v4652, %v5948
    %v7097 = vmul.f32 %v4653, %v5952
    %v7098 = vmul.f32 %v4654, %v5956
    %v7099 = vmul.f32 %v4655, %v5960
    %v7100 = vmul.f32 %v4656, %v5964
    %v7101 = vmul.f32 %v4657, %v5968
    %v7102 = vmul.f32 %v4658, %v5972
    %v7103 = vmul.f32 %v4659, %v5976
    %v7104 = vmul.f32 %v4660, %v5980
    %v7105 = vmul.f32 %v4661, %v5984
    %v7106 = vmul.f32 %v4662, %v5988
    %v7107 = vmul.f32 %v4663, %v5992
    %v7108 = vmul.f32 %v4664, %v5996
    %v7109 = vmul.f32 %v4665, %v6000
    %v7110 = vmul.f32 %v4666, %v6004
    %v7111 = vmul.f32 %v4667, %v6008
    %v7112 = vmul.f32 %v4668, %v6012
    %v7113 = vmul.f32 %v4669, %v6016
    %v7114 = vmul.f32 %v4670, %v6020
    %v7115 = vmul.f32 %v4671, %v6024
    %v7116 = vmul.f32 %v4672, %v6028
    %v7117 = vmul.f32 %v4673, %v6032
    %v7118 = vmul.f32 %v4674, %v6036
    %v7119 = vmul.f32 %v4675, %v6040
    %v7120 = vmul.f32 %v4676, %v6044
    %v7121 = vmul.f32 %v4677, %v6048
    %v7122 = vmul.f32 %v4678, %v6052
    %v7123 = vmul.f32 %v4679, %v6056
    %v7124 = vmul.f32 %v4680, %v6060
    %v7125 = vmul.f32 %v4681, %v6064
    %v7126 = vmul.f32 %v4682, %v6068
    %v7127 = vmul.f32 %v4683, %v6072
    %v7128 = vmul.f32 %v4684, %v6076
    %v7129 = vmul.f32 %v4685, %v6080
    %v7130 = vmul.f32 %v4686, %v6084
    %v7131 = vmul.f32 %v4687, %v6088
    %v7132 = vmul.f32 %v4688, %v6092
    %v7133 = vmul.f32 %v4689, %v6096
    %v7134 = vmul.f32 %v4690, %v6100
    %v7135 = vmul.f32 %v4691, %v6104
    %v7136 = vmul.f32 %v4692, %v6108
    %v7137 = vmul.f32 %v4693, %v6112
    %v7138 = vmul.f32 %v4694, %v6116
    %v7139 = vmul.f32 %v4695, %v6120
    %v7140 = vmul.f32 %v4696, %v6124
    %v7141 = vmul.f32 %v4697, %v6128
    %v7142 = vmul.f32 %v4698, %v6132
    %v7143 = vmul.f32 %v4699, %v6136
    %v7144 = vmul.f32 %v4700, %v6140
    %v7145 = vmul.f32 %v4701, %v6144
    %v7146 = vmul.f32 %v4702, %v6148
    %v7147 = vmul.f32 %v4703, %v6152
    %v7148 = vmul.f32 %v4704, %v6156
    %v7149 = vmul.f32 %v4705, %v6160
    %v7150 = vmul.f32 %v4706, %v6164
    %v7151 = vmul.f32 %v4707, %v6168
    %v7152 = vmul.f32 %v4708, %v6172
    %v7153 = vmul.f32 %v4709, %v6176
    %v7154 = vmul.f32 %v4710, %v6180
    %v7155 = vmul.f32 %v4711, %v6184
    %v7156 = vmul.f32 %v4712, %v6188
    %v7157 = vmul.f32 %v4713, %v6192
    %v7158 = vmul.f32 %v4714, %v6196
    %v7159 = vmul.f32 %v4715, %v6200
    %v7160 = vmul.f32 %v4716, %v6204
    %v7161 = vmul.f32 %v4717, %v6208
    %v7162 = vmul.f32 %v4718, %v6212
    %v7163 = vmul.f32 %v4719, %v6216
    %v7164 = vmul.f32 %v4720, %v6220
    %v7165 = vmul.f32 %v4721, %v6224
    %v7166 = vmul.f32 %v4722, %v6228
    %v7167 = vmul.f32 %v4723, %v6232
    %v7168 = vmul.f32 %v4724, %v6236
    %v7169 = vmul.f32 %v4725, %v6240
    %v7170 = vmul.f32 %v4726, %v6244
    %v7171 = vmul.f32 %v4727, %v6248
    %v7172 = vmul.f32 %v4728, %v6252
    %v7173 = vmul.f32 %v4729, %v6256
    %v7174 = vmul.f32 %v4730, %v6260
    %v7175 = vmul.f32 %v4731, %v6264
    %v7176 = vmul.f32 %v4732, %v6268
    %v7177 = vmul.f32 %v4733, %v6272
    %v7178 = vmul.f32 %v4734, %v6276
    %v7179 = vmul.f32 %v4735, %v6280
    %v7180 = vmul.f32 %v4736, %v6284
    %v7181 = vmul.f32 %v4737, %v6288
    %v7182 = vmul.f32 %v4738, %v6292
    %v7183 = vmul.f32 %v4739, %v6296
    %v7184 = vmul.f32 %v4740, %v6300
    %v7185 = vmul.f32 %v4741, %v6304
    %v7186 = vmul.f32 %v4742, %v6308
    %v7187 = vmul.f32 %v4743, %v6312
    %v7188 = vmul.f32 %v4744, %v6316
    %v7189 = vmul.f32 %v4745, %v6320
    %v7190 = vmul.f32 %v4746, %v6324
    %v7191 = vmul.f32 %v4747, %v6328
    %v7192 = vmul.f32 %v4748, %v6332
    %v7193 = vmul.f32 %v4749, %v6336
    %v7194 = vmul.f32 %v4750, %v6340
    %v7195 = vmul.f32 %v4751, %v6344
    %v7196 = vmul.f32 %v4752, %v6348
    %v7197 = vmul.f32 %v4753, %v6352
    %v7198 = vmul.f32 %v4754, %v6356
    %v7199 = vmul.f32 %v4755, %v6360
    %v7200 = vmul.f32 %v4756, %v6364
    %v7201 = vmul.f32 %v4757, %v6368
    %v7202 = vmul.f32 %v4758, %v6372
    %v7203 = vmul.f32 %v4759, %v6376
    %v7204 = vmul.f32 %v4760, %v6380
    %v7205 = vmul.f32 %v4761, %v6384
    %v7206 = vmul.f32 %v4762, %v6388
    %v7207 = vmul.f32 %v4763, %v6392
    %v7208 = vmul.f32 %v4764, %v6396
    %v7209 = vmul.f32 %v4765, %v6400
    %v7210 = vmul.f32 %v4766, %v6404
    %v7211 = vmul.f32 %v4767, %v6408
    %v7212 = vmul.f32 %v4768, %v6412
    %v7213 = vmul.f32 %v4769, %v6416
    %v7214 = vmul.f32 %v4770, %v6420
    %v7215 = vmul.f32 %v4771, %v6424
    %v7216 = vmul.f32 %v4772, %v6428
    %v7217 = vmul.f32 %v4773, %v6432
    %v7218 = vmul.f32 %v4774, %v6436
    %v7219 = vld [vmem:[#allocation7] sm:$0xff]
    %v7220 = vld [vmem:[#allocation7 + $0x8] sm:$0xff]
    %v7221 = vld [vmem:[#allocation7 + $0x10] sm:$0xff]
    %v7222 = vld [vmem:[#allocation7 + $0x18] sm:$0xff]
    %v7223 = vld [vmem:[#allocation7 + $0x20] sm:$0xff]
    %v7224 = vld [vmem:[#allocation7 + $0x28] sm:$0xff]
    %v7225 = vld [vmem:[#allocation7 + $0x30] sm:$0xff]
    %v7226 = vld [vmem:[#allocation7 + $0x38] sm:$0xff]
    %v7227 = vld [vmem:[#allocation7 + $0x40] sm:$0xff]
    %v7228 = vld [vmem:[#allocation7 + $0x48] sm:$0xff]
    %v7229 = vld [vmem:[#allocation7 + $0x50] sm:$0xff]
    %v7230 = vld [vmem:[#allocation7 + $0x58] sm:$0xff]
    %v7231 = vld [vmem:[#allocation7 + $0x60] sm:$0xff]
    %v7232 = vld [vmem:[#allocation7 + $0x68] sm:$0xff]
    %v7233 = vld [vmem:[#allocation7 + $0x70] sm:$0xff]
    %v7234 = vld [vmem:[#allocation7 + $0x78] sm:$0xff]
    %v7235 = vld [vmem:[#allocation7 + $0x80] sm:$0xff]
    %v7236 = vld [vmem:[#allocation7 + $0x88] sm:$0xff]
    %v7237 = vld [vmem:[#allocation7 + $0x90] sm:$0xff]
    %v7238 = vld [vmem:[#allocation7 + $0x98] sm:$0xff]
    %v7239 = vld [vmem:[#allocation7 + $0xa0] sm:$0xff]
    %v7240 = vld [vmem:[#allocation7 + $0xa8] sm:$0xff]
    %v7241 = vld [vmem:[#allocation7 + $0xb0] sm:$0xff]
    %v7242 = vld [vmem:[#allocation7 + $0xb8] sm:$0xff]
    %v7243 = vld [vmem:[#allocation7 + $0xc0] sm:$0xff]
    %v7244 = vld [vmem:[#allocation7 + $0xc8] sm:$0xff]
    %v7245 = vld [vmem:[#allocation7 + $0xd0] sm:$0xff]
    %v7246 = vld [vmem:[#allocation7 + $0xd8] sm:$0xff]
    %v7247 = vld [vmem:[#allocation7 + $0xe0] sm:$0xff]
    %v7248 = vld [vmem:[#allocation7 + $0xe8] sm:$0xff]
    %v7249 = vld [vmem:[#allocation7 + $0xf0] sm:$0xff]
    %v7250 = vld [vmem:[#allocation7 + $0xf8] sm:$0xff]
    %v7251 = vld [vmem:[#allocation7 + $0x100] sm:$0xff]
    %v7252 = vld [vmem:[#allocation7 + $0x108] sm:$0xff]
    %v7253 = vld [vmem:[#allocation7 + $0x110] sm:$0xff]
    %v7254 = vld [vmem:[#allocation7 + $0x118] sm:$0xff]
    %v7255 = vld [vmem:[#allocation7 + $0x120] sm:$0xff]
    %v7256 = vld [vmem:[#allocation7 + $0x128] sm:$0xff]
    %v7257 = vld [vmem:[#allocation7 + $0x130] sm:$0xff]
    %v7258 = vld [vmem:[#allocation7 + $0x138] sm:$0xff]
    %v7259 = vld [vmem:[#allocation7 + $0x140] sm:$0xff]
    %v7260 = vld [vmem:[#allocation7 + $0x148] sm:$0xff]
    %v7261 = vld [vmem:[#allocation7 + $0x150] sm:$0xff]
    %v7262 = vld [vmem:[#allocation7 + $0x158] sm:$0xff]
    %v7263 = vld [vmem:[#allocation7 + $0x160] sm:$0xff]
    %v7264 = vld [vmem:[#allocation7 + $0x168] sm:$0xff]
    %v7265 = vld [vmem:[#allocation7 + $0x170] sm:$0xff]
    %v7266 = vld [vmem:[#allocation7 + $0x178] sm:$0xff]
    %v7267 = vld [vmem:[#allocation7 + $0x180] sm:$0x7f]
    %v7317 = vlaneseq
    %v7318 = vshrl.u32 %v7317, 7
    %v7319 = vsub.s32 0, %v7318
    %v7320 = vrot.slane %v7219, %v7319
    %v7321 = vlaneseq
    %v7322 = vshrl.u32 %v7321, 7
    %v7323 = vsub.s32 1, %v7322
    %v7324 = vrot.slane %v7219, %v7323
    %v7325 = vlaneseq
    %v7326 = vshrl.u32 %v7325, 7
    %v7327 = vsub.s32 2, %v7326
    %v7328 = vrot.slane %v7219, %v7327
    %v7329 = vlaneseq
    %v7330 = vshrl.u32 %v7329, 7
    %v7331 = vsub.s32 3, %v7330
    %v7332 = vrot.slane %v7219, %v7331
    %v7333 = vlaneseq
    %v7334 = vshrl.u32 %v7333, 7
    %v7335 = vsub.s32 4, %v7334
    %v7336 = vrot.slane %v7219, %v7335
    %v7337 = vlaneseq
    %v7338 = vshrl.u32 %v7337, 7
    %v7339 = vsub.s32 5, %v7338
    %v7340 = vrot.slane %v7219, %v7339
    %v7341 = vlaneseq
    %v7342 = vshrl.u32 %v7341, 7
    %v7343 = vsub.s32 6, %v7342
    %v7344 = vrot.slane %v7219, %v7343
    %v7345 = vlaneseq
    %v7346 = vshrl.u32 %v7345, 7
    %v7347 = vsub.s32 7, %v7346
    %v7348 = vrot.slane %v7219, %v7347
    %v7349 = vlaneseq
    %v7350 = vshrl.u32 %v7349, 7
    %v7351 = vsub.s32 0, %v7350
    %v7352 = vrot.slane %v7220, %v7351
    %v7353 = vlaneseq
    %v7354 = vshrl.u32 %v7353, 7
    %v7355 = vsub.s32 1, %v7354
    %v7356 = vrot.slane %v7220, %v7355
    %v7357 = vlaneseq
    %v7358 = vshrl.u32 %v7357, 7
    %v7359 = vsub.s32 2, %v7358
    %v7360 = vrot.slane %v7220, %v7359
    %v7361 = vlaneseq
    %v7362 = vshrl.u32 %v7361, 7
    %v7363 = vsub.s32 3, %v7362
    %v7364 = vrot.slane %v7220, %v7363
    %v7365 = vlaneseq
    %v7366 = vshrl.u32 %v7365, 7
    %v7367 = vsub.s32 4, %v7366
    %v7368 = vrot.slane %v7220, %v7367
    %v7369 = vlaneseq
    %v7370 = vshrl.u32 %v7369, 7
    %v7371 = vsub.s32 5, %v7370
    %v7372 = vrot.slane %v7220, %v7371
    %v7373 = vlaneseq
    %v7374 = vshrl.u32 %v7373, 7
    %v7375 = vsub.s32 6, %v7374
    %v7376 = vrot.slane %v7220, %v7375
    %v7377 = vlaneseq
    %v7378 = vshrl.u32 %v7377, 7
    %v7379 = vsub.s32 7, %v7378
    %v7380 = vrot.slane %v7220, %v7379
    %v7381 = vlaneseq
    %v7382 = vshrl.u32 %v7381, 7
    %v7383 = vsub.s32 0, %v7382
    %v7384 = vrot.slane %v7221, %v7383
    %v7385 = vlaneseq
    %v7386 = vshrl.u32 %v7385, 7
    %v7387 = vsub.s32 1, %v7386
    %v7388 = vrot.slane %v7221, %v7387
    %v7389 = vlaneseq
    %v7390 = vshrl.u32 %v7389, 7
    %v7391 = vsub.s32 2, %v7390
    %v7392 = vrot.slane %v7221, %v7391
    %v7393 = vlaneseq
    %v7394 = vshrl.u32 %v7393, 7
    %v7395 = vsub.s32 3, %v7394
    %v7396 = vrot.slane %v7221, %v7395
    %v7397 = vlaneseq
    %v7398 = vshrl.u32 %v7397, 7
    %v7399 = vsub.s32 4, %v7398
    %v7400 = vrot.slane %v7221, %v7399
    %v7401 = vlaneseq
    %v7402 = vshrl.u32 %v7401, 7
    %v7403 = vsub.s32 5, %v7402
    %v7404 = vrot.slane %v7221, %v7403
    %v7405 = vlaneseq
    %v7406 = vshrl.u32 %v7405, 7
    %v7407 = vsub.s32 6, %v7406
    %v7408 = vrot.slane %v7221, %v7407
    %v7409 = vlaneseq
    %v7410 = vshrl.u32 %v7409, 7
    %v7411 = vsub.s32 7, %v7410
    %v7412 = vrot.slane %v7221, %v7411
    %v7413 = vlaneseq
    %v7414 = vshrl.u32 %v7413, 7
    %v7415 = vsub.s32 0, %v7414
    %v7416 = vrot.slane %v7222, %v7415
    %v7417 = vlaneseq
    %v7418 = vshrl.u32 %v7417, 7
    %v7419 = vsub.s32 1, %v7418
    %v7420 = vrot.slane %v7222, %v7419
    %v7421 = vlaneseq
    %v7422 = vshrl.u32 %v7421, 7
    %v7423 = vsub.s32 2, %v7422
    %v7424 = vrot.slane %v7222, %v7423
    %v7425 = vlaneseq
    %v7426 = vshrl.u32 %v7425, 7
    %v7427 = vsub.s32 3, %v7426
    %v7428 = vrot.slane %v7222, %v7427
    %v7429 = vlaneseq
    %v7430 = vshrl.u32 %v7429, 7
    %v7431 = vsub.s32 4, %v7430
    %v7432 = vrot.slane %v7222, %v7431
    %v7433 = vlaneseq
    %v7434 = vshrl.u32 %v7433, 7
    %v7435 = vsub.s32 5, %v7434
    %v7436 = vrot.slane %v7222, %v7435
    %v7437 = vlaneseq
    %v7438 = vshrl.u32 %v7437, 7
    %v7439 = vsub.s32 6, %v7438
    %v7440 = vrot.slane %v7222, %v7439
    %v7441 = vlaneseq
    %v7442 = vshrl.u32 %v7441, 7
    %v7443 = vsub.s32 7, %v7442
    %v7444 = vrot.slane %v7222, %v7443
    %v7445 = vlaneseq
    %v7446 = vshrl.u32 %v7445, 7
    %v7447 = vsub.s32 0, %v7446
    %v7448 = vrot.slane %v7223, %v7447
    %v7449 = vlaneseq
    %v7450 = vshrl.u32 %v7449, 7
    %v7451 = vsub.s32 1, %v7450
    %v7452 = vrot.slane %v7223, %v7451
    %v7453 = vlaneseq
    %v7454 = vshrl.u32 %v7453, 7
    %v7455 = vsub.s32 2, %v7454
    %v7456 = vrot.slane %v7223, %v7455
    %v7457 = vlaneseq
    %v7458 = vshrl.u32 %v7457, 7
    %v7459 = vsub.s32 3, %v7458
    %v7460 = vrot.slane %v7223, %v7459
    %v7461 = vlaneseq
    %v7462 = vshrl.u32 %v7461, 7
    %v7463 = vsub.s32 4, %v7462
    %v7464 = vrot.slane %v7223, %v7463
    %v7465 = vlaneseq
    %v7466 = vshrl.u32 %v7465, 7
    %v7467 = vsub.s32 5, %v7466
    %v7468 = vrot.slane %v7223, %v7467
    %v7469 = vlaneseq
    %v7470 = vshrl.u32 %v7469, 7
    %v7471 = vsub.s32 6, %v7470
    %v7472 = vrot.slane %v7223, %v7471
    %v7473 = vlaneseq
    %v7474 = vshrl.u32 %v7473, 7
    %v7475 = vsub.s32 7, %v7474
    %v7476 = vrot.slane %v7223, %v7475
    %v7477 = vlaneseq
    %v7478 = vshrl.u32 %v7477, 7
    %v7479 = vsub.s32 0, %v7478
    %v7480 = vrot.slane %v7224, %v7479
    %v7481 = vlaneseq
    %v7482 = vshrl.u32 %v7481, 7
    %v7483 = vsub.s32 1, %v7482
    %v7484 = vrot.slane %v7224, %v7483
    %v7485 = vlaneseq
    %v7486 = vshrl.u32 %v7485, 7
    %v7487 = vsub.s32 2, %v7486
    %v7488 = vrot.slane %v7224, %v7487
    %v7489 = vlaneseq
    %v7490 = vshrl.u32 %v7489, 7
    %v7491 = vsub.s32 3, %v7490
    %v7492 = vrot.slane %v7224, %v7491
    %v7493 = vlaneseq
    %v7494 = vshrl.u32 %v7493, 7
    %v7495 = vsub.s32 4, %v7494
    %v7496 = vrot.slane %v7224, %v7495
    %v7497 = vlaneseq
    %v7498 = vshrl.u32 %v7497, 7
    %v7499 = vsub.s32 5, %v7498
    %v7500 = vrot.slane %v7224, %v7499
    %v7501 = vlaneseq
    %v7502 = vshrl.u32 %v7501, 7
    %v7503 = vsub.s32 6, %v7502
    %v7504 = vrot.slane %v7224, %v7503
    %v7505 = vlaneseq
    %v7506 = vshrl.u32 %v7505, 7
    %v7507 = vsub.s32 7, %v7506
    %v7508 = vrot.slane %v7224, %v7507
    %v7509 = vlaneseq
    %v7510 = vshrl.u32 %v7509, 7
    %v7511 = vsub.s32 0, %v7510
    %v7512 = vrot.slane %v7225, %v7511
    %v7513 = vlaneseq
    %v7514 = vshrl.u32 %v7513, 7
    %v7515 = vsub.s32 1, %v7514
    %v7516 = vrot.slane %v7225, %v7515
    %v7517 = vlaneseq
    %v7518 = vshrl.u32 %v7517, 7
    %v7519 = vsub.s32 2, %v7518
    %v7520 = vrot.slane %v7225, %v7519
    %v7521 = vlaneseq
    %v7522 = vshrl.u32 %v7521, 7
    %v7523 = vsub.s32 3, %v7522
    %v7524 = vrot.slane %v7225, %v7523
    %v7525 = vlaneseq
    %v7526 = vshrl.u32 %v7525, 7
    %v7527 = vsub.s32 4, %v7526
    %v7528 = vrot.slane %v7225, %v7527
    %v7529 = vlaneseq
    %v7530 = vshrl.u32 %v7529, 7
    %v7531 = vsub.s32 5, %v7530
    %v7532 = vrot.slane %v7225, %v7531
    %v7533 = vlaneseq
    %v7534 = vshrl.u32 %v7533, 7
    %v7535 = vsub.s32 6, %v7534
    %v7536 = vrot.slane %v7225, %v7535
    %v7537 = vlaneseq
    %v7538 = vshrl.u32 %v7537, 7
    %v7539 = vsub.s32 7, %v7538
    %v7540 = vrot.slane %v7225, %v7539
    %v7541 = vlaneseq
    %v7542 = vshrl.u32 %v7541, 7
    %v7543 = vsub.s32 0, %v7542
    %v7544 = vrot.slane %v7226, %v7543
    %v7545 = vlaneseq
    %v7546 = vshrl.u32 %v7545, 7
    %v7547 = vsub.s32 1, %v7546
    %v7548 = vrot.slane %v7226, %v7547
    %v7549 = vlaneseq
    %v7550 = vshrl.u32 %v7549, 7
    %v7551 = vsub.s32 2, %v7550
    %v7552 = vrot.slane %v7226, %v7551
    %v7553 = vlaneseq
    %v7554 = vshrl.u32 %v7553, 7
    %v7555 = vsub.s32 3, %v7554
    %v7556 = vrot.slane %v7226, %v7555
    %v7557 = vlaneseq
    %v7558 = vshrl.u32 %v7557, 7
    %v7559 = vsub.s32 4, %v7558
    %v7560 = vrot.slane %v7226, %v7559
    %v7561 = vlaneseq
    %v7562 = vshrl.u32 %v7561, 7
    %v7563 = vsub.s32 5, %v7562
    %v7564 = vrot.slane %v7226, %v7563
    %v7565 = vlaneseq
    %v7566 = vshrl.u32 %v7565, 7
    %v7567 = vsub.s32 6, %v7566
    %v7568 = vrot.slane %v7226, %v7567
    %v7569 = vlaneseq
    %v7570 = vshrl.u32 %v7569, 7
    %v7571 = vsub.s32 7, %v7570
    %v7572 = vrot.slane %v7226, %v7571
    %v7573 = vlaneseq
    %v7574 = vshrl.u32 %v7573, 7
    %v7575 = vsub.s32 0, %v7574
    %v7576 = vrot.slane %v7227, %v7575
    %v7577 = vlaneseq
    %v7578 = vshrl.u32 %v7577, 7
    %v7579 = vsub.s32 1, %v7578
    %v7580 = vrot.slane %v7227, %v7579
    %v7581 = vlaneseq
    %v7582 = vshrl.u32 %v7581, 7
    %v7583 = vsub.s32 2, %v7582
    %v7584 = vrot.slane %v7227, %v7583
    %v7585 = vlaneseq
    %v7586 = vshrl.u32 %v7585, 7
    %v7587 = vsub.s32 3, %v7586
    %v7588 = vrot.slane %v7227, %v7587
    %v7589 = vlaneseq
    %v7590 = vshrl.u32 %v7589, 7
    %v7591 = vsub.s32 4, %v7590
    %v7592 = vrot.slane %v7227, %v7591
    %v7593 = vlaneseq
    %v7594 = vshrl.u32 %v7593, 7
    %v7595 = vsub.s32 5, %v7594
    %v7596 = vrot.slane %v7227, %v7595
    %v7597 = vlaneseq
    %v7598 = vshrl.u32 %v7597, 7
    %v7599 = vsub.s32 6, %v7598
    %v7600 = vrot.slane %v7227, %v7599
    %v7601 = vlaneseq
    %v7602 = vshrl.u32 %v7601, 7
    %v7603 = vsub.s32 7, %v7602
    %v7604 = vrot.slane %v7227, %v7603
    %v7605 = vlaneseq
    %v7606 = vshrl.u32 %v7605, 7
    %v7607 = vsub.s32 0, %v7606
    %v7608 = vrot.slane %v7228, %v7607
    %v7609 = vlaneseq
    %v7610 = vshrl.u32 %v7609, 7
    %v7611 = vsub.s32 1, %v7610
    %v7612 = vrot.slane %v7228, %v7611
    %v7613 = vlaneseq
    %v7614 = vshrl.u32 %v7613, 7
    %v7615 = vsub.s32 2, %v7614
    %v7616 = vrot.slane %v7228, %v7615
    %v7617 = vlaneseq
    %v7618 = vshrl.u32 %v7617, 7
    %v7619 = vsub.s32 3, %v7618
    %v7620 = vrot.slane %v7228, %v7619
    %v7621 = vlaneseq
    %v7622 = vshrl.u32 %v7621, 7
    %v7623 = vsub.s32 4, %v7622
    %v7624 = vrot.slane %v7228, %v7623
    %v7625 = vlaneseq
    %v7626 = vshrl.u32 %v7625, 7
    %v7627 = vsub.s32 5, %v7626
    %v7628 = vrot.slane %v7228, %v7627
    %v7629 = vlaneseq
    %v7630 = vshrl.u32 %v7629, 7
    %v7631 = vsub.s32 6, %v7630
    %v7632 = vrot.slane %v7228, %v7631
    %v7633 = vlaneseq
    %v7634 = vshrl.u32 %v7633, 7
    %v7635 = vsub.s32 7, %v7634
    %v7636 = vrot.slane %v7228, %v7635
    %v7637 = vlaneseq
    %v7638 = vshrl.u32 %v7637, 7
    %v7639 = vsub.s32 0, %v7638
    %v7640 = vrot.slane %v7229, %v7639
    %v7641 = vlaneseq
    %v7642 = vshrl.u32 %v7641, 7
    %v7643 = vsub.s32 1, %v7642
    %v7644 = vrot.slane %v7229, %v7643
    %v7645 = vlaneseq
    %v7646 = vshrl.u32 %v7645, 7
    %v7647 = vsub.s32 2, %v7646
    %v7648 = vrot.slane %v7229, %v7647
    %v7649 = vlaneseq
    %v7650 = vshrl.u32 %v7649, 7
    %v7651 = vsub.s32 3, %v7650
    %v7652 = vrot.slane %v7229, %v7651
    %v7653 = vlaneseq
    %v7654 = vshrl.u32 %v7653, 7
    %v7655 = vsub.s32 4, %v7654
    %v7656 = vrot.slane %v7229, %v7655
    %v7657 = vlaneseq
    %v7658 = vshrl.u32 %v7657, 7
    %v7659 = vsub.s32 5, %v7658
    %v7660 = vrot.slane %v7229, %v7659
    %v7661 = vlaneseq
    %v7662 = vshrl.u32 %v7661, 7
    %v7663 = vsub.s32 6, %v7662
    %v7664 = vrot.slane %v7229, %v7663
    %v7665 = vlaneseq
    %v7666 = vshrl.u32 %v7665, 7
    %v7667 = vsub.s32 7, %v7666
    %v7668 = vrot.slane %v7229, %v7667
    %v7669 = vlaneseq
    %v7670 = vshrl.u32 %v7669, 7
    %v7671 = vsub.s32 0, %v7670
    %v7672 = vrot.slane %v7230, %v7671
    %v7673 = vlaneseq
    %v7674 = vshrl.u32 %v7673, 7
    %v7675 = vsub.s32 1, %v7674
    %v7676 = vrot.slane %v7230, %v7675
    %v7677 = vlaneseq
    %v7678 = vshrl.u32 %v7677, 7
    %v7679 = vsub.s32 2, %v7678
    %v7680 = vrot.slane %v7230, %v7679
    %v7681 = vlaneseq
    %v7682 = vshrl.u32 %v7681, 7
    %v7683 = vsub.s32 3, %v7682
    %v7684 = vrot.slane %v7230, %v7683
    %v7685 = vlaneseq
    %v7686 = vshrl.u32 %v7685, 7
    %v7687 = vsub.s32 4, %v7686
    %v7688 = vrot.slane %v7230, %v7687
    %v7689 = vlaneseq
    %v7690 = vshrl.u32 %v7689, 7
    %v7691 = vsub.s32 5, %v7690
    %v7692 = vrot.slane %v7230, %v7691
    %v7693 = vlaneseq
    %v7694 = vshrl.u32 %v7693, 7
    %v7695 = vsub.s32 6, %v7694
    %v7696 = vrot.slane %v7230, %v7695
    %v7697 = vlaneseq
    %v7698 = vshrl.u32 %v7697, 7
    %v7699 = vsub.s32 7, %v7698
    %v7700 = vrot.slane %v7230, %v7699
    %v7701 = vlaneseq
    %v7702 = vshrl.u32 %v7701, 7
    %v7703 = vsub.s32 0, %v7702
    %v7704 = vrot.slane %v7231, %v7703
    %v7705 = vlaneseq
    %v7706 = vshrl.u32 %v7705, 7
    %v7707 = vsub.s32 1, %v7706
    %v7708 = vrot.slane %v7231, %v7707
    %v7709 = vlaneseq
    %v7710 = vshrl.u32 %v7709, 7
    %v7711 = vsub.s32 2, %v7710
    %v7712 = vrot.slane %v7231, %v7711
    %v7713 = vlaneseq
    %v7714 = vshrl.u32 %v7713, 7
    %v7715 = vsub.s32 3, %v7714
    %v7716 = vrot.slane %v7231, %v7715
    %v7717 = vlaneseq
    %v7718 = vshrl.u32 %v7717, 7
    %v7719 = vsub.s32 4, %v7718
    %v7720 = vrot.slane %v7231, %v7719
    %v7721 = vlaneseq
    %v7722 = vshrl.u32 %v7721, 7
    %v7723 = vsub.s32 5, %v7722
    %v7724 = vrot.slane %v7231, %v7723
    %v7725 = vlaneseq
    %v7726 = vshrl.u32 %v7725, 7
    %v7727 = vsub.s32 6, %v7726
    %v7728 = vrot.slane %v7231, %v7727
    %v7729 = vlaneseq
    %v7730 = vshrl.u32 %v7729, 7
    %v7731 = vsub.s32 7, %v7730
    %v7732 = vrot.slane %v7231, %v7731
    %v7733 = vlaneseq
    %v7734 = vshrl.u32 %v7733, 7
    %v7735 = vsub.s32 0, %v7734
    %v7736 = vrot.slane %v7232, %v7735
    %v7737 = vlaneseq
    %v7738 = vshrl.u32 %v7737, 7
    %v7739 = vsub.s32 1, %v7738
    %v7740 = vrot.slane %v7232, %v7739
    %v7741 = vlaneseq
    %v7742 = vshrl.u32 %v7741, 7
    %v7743 = vsub.s32 2, %v7742
    %v7744 = vrot.slane %v7232, %v7743
    %v7745 = vlaneseq
    %v7746 = vshrl.u32 %v7745, 7
    %v7747 = vsub.s32 3, %v7746
    %v7748 = vrot.slane %v7232, %v7747
    %v7749 = vlaneseq
    %v7750 = vshrl.u32 %v7749, 7
    %v7751 = vsub.s32 4, %v7750
    %v7752 = vrot.slane %v7232, %v7751
    %v7753 = vlaneseq
    %v7754 = vshrl.u32 %v7753, 7
    %v7755 = vsub.s32 5, %v7754
    %v7756 = vrot.slane %v7232, %v7755
    %v7757 = vlaneseq
    %v7758 = vshrl.u32 %v7757, 7
    %v7759 = vsub.s32 6, %v7758
    %v7760 = vrot.slane %v7232, %v7759
    %v7761 = vlaneseq
    %v7762 = vshrl.u32 %v7761, 7
    %v7763 = vsub.s32 7, %v7762
    %v7764 = vrot.slane %v7232, %v7763
    %v7765 = vlaneseq
    %v7766 = vshrl.u32 %v7765, 7
    %v7767 = vsub.s32 0, %v7766
    %v7768 = vrot.slane %v7233, %v7767
    %v7769 = vlaneseq
    %v7770 = vshrl.u32 %v7769, 7
    %v7771 = vsub.s32 1, %v7770
    %v7772 = vrot.slane %v7233, %v7771
    %v7773 = vlaneseq
    %v7774 = vshrl.u32 %v7773, 7
    %v7775 = vsub.s32 2, %v7774
    %v7776 = vrot.slane %v7233, %v7775
    %v7777 = vlaneseq
    %v7778 = vshrl.u32 %v7777, 7
    %v7779 = vsub.s32 3, %v7778
    %v7780 = vrot.slane %v7233, %v7779
    %v7781 = vlaneseq
    %v7782 = vshrl.u32 %v7781, 7
    %v7783 = vsub.s32 4, %v7782
    %v7784 = vrot.slane %v7233, %v7783
    %v7785 = vlaneseq
    %v7786 = vshrl.u32 %v7785, 7
    %v7787 = vsub.s32 5, %v7786
    %v7788 = vrot.slane %v7233, %v7787
    %v7789 = vlaneseq
    %v7790 = vshrl.u32 %v7789, 7
    %v7791 = vsub.s32 6, %v7790
    %v7792 = vrot.slane %v7233, %v7791
    %v7793 = vlaneseq
    %v7794 = vshrl.u32 %v7793, 7
    %v7795 = vsub.s32 7, %v7794
    %v7796 = vrot.slane %v7233, %v7795
    %v7797 = vlaneseq
    %v7798 = vshrl.u32 %v7797, 7
    %v7799 = vsub.s32 0, %v7798
    %v7800 = vrot.slane %v7234, %v7799
    %v7801 = vlaneseq
    %v7802 = vshrl.u32 %v7801, 7
    %v7803 = vsub.s32 1, %v7802
    %v7804 = vrot.slane %v7234, %v7803
    %v7805 = vlaneseq
    %v7806 = vshrl.u32 %v7805, 7
    %v7807 = vsub.s32 2, %v7806
    %v7808 = vrot.slane %v7234, %v7807
    %v7809 = vlaneseq
    %v7810 = vshrl.u32 %v7809, 7
    %v7811 = vsub.s32 3, %v7810
    %v7812 = vrot.slane %v7234, %v7811
    %v7813 = vlaneseq
    %v7814 = vshrl.u32 %v7813, 7
    %v7815 = vsub.s32 4, %v7814
    %v7816 = vrot.slane %v7234, %v7815
    %v7817 = vlaneseq
    %v7818 = vshrl.u32 %v7817, 7
    %v7819 = vsub.s32 5, %v7818
    %v7820 = vrot.slane %v7234, %v7819
    %v7821 = vlaneseq
    %v7822 = vshrl.u32 %v7821, 7
    %v7823 = vsub.s32 6, %v7822
    %v7824 = vrot.slane %v7234, %v7823
    %v7825 = vlaneseq
    %v7826 = vshrl.u32 %v7825, 7
    %v7827 = vsub.s32 7, %v7826
    %v7828 = vrot.slane %v7234, %v7827
    %v7829 = vlaneseq
    %v7830 = vshrl.u32 %v7829, 7
    %v7831 = vsub.s32 0, %v7830
    %v7832 = vrot.slane %v7235, %v7831
    %v7833 = vlaneseq
    %v7834 = vshrl.u32 %v7833, 7
    %v7835 = vsub.s32 1, %v7834
    %v7836 = vrot.slane %v7235, %v7835
    %v7837 = vlaneseq
    %v7838 = vshrl.u32 %v7837, 7
    %v7839 = vsub.s32 2, %v7838
    %v7840 = vrot.slane %v7235, %v7839
    %v7841 = vlaneseq
    %v7842 = vshrl.u32 %v7841, 7
    %v7843 = vsub.s32 3, %v7842
    %v7844 = vrot.slane %v7235, %v7843
    %v7845 = vlaneseq
    %v7846 = vshrl.u32 %v7845, 7
    %v7847 = vsub.s32 4, %v7846
    %v7848 = vrot.slane %v7235, %v7847
    %v7849 = vlaneseq
    %v7850 = vshrl.u32 %v7849, 7
    %v7851 = vsub.s32 5, %v7850
    %v7852 = vrot.slane %v7235, %v7851
    %v7853 = vlaneseq
    %v7854 = vshrl.u32 %v7853, 7
    %v7855 = vsub.s32 6, %v7854
    %v7856 = vrot.slane %v7235, %v7855
    %v7857 = vlaneseq
    %v7858 = vshrl.u32 %v7857, 7
    %v7859 = vsub.s32 7, %v7858
    %v7860 = vrot.slane %v7235, %v7859
    %v7861 = vlaneseq
    %v7862 = vshrl.u32 %v7861, 7
    %v7863 = vsub.s32 0, %v7862
    %v7864 = vrot.slane %v7236, %v7863
    %v7865 = vlaneseq
    %v7866 = vshrl.u32 %v7865, 7
    %v7867 = vsub.s32 1, %v7866
    %v7868 = vrot.slane %v7236, %v7867
    %v7869 = vlaneseq
    %v7870 = vshrl.u32 %v7869, 7
    %v7871 = vsub.s32 2, %v7870
    %v7872 = vrot.slane %v7236, %v7871
    %v7873 = vlaneseq
    %v7874 = vshrl.u32 %v7873, 7
    %v7875 = vsub.s32 3, %v7874
    %v7876 = vrot.slane %v7236, %v7875
    %v7877 = vlaneseq
    %v7878 = vshrl.u32 %v7877, 7
    %v7879 = vsub.s32 4, %v7878
    %v7880 = vrot.slane %v7236, %v7879
    %v7881 = vlaneseq
    %v7882 = vshrl.u32 %v7881, 7
    %v7883 = vsub.s32 5, %v7882
    %v7884 = vrot.slane %v7236, %v7883
    %v7885 = vlaneseq
    %v7886 = vshrl.u32 %v7885, 7
    %v7887 = vsub.s32 6, %v7886
    %v7888 = vrot.slane %v7236, %v7887
    %v7889 = vlaneseq
    %v7890 = vshrl.u32 %v7889, 7
    %v7891 = vsub.s32 7, %v7890
    %v7892 = vrot.slane %v7236, %v7891
    %v7893 = vlaneseq
    %v7894 = vshrl.u32 %v7893, 7
    %v7895 = vsub.s32 0, %v7894
    %v7896 = vrot.slane %v7237, %v7895
    %v7897 = vlaneseq
    %v7898 = vshrl.u32 %v7897, 7
    %v7899 = vsub.s32 1, %v7898
    %v7900 = vrot.slane %v7237, %v7899
    %v7901 = vlaneseq
    %v7902 = vshrl.u32 %v7901, 7
    %v7903 = vsub.s32 2, %v7902
    %v7904 = vrot.slane %v7237, %v7903
    %v7905 = vlaneseq
    %v7906 = vshrl.u32 %v7905, 7
    %v7907 = vsub.s32 3, %v7906
    %v7908 = vrot.slane %v7237, %v7907
    %v7909 = vlaneseq
    %v7910 = vshrl.u32 %v7909, 7
    %v7911 = vsub.s32 4, %v7910
    %v7912 = vrot.slane %v7237, %v7911
    %v7913 = vlaneseq
    %v7914 = vshrl.u32 %v7913, 7
    %v7915 = vsub.s32 5, %v7914
    %v7916 = vrot.slane %v7237, %v7915
    %v7917 = vlaneseq
    %v7918 = vshrl.u32 %v7917, 7
    %v7919 = vsub.s32 6, %v7918
    %v7920 = vrot.slane %v7237, %v7919
    %v7921 = vlaneseq
    %v7922 = vshrl.u32 %v7921, 7
    %v7923 = vsub.s32 7, %v7922
    %v7924 = vrot.slane %v7237, %v7923
    %v7925 = vlaneseq
    %v7926 = vshrl.u32 %v7925, 7
    %v7927 = vsub.s32 0, %v7926
    %v7928 = vrot.slane %v7238, %v7927
    %v7929 = vlaneseq
    %v7930 = vshrl.u32 %v7929, 7
    %v7931 = vsub.s32 1, %v7930
    %v7932 = vrot.slane %v7238, %v7931
    %v7933 = vlaneseq
    %v7934 = vshrl.u32 %v7933, 7
    %v7935 = vsub.s32 2, %v7934
    %v7936 = vrot.slane %v7238, %v7935
    %v7937 = vlaneseq
    %v7938 = vshrl.u32 %v7937, 7
    %v7939 = vsub.s32 3, %v7938
    %v7940 = vrot.slane %v7238, %v7939
    %v7941 = vlaneseq
    %v7942 = vshrl.u32 %v7941, 7
    %v7943 = vsub.s32 4, %v7942
    %v7944 = vrot.slane %v7238, %v7943
    %v7945 = vlaneseq
    %v7946 = vshrl.u32 %v7945, 7
    %v7947 = vsub.s32 5, %v7946
    %v7948 = vrot.slane %v7238, %v7947
    %v7949 = vlaneseq
    %v7950 = vshrl.u32 %v7949, 7
    %v7951 = vsub.s32 6, %v7950
    %v7952 = vrot.slane %v7238, %v7951
    %v7953 = vlaneseq
    %v7954 = vshrl.u32 %v7953, 7
    %v7955 = vsub.s32 7, %v7954
    %v7956 = vrot.slane %v7238, %v7955
    %v7957 = vlaneseq
    %v7958 = vshrl.u32 %v7957, 7
    %v7959 = vsub.s32 0, %v7958
    %v7960 = vrot.slane %v7239, %v7959
    %v7961 = vlaneseq
    %v7962 = vshrl.u32 %v7961, 7
    %v7963 = vsub.s32 1, %v7962
    %v7964 = vrot.slane %v7239, %v7963
    %v7965 = vlaneseq
    %v7966 = vshrl.u32 %v7965, 7
    %v7967 = vsub.s32 2, %v7966
    %v7968 = vrot.slane %v7239, %v7967
    %v7969 = vlaneseq
    %v7970 = vshrl.u32 %v7969, 7
    %v7971 = vsub.s32 3, %v7970
    %v7972 = vrot.slane %v7239, %v7971
    %v7973 = vlaneseq
    %v7974 = vshrl.u32 %v7973, 7
    %v7975 = vsub.s32 4, %v7974
    %v7976 = vrot.slane %v7239, %v7975
    %v7977 = vlaneseq
    %v7978 = vshrl.u32 %v7977, 7
    %v7979 = vsub.s32 5, %v7978
    %v7980 = vrot.slane %v7239, %v7979
    %v7981 = vlaneseq
    %v7982 = vshrl.u32 %v7981, 7
    %v7983 = vsub.s32 6, %v7982
    %v7984 = vrot.slane %v7239, %v7983
    %v7985 = vlaneseq
    %v7986 = vshrl.u32 %v7985, 7
    %v7987 = vsub.s32 7, %v7986
    %v7988 = vrot.slane %v7239, %v7987
    %v7989 = vlaneseq
    %v7990 = vshrl.u32 %v7989, 7
    %v7991 = vsub.s32 0, %v7990
    %v7992 = vrot.slane %v7240, %v7991
    %v7993 = vlaneseq
    %v7994 = vshrl.u32 %v7993, 7
    %v7995 = vsub.s32 1, %v7994
    %v7996 = vrot.slane %v7240, %v7995
    %v7997 = vlaneseq
    %v7998 = vshrl.u32 %v7997, 7
    %v7999 = vsub.s32 2, %v7998
    %v8000 = vrot.slane %v7240, %v7999
    %v8001 = vlaneseq
    %v8002 = vshrl.u32 %v8001, 7
    %v8003 = vsub.s32 3, %v8002
    %v8004 = vrot.slane %v7240, %v8003
    %v8005 = vlaneseq
    %v8006 = vshrl.u32 %v8005, 7
    %v8007 = vsub.s32 4, %v8006
    %v8008 = vrot.slane %v7240, %v8007
    %v8009 = vlaneseq
    %v8010 = vshrl.u32 %v8009, 7
    %v8011 = vsub.s32 5, %v8010
    %v8012 = vrot.slane %v7240, %v8011
    %v8013 = vlaneseq
    %v8014 = vshrl.u32 %v8013, 7
    %v8015 = vsub.s32 6, %v8014
    %v8016 = vrot.slane %v7240, %v8015
    %v8017 = vlaneseq
    %v8018 = vshrl.u32 %v8017, 7
    %v8019 = vsub.s32 7, %v8018
    %v8020 = vrot.slane %v7240, %v8019
    %v8021 = vlaneseq
    %v8022 = vshrl.u32 %v8021, 7
    %v8023 = vsub.s32 0, %v8022
    %v8024 = vrot.slane %v7241, %v8023
    %v8025 = vlaneseq
    %v8026 = vshrl.u32 %v8025, 7
    %v8027 = vsub.s32 1, %v8026
    %v8028 = vrot.slane %v7241, %v8027
    %v8029 = vlaneseq
    %v8030 = vshrl.u32 %v8029, 7
    %v8031 = vsub.s32 2, %v8030
    %v8032 = vrot.slane %v7241, %v8031
    %v8033 = vlaneseq
    %v8034 = vshrl.u32 %v8033, 7
    %v8035 = vsub.s32 3, %v8034
    %v8036 = vrot.slane %v7241, %v8035
    %v8037 = vlaneseq
    %v8038 = vshrl.u32 %v8037, 7
    %v8039 = vsub.s32 4, %v8038
    %v8040 = vrot.slane %v7241, %v8039
    %v8041 = vlaneseq
    %v8042 = vshrl.u32 %v8041, 7
    %v8043 = vsub.s32 5, %v8042
    %v8044 = vrot.slane %v7241, %v8043
    %v8045 = vlaneseq
    %v8046 = vshrl.u32 %v8045, 7
    %v8047 = vsub.s32 6, %v8046
    %v8048 = vrot.slane %v7241, %v8047
    %v8049 = vlaneseq
    %v8050 = vshrl.u32 %v8049, 7
    %v8051 = vsub.s32 7, %v8050
    %v8052 = vrot.slane %v7241, %v8051
    %v8053 = vlaneseq
    %v8054 = vshrl.u32 %v8053, 7
    %v8055 = vsub.s32 0, %v8054
    %v8056 = vrot.slane %v7242, %v8055
    %v8057 = vlaneseq
    %v8058 = vshrl.u32 %v8057, 7
    %v8059 = vsub.s32 1, %v8058
    %v8060 = vrot.slane %v7242, %v8059
    %v8061 = vlaneseq
    %v8062 = vshrl.u32 %v8061, 7
    %v8063 = vsub.s32 2, %v8062
    %v8064 = vrot.slane %v7242, %v8063
    %v8065 = vlaneseq
    %v8066 = vshrl.u32 %v8065, 7
    %v8067 = vsub.s32 3, %v8066
    %v8068 = vrot.slane %v7242, %v8067
    %v8069 = vlaneseq
    %v8070 = vshrl.u32 %v8069, 7
    %v8071 = vsub.s32 4, %v8070
    %v8072 = vrot.slane %v7242, %v8071
    %v8073 = vlaneseq
    %v8074 = vshrl.u32 %v8073, 7
    %v8075 = vsub.s32 5, %v8074
    %v8076 = vrot.slane %v7242, %v8075
    %v8077 = vlaneseq
    %v8078 = vshrl.u32 %v8077, 7
    %v8079 = vsub.s32 6, %v8078
    %v8080 = vrot.slane %v7242, %v8079
    %v8081 = vlaneseq
    %v8082 = vshrl.u32 %v8081, 7
    %v8083 = vsub.s32 7, %v8082
    %v8084 = vrot.slane %v7242, %v8083
    %v8085 = vlaneseq
    %v8086 = vshrl.u32 %v8085, 7
    %v8087 = vsub.s32 0, %v8086
    %v8088 = vrot.slane %v7243, %v8087
    %v8089 = vlaneseq
    %v8090 = vshrl.u32 %v8089, 7
    %v8091 = vsub.s32 1, %v8090
    %v8092 = vrot.slane %v7243, %v8091
    %v8093 = vlaneseq
    %v8094 = vshrl.u32 %v8093, 7
    %v8095 = vsub.s32 2, %v8094
    %v8096 = vrot.slane %v7243, %v8095
    %v8097 = vlaneseq
    %v8098 = vshrl.u32 %v8097, 7
    %v8099 = vsub.s32 3, %v8098
    %v8100 = vrot.slane %v7243, %v8099
    %v8101 = vlaneseq
    %v8102 = vshrl.u32 %v8101, 7
    %v8103 = vsub.s32 4, %v8102
    %v8104 = vrot.slane %v7243, %v8103
    %v8105 = vlaneseq
    %v8106 = vshrl.u32 %v8105, 7
    %v8107 = vsub.s32 5, %v8106
    %v8108 = vrot.slane %v7243, %v8107
    %v8109 = vlaneseq
    %v8110 = vshrl.u32 %v8109, 7
    %v8111 = vsub.s32 6, %v8110
    %v8112 = vrot.slane %v7243, %v8111
    %v8113 = vlaneseq
    %v8114 = vshrl.u32 %v8113, 7
    %v8115 = vsub.s32 7, %v8114
    %v8116 = vrot.slane %v7243, %v8115
    %v8117 = vlaneseq
    %v8118 = vshrl.u32 %v8117, 7
    %v8119 = vsub.s32 0, %v8118
    %v8120 = vrot.slane %v7244, %v8119
    %v8121 = vlaneseq
    %v8122 = vshrl.u32 %v8121, 7
    %v8123 = vsub.s32 1, %v8122
    %v8124 = vrot.slane %v7244, %v8123
    %v8125 = vlaneseq
    %v8126 = vshrl.u32 %v8125, 7
    %v8127 = vsub.s32 2, %v8126
    %v8128 = vrot.slane %v7244, %v8127
    %v8129 = vlaneseq
    %v8130 = vshrl.u32 %v8129, 7
    %v8131 = vsub.s32 3, %v8130
    %v8132 = vrot.slane %v7244, %v8131
    %v8133 = vlaneseq
    %v8134 = vshrl.u32 %v8133, 7
    %v8135 = vsub.s32 4, %v8134
    %v8136 = vrot.slane %v7244, %v8135
    %v8137 = vlaneseq
    %v8138 = vshrl.u32 %v8137, 7
    %v8139 = vsub.s32 5, %v8138
    %v8140 = vrot.slane %v7244, %v8139
    %v8141 = vlaneseq
    %v8142 = vshrl.u32 %v8141, 7
    %v8143 = vsub.s32 6, %v8142
    %v8144 = vrot.slane %v7244, %v8143
    %v8145 = vlaneseq
    %v8146 = vshrl.u32 %v8145, 7
    %v8147 = vsub.s32 7, %v8146
    %v8148 = vrot.slane %v7244, %v8147
    %v8149 = vlaneseq
    %v8150 = vshrl.u32 %v8149, 7
    %v8151 = vsub.s32 0, %v8150
    %v8152 = vrot.slane %v7245, %v8151
    %v8153 = vlaneseq
    %v8154 = vshrl.u32 %v8153, 7
    %v8155 = vsub.s32 1, %v8154
    %v8156 = vrot.slane %v7245, %v8155
    %v8157 = vlaneseq
    %v8158 = vshrl.u32 %v8157, 7
    %v8159 = vsub.s32 2, %v8158
    %v8160 = vrot.slane %v7245, %v8159
    %v8161 = vlaneseq
    %v8162 = vshrl.u32 %v8161, 7
    %v8163 = vsub.s32 3, %v8162
    %v8164 = vrot.slane %v7245, %v8163
    %v8165 = vlaneseq
    %v8166 = vshrl.u32 %v8165, 7
    %v8167 = vsub.s32 4, %v8166
    %v8168 = vrot.slane %v7245, %v8167
    %v8169 = vlaneseq
    %v8170 = vshrl.u32 %v8169, 7
    %v8171 = vsub.s32 5, %v8170
    %v8172 = vrot.slane %v7245, %v8171
    %v8173 = vlaneseq
    %v8174 = vshrl.u32 %v8173, 7
    %v8175 = vsub.s32 6, %v8174
    %v8176 = vrot.slane %v7245, %v8175
    %v8177 = vlaneseq
    %v8178 = vshrl.u32 %v8177, 7
    %v8179 = vsub.s32 7, %v8178
    %v8180 = vrot.slane %v7245, %v8179
    %v8181 = vlaneseq
    %v8182 = vshrl.u32 %v8181, 7
    %v8183 = vsub.s32 0, %v8182
    %v8184 = vrot.slane %v7246, %v8183
    %v8185 = vlaneseq
    %v8186 = vshrl.u32 %v8185, 7
    %v8187 = vsub.s32 1, %v8186
    %v8188 = vrot.slane %v7246, %v8187
    %v8189 = vlaneseq
    %v8190 = vshrl.u32 %v8189, 7
    %v8191 = vsub.s32 2, %v8190
    %v8192 = vrot.slane %v7246, %v8191
    %v8193 = vlaneseq
    %v8194 = vshrl.u32 %v8193, 7
    %v8195 = vsub.s32 3, %v8194
    %v8196 = vrot.slane %v7246, %v8195
    %v8197 = vlaneseq
    %v8198 = vshrl.u32 %v8197, 7
    %v8199 = vsub.s32 4, %v8198
    %v8200 = vrot.slane %v7246, %v8199
    %v8201 = vlaneseq
    %v8202 = vshrl.u32 %v8201, 7
    %v8203 = vsub.s32 5, %v8202
    %v8204 = vrot.slane %v7246, %v8203
    %v8205 = vlaneseq
    %v8206 = vshrl.u32 %v8205, 7
    %v8207 = vsub.s32 6, %v8206
    %v8208 = vrot.slane %v7246, %v8207
    %v8209 = vlaneseq
    %v8210 = vshrl.u32 %v8209, 7
    %v8211 = vsub.s32 7, %v8210
    %v8212 = vrot.slane %v7246, %v8211
    %v8213 = vlaneseq
    %v8214 = vshrl.u32 %v8213, 7
    %v8215 = vsub.s32 0, %v8214
    %v8216 = vrot.slane %v7247, %v8215
    %v8217 = vlaneseq
    %v8218 = vshrl.u32 %v8217, 7
    %v8219 = vsub.s32 1, %v8218
    %v8220 = vrot.slane %v7247, %v8219
    %v8221 = vlaneseq
    %v8222 = vshrl.u32 %v8221, 7
    %v8223 = vsub.s32 2, %v8222
    %v8224 = vrot.slane %v7247, %v8223
    %v8225 = vlaneseq
    %v8226 = vshrl.u32 %v8225, 7
    %v8227 = vsub.s32 3, %v8226
    %v8228 = vrot.slane %v7247, %v8227
    %v8229 = vlaneseq
    %v8230 = vshrl.u32 %v8229, 7
    %v8231 = vsub.s32 4, %v8230
    %v8232 = vrot.slane %v7247, %v8231
    %v8233 = vlaneseq
    %v8234 = vshrl.u32 %v8233, 7
    %v8235 = vsub.s32 5, %v8234
    %v8236 = vrot.slane %v7247, %v8235
    %v8237 = vlaneseq
    %v8238 = vshrl.u32 %v8237, 7
    %v8239 = vsub.s32 6, %v8238
    %v8240 = vrot.slane %v7247, %v8239
    %v8241 = vlaneseq
    %v8242 = vshrl.u32 %v8241, 7
    %v8243 = vsub.s32 7, %v8242
    %v8244 = vrot.slane %v7247, %v8243
    %v8245 = vlaneseq
    %v8246 = vshrl.u32 %v8245, 7
    %v8247 = vsub.s32 0, %v8246
    %v8248 = vrot.slane %v7248, %v8247
    %v8249 = vlaneseq
    %v8250 = vshrl.u32 %v8249, 7
    %v8251 = vsub.s32 1, %v8250
    %v8252 = vrot.slane %v7248, %v8251
    %v8253 = vlaneseq
    %v8254 = vshrl.u32 %v8253, 7
    %v8255 = vsub.s32 2, %v8254
    %v8256 = vrot.slane %v7248, %v8255
    %v8257 = vlaneseq
    %v8258 = vshrl.u32 %v8257, 7
    %v8259 = vsub.s32 3, %v8258
    %v8260 = vrot.slane %v7248, %v8259
    %v8261 = vlaneseq
    %v8262 = vshrl.u32 %v8261, 7
    %v8263 = vsub.s32 4, %v8262
    %v8264 = vrot.slane %v7248, %v8263
    %v8265 = vlaneseq
    %v8266 = vshrl.u32 %v8265, 7
    %v8267 = vsub.s32 5, %v8266
    %v8268 = vrot.slane %v7248, %v8267
    %v8269 = vlaneseq
    %v8270 = vshrl.u32 %v8269, 7
    %v8271 = vsub.s32 6, %v8270
    %v8272 = vrot.slane %v7248, %v8271
    %v8273 = vlaneseq
    %v8274 = vshrl.u32 %v8273, 7
    %v8275 = vsub.s32 7, %v8274
    %v8276 = vrot.slane %v7248, %v8275
    %v8277 = vlaneseq
    %v8278 = vshrl.u32 %v8277, 7
    %v8279 = vsub.s32 0, %v8278
    %v8280 = vrot.slane %v7249, %v8279
    %v8281 = vlaneseq
    %v8282 = vshrl.u32 %v8281, 7
    %v8283 = vsub.s32 1, %v8282
    %v8284 = vrot.slane %v7249, %v8283
    %v8285 = vlaneseq
    %v8286 = vshrl.u32 %v8285, 7
    %v8287 = vsub.s32 2, %v8286
    %v8288 = vrot.slane %v7249, %v8287
    %v8289 = vlaneseq
    %v8290 = vshrl.u32 %v8289, 7
    %v8291 = vsub.s32 3, %v8290
    %v8292 = vrot.slane %v7249, %v8291
    %v8293 = vlaneseq
    %v8294 = vshrl.u32 %v8293, 7
    %v8295 = vsub.s32 4, %v8294
    %v8296 = vrot.slane %v7249, %v8295
    %v8297 = vlaneseq
    %v8298 = vshrl.u32 %v8297, 7
    %v8299 = vsub.s32 5, %v8298
    %v8300 = vrot.slane %v7249, %v8299
    %v8301 = vlaneseq
    %v8302 = vshrl.u32 %v8301, 7
    %v8303 = vsub.s32 6, %v8302
    %v8304 = vrot.slane %v7249, %v8303
    %v8305 = vlaneseq
    %v8306 = vshrl.u32 %v8305, 7
    %v8307 = vsub.s32 7, %v8306
    %v8308 = vrot.slane %v7249, %v8307
    %v8309 = vlaneseq
    %v8310 = vshrl.u32 %v8309, 7
    %v8311 = vsub.s32 0, %v8310
    %v8312 = vrot.slane %v7250, %v8311
    %v8313 = vlaneseq
    %v8314 = vshrl.u32 %v8313, 7
    %v8315 = vsub.s32 1, %v8314
    %v8316 = vrot.slane %v7250, %v8315
    %v8317 = vlaneseq
    %v8318 = vshrl.u32 %v8317, 7
    %v8319 = vsub.s32 2, %v8318
    %v8320 = vrot.slane %v7250, %v8319
    %v8321 = vlaneseq
    %v8322 = vshrl.u32 %v8321, 7
    %v8323 = vsub.s32 3, %v8322
    %v8324 = vrot.slane %v7250, %v8323
    %v8325 = vlaneseq
    %v8326 = vshrl.u32 %v8325, 7
    %v8327 = vsub.s32 4, %v8326
    %v8328 = vrot.slane %v7250, %v8327
    %v8329 = vlaneseq
    %v8330 = vshrl.u32 %v8329, 7
    %v8331 = vsub.s32 5, %v8330
    %v8332 = vrot.slane %v7250, %v8331
    %v8333 = vlaneseq
    %v8334 = vshrl.u32 %v8333, 7
    %v8335 = vsub.s32 6, %v8334
    %v8336 = vrot.slane %v7250, %v8335
    %v8337 = vlaneseq
    %v8338 = vshrl.u32 %v8337, 7
    %v8339 = vsub.s32 7, %v8338
    %v8340 = vrot.slane %v7250, %v8339
    %v8341 = vlaneseq
    %v8342 = vshrl.u32 %v8341, 7
    %v8343 = vsub.s32 0, %v8342
    %v8344 = vrot.slane %v7251, %v8343
    %v8345 = vlaneseq
    %v8346 = vshrl.u32 %v8345, 7
    %v8347 = vsub.s32 1, %v8346
    %v8348 = vrot.slane %v7251, %v8347
    %v8349 = vlaneseq
    %v8350 = vshrl.u32 %v8349, 7
    %v8351 = vsub.s32 2, %v8350
    %v8352 = vrot.slane %v7251, %v8351
    %v8353 = vlaneseq
    %v8354 = vshrl.u32 %v8353, 7
    %v8355 = vsub.s32 3, %v8354
    %v8356 = vrot.slane %v7251, %v8355
    %v8357 = vlaneseq
    %v8358 = vshrl.u32 %v8357, 7
    %v8359 = vsub.s32 4, %v8358
    %v8360 = vrot.slane %v7251, %v8359
    %v8361 = vlaneseq
    %v8362 = vshrl.u32 %v8361, 7
    %v8363 = vsub.s32 5, %v8362
    %v8364 = vrot.slane %v7251, %v8363
    %v8365 = vlaneseq
    %v8366 = vshrl.u32 %v8365, 7
    %v8367 = vsub.s32 6, %v8366
    %v8368 = vrot.slane %v7251, %v8367
    %v8369 = vlaneseq
    %v8370 = vshrl.u32 %v8369, 7
    %v8371 = vsub.s32 7, %v8370
    %v8372 = vrot.slane %v7251, %v8371
    %v8373 = vlaneseq
    %v8374 = vshrl.u32 %v8373, 7
    %v8375 = vsub.s32 0, %v8374
    %v8376 = vrot.slane %v7252, %v8375
    %v8377 = vlaneseq
    %v8378 = vshrl.u32 %v8377, 7
    %v8379 = vsub.s32 1, %v8378
    %v8380 = vrot.slane %v7252, %v8379
    %v8381 = vlaneseq
    %v8382 = vshrl.u32 %v8381, 7
    %v8383 = vsub.s32 2, %v8382
    %v8384 = vrot.slane %v7252, %v8383
    %v8385 = vlaneseq
    %v8386 = vshrl.u32 %v8385, 7
    %v8387 = vsub.s32 3, %v8386
    %v8388 = vrot.slane %v7252, %v8387
    %v8389 = vlaneseq
    %v8390 = vshrl.u32 %v8389, 7
    %v8391 = vsub.s32 4, %v8390
    %v8392 = vrot.slane %v7252, %v8391
    %v8393 = vlaneseq
    %v8394 = vshrl.u32 %v8393, 7
    %v8395 = vsub.s32 5, %v8394
    %v8396 = vrot.slane %v7252, %v8395
    %v8397 = vlaneseq
    %v8398 = vshrl.u32 %v8397, 7
    %v8399 = vsub.s32 6, %v8398
    %v8400 = vrot.slane %v7252, %v8399
    %v8401 = vlaneseq
    %v8402 = vshrl.u32 %v8401, 7
    %v8403 = vsub.s32 7, %v8402
    %v8404 = vrot.slane %v7252, %v8403
    %v8405 = vlaneseq
    %v8406 = vshrl.u32 %v8405, 7
    %v8407 = vsub.s32 0, %v8406
    %v8408 = vrot.slane %v7253, %v8407
    %v8409 = vlaneseq
    %v8410 = vshrl.u32 %v8409, 7
    %v8411 = vsub.s32 1, %v8410
    %v8412 = vrot.slane %v7253, %v8411
    %v8413 = vlaneseq
    %v8414 = vshrl.u32 %v8413, 7
    %v8415 = vsub.s32 2, %v8414
    %v8416 = vrot.slane %v7253, %v8415
    %v8417 = vlaneseq
    %v8418 = vshrl.u32 %v8417, 7
    %v8419 = vsub.s32 3, %v8418
    %v8420 = vrot.slane %v7253, %v8419
    %v8421 = vlaneseq
    %v8422 = vshrl.u32 %v8421, 7
    %v8423 = vsub.s32 4, %v8422
    %v8424 = vrot.slane %v7253, %v8423
    %v8425 = vlaneseq
    %v8426 = vshrl.u32 %v8425, 7
    %v8427 = vsub.s32 5, %v8426
    %v8428 = vrot.slane %v7253, %v8427
    %v8429 = vlaneseq
    %v8430 = vshrl.u32 %v8429, 7
    %v8431 = vsub.s32 6, %v8430
    %v8432 = vrot.slane %v7253, %v8431
    %v8433 = vlaneseq
    %v8434 = vshrl.u32 %v8433, 7
    %v8435 = vsub.s32 7, %v8434
    %v8436 = vrot.slane %v7253, %v8435
    %v8437 = vlaneseq
    %v8438 = vshrl.u32 %v8437, 7
    %v8439 = vsub.s32 0, %v8438
    %v8440 = vrot.slane %v7254, %v8439
    %v8441 = vlaneseq
    %v8442 = vshrl.u32 %v8441, 7
    %v8443 = vsub.s32 1, %v8442
    %v8444 = vrot.slane %v7254, %v8443
    %v8445 = vlaneseq
    %v8446 = vshrl.u32 %v8445, 7
    %v8447 = vsub.s32 2, %v8446
    %v8448 = vrot.slane %v7254, %v8447
    %v8449 = vlaneseq
    %v8450 = vshrl.u32 %v8449, 7
    %v8451 = vsub.s32 3, %v8450
    %v8452 = vrot.slane %v7254, %v8451
    %v8453 = vlaneseq
    %v8454 = vshrl.u32 %v8453, 7
    %v8455 = vsub.s32 4, %v8454
    %v8456 = vrot.slane %v7254, %v8455
    %v8457 = vlaneseq
    %v8458 = vshrl.u32 %v8457, 7
    %v8459 = vsub.s32 5, %v8458
    %v8460 = vrot.slane %v7254, %v8459
    %v8461 = vlaneseq
    %v8462 = vshrl.u32 %v8461, 7
    %v8463 = vsub.s32 6, %v8462
    %v8464 = vrot.slane %v7254, %v8463
    %v8465 = vlaneseq
    %v8466 = vshrl.u32 %v8465, 7
    %v8467 = vsub.s32 7, %v8466
    %v8468 = vrot.slane %v7254, %v8467
    %v8469 = vlaneseq
    %v8470 = vshrl.u32 %v8469, 7
    %v8471 = vsub.s32 0, %v8470
    %v8472 = vrot.slane %v7255, %v8471
    %v8473 = vlaneseq
    %v8474 = vshrl.u32 %v8473, 7
    %v8475 = vsub.s32 1, %v8474
    %v8476 = vrot.slane %v7255, %v8475
    %v8477 = vlaneseq
    %v8478 = vshrl.u32 %v8477, 7
    %v8479 = vsub.s32 2, %v8478
    %v8480 = vrot.slane %v7255, %v8479
    %v8481 = vlaneseq
    %v8482 = vshrl.u32 %v8481, 7
    %v8483 = vsub.s32 3, %v8482
    %v8484 = vrot.slane %v7255, %v8483
    %v8485 = vlaneseq
    %v8486 = vshrl.u32 %v8485, 7
    %v8487 = vsub.s32 4, %v8486
    %v8488 = vrot.slane %v7255, %v8487
    %v8489 = vlaneseq
    %v8490 = vshrl.u32 %v8489, 7
    %v8491 = vsub.s32 5, %v8490
    %v8492 = vrot.slane %v7255, %v8491
    %v8493 = vlaneseq
    %v8494 = vshrl.u32 %v8493, 7
    %v8495 = vsub.s32 6, %v8494
    %v8496 = vrot.slane %v7255, %v8495
    %v8497 = vlaneseq
    %v8498 = vshrl.u32 %v8497, 7
    %v8499 = vsub.s32 7, %v8498
    %v8500 = vrot.slane %v7255, %v8499
    %v8501 = vlaneseq
    %v8502 = vshrl.u32 %v8501, 7
    %v8503 = vsub.s32 0, %v8502
    %v8504 = vrot.slane %v7256, %v8503
    %v8505 = vlaneseq
    %v8506 = vshrl.u32 %v8505, 7
    %v8507 = vsub.s32 1, %v8506
    %v8508 = vrot.slane %v7256, %v8507
    %v8509 = vlaneseq
    %v8510 = vshrl.u32 %v8509, 7
    %v8511 = vsub.s32 2, %v8510
    %v8512 = vrot.slane %v7256, %v8511
    %v8513 = vlaneseq
    %v8514 = vshrl.u32 %v8513, 7
    %v8515 = vsub.s32 3, %v8514
    %v8516 = vrot.slane %v7256, %v8515
    %v8517 = vlaneseq
    %v8518 = vshrl.u32 %v8517, 7
    %v8519 = vsub.s32 4, %v8518
    %v8520 = vrot.slane %v7256, %v8519
    %v8521 = vlaneseq
    %v8522 = vshrl.u32 %v8521, 7
    %v8523 = vsub.s32 5, %v8522
    %v8524 = vrot.slane %v7256, %v8523
    %v8525 = vlaneseq
    %v8526 = vshrl.u32 %v8525, 7
    %v8527 = vsub.s32 6, %v8526
    %v8528 = vrot.slane %v7256, %v8527
    %v8529 = vlaneseq
    %v8530 = vshrl.u32 %v8529, 7
    %v8531 = vsub.s32 7, %v8530
    %v8532 = vrot.slane %v7256, %v8531
    %v8533 = vlaneseq
    %v8534 = vshrl.u32 %v8533, 7
    %v8535 = vsub.s32 0, %v8534
    %v8536 = vrot.slane %v7257, %v8535
    %v8537 = vlaneseq
    %v8538 = vshrl.u32 %v8537, 7
    %v8539 = vsub.s32 1, %v8538
    %v8540 = vrot.slane %v7257, %v8539
    %v8541 = vlaneseq
    %v8542 = vshrl.u32 %v8541, 7
    %v8543 = vsub.s32 2, %v8542
    %v8544 = vrot.slane %v7257, %v8543
    %v8545 = vlaneseq
    %v8546 = vshrl.u32 %v8545, 7
    %v8547 = vsub.s32 3, %v8546
    %v8548 = vrot.slane %v7257, %v8547
    %v8549 = vlaneseq
    %v8550 = vshrl.u32 %v8549, 7
    %v8551 = vsub.s32 4, %v8550
    %v8552 = vrot.slane %v7257, %v8551
    %v8553 = vlaneseq
    %v8554 = vshrl.u32 %v8553, 7
    %v8555 = vsub.s32 5, %v8554
    %v8556 = vrot.slane %v7257, %v8555
    %v8557 = vlaneseq
    %v8558 = vshrl.u32 %v8557, 7
    %v8559 = vsub.s32 6, %v8558
    %v8560 = vrot.slane %v7257, %v8559
    %v8561 = vlaneseq
    %v8562 = vshrl.u32 %v8561, 7
    %v8563 = vsub.s32 7, %v8562
    %v8564 = vrot.slane %v7257, %v8563
    %v8565 = vlaneseq
    %v8566 = vshrl.u32 %v8565, 7
    %v8567 = vsub.s32 0, %v8566
    %v8568 = vrot.slane %v7258, %v8567
    %v8569 = vlaneseq
    %v8570 = vshrl.u32 %v8569, 7
    %v8571 = vsub.s32 1, %v8570
    %v8572 = vrot.slane %v7258, %v8571
    %v8573 = vlaneseq
    %v8574 = vshrl.u32 %v8573, 7
    %v8575 = vsub.s32 2, %v8574
    %v8576 = vrot.slane %v7258, %v8575
    %v8577 = vlaneseq
    %v8578 = vshrl.u32 %v8577, 7
    %v8579 = vsub.s32 3, %v8578
    %v8580 = vrot.slane %v7258, %v8579
    %v8581 = vlaneseq
    %v8582 = vshrl.u32 %v8581, 7
    %v8583 = vsub.s32 4, %v8582
    %v8584 = vrot.slane %v7258, %v8583
    %v8585 = vlaneseq
    %v8586 = vshrl.u32 %v8585, 7
    %v8587 = vsub.s32 5, %v8586
    %v8588 = vrot.slane %v7258, %v8587
    %v8589 = vlaneseq
    %v8590 = vshrl.u32 %v8589, 7
    %v8591 = vsub.s32 6, %v8590
    %v8592 = vrot.slane %v7258, %v8591
    %v8593 = vlaneseq
    %v8594 = vshrl.u32 %v8593, 7
    %v8595 = vsub.s32 7, %v8594
    %v8596 = vrot.slane %v7258, %v8595
    %v8597 = vlaneseq
    %v8598 = vshrl.u32 %v8597, 7
    %v8599 = vsub.s32 0, %v8598
    %v8600 = vrot.slane %v7259, %v8599
    %v8601 = vlaneseq
    %v8602 = vshrl.u32 %v8601, 7
    %v8603 = vsub.s32 1, %v8602
    %v8604 = vrot.slane %v7259, %v8603
    %v8605 = vlaneseq
    %v8606 = vshrl.u32 %v8605, 7
    %v8607 = vsub.s32 2, %v8606
    %v8608 = vrot.slane %v7259, %v8607
    %v8609 = vlaneseq
    %v8610 = vshrl.u32 %v8609, 7
    %v8611 = vsub.s32 3, %v8610
    %v8612 = vrot.slane %v7259, %v8611
    %v8613 = vlaneseq
    %v8614 = vshrl.u32 %v8613, 7
    %v8615 = vsub.s32 4, %v8614
    %v8616 = vrot.slane %v7259, %v8615
    %v8617 = vlaneseq
    %v8618 = vshrl.u32 %v8617, 7
    %v8619 = vsub.s32 5, %v8618
    %v8620 = vrot.slane %v7259, %v8619
    %v8621 = vlaneseq
    %v8622 = vshrl.u32 %v8621, 7
    %v8623 = vsub.s32 6, %v8622
    %v8624 = vrot.slane %v7259, %v8623
    %v8625 = vlaneseq
    %v8626 = vshrl.u32 %v8625, 7
    %v8627 = vsub.s32 7, %v8626
    %v8628 = vrot.slane %v7259, %v8627
    %v8629 = vlaneseq
    %v8630 = vshrl.u32 %v8629, 7
    %v8631 = vsub.s32 0, %v8630
    %v8632 = vrot.slane %v7260, %v8631
    %v8633 = vlaneseq
    %v8634 = vshrl.u32 %v8633, 7
    %v8635 = vsub.s32 1, %v8634
    %v8636 = vrot.slane %v7260, %v8635
    %v8637 = vlaneseq
    %v8638 = vshrl.u32 %v8637, 7
    %v8639 = vsub.s32 2, %v8638
    %v8640 = vrot.slane %v7260, %v8639
    %v8641 = vlaneseq
    %v8642 = vshrl.u32 %v8641, 7
    %v8643 = vsub.s32 3, %v8642
    %v8644 = vrot.slane %v7260, %v8643
    %v8645 = vlaneseq
    %v8646 = vshrl.u32 %v8645, 7
    %v8647 = vsub.s32 4, %v8646
    %v8648 = vrot.slane %v7260, %v8647
    %v8649 = vlaneseq
    %v8650 = vshrl.u32 %v8649, 7
    %v8651 = vsub.s32 5, %v8650
    %v8652 = vrot.slane %v7260, %v8651
    %v8653 = vlaneseq
    %v8654 = vshrl.u32 %v8653, 7
    %v8655 = vsub.s32 6, %v8654
    %v8656 = vrot.slane %v7260, %v8655
    %v8657 = vlaneseq
    %v8658 = vshrl.u32 %v8657, 7
    %v8659 = vsub.s32 7, %v8658
    %v8660 = vrot.slane %v7260, %v8659
    %v8661 = vlaneseq
    %v8662 = vshrl.u32 %v8661, 7
    %v8663 = vsub.s32 0, %v8662
    %v8664 = vrot.slane %v7261, %v8663
    %v8665 = vlaneseq
    %v8666 = vshrl.u32 %v8665, 7
    %v8667 = vsub.s32 1, %v8666
    %v8668 = vrot.slane %v7261, %v8667
    %v8669 = vlaneseq
    %v8670 = vshrl.u32 %v8669, 7
    %v8671 = vsub.s32 2, %v8670
    %v8672 = vrot.slane %v7261, %v8671
    %v8673 = vlaneseq
    %v8674 = vshrl.u32 %v8673, 7
    %v8675 = vsub.s32 3, %v8674
    %v8676 = vrot.slane %v7261, %v8675
    %v8677 = vlaneseq
    %v8678 = vshrl.u32 %v8677, 7
    %v8679 = vsub.s32 4, %v8678
    %v8680 = vrot.slane %v7261, %v8679
    %v8681 = vlaneseq
    %v8682 = vshrl.u32 %v8681, 7
    %v8683 = vsub.s32 5, %v8682
    %v8684 = vrot.slane %v7261, %v8683
    %v8685 = vlaneseq
    %v8686 = vshrl.u32 %v8685, 7
    %v8687 = vsub.s32 6, %v8686
    %v8688 = vrot.slane %v7261, %v8687
    %v8689 = vlaneseq
    %v8690 = vshrl.u32 %v8689, 7
    %v8691 = vsub.s32 7, %v8690
    %v8692 = vrot.slane %v7261, %v8691
    %v8693 = vlaneseq
    %v8694 = vshrl.u32 %v8693, 7
    %v8695 = vsub.s32 0, %v8694
    %v8696 = vrot.slane %v7262, %v8695
    %v8697 = vlaneseq
    %v8698 = vshrl.u32 %v8697, 7
    %v8699 = vsub.s32 1, %v8698
    %v8700 = vrot.slane %v7262, %v8699
    %v8701 = vlaneseq
    %v8702 = vshrl.u32 %v8701, 7
    %v8703 = vsub.s32 2, %v8702
    %v8704 = vrot.slane %v7262, %v8703
    %v8705 = vlaneseq
    %v8706 = vshrl.u32 %v8705, 7
    %v8707 = vsub.s32 3, %v8706
    %v8708 = vrot.slane %v7262, %v8707
    %v8709 = vlaneseq
    %v8710 = vshrl.u32 %v8709, 7
    %v8711 = vsub.s32 4, %v8710
    %v8712 = vrot.slane %v7262, %v8711
    %v8713 = vlaneseq
    %v8714 = vshrl.u32 %v8713, 7
    %v8715 = vsub.s32 5, %v8714
    %v8716 = vrot.slane %v7262, %v8715
    %v8717 = vlaneseq
    %v8718 = vshrl.u32 %v8717, 7
    %v8719 = vsub.s32 6, %v8718
    %v8720 = vrot.slane %v7262, %v8719
    %v8721 = vlaneseq
    %v8722 = vshrl.u32 %v8721, 7
    %v8723 = vsub.s32 7, %v8722
    %v8724 = vrot.slane %v7262, %v8723
    %v8725 = vlaneseq
    %v8726 = vshrl.u32 %v8725, 7
    %v8727 = vsub.s32 0, %v8726
    %v8728 = vrot.slane %v7263, %v8727
    %v8729 = vlaneseq
    %v8730 = vshrl.u32 %v8729, 7
    %v8731 = vsub.s32 1, %v8730
    %v8732 = vrot.slane %v7263, %v8731
    %v8733 = vlaneseq
    %v8734 = vshrl.u32 %v8733, 7
    %v8735 = vsub.s32 2, %v8734
    %v8736 = vrot.slane %v7263, %v8735
    %v8737 = vlaneseq
    %v8738 = vshrl.u32 %v8737, 7
    %v8739 = vsub.s32 3, %v8738
    %v8740 = vrot.slane %v7263, %v8739
    %v8741 = vlaneseq
    %v8742 = vshrl.u32 %v8741, 7
    %v8743 = vsub.s32 4, %v8742
    %v8744 = vrot.slane %v7263, %v8743
    %v8745 = vlaneseq
    %v8746 = vshrl.u32 %v8745, 7
    %v8747 = vsub.s32 5, %v8746
    %v8748 = vrot.slane %v7263, %v8747
    %v8749 = vlaneseq
    %v8750 = vshrl.u32 %v8749, 7
    %v8751 = vsub.s32 6, %v8750
    %v8752 = vrot.slane %v7263, %v8751
    %v8753 = vlaneseq
    %v8754 = vshrl.u32 %v8753, 7
    %v8755 = vsub.s32 7, %v8754
    %v8756 = vrot.slane %v7263, %v8755
    %v8757 = vlaneseq
    %v8758 = vshrl.u32 %v8757, 7
    %v8759 = vsub.s32 0, %v8758
    %v8760 = vrot.slane %v7264, %v8759
    %v8761 = vlaneseq
    %v8762 = vshrl.u32 %v8761, 7
    %v8763 = vsub.s32 1, %v8762
    %v8764 = vrot.slane %v7264, %v8763
    %v8765 = vlaneseq
    %v8766 = vshrl.u32 %v8765, 7
    %v8767 = vsub.s32 2, %v8766
    %v8768 = vrot.slane %v7264, %v8767
    %v8769 = vlaneseq
    %v8770 = vshrl.u32 %v8769, 7
    %v8771 = vsub.s32 3, %v8770
    %v8772 = vrot.slane %v7264, %v8771
    %v8773 = vlaneseq
    %v8774 = vshrl.u32 %v8773, 7
    %v8775 = vsub.s32 4, %v8774
    %v8776 = vrot.slane %v7264, %v8775
    %v8777 = vlaneseq
    %v8778 = vshrl.u32 %v8777, 7
    %v8779 = vsub.s32 5, %v8778
    %v8780 = vrot.slane %v7264, %v8779
    %v8781 = vlaneseq
    %v8782 = vshrl.u32 %v8781, 7
    %v8783 = vsub.s32 6, %v8782
    %v8784 = vrot.slane %v7264, %v8783
    %v8785 = vlaneseq
    %v8786 = vshrl.u32 %v8785, 7
    %v8787 = vsub.s32 7, %v8786
    %v8788 = vrot.slane %v7264, %v8787
    %v8789 = vlaneseq
    %v8790 = vshrl.u32 %v8789, 7
    %v8791 = vsub.s32 0, %v8790
    %v8792 = vrot.slane %v7265, %v8791
    %v8793 = vlaneseq
    %v8794 = vshrl.u32 %v8793, 7
    %v8795 = vsub.s32 1, %v8794
    %v8796 = vrot.slane %v7265, %v8795
    %v8797 = vlaneseq
    %v8798 = vshrl.u32 %v8797, 7
    %v8799 = vsub.s32 2, %v8798
    %v8800 = vrot.slane %v7265, %v8799
    %v8801 = vlaneseq
    %v8802 = vshrl.u32 %v8801, 7
    %v8803 = vsub.s32 3, %v8802
    %v8804 = vrot.slane %v7265, %v8803
    %v8805 = vlaneseq
    %v8806 = vshrl.u32 %v8805, 7
    %v8807 = vsub.s32 4, %v8806
    %v8808 = vrot.slane %v7265, %v8807
    %v8809 = vlaneseq
    %v8810 = vshrl.u32 %v8809, 7
    %v8811 = vsub.s32 5, %v8810
    %v8812 = vrot.slane %v7265, %v8811
    %v8813 = vlaneseq
    %v8814 = vshrl.u32 %v8813, 7
    %v8815 = vsub.s32 6, %v8814
    %v8816 = vrot.slane %v7265, %v8815
    %v8817 = vlaneseq
    %v8818 = vshrl.u32 %v8817, 7
    %v8819 = vsub.s32 7, %v8818
    %v8820 = vrot.slane %v7265, %v8819
    %v8821 = vlaneseq
    %v8822 = vshrl.u32 %v8821, 7
    %v8823 = vsub.s32 0, %v8822
    %v8824 = vrot.slane %v7266, %v8823
    %v8825 = vlaneseq
    %v8826 = vshrl.u32 %v8825, 7
    %v8827 = vsub.s32 1, %v8826
    %v8828 = vrot.slane %v7266, %v8827
    %v8829 = vlaneseq
    %v8830 = vshrl.u32 %v8829, 7
    %v8831 = vsub.s32 2, %v8830
    %v8832 = vrot.slane %v7266, %v8831
    %v8833 = vlaneseq
    %v8834 = vshrl.u32 %v8833, 7
    %v8835 = vsub.s32 3, %v8834
    %v8836 = vrot.slane %v7266, %v8835
    %v8837 = vlaneseq
    %v8838 = vshrl.u32 %v8837, 7
    %v8839 = vsub.s32 4, %v8838
    %v8840 = vrot.slane %v7266, %v8839
    %v8841 = vlaneseq
    %v8842 = vshrl.u32 %v8841, 7
    %v8843 = vsub.s32 5, %v8842
    %v8844 = vrot.slane %v7266, %v8843
    %v8845 = vlaneseq
    %v8846 = vshrl.u32 %v8845, 7
    %v8847 = vsub.s32 6, %v8846
    %v8848 = vrot.slane %v7266, %v8847
    %v8849 = vlaneseq
    %v8850 = vshrl.u32 %v8849, 7
    %v8851 = vsub.s32 7, %v8850
    %v8852 = vrot.slane %v7266, %v8851
    %v8853 = vlaneseq
    %v8854 = vshrl.u32 %v8853, 7
    %v8855 = vsub.s32 0, %v8854
    %v8856 = vrot.slane %v7267, %v8855
    %v8857 = vlaneseq
    %v8858 = vshrl.u32 %v8857, 7
    %v8859 = vsub.s32 1, %v8858
    %v8860 = vrot.slane %v7267, %v8859
    %v8861 = vlaneseq
    %v8862 = vshrl.u32 %v8861, 7
    %v8863 = vsub.s32 2, %v8862
    %v8864 = vrot.slane %v7267, %v8863
    %v8865 = vlaneseq
    %v8866 = vshrl.u32 %v8865, 7
    %v8867 = vsub.s32 3, %v8866
    %v8868 = vrot.slane %v7267, %v8867
    %v8869 = vlaneseq
    %v8870 = vshrl.u32 %v8869, 7
    %v8871 = vsub.s32 4, %v8870
    %v8872 = vrot.slane %v7267, %v8871
    %v8873 = vlaneseq
    %v8874 = vshrl.u32 %v8873, 7
    %v8875 = vsub.s32 5, %v8874
    %v8876 = vrot.slane %v7267, %v8875
    %v8877 = vlaneseq
    %v8878 = vshrl.u32 %v8877, 7
    %v8879 = vsub.s32 6, %v8878
    %v8880 = vrot.slane %v7267, %v8879
    %v9272 = vadd.f32 %v6828, %v7320
    %v9273 = vadd.f32 %v6829, %v7324
    %v9274 = vadd.f32 %v6830, %v7328
    %v9275 = vadd.f32 %v6831, %v7332
    %v9276 = vadd.f32 %v6832, %v7336
    %v9277 = vadd.f32 %v6833, %v7340
    %v9278 = vadd.f32 %v6834, %v7344
    %v9279 = vadd.f32 %v6835, %v7348
    %v9280 = vadd.f32 %v6836, %v7352
    %v9281 = vadd.f32 %v6837, %v7356
    %v9282 = vadd.f32 %v6838, %v7360
    %v9283 = vadd.f32 %v6839, %v7364
    %v9284 = vadd.f32 %v6840, %v7368
    %v9285 = vadd.f32 %v6841, %v7372
    %v9286 = vadd.f32 %v6842, %v7376
    %v9287 = vadd.f32 %v6843, %v7380
    %v9288 = vadd.f32 %v6844, %v7384
    %v9289 = vadd.f32 %v6845, %v7388
    %v9290 = vadd.f32 %v6846, %v7392
    %v9291 = vadd.f32 %v6847, %v7396
    %v9292 = vadd.f32 %v6848, %v7400
    %v9293 = vadd.f32 %v6849, %v7404
    %v9294 = vadd.f32 %v6850, %v7408
    %v9295 = vadd.f32 %v6851, %v7412
    %v9296 = vadd.f32 %v6852, %v7416
    %v9297 = vadd.f32 %v6853, %v7420
    %v9298 = vadd.f32 %v6854, %v7424
    %v9299 = vadd.f32 %v6855, %v7428
    %v9300 = vadd.f32 %v6856, %v7432
    %v9301 = vadd.f32 %v6857, %v7436
    %v9302 = vadd.f32 %v6858, %v7440
    %v9303 = vadd.f32 %v6859, %v7444
    %v9304 = vadd.f32 %v6860, %v7448
    %v9305 = vadd.f32 %v6861, %v7452
    %v9306 = vadd.f32 %v6862, %v7456
    %v9307 = vadd.f32 %v6863, %v7460
    %v9308 = vadd.f32 %v6864, %v7464
    %v9309 = vadd.f32 %v6865, %v7468
    %v9310 = vadd.f32 %v6866, %v7472
    %v9311 = vadd.f32 %v6867, %v7476
    %v9312 = vadd.f32 %v6868, %v7480
    %v9313 = vadd.f32 %v6869, %v7484
    %v9314 = vadd.f32 %v6870, %v7488
    %v9315 = vadd.f32 %v6871, %v7492
    %v9316 = vadd.f32 %v6872, %v7496
    %v9317 = vadd.f32 %v6873, %v7500
    %v9318 = vadd.f32 %v6874, %v7504
    %v9319 = vadd.f32 %v6875, %v7508
    %v9320 = vadd.f32 %v6876, %v7512
    %v9321 = vadd.f32 %v6877, %v7516
    %v9322 = vadd.f32 %v6878, %v7520
    %v9323 = vadd.f32 %v6879, %v7524
    %v9324 = vadd.f32 %v6880, %v7528
    %v9325 = vadd.f32 %v6881, %v7532
    %v9326 = vadd.f32 %v6882, %v7536
    %v9327 = vadd.f32 %v6883, %v7540
    %v9328 = vadd.f32 %v6884, %v7544
    %v9329 = vadd.f32 %v6885, %v7548
    %v9330 = vadd.f32 %v6886, %v7552
    %v9331 = vadd.f32 %v6887, %v7556
    %v9332 = vadd.f32 %v6888, %v7560
    %v9333 = vadd.f32 %v6889, %v7564
    %v9334 = vadd.f32 %v6890, %v7568
    %v9335 = vadd.f32 %v6891, %v7572
    %v9336 = vadd.f32 %v6892, %v7576
    %v9337 = vadd.f32 %v6893, %v7580
    %v9338 = vadd.f32 %v6894, %v7584
    %v9339 = vadd.f32 %v6895, %v7588
    %v9340 = vadd.f32 %v6896, %v7592
    %v9341 = vadd.f32 %v6897, %v7596
    %v9342 = vadd.f32 %v6898, %v7600
    %v9343 = vadd.f32 %v6899, %v7604
    %v9344 = vadd.f32 %v6900, %v7608
    %v9345 = vadd.f32 %v6901, %v7612
    %v9346 = vadd.f32 %v6902, %v7616
    %v9347 = vadd.f32 %v6903, %v7620
    %v9348 = vadd.f32 %v6904, %v7624
    %v9349 = vadd.f32 %v6905, %v7628
    %v9350 = vadd.f32 %v6906, %v7632
    %v9351 = vadd.f32 %v6907, %v7636
    %v9352 = vadd.f32 %v6908, %v7640
    %v9353 = vadd.f32 %v6909, %v7644
    %v9354 = vadd.f32 %v6910, %v7648
    %v9355 = vadd.f32 %v6911, %v7652
    %v9356 = vadd.f32 %v6912, %v7656
    %v9357 = vadd.f32 %v6913, %v7660
    %v9358 = vadd.f32 %v6914, %v7664
    %v9359 = vadd.f32 %v6915, %v7668
    %v9360 = vadd.f32 %v6916, %v7672
    %v9361 = vadd.f32 %v6917, %v7676
    %v9362 = vadd.f32 %v6918, %v7680
    %v9363 = vadd.f32 %v6919, %v7684
    %v9364 = vadd.f32 %v6920, %v7688
    %v9365 = vadd.f32 %v6921, %v7692
    %v9366 = vadd.f32 %v6922, %v7696
    %v9367 = vadd.f32 %v6923, %v7700
    %v9368 = vadd.f32 %v6924, %v7704
    %v9369 = vadd.f32 %v6925, %v7708
    %v9370 = vadd.f32 %v6926, %v7712
    %v9371 = vadd.f32 %v6927, %v7716
    %v9372 = vadd.f32 %v6928, %v7720
    %v9373 = vadd.f32 %v6929, %v7724
    %v9374 = vadd.f32 %v6930, %v7728
    %v9375 = vadd.f32 %v6931, %v7732
    %v9376 = vadd.f32 %v6932, %v7736
    %v9377 = vadd.f32 %v6933, %v7740
    %v9378 = vadd.f32 %v6934, %v7744
    %v9379 = vadd.f32 %v6935, %v7748
    %v9380 = vadd.f32 %v6936, %v7752
    %v9381 = vadd.f32 %v6937, %v7756
    %v9382 = vadd.f32 %v6938, %v7760
    %v9383 = vadd.f32 %v6939, %v7764
    %v9384 = vadd.f32 %v6940, %v7768
    %v9385 = vadd.f32 %v6941, %v7772
    %v9386 = vadd.f32 %v6942, %v7776
    %v9387 = vadd.f32 %v6943, %v7780
    %v9388 = vadd.f32 %v6944, %v7784
    %v9389 = vadd.f32 %v6945, %v7788
    %v9390 = vadd.f32 %v6946, %v7792
    %v9391 = vadd.f32 %v6947, %v7796
    %v9392 = vadd.f32 %v6948, %v7800
    %v9393 = vadd.f32 %v6949, %v7804
    %v9394 = vadd.f32 %v6950, %v7808
    %v9395 = vadd.f32 %v6951, %v7812
    %v9396 = vadd.f32 %v6952, %v7816
    %v9397 = vadd.f32 %v6953, %v7820
    %v9398 = vadd.f32 %v6954, %v7824
    %v9399 = vadd.f32 %v6955, %v7828
    %v9400 = vadd.f32 %v6956, %v7832
    %v9401 = vadd.f32 %v6957, %v7836
    %v9402 = vadd.f32 %v6958, %v7840
    %v9403 = vadd.f32 %v6959, %v7844
    %v9404 = vadd.f32 %v6960, %v7848
    %v9405 = vadd.f32 %v6961, %v7852
    %v9406 = vadd.f32 %v6962, %v7856
    %v9407 = vadd.f32 %v6963, %v7860
    %v9408 = vadd.f32 %v6964, %v7864
    %v9409 = vadd.f32 %v6965, %v7868
    %v9410 = vadd.f32 %v6966, %v7872
    %v9411 = vadd.f32 %v6967, %v7876
    %v9412 = vadd.f32 %v6968, %v7880
    %v9413 = vadd.f32 %v6969, %v7884
    %v9414 = vadd.f32 %v6970, %v7888
    %v9415 = vadd.f32 %v6971, %v7892
    %v9416 = vadd.f32 %v6972, %v7896
    %v9417 = vadd.f32 %v6973, %v7900
    %v9418 = vadd.f32 %v6974, %v7904
    %v9419 = vadd.f32 %v6975, %v7908
    %v9420 = vadd.f32 %v6976, %v7912
    %v9421 = vadd.f32 %v6977, %v7916
    %v9422 = vadd.f32 %v6978, %v7920
    %v9423 = vadd.f32 %v6979, %v7924
    %v9424 = vadd.f32 %v6980, %v7928
    %v9425 = vadd.f32 %v6981, %v7932
    %v9426 = vadd.f32 %v6982, %v7936
    %v9427 = vadd.f32 %v6983, %v7940
    %v9428 = vadd.f32 %v6984, %v7944
    %v9429 = vadd.f32 %v6985, %v7948
    %v9430 = vadd.f32 %v6986, %v7952
    %v9431 = vadd.f32 %v6987, %v7956
    %v9432 = vadd.f32 %v6988, %v7960
    %v9433 = vadd.f32 %v6989, %v7964
    %v9434 = vadd.f32 %v6990, %v7968
    %v9435 = vadd.f32 %v6991, %v7972
    %v9436 = vadd.f32 %v6992, %v7976
    %v9437 = vadd.f32 %v6993, %v7980
    %v9438 = vadd.f32 %v6994, %v7984
    %v9439 = vadd.f32 %v6995, %v7988
    %v9440 = vadd.f32 %v6996, %v7992
    %v9441 = vadd.f32 %v6997, %v7996
    %v9442 = vadd.f32 %v6998, %v8000
    %v9443 = vadd.f32 %v6999, %v8004
    %v9444 = vadd.f32 %v7000, %v8008
    %v9445 = vadd.f32 %v7001, %v8012
    %v9446 = vadd.f32 %v7002, %v8016
    %v9447 = vadd.f32 %v7003, %v8020
    %v9448 = vadd.f32 %v7004, %v8024
    %v9449 = vadd.f32 %v7005, %v8028
    %v9450 = vadd.f32 %v7006, %v8032
    %v9451 = vadd.f32 %v7007, %v8036
    %v9452 = vadd.f32 %v7008, %v8040
    %v9453 = vadd.f32 %v7009, %v8044
    %v9454 = vadd.f32 %v7010, %v8048
    %v9455 = vadd.f32 %v7011, %v8052
    %v9456 = vadd.f32 %v7012, %v8056
    %v9457 = vadd.f32 %v7013, %v8060
    %v9458 = vadd.f32 %v7014, %v8064
    %v9459 = vadd.f32 %v7015, %v8068
    %v9460 = vadd.f32 %v7016, %v8072
    %v9461 = vadd.f32 %v7017, %v8076
    %v9462 = vadd.f32 %v7018, %v8080
    %v9463 = vadd.f32 %v7019, %v8084
    %v9464 = vadd.f32 %v7020, %v8088
    %v9465 = vadd.f32 %v7021, %v8092
    %v9466 = vadd.f32 %v7022, %v8096
    %v9467 = vadd.f32 %v7023, %v8100
    %v9468 = vadd.f32 %v7024, %v8104
    %v9469 = vadd.f32 %v7025, %v8108
    %v9470 = vadd.f32 %v7026, %v8112
    %v9471 = vadd.f32 %v7027, %v8116
    %v9472 = vadd.f32 %v7028, %v8120
    %v9473 = vadd.f32 %v7029, %v8124
    %v9474 = vadd.f32 %v7030, %v8128
    %v9475 = vadd.f32 %v7031, %v8132
    %v9476 = vadd.f32 %v7032, %v8136
    %v9477 = vadd.f32 %v7033, %v8140
    %v9478 = vadd.f32 %v7034, %v8144
    %v9479 = vadd.f32 %v7035, %v8148
    %v9480 = vadd.f32 %v7036, %v8152
    %v9481 = vadd.f32 %v7037, %v8156
    %v9482 = vadd.f32 %v7038, %v8160
    %v9483 = vadd.f32 %v7039, %v8164
    %v9484 = vadd.f32 %v7040, %v8168
    %v9485 = vadd.f32 %v7041, %v8172
    %v9486 = vadd.f32 %v7042, %v8176
    %v9487 = vadd.f32 %v7043, %v8180
    %v9488 = vadd.f32 %v7044, %v8184
    %v9489 = vadd.f32 %v7045, %v8188
    %v9490 = vadd.f32 %v7046, %v8192
    %v9491 = vadd.f32 %v7047, %v8196
    %v9492 = vadd.f32 %v7048, %v8200
    %v9493 = vadd.f32 %v7049, %v8204
    %v9494 = vadd.f32 %v7050, %v8208
    %v9495 = vadd.f32 %v7051, %v8212
    %v9496 = vadd.f32 %v7052, %v8216
    %v9497 = vadd.f32 %v7053, %v8220
    %v9498 = vadd.f32 %v7054, %v8224
    %v9499 = vadd.f32 %v7055, %v8228
    %v9500 = vadd.f32 %v7056, %v8232
    %v9501 = vadd.f32 %v7057, %v8236
    %v9502 = vadd.f32 %v7058, %v8240
    %v9503 = vadd.f32 %v7059, %v8244
    %v9504 = vadd.f32 %v7060, %v8248
    %v9505 = vadd.f32 %v7061, %v8252
    %v9506 = vadd.f32 %v7062, %v8256
    %v9507 = vadd.f32 %v7063, %v8260
    %v9508 = vadd.f32 %v7064, %v8264
    %v9509 = vadd.f32 %v7065, %v8268
    %v9510 = vadd.f32 %v7066, %v8272
    %v9511 = vadd.f32 %v7067, %v8276
    %v9512 = vadd.f32 %v7068, %v8280
    %v9513 = vadd.f32 %v7069, %v8284
    %v9514 = vadd.f32 %v7070, %v8288
    %v9515 = vadd.f32 %v7071, %v8292
    %v9516 = vadd.f32 %v7072, %v8296
    %v9517 = vadd.f32 %v7073, %v8300
    %v9518 = vadd.f32 %v7074, %v8304
    %v9519 = vadd.f32 %v7075, %v8308
    %v9520 = vadd.f32 %v7076, %v8312
    %v9521 = vadd.f32 %v7077, %v8316
    %v9522 = vadd.f32 %v7078, %v8320
    %v9523 = vadd.f32 %v7079, %v8324
    %v9524 = vadd.f32 %v7080, %v8328
    %v9525 = vadd.f32 %v7081, %v8332
    %v9526 = vadd.f32 %v7082, %v8336
    %v9527 = vadd.f32 %v7083, %v8340
    %v9528 = vadd.f32 %v7084, %v8344
    %v9529 = vadd.f32 %v7085, %v8348
    %v9530 = vadd.f32 %v7086, %v8352
    %v9531 = vadd.f32 %v7087, %v8356
    %v9532 = vadd.f32 %v7088, %v8360
    %v9533 = vadd.f32 %v7089, %v8364
    %v9534 = vadd.f32 %v7090, %v8368
    %v9535 = vadd.f32 %v7091, %v8372
    %v9536 = vadd.f32 %v7092, %v8376
    %v9537 = vadd.f32 %v7093, %v8380
    %v9538 = vadd.f32 %v7094, %v8384
    %v9539 = vadd.f32 %v7095, %v8388
    %v9540 = vadd.f32 %v7096, %v8392
    %v9541 = vadd.f32 %v7097, %v8396
    %v9542 = vadd.f32 %v7098, %v8400
    %v9543 = vadd.f32 %v7099, %v8404
    %v9544 = vadd.f32 %v7100, %v8408
    %v9545 = vadd.f32 %v7101, %v8412
    %v9546 = vadd.f32 %v7102, %v8416
    %v9547 = vadd.f32 %v7103, %v8420
    %v9548 = vadd.f32 %v7104, %v8424
    %v9549 = vadd.f32 %v7105, %v8428
    %v9550 = vadd.f32 %v7106, %v8432
    %v9551 = vadd.f32 %v7107, %v8436
    %v9552 = vadd.f32 %v7108, %v8440
    %v9553 = vadd.f32 %v7109, %v8444
    %v9554 = vadd.f32 %v7110, %v8448
    %v9555 = vadd.f32 %v7111, %v8452
    %v9556 = vadd.f32 %v7112, %v8456
    %v9557 = vadd.f32 %v7113, %v8460
    %v9558 = vadd.f32 %v7114, %v8464
    %v9559 = vadd.f32 %v7115, %v8468
    %v9560 = vadd.f32 %v7116, %v8472
    %v9561 = vadd.f32 %v7117, %v8476
    %v9562 = vadd.f32 %v7118, %v8480
    %v9563 = vadd.f32 %v7119, %v8484
    %v9564 = vadd.f32 %v7120, %v8488
    %v9565 = vadd.f32 %v7121, %v8492
    %v9566 = vadd.f32 %v7122, %v8496
    %v9567 = vadd.f32 %v7123, %v8500
    %v9568 = vadd.f32 %v7124, %v8504
    %v9569 = vadd.f32 %v7125, %v8508
    %v9570 = vadd.f32 %v7126, %v8512
    %v9571 = vadd.f32 %v7127, %v8516
    %v9572 = vadd.f32 %v7128, %v8520
    %v9573 = vadd.f32 %v7129, %v8524
    %v9574 = vadd.f32 %v7130, %v8528
    %v9575 = vadd.f32 %v7131, %v8532
    %v9576 = vadd.f32 %v7132, %v8536
    %v9577 = vadd.f32 %v7133, %v8540
    %v9578 = vadd.f32 %v7134, %v8544
    %v9579 = vadd.f32 %v7135, %v8548
    %v9580 = vadd.f32 %v7136, %v8552
    %v9581 = vadd.f32 %v7137, %v8556
    %v9582 = vadd.f32 %v7138, %v8560
    %v9583 = vadd.f32 %v7139, %v8564
    %v9584 = vadd.f32 %v7140, %v8568
    %v9585 = vadd.f32 %v7141, %v8572
    %v9586 = vadd.f32 %v7142, %v8576
    %v9587 = vadd.f32 %v7143, %v8580
    %v9588 = vadd.f32 %v7144, %v8584
    %v9589 = vadd.f32 %v7145, %v8588
    %v9590 = vadd.f32 %v7146, %v8592
    %v9591 = vadd.f32 %v7147, %v8596
    %v9592 = vadd.f32 %v7148, %v8600
    %v9593 = vadd.f32 %v7149, %v8604
    %v9594 = vadd.f32 %v7150, %v8608
    %v9595 = vadd.f32 %v7151, %v8612
    %v9596 = vadd.f32 %v7152, %v8616
    %v9597 = vadd.f32 %v7153, %v8620
    %v9598 = vadd.f32 %v7154, %v8624
    %v9599 = vadd.f32 %v7155, %v8628
    %v9600 = vadd.f32 %v7156, %v8632
    %v9601 = vadd.f32 %v7157, %v8636
    %v9602 = vadd.f32 %v7158, %v8640
    %v9603 = vadd.f32 %v7159, %v8644
    %v9604 = vadd.f32 %v7160, %v8648
    %v9605 = vadd.f32 %v7161, %v8652
    %v9606 = vadd.f32 %v7162, %v8656
    %v9607 = vadd.f32 %v7163, %v8660
    %v9608 = vadd.f32 %v7164, %v8664
    %v9609 = vadd.f32 %v7165, %v8668
    %v9610 = vadd.f32 %v7166, %v8672
    %v9611 = vadd.f32 %v7167, %v8676
    %v9612 = vadd.f32 %v7168, %v8680
    %v9613 = vadd.f32 %v7169, %v8684
    %v9614 = vadd.f32 %v7170, %v8688
    %v9615 = vadd.f32 %v7171, %v8692
    %v9616 = vadd.f32 %v7172, %v8696
    %v9617 = vadd.f32 %v7173, %v8700
    %v9618 = vadd.f32 %v7174, %v8704
    %v9619 = vadd.f32 %v7175, %v8708
    %v9620 = vadd.f32 %v7176, %v8712
    %v9621 = vadd.f32 %v7177, %v8716
    %v9622 = vadd.f32 %v7178, %v8720
    %v9623 = vadd.f32 %v7179, %v8724
    %v9624 = vadd.f32 %v7180, %v8728
    %v9625 = vadd.f32 %v7181, %v8732
    %v9626 = vadd.f32 %v7182, %v8736
    %v9627 = vadd.f32 %v7183, %v8740
    %v9628 = vadd.f32 %v7184, %v8744
    %v9629 = vadd.f32 %v7185, %v8748
    %v9630 = vadd.f32 %v7186, %v8752
    %v9631 = vadd.f32 %v7187, %v8756
    %v9632 = vadd.f32 %v7188, %v8760
    %v9633 = vadd.f32 %v7189, %v8764
    %v9634 = vadd.f32 %v7190, %v8768
    %v9635 = vadd.f32 %v7191, %v8772
    %v9636 = vadd.f32 %v7192, %v8776
    %v9637 = vadd.f32 %v7193, %v8780
    %v9638 = vadd.f32 %v7194, %v8784
    %v9639 = vadd.f32 %v7195, %v8788
    %v9640 = vadd.f32 %v7196, %v8792
    %v9641 = vadd.f32 %v7197, %v8796
    %v9642 = vadd.f32 %v7198, %v8800
    %v9643 = vadd.f32 %v7199, %v8804
    %v9644 = vadd.f32 %v7200, %v8808
    %v9645 = vadd.f32 %v7201, %v8812
    %v9646 = vadd.f32 %v7202, %v8816
    %v9647 = vadd.f32 %v7203, %v8820
    %v9648 = vadd.f32 %v7204, %v8824
    %v9649 = vadd.f32 %v7205, %v8828
    %v9650 = vadd.f32 %v7206, %v8832
    %v9651 = vadd.f32 %v7207, %v8836
    %v9652 = vadd.f32 %v7208, %v8840
    %v9653 = vadd.f32 %v7209, %v8844
    %v9654 = vadd.f32 %v7210, %v8848
    %v9655 = vadd.f32 %v7211, %v8852
    %v9656 = vadd.f32 %v7212, %v8856
    %v9657 = vadd.f32 %v7213, %v8860
    %v9658 = vadd.f32 %v7214, %v8864
    %v9659 = vadd.f32 %v7215, %v8868
    %v9660 = vadd.f32 %v7216, %v8872
    %v9661 = vadd.f32 %v7217, %v8876
    %v9662 = vadd.f32 %v7218, %v8880
    %v9663 = vsel %vm833, %v9272, -inf
    %v9664 = vsel %vm834, %v9273, -inf
    %v9665 = vsel %vm835, %v9274, -inf
    %v9666 = vsel %vm836, %v9275, -inf
    %v9667 = vsel %vm837, %v9276, -inf
    %v9668 = vsel %vm838, %v9277, -inf
    %v9669 = vsel %vm839, %v9278, -inf
    %v9670 = vsel %vm840, %v9279, -inf
    %v9671 = vsel %vm841, %v9280, -inf
    %v9672 = vsel %vm842, %v9281, -inf
    %v9673 = vsel %vm843, %v9282, -inf
    %v9674 = vsel %vm844, %v9283, -inf
    %v9675 = vsel %vm845, %v9284, -inf
    %v9676 = vsel %vm846, %v9285, -inf
    %v9677 = vsel %vm847, %v9286, -inf
    %v9678 = vsel %vm848, %v9287, -inf
    %v9679 = vsel %vm849, %v9288, -inf
    %v9680 = vsel %vm850, %v9289, -inf
    %v9681 = vsel %vm851, %v9290, -inf
    %v9682 = vsel %vm852, %v9291, -inf
    %v9683 = vsel %vm853, %v9292, -inf
    %v9684 = vsel %vm854, %v9293, -inf
    %v9685 = vsel %vm855, %v9294, -inf
    %v9686 = vsel %vm856, %v9295, -inf
    %v9687 = vsel %vm857, %v9296, -inf
    %v9688 = vsel %vm858, %v9297, -inf
    %v9689 = vsel %vm859, %v9298, -inf
    %v9690 = vsel %vm860, %v9299, -inf
    %v9691 = vsel %vm861, %v9300, -inf
    %v9692 = vsel %vm862, %v9301, -inf
    %v9693 = vsel %vm863, %v9302, -inf
    %v9694 = vsel %vm864, %v9303, -inf
    %v9695 = vsel %vm865, %v9304, -inf
    %v9696 = vsel %vm866, %v9305, -inf
    %v9697 = vsel %vm867, %v9306, -inf
    %v9698 = vsel %vm868, %v9307, -inf
    %v9699 = vsel %vm869, %v9308, -inf
    %v9700 = vsel %vm870, %v9309, -inf
    %v9701 = vsel %vm871, %v9310, -inf
    %v9702 = vsel %vm872, %v9311, -inf
    %v9703 = vsel %vm873, %v9312, -inf
    %v9704 = vsel %vm874, %v9313, -inf
    %v9705 = vsel %vm875, %v9314, -inf
    %v9706 = vsel %vm876, %v9315, -inf
    %v9707 = vsel %vm877, %v9316, -inf
    %v9708 = vsel %vm878, %v9317, -inf
    %v9709 = vsel %vm879, %v9318, -inf
    %v9710 = vsel %vm880, %v9319, -inf
    %v9711 = vsel %vm881, %v9320, -inf
    %v9712 = vsel %vm882, %v9321, -inf
    %v9713 = vsel %vm883, %v9322, -inf
    %v9714 = vsel %vm884, %v9323, -inf
    %v9715 = vsel %vm885, %v9324, -inf
    %v9716 = vsel %vm886, %v9325, -inf
    %v9717 = vsel %vm887, %v9326, -inf
    %v9718 = vsel %vm888, %v9327, -inf
    %v9719 = vsel %vm889, %v9328, -inf
    %v9720 = vsel %vm890, %v9329, -inf
    %v9721 = vsel %vm891, %v9330, -inf
    %v9722 = vsel %vm892, %v9331, -inf
    %v9723 = vsel %vm893, %v9332, -inf
    %v9724 = vsel %vm894, %v9333, -inf
    %v9725 = vsel %vm895, %v9334, -inf
    %v9726 = vsel %vm896, %v9335, -inf
    %v9727 = vsel %vm897, %v9336, -inf
    %v9728 = vsel %vm898, %v9337, -inf
    %v9729 = vsel %vm899, %v9338, -inf
    %v9730 = vsel %vm900, %v9339, -inf
    %v9731 = vsel %vm901, %v9340, -inf
    %v9732 = vsel %vm902, %v9341, -inf
    %v9733 = vsel %vm903, %v9342, -inf
    %v9734 = vsel %vm904, %v9343, -inf
    %v9735 = vsel %vm905, %v9344, -inf
    %v9736 = vsel %vm906, %v9345, -inf
    %v9737 = vsel %vm907, %v9346, -inf
    %v9738 = vsel %vm908, %v9347, -inf
    %v9739 = vsel %vm909, %v9348, -inf
    %v9740 = vsel %vm910, %v9349, -inf
    %v9741 = vsel %vm911, %v9350, -inf
    %v9742 = vsel %vm912, %v9351, -inf
    %v9743 = vsel %vm913, %v9352, -inf
    %v9744 = vsel %vm914, %v9353, -inf
    %v9745 = vsel %vm915, %v9354, -inf
    %v9746 = vsel %vm916, %v9355, -inf
    %v9747 = vsel %vm917, %v9356, -inf
    %v9748 = vsel %vm918, %v9357, -inf
    %v9749 = vsel %vm919, %v9358, -inf
    %v9750 = vsel %vm920, %v9359, -inf
    %v9751 = vsel %vm921, %v9360, -inf
    %v9752 = vsel %vm922, %v9361, -inf
    %v9753 = vsel %vm923, %v9362, -inf
    %v9754 = vsel %vm924, %v9363, -inf
    %v9755 = vsel %vm925, %v9364, -inf
    %v9756 = vsel %vm926, %v9365, -inf
    %v9757 = vsel %vm927, %v9366, -inf
    %v9758 = vsel %vm928, %v9367, -inf
    %v9759 = vsel %vm929, %v9368, -inf
    %v9760 = vsel %vm930, %v9369, -inf
    %v9761 = vsel %vm931, %v9370, -inf
    %v9762 = vsel %vm932, %v9371, -inf
    %v9763 = vsel %vm933, %v9372, -inf
    %v9764 = vsel %vm934, %v9373, -inf
    %v9765 = vsel %vm935, %v9374, -inf
    %v9766 = vsel %vm936, %v9375, -inf
    %v9767 = vsel %vm937, %v9376, -inf
    %v9768 = vsel %vm938, %v9377, -inf
    %v9769 = vsel %vm939, %v9378, -inf
    %v9770 = vsel %vm940, %v9379, -inf
    %v9771 = vsel %vm941, %v9380, -inf
    %v9772 = vsel %vm942, %v9381, -inf
    %v9773 = vsel %vm943, %v9382, -inf
    %v9774 = vsel %vm944, %v9383, -inf
    %v9775 = vsel %vm945, %v9384, -inf
    %v9776 = vsel %vm946, %v9385, -inf
    %v9777 = vsel %vm947, %v9386, -inf
    %v9778 = vsel %vm948, %v9387, -inf
    %v9779 = vsel %vm949, %v9388, -inf
    %v9780 = vsel %vm950, %v9389, -inf
    %v9781 = vsel %vm951, %v9390, -inf
    %v9782 = vsel %vm952, %v9391, -inf
    %v9783 = vsel %vm953, %v9392, -inf
    %v9784 = vsel %vm954, %v9393, -inf
    %v9785 = vsel %vm955, %v9394, -inf
    %v9786 = vsel %vm956, %v9395, -inf
    %v9787 = vsel %vm957, %v9396, -inf
    %v9788 = vsel %vm958, %v9397, -inf
    %v9789 = vsel %vm959, %v9398, -inf
    %v9790 = vsel %vm960, %v9399, -inf
    %v9791 = vsel %vm961, %v9400, -inf
    %v9792 = vsel %vm962, %v9401, -inf
    %v9793 = vsel %vm963, %v9402, -inf
    %v9794 = vsel %vm964, %v9403, -inf
    %v9795 = vsel %vm965, %v9404, -inf
    %v9796 = vsel %vm966, %v9405, -inf
    %v9797 = vsel %vm967, %v9406, -inf
    %v9798 = vsel %vm968, %v9407, -inf
    %v9799 = vsel %vm969, %v9408, -inf
    %v9800 = vsel %vm970, %v9409, -inf
    %v9801 = vsel %vm971, %v9410, -inf
    %v9802 = vsel %vm972, %v9411, -inf
    %v9803 = vsel %vm973, %v9412, -inf
    %v9804 = vsel %vm974, %v9413, -inf
    %v9805 = vsel %vm975, %v9414, -inf
    %v9806 = vsel %vm976, %v9415, -inf
    %v9807 = vsel %vm977, %v9416, -inf
    %v9808 = vsel %vm978, %v9417, -inf
    %v9809 = vsel %vm979, %v9418, -inf
    %v9810 = vsel %vm980, %v9419, -inf
    %v9811 = vsel %vm981, %v9420, -inf
    %v9812 = vsel %vm982, %v9421, -inf
    %v9813 = vsel %vm983, %v9422, -inf
    %v9814 = vsel %vm984, %v9423, -inf
    %v9815 = vsel %vm985, %v9424, -inf
    %v9816 = vsel %vm986, %v9425, -inf
    %v9817 = vsel %vm987, %v9426, -inf
    %v9818 = vsel %vm988, %v9427, -inf
    %v9819 = vsel %vm989, %v9428, -inf
    %v9820 = vsel %vm990, %v9429, -inf
    %v9821 = vsel %vm991, %v9430, -inf
    %v9822 = vsel %vm992, %v9431, -inf
    %v9823 = vsel %vm993, %v9432, -inf
    %v9824 = vsel %vm994, %v9433, -inf
    %v9825 = vsel %vm995, %v9434, -inf
    %v9826 = vsel %vm996, %v9435, -inf
    %v9827 = vsel %vm997, %v9436, -inf
    %v9828 = vsel %vm998, %v9437, -inf
    %v9829 = vsel %vm999, %v9438, -inf
    %v9830 = vsel %vm1000, %v9439, -inf
    %v9831 = vsel %vm1001, %v9440, -inf
    %v9832 = vsel %vm1002, %v9441, -inf
    %v9833 = vsel %vm1003, %v9442, -inf
    %v9834 = vsel %vm1004, %v9443, -inf
    %v9835 = vsel %vm1005, %v9444, -inf
    %v9836 = vsel %vm1006, %v9445, -inf
    %v9837 = vsel %vm1007, %v9446, -inf
    %v9838 = vsel %vm1008, %v9447, -inf
    %v9839 = vsel %vm1009, %v9448, -inf
    %v9840 = vsel %vm1010, %v9449, -inf
    %v9841 = vsel %vm1011, %v9450, -inf
    %v9842 = vsel %vm1012, %v9451, -inf
    %v9843 = vsel %vm1013, %v9452, -inf
    %v9844 = vsel %vm1014, %v9453, -inf
    %v9845 = vsel %vm1015, %v9454, -inf
    %v9846 = vsel %vm1016, %v9455, -inf
    %v9847 = vsel %vm1017, %v9456, -inf
    %v9848 = vsel %vm1018, %v9457, -inf
    %v9849 = vsel %vm1019, %v9458, -inf
    %v9850 = vsel %vm1020, %v9459, -inf
    %v9851 = vsel %vm1021, %v9460, -inf
    %v9852 = vsel %vm1022, %v9461, -inf
    %v9853 = vsel %vm1023, %v9462, -inf
    %v9854 = vsel %vm1024, %v9463, -inf
    %v9855 = vsel %vm1025, %v9464, -inf
    %v9856 = vsel %vm1026, %v9465, -inf
    %v9857 = vsel %vm1027, %v9466, -inf
    %v9858 = vsel %vm1028, %v9467, -inf
    %v9859 = vsel %vm1029, %v9468, -inf
    %v9860 = vsel %vm1030, %v9469, -inf
    %v9861 = vsel %vm1031, %v9470, -inf
    %v9862 = vsel %vm1032, %v9471, -inf
    %v9863 = vsel %vm1033, %v9472, -inf
    %v9864 = vsel %vm1034, %v9473, -inf
    %v9865 = vsel %vm1035, %v9474, -inf
    %v9866 = vsel %vm1036, %v9475, -inf
    %v9867 = vsel %vm1037, %v9476, -inf
    %v9868 = vsel %vm1038, %v9477, -inf
    %v9869 = vsel %vm1039, %v9478, -inf
    %v9870 = vsel %vm1040, %v9479, -inf
    %v9871 = vsel %vm1041, %v9480, -inf
    %v9872 = vsel %vm1042, %v9481, -inf
    %v9873 = vsel %vm1043, %v9482, -inf
    %v9874 = vsel %vm1044, %v9483, -inf
    %v9875 = vsel %vm1045, %v9484, -inf
    %v9876 = vsel %vm1046, %v9485, -inf
    %v9877 = vsel %vm1047, %v9486, -inf
    %v9878 = vsel %vm1048, %v9487, -inf
    %v9879 = vsel %vm1049, %v9488, -inf
    %v9880 = vsel %vm1050, %v9489, -inf
    %v9881 = vsel %vm1051, %v9490, -inf
    %v9882 = vsel %vm1052, %v9491, -inf
    %v9883 = vsel %vm1053, %v9492, -inf
    %v9884 = vsel %vm1054, %v9493, -inf
    %v9885 = vsel %vm1055, %v9494, -inf
    %v9886 = vsel %vm1056, %v9495, -inf
    %v9887 = vsel %vm1057, %v9496, -inf
    %v9888 = vsel %vm1058, %v9497, -inf
    %v9889 = vsel %vm1059, %v9498, -inf
    %v9890 = vsel %vm1060, %v9499, -inf
    %v9891 = vsel %vm1061, %v9500, -inf
    %v9892 = vsel %vm1062, %v9501, -inf
    %v9893 = vsel %vm1063, %v9502, -inf
    %v9894 = vsel %vm1064, %v9503, -inf
    %v9895 = vsel %vm1065, %v9504, -inf
    %v9896 = vsel %vm1066, %v9505, -inf
    %v9897 = vsel %vm1067, %v9506, -inf
    %v9898 = vsel %vm1068, %v9507, -inf
    %v9899 = vsel %vm1069, %v9508, -inf
    %v9900 = vsel %vm1070, %v9509, -inf
    %v9901 = vsel %vm1071, %v9510, -inf
    %v9902 = vsel %vm1072, %v9511, -inf
    %v9903 = vsel %vm1073, %v9512, -inf
    %v9904 = vsel %vm1074, %v9513, -inf
    %v9905 = vsel %vm1075, %v9514, -inf
    %v9906 = vsel %vm1076, %v9515, -inf
    %v9907 = vsel %vm1077, %v9516, -inf
    %v9908 = vsel %vm1078, %v9517, -inf
    %v9909 = vsel %vm1079, %v9518, -inf
    %v9910 = vsel %vm1080, %v9519, -inf
    %v9911 = vsel %vm1081, %v9520, -inf
    %v9912 = vsel %vm1082, %v9521, -inf
    %v9913 = vsel %vm1083, %v9522, -inf
    %v9914 = vsel %vm1084, %v9523, -inf
    %v9915 = vsel %vm1085, %v9524, -inf
    %v9916 = vsel %vm1086, %v9525, -inf
    %v9917 = vsel %vm1087, %v9526, -inf
    %v9918 = vsel %vm1088, %v9527, -inf
    %v9919 = vsel %vm1089, %v9528, -inf
    %v9920 = vsel %vm1090, %v9529, -inf
    %v9921 = vsel %vm1091, %v9530, -inf
    %v9922 = vsel %vm1092, %v9531, -inf
    %v9923 = vsel %vm1093, %v9532, -inf
    %v9924 = vsel %vm1094, %v9533, -inf
    %v9925 = vsel %vm1095, %v9534, -inf
    %v9926 = vsel %vm1096, %v9535, -inf
    %v9927 = vsel %vm1097, %v9536, -inf
    %v9928 = vsel %vm1098, %v9537, -inf
    %v9929 = vsel %vm1099, %v9538, -inf
    %v9930 = vsel %vm1100, %v9539, -inf
    %v9931 = vsel %vm1101, %v9540, -inf
    %v9932 = vsel %vm1102, %v9541, -inf
    %v9933 = vsel %vm1103, %v9542, -inf
    %v9934 = vsel %vm1104, %v9543, -inf
    %v9935 = vsel %vm1105, %v9544, -inf
    %v9936 = vsel %vm1106, %v9545, -inf
    %v9937 = vsel %vm1107, %v9546, -inf
    %v9938 = vsel %vm1108, %v9547, -inf
    %v9939 = vsel %vm1109, %v9548, -inf
    %v9940 = vsel %vm1110, %v9549, -inf
    %v9941 = vsel %vm1111, %v9550, -inf
    %v9942 = vsel %vm1112, %v9551, -inf
    %v9943 = vsel %vm1113, %v9552, -inf
    %v9944 = vsel %vm1114, %v9553, -inf
    %v9945 = vsel %vm1115, %v9554, -inf
    %v9946 = vsel %vm1116, %v9555, -inf
    %v9947 = vsel %vm1117, %v9556, -inf
    %v9948 = vsel %vm1118, %v9557, -inf
    %v9949 = vsel %vm1119, %v9558, -inf
    %v9950 = vsel %vm1120, %v9559, -inf
    %v9951 = vsel %vm1121, %v9560, -inf
    %v9952 = vsel %vm1122, %v9561, -inf
    %v9953 = vsel %vm1123, %v9562, -inf
    %v9954 = vsel %vm1124, %v9563, -inf
    %v9955 = vsel %vm1125, %v9564, -inf
    %v9956 = vsel %vm1126, %v9565, -inf
    %v9957 = vsel %vm1127, %v9566, -inf
    %v9958 = vsel %vm1128, %v9567, -inf
    %v9959 = vsel %vm1129, %v9568, -inf
    %v9960 = vsel %vm1130, %v9569, -inf
    %v9961 = vsel %vm1131, %v9570, -inf
    %v9962 = vsel %vm1132, %v9571, -inf
    %v9963 = vsel %vm1133, %v9572, -inf
    %v9964 = vsel %vm1134, %v9573, -inf
    %v9965 = vsel %vm1135, %v9574, -inf
    %v9966 = vsel %vm1136, %v9575, -inf
    %v9967 = vsel %vm1137, %v9576, -inf
    %v9968 = vsel %vm1138, %v9577, -inf
    %v9969 = vsel %vm1139, %v9578, -inf
    %v9970 = vsel %vm1140, %v9579, -inf
    %v9971 = vsel %vm1141, %v9580, -inf
    %v9972 = vsel %vm1142, %v9581, -inf
    %v9973 = vsel %vm1143, %v9582, -inf
    %v9974 = vsel %vm1144, %v9583, -inf
    %v9975 = vsel %vm1145, %v9584, -inf
    %v9976 = vsel %vm1146, %v9585, -inf
    %v9977 = vsel %vm1147, %v9586, -inf
    %v9978 = vsel %vm1148, %v9587, -inf
    %v9979 = vsel %vm1149, %v9588, -inf
    %v9980 = vsel %vm1150, %v9589, -inf
    %v9981 = vsel %vm1151, %v9590, -inf
    %v9982 = vsel %vm1152, %v9591, -inf
    %v9983 = vsel %vm1153, %v9592, -inf
    %v9984 = vsel %vm1154, %v9593, -inf
    %v9985 = vsel %vm1155, %v9594, -inf
    %v9986 = vsel %vm1156, %v9595, -inf
    %v9987 = vsel %vm1157, %v9596, -inf
    %v9988 = vsel %vm1158, %v9597, -inf
    %v9989 = vsel %vm1159, %v9598, -inf
    %v9990 = vsel %vm1160, %v9599, -inf
    %v9991 = vsel %vm1161, %v9600, -inf
    %v9992 = vsel %vm1162, %v9601, -inf
    %v9993 = vsel %vm1163, %v9602, -inf
    %v9994 = vsel %vm1164, %v9603, -inf
    %v9995 = vsel %vm1165, %v9604, -inf
    %v9996 = vsel %vm1166, %v9605, -inf
    %v9997 = vsel %vm1167, %v9606, -inf
    %v9998 = vsel %vm1168, %v9607, -inf
    %v9999 = vsel %vm1169, %v9608, -inf
    %v10000 = vsel %vm1170, %v9609, -inf
    %v10001 = vsel %vm1171, %v9610, -inf
    %v10002 = vsel %vm1172, %v9611, -inf
    %v10003 = vsel %vm1173, %v9612, -inf
    %v10004 = vsel %vm1174, %v9613, -inf
    %v10005 = vsel %vm1175, %v9614, -inf
    %v10006 = vsel %vm1176, %v9615, -inf
    %v10007 = vsel %vm1177, %v9616, -inf
    %v10008 = vsel %vm1178, %v9617, -inf
    %v10009 = vsel %vm1179, %v9618, -inf
    %v10010 = vsel %vm1180, %v9619, -inf
    %v10011 = vsel %vm1181, %v9620, -inf
    %v10012 = vsel %vm1182, %v9621, -inf
    %v10013 = vsel %vm1183, %v9622, -inf
    %v10014 = vsel %vm1184, %v9623, -inf
    %v10015 = vsel %vm1185, %v9624, -inf
    %v10016 = vsel %vm1186, %v9625, -inf
    %v10017 = vsel %vm1187, %v9626, -inf
    %v10018 = vsel %vm1188, %v9627, -inf
    %v10019 = vsel %vm1189, %v9628, -inf
    %v10020 = vsel %vm1190, %v9629, -inf
    %v10021 = vsel %vm1191, %v9630, -inf
    %v10022 = vsel %vm1192, %v9631, -inf
    %v10023 = vsel %vm1193, %v9632, -inf
    %v10024 = vsel %vm1194, %v9633, -inf
    %v10025 = vsel %vm1195, %v9634, -inf
    %v10026 = vsel %vm1196, %v9635, -inf
    %v10027 = vsel %vm1197, %v9636, -inf
    %v10028 = vsel %vm1198, %v9637, -inf
    %v10029 = vsel %vm1199, %v9638, -inf
    %v10030 = vsel %vm1200, %v9639, -inf
    %v10031 = vsel %vm1201, %v9640, -inf
    %v10032 = vsel %vm1202, %v9641, -inf
    %v10033 = vsel %vm1203, %v9642, -inf
    %v10034 = vsel %vm1204, %v9643, -inf
    %v10035 = vsel %vm1205, %v9644, -inf
    %v10036 = vsel %vm1206, %v9645, -inf
    %v10037 = vsel %vm1207, %v9646, -inf
    %v10038 = vsel %vm1208, %v9647, -inf
    %v10039 = vsel %vm1209, %v9648, -inf
    %v10040 = vsel %vm1210, %v9649, -inf
    %v10041 = vsel %vm1211, %v9650, -inf
    %v10042 = vsel %vm1212, %v9651, -inf
    %v10043 = vsel %vm1213, %v9652, -inf
    %v10044 = vsel %vm1214, %v9653, -inf
    %v10045 = vsel %vm1215, %v9654, -inf
    %v10046 = vsel %vm1216, %v9655, -inf
    %v10047 = vsel %vm1217, %v9656, -inf
    %v10048 = vsel %vm1218, %v9657, -inf
    %v10049 = vsel %vm1219, %v9658, -inf
    %v10050 = vsel %vm1220, %v9659, -inf
    %v10051 = vsel %vm1221, %v9660, -inf
    %v10052 = vsel %vm1222, %v9661, -inf
    %v10053 = vsel %vm1223, %v9662, -inf
    %v10054 = vmax.f32 %v9663, %v9667
    %v10055 = vmax.f32 %v9664, %v9668
    %v10056 = vmax.f32 %v9665, %v9669
    %v10057 = vmax.f32 %v9666, %v9670
    %v10058 = vmax.f32 %v10054, %v9671
    %v10059 = vmax.f32 %v10055, %v9672
    %v10060 = vmax.f32 %v10056, %v9673
    %v10061 = vmax.f32 %v10057, %v9674
    %v10062 = vmax.f32 %v10058, %v9675
    %v10063 = vmax.f32 %v10059, %v9676
    %v10064 = vmax.f32 %v10060, %v9677
    %v10065 = vmax.f32 %v10061, %v9678
    %v10066 = vmax.f32 %v10062, %v9679
    %v10067 = vmax.f32 %v10063, %v9680
    %v10068 = vmax.f32 %v10064, %v9681
    %v10069 = vmax.f32 %v10065, %v9682
    %v10070 = vmax.f32 %v10066, %v9683
    %v10071 = vmax.f32 %v10067, %v9684
    %v10072 = vmax.f32 %v10068, %v9685
    %v10073 = vmax.f32 %v10069, %v9686
    %v10074 = vmax.f32 %v10070, %v9687
    %v10075 = vmax.f32 %v10071, %v9688
    %v10076 = vmax.f32 %v10072, %v9689
    %v10077 = vmax.f32 %v10073, %v9690
    %v10078 = vmax.f32 %v10074, %v9691
    %v10079 = vmax.f32 %v10075, %v9692
    %v10080 = vmax.f32 %v10076, %v9693
    %v10081 = vmax.f32 %v10077, %v9694
    %v10082 = vmax.f32 %v10078, %v9695
    %v10083 = vmax.f32 %v10079, %v9696
    %v10084 = vmax.f32 %v10080, %v9697
    %v10085 = vmax.f32 %v10081, %v9698
    %v10086 = vmax.f32 %v10082, %v9699
    %v10087 = vmax.f32 %v10083, %v9700
    %v10088 = vmax.f32 %v10084, %v9701
    %v10089 = vmax.f32 %v10085, %v9702
    %v10090 = vmax.f32 %v10086, %v9703
    %v10091 = vmax.f32 %v10087, %v9704
    %v10092 = vmax.f32 %v10088, %v9705
    %v10093 = vmax.f32 %v10089, %v9706
    %v10094 = vmax.f32 %v10090, %v9707
    %v10095 = vmax.f32 %v10091, %v9708
    %v10096 = vmax.f32 %v10092, %v9709
    %v10097 = vmax.f32 %v10093, %v9710
    %v10098 = vmax.f32 %v10094, %v9711
    %v10099 = vmax.f32 %v10095, %v9712
    %v10100 = vmax.f32 %v10096, %v9713
    %v10101 = vmax.f32 %v10097, %v9714
    %v10102 = vmax.f32 %v10098, %v9715
    %v10103 = vmax.f32 %v10099, %v9716
    %v10104 = vmax.f32 %v10100, %v9717
    %v10105 = vmax.f32 %v10101, %v9718
    %v10106 = vmax.f32 %v10102, %v9719
    %v10107 = vmax.f32 %v10103, %v9720
    %v10108 = vmax.f32 %v10104, %v9721
    %v10109 = vmax.f32 %v10105, %v9722
    %v10110 = vmax.f32 %v10106, %v9723
    %v10111 = vmax.f32 %v10107, %v9724
    %v10112 = vmax.f32 %v10108, %v9725
    %v10113 = vmax.f32 %v10109, %v9726
    %v10114 = vmax.f32 %v10110, %v9727
    %v10115 = vmax.f32 %v10111, %v9728
    %v10116 = vmax.f32 %v10112, %v9729
    %v10117 = vmax.f32 %v10113, %v9730
    %v10118 = vmax.f32 %v10114, %v9731
    %v10119 = vmax.f32 %v10115, %v9732
    %v10120 = vmax.f32 %v10116, %v9733
    %v10121 = vmax.f32 %v10117, %v9734
    %v10122 = vmax.f32 %v10118, %v9735
    %v10123 = vmax.f32 %v10119, %v9736
    %v10124 = vmax.f32 %v10120, %v9737
    %v10125 = vmax.f32 %v10121, %v9738
    %v10126 = vmax.f32 %v10122, %v9739
    %v10127 = vmax.f32 %v10123, %v9740
    %v10128 = vmax.f32 %v10124, %v9741
    %v10129 = vmax.f32 %v10125, %v9742
    %v10130 = vmax.f32 %v10126, %v9743
    %v10131 = vmax.f32 %v10127, %v9744
    %v10132 = vmax.f32 %v10128, %v9745
    %v10133 = vmax.f32 %v10129, %v9746
    %v10134 = vmax.f32 %v10130, %v9747
    %v10135 = vmax.f32 %v10131, %v9748
    %v10136 = vmax.f32 %v10132, %v9749
    %v10137 = vmax.f32 %v10133, %v9750
    %v10138 = vmax.f32 %v10134, %v9751
    %v10139 = vmax.f32 %v10135, %v9752
    %v10140 = vmax.f32 %v10136, %v9753
    %v10141 = vmax.f32 %v10137, %v9754
    %v10142 = vmax.f32 %v10138, %v9755
    %v10143 = vmax.f32 %v10139, %v9756
    %v10144 = vmax.f32 %v10140, %v9757
    %v10145 = vmax.f32 %v10141, %v9758
    %v10146 = vmax.f32 %v10142, %v9759
    %v10147 = vmax.f32 %v10143, %v9760
    %v10148 = vmax.f32 %v10144, %v9761
    %v10149 = vmax.f32 %v10145, %v9762
    %v10150 = vmax.f32 %v10146, %v9763
    %v10151 = vmax.f32 %v10147, %v9764
    %v10152 = vmax.f32 %v10148, %v9765
    %v10153 = vmax.f32 %v10149, %v9766
    %v10154 = vmax.f32 %v10150, %v9767
    %v10155 = vmax.f32 %v10151, %v9768
    %v10156 = vmax.f32 %v10152, %v9769
    %v10157 = vmax.f32 %v10153, %v9770
    %v10158 = vmax.f32 %v10154, %v9771
    %v10159 = vmax.f32 %v10155, %v9772
    %v10160 = vmax.f32 %v10156, %v9773
    %v10161 = vmax.f32 %v10157, %v9774
    %v10162 = vmax.f32 %v10158, %v9775
    %v10163 = vmax.f32 %v10159, %v9776
    %v10164 = vmax.f32 %v10160, %v9777
    %v10165 = vmax.f32 %v10161, %v9778
    %v10166 = vmax.f32 %v10162, %v9779
    %v10167 = vmax.f32 %v10163, %v9780
    %v10168 = vmax.f32 %v10164, %v9781
    %v10169 = vmax.f32 %v10165, %v9782
    %v10170 = vmax.f32 %v10166, %v9783
    %v10171 = vmax.f32 %v10167, %v9784
    %v10172 = vmax.f32 %v10168, %v9785
    %v10173 = vmax.f32 %v10169, %v9786
    %v10174 = vmax.f32 %v10170, %v9787
    %v10175 = vmax.f32 %v10171, %v9788
    %v10176 = vmax.f32 %v10172, %v9789
    %v10177 = vmax.f32 %v10173, %v9790
    %v10178 = vmax.f32 %v10174, %v9791
    %v10179 = vmax.f32 %v10175, %v9792
    %v10180 = vmax.f32 %v10176, %v9793
    %v10181 = vmax.f32 %v10177, %v9794
    %v10182 = vmax.f32 %v10178, %v9795
    %v10183 = vmax.f32 %v10179, %v9796
    %v10184 = vmax.f32 %v10180, %v9797
    %v10185 = vmax.f32 %v10181, %v9798
    %v10186 = vmax.f32 %v10182, %v9799
    %v10187 = vmax.f32 %v10183, %v9800
    %v10188 = vmax.f32 %v10184, %v9801
    %v10189 = vmax.f32 %v10185, %v9802
    %v10190 = vmax.f32 %v10186, %v9803
    %v10191 = vmax.f32 %v10187, %v9804
    %v10192 = vmax.f32 %v10188, %v9805
    %v10193 = vmax.f32 %v10189, %v9806
    %v10194 = vmax.f32 %v10190, %v9807
    %v10195 = vmax.f32 %v10191, %v9808
    %v10196 = vmax.f32 %v10192, %v9809
    %v10197 = vmax.f32 %v10193, %v9810
    %v10198 = vmax.f32 %v10194, %v9811
    %v10199 = vmax.f32 %v10195, %v9812
    %v10200 = vmax.f32 %v10196, %v9813
    %v10201 = vmax.f32 %v10197, %v9814
    %v10202 = vmax.f32 %v10198, %v9815
    %v10203 = vmax.f32 %v10199, %v9816
    %v10204 = vmax.f32 %v10200, %v9817
    %v10205 = vmax.f32 %v10201, %v9818
    %v10206 = vmax.f32 %v10202, %v9819
    %v10207 = vmax.f32 %v10203, %v9820
    %v10208 = vmax.f32 %v10204, %v9821
    %v10209 = vmax.f32 %v10205, %v9822
    %v10210 = vmax.f32 %v10206, %v9823
    %v10211 = vmax.f32 %v10207, %v9824
    %v10212 = vmax.f32 %v10208, %v9825
    %v10213 = vmax.f32 %v10209, %v9826
    %v10214 = vmax.f32 %v10210, %v9827
    %v10215 = vmax.f32 %v10211, %v9828
    %v10216 = vmax.f32 %v10212, %v9829
    %v10217 = vmax.f32 %v10213, %v9830
    %v10218 = vmax.f32 %v10214, %v9831
    %v10219 = vmax.f32 %v10215, %v9832
    %v10220 = vmax.f32 %v10216, %v9833
    %v10221 = vmax.f32 %v10217, %v9834
    %v10222 = vmax.f32 %v10218, %v9835
    %v10223 = vmax.f32 %v10219, %v9836
    %v10224 = vmax.f32 %v10220, %v9837
    %v10225 = vmax.f32 %v10221, %v9838
    %v10226 = vmax.f32 %v10222, %v9839
    %v10227 = vmax.f32 %v10223, %v9840
    %v10228 = vmax.f32 %v10224, %v9841
    %v10229 = vmax.f32 %v10225, %v9842
    %v10230 = vmax.f32 %v10226, %v9843
    %v10231 = vmax.f32 %v10227, %v9844
    %v10232 = vmax.f32 %v10228, %v9845
    %v10233 = vmax.f32 %v10229, %v9846
    %v10234 = vmax.f32 %v10230, %v9847
    %v10235 = vmax.f32 %v10231, %v9848
    %v10236 = vmax.f32 %v10232, %v9849
    %v10237 = vmax.f32 %v10233, %v9850
    %v10238 = vmax.f32 %v10234, %v9851
    %v10239 = vmax.f32 %v10235, %v9852
    %v10240 = vmax.f32 %v10236, %v9853
    %v10241 = vmax.f32 %v10237, %v9854
    %v10242 = vmax.f32 %v10238, %v9855
    %v10243 = vmax.f32 %v10239, %v9856
    %v10244 = vmax.f32 %v10240, %v9857
    %v10245 = vmax.f32 %v10241, %v9858
    %v10246 = vmax.f32 %v10242, %v9859
    %v10247 = vmax.f32 %v10243, %v9860
    %v10248 = vmax.f32 %v10244, %v9861
    %v10249 = vmax.f32 %v10245, %v9862
    %v10250 = vmax.f32 %v10246, %v9863
    %v10251 = vmax.f32 %v10247, %v9864
    %v10252 = vmax.f32 %v10248, %v9865
    %v10253 = vmax.f32 %v10249, %v9866
    %v10254 = vmax.f32 %v10250, %v9867
    %v10255 = vmax.f32 %v10251, %v9868
    %v10256 = vmax.f32 %v10252, %v9869
    %v10257 = vmax.f32 %v10253, %v9870
    %v10258 = vmax.f32 %v10254, %v9871
    %v10259 = vmax.f32 %v10255, %v9872
    %v10260 = vmax.f32 %v10256, %v9873
    %v10261 = vmax.f32 %v10257, %v9874
    %v10262 = vmax.f32 %v10258, %v9875
    %v10263 = vmax.f32 %v10259, %v9876
    %v10264 = vmax.f32 %v10260, %v9877
    %v10265 = vmax.f32 %v10261, %v9878
    %v10266 = vmax.f32 %v10262, %v9879
    %v10267 = vmax.f32 %v10263, %v9880
    %v10268 = vmax.f32 %v10264, %v9881
    %v10269 = vmax.f32 %v10265, %v9882
    %v10270 = vmax.f32 %v10266, %v9883
    %v10271 = vmax.f32 %v10267, %v9884
    %v10272 = vmax.f32 %v10268, %v9885
    %v10273 = vmax.f32 %v10269, %v9886
    %v10274 = vmax.f32 %v10270, %v9887
    %v10275 = vmax.f32 %v10271, %v9888
    %v10276 = vmax.f32 %v10272, %v9889
    %v10277 = vmax.f32 %v10273, %v9890
    %v10278 = vmax.f32 %v10274, %v9891
    %v10279 = vmax.f32 %v10275, %v9892
    %v10280 = vmax.f32 %v10276, %v9893
    %v10281 = vmax.f32 %v10277, %v9894
    %v10282 = vmax.f32 %v10278, %v9895
    %v10283 = vmax.f32 %v10279, %v9896
    %v10284 = vmax.f32 %v10280, %v9897
    %v10285 = vmax.f32 %v10281, %v9898
    %v10286 = vmax.f32 %v10282, %v9899
    %v10287 = vmax.f32 %v10283, %v9900
    %v10288 = vmax.f32 %v10284, %v9901
    %v10289 = vmax.f32 %v10285, %v9902
    %v10290 = vmax.f32 %v10286, %v9903
    %v10291 = vmax.f32 %v10287, %v9904
    %v10292 = vmax.f32 %v10288, %v9905
    %v10293 = vmax.f32 %v10289, %v9906
    %v10294 = vmax.f32 %v10290, %v9907
    %v10295 = vmax.f32 %v10291, %v9908
    %v10296 = vmax.f32 %v10292, %v9909
    %v10297 = vmax.f32 %v10293, %v9910
    %v10298 = vmax.f32 %v10294, %v9911
    %v10299 = vmax.f32 %v10295, %v9912
    %v10300 = vmax.f32 %v10296, %v9913
    %v10301 = vmax.f32 %v10297, %v9914
    %v10302 = vmax.f32 %v10298, %v9915
    %v10303 = vmax.f32 %v10299, %v9916
    %v10304 = vmax.f32 %v10300, %v9917
    %v10305 = vmax.f32 %v10301, %v9918
    %v10306 = vmax.f32 %v10302, %v9919
    %v10307 = vmax.f32 %v10303, %v9920
    %v10308 = vmax.f32 %v10304, %v9921
    %v10309 = vmax.f32 %v10305, %v9922
    %v10310 = vmax.f32 %v10306, %v9923
    %v10311 = vmax.f32 %v10307, %v9924
    %v10312 = vmax.f32 %v10308, %v9925
    %v10313 = vmax.f32 %v10309, %v9926
    %v10314 = vmax.f32 %v10310, %v9927
    %v10315 = vmax.f32 %v10311, %v9928
    %v10316 = vmax.f32 %v10312, %v9929
    %v10317 = vmax.f32 %v10313, %v9930
    %v10318 = vmax.f32 %v10314, %v9931
    %v10319 = vmax.f32 %v10315, %v9932
    %v10320 = vmax.f32 %v10316, %v9933
    %v10321 = vmax.f32 %v10317, %v9934
    %v10322 = vmax.f32 %v10318, %v9935
    %v10323 = vmax.f32 %v10319, %v9936
    %v10324 = vmax.f32 %v10320, %v9937
    %v10325 = vmax.f32 %v10321, %v9938
    %v10326 = vmax.f32 %v10322, %v9939
    %v10327 = vmax.f32 %v10323, %v9940
    %v10328 = vmax.f32 %v10324, %v9941
    %v10329 = vmax.f32 %v10325, %v9942
    %v10330 = vmax.f32 %v10326, %v9943
    %v10331 = vmax.f32 %v10327, %v9944
    %v10332 = vmax.f32 %v10328, %v9945
    %v10333 = vmax.f32 %v10329, %v9946
    %v10334 = vmax.f32 %v10330, %v9947
    %v10335 = vmax.f32 %v10331, %v9948
    %v10336 = vmax.f32 %v10332, %v9949
    %v10337 = vmax.f32 %v10333, %v9950
    %v10338 = vmax.f32 %v10334, %v9951
    %v10339 = vmax.f32 %v10335, %v9952
    %v10340 = vmax.f32 %v10336, %v9953
    %v10341 = vmax.f32 %v10337, %v9954
    %v10342 = vmax.f32 %v10338, %v9955
    %v10343 = vmax.f32 %v10339, %v9956
    %v10344 = vmax.f32 %v10340, %v9957
    %v10345 = vmax.f32 %v10341, %v9958
    %v10346 = vmax.f32 %v10342, %v9959
    %v10347 = vmax.f32 %v10343, %v9960
    %v10348 = vmax.f32 %v10344, %v9961
    %v10349 = vmax.f32 %v10345, %v9962
    %v10350 = vmax.f32 %v10346, %v9963
    %v10351 = vmax.f32 %v10347, %v9964
    %v10352 = vmax.f32 %v10348, %v9965
    %v10353 = vmax.f32 %v10349, %v9966
    %v10354 = vmax.f32 %v10350, %v9967
    %v10355 = vmax.f32 %v10351, %v9968
    %v10356 = vmax.f32 %v10352, %v9969
    %v10357 = vmax.f32 %v10353, %v9970
    %v10358 = vmax.f32 %v10354, %v9971
    %v10359 = vmax.f32 %v10355, %v9972
    %v10360 = vmax.f32 %v10356, %v9973
    %v10361 = vmax.f32 %v10357, %v9974
    %v10362 = vmax.f32 %v10358, %v9975
    %v10363 = vmax.f32 %v10359, %v9976
    %v10364 = vmax.f32 %v10360, %v9977
    %v10365 = vmax.f32 %v10361, %v9978
    %v10366 = vmax.f32 %v10362, %v9979
    %v10367 = vmax.f32 %v10363, %v9980
    %v10368 = vmax.f32 %v10364, %v9981
    %v10369 = vmax.f32 %v10365, %v9982
    %v10370 = vmax.f32 %v10366, %v9983
    %v10371 = vmax.f32 %v10367, %v9984
    %v10372 = vmax.f32 %v10368, %v9985
    %v10373 = vmax.f32 %v10369, %v9986
    %v10374 = vmax.f32 %v10370, %v9987
    %v10375 = vmax.f32 %v10371, %v9988
    %v10376 = vmax.f32 %v10372, %v9989
    %v10377 = vmax.f32 %v10373, %v9990
    %v10378 = vmax.f32 %v10374, %v9991
    %v10379 = vmax.f32 %v10375, %v9992
    %v10380 = vmax.f32 %v10376, %v9993
    %v10381 = vmax.f32 %v10377, %v9994
    %v10382 = vmax.f32 %v10378, %v9995
    %v10383 = vmax.f32 %v10379, %v9996
    %v10384 = vmax.f32 %v10380, %v9997
    %v10385 = vmax.f32 %v10381, %v9998
    %v10386 = vmax.f32 %v10382, %v9999
    %v10387 = vmax.f32 %v10383, %v10000
    %v10388 = vmax.f32 %v10384, %v10001
    %v10389 = vmax.f32 %v10385, %v10002
    %v10390 = vmax.f32 %v10386, %v10003
    %v10391 = vmax.f32 %v10387, %v10004
    %v10392 = vmax.f32 %v10388, %v10005
    %v10393 = vmax.f32 %v10389, %v10006
    %v10394 = vmax.f32 %v10390, %v10007
    %v10395 = vmax.f32 %v10391, %v10008
    %v10396 = vmax.f32 %v10392, %v10009
    %v10397 = vmax.f32 %v10393, %v10010
    %v10398 = vmax.f32 %v10394, %v10011
    %v10399 = vmax.f32 %v10395, %v10012
    %v10400 = vmax.f32 %v10396, %v10013
    %v10401 = vmax.f32 %v10397, %v10014
    %v10402 = vmax.f32 %v10398, %v10015
    %v10403 = vmax.f32 %v10399, %v10016
    %v10404 = vmax.f32 %v10400, %v10017
    %v10405 = vmax.f32 %v10401, %v10018
    %v10406 = vmax.f32 %v10402, %v10019
    %v10407 = vmax.f32 %v10403, %v10020
    %v10408 = vmax.f32 %v10404, %v10021
    %v10409 = vmax.f32 %v10405, %v10022
    %v10410 = vmax.f32 %v10406, %v10023
    %v10411 = vmax.f32 %v10407, %v10024
    %v10412 = vmax.f32 %v10408, %v10025
    %v10413 = vmax.f32 %v10409, %v10026
    %v10414 = vmax.f32 %v10410, %v10027
    %v10415 = vmax.f32 %v10411, %v10028
    %v10416 = vmax.f32 %v10412, %v10029
    %v10417 = vmax.f32 %v10413, %v10030
    %v10418 = vmax.f32 %v10414, %v10031
    %v10419 = vmax.f32 %v10415, %v10032
    %v10420 = vmax.f32 %v10416, %v10033
    %v10421 = vmax.f32 %v10417, %v10034
    %v10422 = vmax.f32 %v10418, %v10035
    %v10423 = vmax.f32 %v10419, %v10036
    %v10424 = vmax.f32 %v10420, %v10037
    %v10425 = vmax.f32 %v10421, %v10038
    %v10426 = vmax.f32 %v10422, %v10039
    %v10427 = vmax.f32 %v10423, %v10040
    %v10428 = vmax.f32 %v10424, %v10041
    %v10429 = vmax.f32 %v10425, %v10042
    %v10430 = vmax.f32 %v10426, %v10043
    %v10431 = vmax.f32 %v10427, %v10044
    %v10432 = vmax.f32 %v10428, %v10045
    %v10433 = vmax.f32 %v10429, %v10046
    %v10434 = vmax.f32 %v10430, %v10047
    %v10435 = vmax.f32 %v10431, %v10048
    %v10436 = vmax.f32 %v10432, %v10049
    %v10437 = vmax.f32 %v10433, %v10050
    %v10438 = vmax.f32 %v10434, %v10051
    %v10439 = vmax.f32 %v10435, %v10052
    %v10440 = vsel %vm2395, %v10053, -inf
    %v10441 = vmax.f32 %v10436, %v10440
    %v10442 = vmax.f32 %v10438, %v10439
    %v10443 = vmax.f32 %v10441, %v10437
    %v10444 = vmax.f32 %v10442, %v10443
    %10445 = vmax.xlane.f32.xlu0 %v10444
    %v10446 = vpop.xlane.xlu0 %10445
    %v10447 = vsub.f32 %v9663, %v10446
    %v10448 = vsub.f32 %v9664, %v10446
    %v10449 = vsub.f32 %v9665, %v10446
    %v10450 = vsub.f32 %v9666, %v10446
    %v10451 = vsub.f32 %v9667, %v10446
    %v10452 = vsub.f32 %v9668, %v10446
    %v10453 = vsub.f32 %v9669, %v10446
    %v10454 = vsub.f32 %v9670, %v10446
    %v10455 = vsub.f32 %v9671, %v10446
    %v10456 = vsub.f32 %v9672, %v10446
    %v10457 = vsub.f32 %v9673, %v10446
    %v10458 = vsub.f32 %v9674, %v10446
    %v10459 = vsub.f32 %v9675, %v10446
    %v10460 = vsub.f32 %v9676, %v10446
    %v10461 = vsub.f32 %v9677, %v10446
    %v10462 = vsub.f32 %v9678, %v10446
    %v10463 = vsub.f32 %v9679, %v10446
    %v10464 = vsub.f32 %v9680, %v10446
    %v10465 = vsub.f32 %v9681, %v10446
    %v10466 = vsub.f32 %v9682, %v10446
    %v10467 = vsub.f32 %v9683, %v10446
    %v10468 = vsub.f32 %v9684, %v10446
    %v10469 = vsub.f32 %v9685, %v10446
    %v10470 = vsub.f32 %v9686, %v10446
    %v10471 = vsub.f32 %v9687, %v10446
    %v10472 = vsub.f32 %v9688, %v10446
    %v10473 = vsub.f32 %v9689, %v10446
    %v10474 = vsub.f32 %v9690, %v10446
    %v10475 = vsub.f32 %v9691, %v10446
    %v10476 = vsub.f32 %v9692, %v10446
    %v10477 = vsub.f32 %v9693, %v10446
    %v10478 = vsub.f32 %v9694, %v10446
    %v10479 = vsub.f32 %v9695, %v10446
    %v10480 = vsub.f32 %v9696, %v10446
    %v10481 = vsub.f32 %v9697, %v10446
    %v10482 = vsub.f32 %v9698, %v10446
    %v10483 = vsub.f32 %v9699, %v10446
    %v10484 = vsub.f32 %v9700, %v10446
    %v10485 = vsub.f32 %v9701, %v10446
    %v10486 = vsub.f32 %v9702, %v10446
    %v10487 = vsub.f32 %v9703, %v10446
    %v10488 = vsub.f32 %v9704, %v10446
    %v10489 = vsub.f32 %v9705, %v10446
    %v10490 = vsub.f32 %v9706, %v10446
    %v10491 = vsub.f32 %v9707, %v10446
    %v10492 = vsub.f32 %v9708, %v10446
    %v10493 = vsub.f32 %v9709, %v10446
    %v10494 = vsub.f32 %v9710, %v10446
    %v10495 = vsub.f32 %v9711, %v10446
    %v10496 = vsub.f32 %v9712, %v10446
    %v10497 = vsub.f32 %v9713, %v10446
    %v10498 = vsub.f32 %v9714, %v10446
    %v10499 = vsub.f32 %v9715, %v10446
    %v10500 = vsub.f32 %v9716, %v10446
    %v10501 = vsub.f32 %v9717, %v10446
    %v10502 = vsub.f32 %v9718, %v10446
    %v10503 = vsub.f32 %v9719, %v10446
    %v10504 = vsub.f32 %v9720, %v10446
    %v10505 = vsub.f32 %v9721, %v10446
    %v10506 = vsub.f32 %v9722, %v10446
    %v10507 = vsub.f32 %v9723, %v10446
    %v10508 = vsub.f32 %v9724, %v10446
    %v10509 = vsub.f32 %v9725, %v10446
    %v10510 = vsub.f32 %v9726, %v10446
    %v10511 = vsub.f32 %v9727, %v10446
    %v10512 = vsub.f32 %v9728, %v10446
    %v10513 = vsub.f32 %v9729, %v10446
    %v10514 = vsub.f32 %v9730, %v10446
    %v10515 = vsub.f32 %v9731, %v10446
    %v10516 = vsub.f32 %v9732, %v10446
    %v10517 = vsub.f32 %v9733, %v10446
    %v10518 = vsub.f32 %v9734, %v10446
    %v10519 = vsub.f32 %v9735, %v10446
    %v10520 = vsub.f32 %v9736, %v10446
    %v10521 = vsub.f32 %v9737, %v10446
    %v10522 = vsub.f32 %v9738, %v10446
    %v10523 = vsub.f32 %v9739, %v10446
    %v10524 = vsub.f32 %v9740, %v10446
    %v10525 = vsub.f32 %v9741, %v10446
    %v10526 = vsub.f32 %v9742, %v10446
    %v10527 = vsub.f32 %v9743, %v10446
    %v10528 = vsub.f32 %v9744, %v10446
    %v10529 = vsub.f32 %v9745, %v10446
    %v10530 = vsub.f32 %v9746, %v10446
    %v10531 = vsub.f32 %v9747, %v10446
    %v10532 = vsub.f32 %v9748, %v10446
    %v10533 = vsub.f32 %v9749, %v10446
    %v10534 = vsub.f32 %v9750, %v10446
    %v10535 = vsub.f32 %v9751, %v10446
    %v10536 = vsub.f32 %v9752, %v10446
    %v10537 = vsub.f32 %v9753, %v10446
    %v10538 = vsub.f32 %v9754, %v10446
    %v10539 = vsub.f32 %v9755, %v10446
    %v10540 = vsub.f32 %v9756, %v10446
    %v10541 = vsub.f32 %v9757, %v10446
    %v10542 = vsub.f32 %v9758, %v10446
    %v10543 = vsub.f32 %v9759, %v10446
    %v10544 = vsub.f32 %v9760, %v10446
    %v10545 = vsub.f32 %v9761, %v10446
    %v10546 = vsub.f32 %v9762, %v10446
    %v10547 = vsub.f32 %v9763, %v10446
    %v10548 = vsub.f32 %v9764, %v10446
    %v10549 = vsub.f32 %v9765, %v10446
    %v10550 = vsub.f32 %v9766, %v10446
    %v10551 = vsub.f32 %v9767, %v10446
    %v10552 = vsub.f32 %v9768, %v10446
    %v10553 = vsub.f32 %v9769, %v10446
    %v10554 = vsub.f32 %v9770, %v10446
    %v10555 = vsub.f32 %v9771, %v10446
    %v10556 = vsub.f32 %v9772, %v10446
    %v10557 = vsub.f32 %v9773, %v10446
    %v10558 = vsub.f32 %v9774, %v10446
    %v10559 = vsub.f32 %v9775, %v10446
    %v10560 = vsub.f32 %v9776, %v10446
    %v10561 = vsub.f32 %v9777, %v10446
    %v10562 = vsub.f32 %v9778, %v10446
    %v10563 = vsub.f32 %v9779, %v10446
    %v10564 = vsub.f32 %v9780, %v10446
    %v10565 = vsub.f32 %v9781, %v10446
    %v10566 = vsub.f32 %v9782, %v10446
    %v10567 = vsub.f32 %v9783, %v10446
    %v10568 = vsub.f32 %v9784, %v10446
    %v10569 = vsub.f32 %v9785, %v10446
    %v10570 = vsub.f32 %v9786, %v10446
    %v10571 = vsub.f32 %v9787, %v10446
    %v10572 = vsub.f32 %v9788, %v10446
    %v10573 = vsub.f32 %v9789, %v10446
    %v10574 = vsub.f32 %v9790, %v10446
    %v10575 = vsub.f32 %v9791, %v10446
    %v10576 = vsub.f32 %v9792, %v10446
    %v10577 = vsub.f32 %v9793, %v10446
    %v10578 = vsub.f32 %v9794, %v10446
    %v10579 = vsub.f32 %v9795, %v10446
    %v10580 = vsub.f32 %v9796, %v10446
    %v10581 = vsub.f32 %v9797, %v10446
    %v10582 = vsub.f32 %v9798, %v10446
    %v10583 = vsub.f32 %v9799, %v10446
    %v10584 = vsub.f32 %v9800, %v10446
    %v10585 = vsub.f32 %v9801, %v10446
    %v10586 = vsub.f32 %v9802, %v10446
    %v10587 = vsub.f32 %v9803, %v10446
    %v10588 = vsub.f32 %v9804, %v10446
    %v10589 = vsub.f32 %v9805, %v10446
    %v10590 = vsub.f32 %v9806, %v10446
    %v10591 = vsub.f32 %v9807, %v10446
    %v10592 = vsub.f32 %v9808, %v10446
    %v10593 = vsub.f32 %v9809, %v10446
    %v10594 = vsub.f32 %v9810, %v10446
    %v10595 = vsub.f32 %v9811, %v10446
    %v10596 = vsub.f32 %v9812, %v10446
    %v10597 = vsub.f32 %v9813, %v10446
    %v10598 = vsub.f32 %v9814, %v10446
    %v10599 = vsub.f32 %v9815, %v10446
    %v10600 = vsub.f32 %v9816, %v10446
    %v10601 = vsub.f32 %v9817, %v10446
    %v10602 = vsub.f32 %v9818, %v10446
    %v10603 = vsub.f32 %v9819, %v10446
    %v10604 = vsub.f32 %v9820, %v10446
    %v10605 = vsub.f32 %v9821, %v10446
    %v10606 = vsub.f32 %v9822, %v10446
    %v10607 = vsub.f32 %v9823, %v10446
    %v10608 = vsub.f32 %v9824, %v10446
    %v10609 = vsub.f32 %v9825, %v10446
    %v10610 = vsub.f32 %v9826, %v10446
    %v10611 = vsub.f32 %v9827, %v10446
    %v10612 = vsub.f32 %v9828, %v10446
    %v10613 = vsub.f32 %v9829, %v10446
    %v10614 = vsub.f32 %v9830, %v10446
    %v10615 = vsub.f32 %v9831, %v10446
    %v10616 = vsub.f32 %v9832, %v10446
    %v10617 = vsub.f32 %v9833, %v10446
    %v10618 = vsub.f32 %v9834, %v10446
    %v10619 = vsub.f32 %v9835, %v10446
    %v10620 = vsub.f32 %v9836, %v10446
    %v10621 = vsub.f32 %v9837, %v10446
    %v10622 = vsub.f32 %v9838, %v10446
    %v10623 = vsub.f32 %v9839, %v10446
    %v10624 = vsub.f32 %v9840, %v10446
    %v10625 = vsub.f32 %v9841, %v10446
    %v10626 = vsub.f32 %v9842, %v10446
    %v10627 = vsub.f32 %v9843, %v10446
    %v10628 = vsub.f32 %v9844, %v10446
    %v10629 = vsub.f32 %v9845, %v10446
    %v10630 = vsub.f32 %v9846, %v10446
    %v10631 = vsub.f32 %v9847, %v10446
    %v10632 = vsub.f32 %v9848, %v10446
    %v10633 = vsub.f32 %v9849, %v10446
    %v10634 = vsub.f32 %v9850, %v10446
    %v10635 = vsub.f32 %v9851, %v10446
    %v10636 = vsub.f32 %v9852, %v10446
    %v10637 = vsub.f32 %v9853, %v10446
    %v10638 = vsub.f32 %v9854, %v10446
    %v10639 = vsub.f32 %v9855, %v10446
    %v10640 = vsub.f32 %v9856, %v10446
    %v10641 = vsub.f32 %v9857, %v10446
    %v10642 = vsub.f32 %v9858, %v10446
    %v10643 = vsub.f32 %v9859, %v10446
    %v10644 = vsub.f32 %v9860, %v10446
    %v10645 = vsub.f32 %v9861, %v10446
    %v10646 = vsub.f32 %v9862, %v10446
    %v10647 = vsub.f32 %v9863, %v10446
    %v10648 = vsub.f32 %v9864, %v10446
    %v10649 = vsub.f32 %v9865, %v10446
    %v10650 = vsub.f32 %v9866, %v10446
    %v10651 = vsub.f32 %v9867, %v10446
    %v10652 = vsub.f32 %v9868, %v10446
    %v10653 = vsub.f32 %v9869, %v10446
    %v10654 = vsub.f32 %v9870, %v10446
    %v10655 = vsub.f32 %v9871, %v10446
    %v10656 = vsub.f32 %v9872, %v10446
    %v10657 = vsub.f32 %v9873, %v10446
    %v10658 = vsub.f32 %v9874, %v10446
    %v10659 = vsub.f32 %v9875, %v10446
    %v10660 = vsub.f32 %v9876, %v10446
    %v10661 = vsub.f32 %v9877, %v10446
    %v10662 = vsub.f32 %v9878, %v10446
    %v10663 = vsub.f32 %v9879, %v10446
    %v10664 = vsub.f32 %v9880, %v10446
    %v10665 = vsub.f32 %v9881, %v10446
    %v10666 = vsub.f32 %v9882, %v10446
    %v10667 = vsub.f32 %v9883, %v10446
    %v10668 = vsub.f32 %v9884, %v10446
    %v10669 = vsub.f32 %v9885, %v10446
    %v10670 = vsub.f32 %v9886, %v10446
    %v10671 = vsub.f32 %v9887, %v10446
    %v10672 = vsub.f32 %v9888, %v10446
    %v10673 = vsub.f32 %v9889, %v10446
    %v10674 = vsub.f32 %v9890, %v10446
    %v10675 = vsub.f32 %v9891, %v10446
    %v10676 = vsub.f32 %v9892, %v10446
    %v10677 = vsub.f32 %v9893, %v10446
    %v10678 = vsub.f32 %v9894, %v10446
    %v10679 = vsub.f32 %v9895, %v10446
    %v10680 = vsub.f32 %v9896, %v10446
    %v10681 = vsub.f32 %v9897, %v10446
    %v10682 = vsub.f32 %v9898, %v10446
    %v10683 = vsub.f32 %v9899, %v10446
    %v10684 = vsub.f32 %v9900, %v10446
    %v10685 = vsub.f32 %v9901, %v10446
    %v10686 = vsub.f32 %v9902, %v10446
    %v10687 = vsub.f32 %v9903, %v10446
    %v10688 = vsub.f32 %v9904, %v10446
    %v10689 = vsub.f32 %v9905, %v10446
    %v10690 = vsub.f32 %v9906, %v10446
    %v10691 = vsub.f32 %v9907, %v10446
    %v10692 = vsub.f32 %v9908, %v10446
    %v10693 = vsub.f32 %v9909, %v10446
    %v10694 = vsub.f32 %v9910, %v10446
    %v10695 = vsub.f32 %v9911, %v10446
    %v10696 = vsub.f32 %v9912, %v10446
    %v10697 = vsub.f32 %v9913, %v10446
    %v10698 = vsub.f32 %v9914, %v10446
    %v10699 = vsub.f32 %v9915, %v10446
    %v10700 = vsub.f32 %v9916, %v10446
    %v10701 = vsub.f32 %v9917, %v10446
    %v10702 = vsub.f32 %v9918, %v10446
    %v10703 = vsub.f32 %v9919, %v10446
    %v10704 = vsub.f32 %v9920, %v10446
    %v10705 = vsub.f32 %v9921, %v10446
    %v10706 = vsub.f32 %v9922, %v10446
    %v10707 = vsub.f32 %v9923, %v10446
    %v10708 = vsub.f32 %v9924, %v10446
    %v10709 = vsub.f32 %v9925, %v10446
    %v10710 = vsub.f32 %v9926, %v10446
    %v10711 = vsub.f32 %v9927, %v10446
    %v10712 = vsub.f32 %v9928, %v10446
    %v10713 = vsub.f32 %v9929, %v10446
    %v10714 = vsub.f32 %v9930, %v10446
    %v10715 = vsub.f32 %v9931, %v10446
    %v10716 = vsub.f32 %v9932, %v10446
    %v10717 = vsub.f32 %v9933, %v10446
    %v10718 = vsub.f32 %v9934, %v10446
    %v10719 = vsub.f32 %v9935, %v10446
    %v10720 = vsub.f32 %v9936, %v10446
    %v10721 = vsub.f32 %v9937, %v10446
    %v10722 = vsub.f32 %v9938, %v10446
    %v10723 = vsub.f32 %v9939, %v10446
    %v10724 = vsub.f32 %v9940, %v10446
    %v10725 = vsub.f32 %v9941, %v10446
    %v10726 = vsub.f32 %v9942, %v10446
    %v10727 = vsub.f32 %v9943, %v10446
    %v10728 = vsub.f32 %v9944, %v10446
    %v10729 = vsub.f32 %v9945, %v10446
    %v10730 = vsub.f32 %v9946, %v10446
    %v10731 = vsub.f32 %v9947, %v10446
    %v10732 = vsub.f32 %v9948, %v10446
    %v10733 = vsub.f32 %v9949, %v10446
    %v10734 = vsub.f32 %v9950, %v10446
    %v10735 = vsub.f32 %v9951, %v10446
    %v10736 = vsub.f32 %v9952, %v10446
    %v10737 = vsub.f32 %v9953, %v10446
    %v10738 = vsub.f32 %v9954, %v10446
    %v10739 = vsub.f32 %v9955, %v10446
    %v10740 = vsub.f32 %v9956, %v10446
    %v10741 = vsub.f32 %v9957, %v10446
    %v10742 = vsub.f32 %v9958, %v10446
    %v10743 = vsub.f32 %v9959, %v10446
    %v10744 = vsub.f32 %v9960, %v10446
    %v10745 = vsub.f32 %v9961, %v10446
    %v10746 = vsub.f32 %v9962, %v10446
    %v10747 = vsub.f32 %v9963, %v10446
    %v10748 = vsub.f32 %v9964, %v10446
    %v10749 = vsub.f32 %v9965, %v10446
    %v10750 = vsub.f32 %v9966, %v10446
    %v10751 = vsub.f32 %v9967, %v10446
    %v10752 = vsub.f32 %v9968, %v10446
    %v10753 = vsub.f32 %v9969, %v10446
    %v10754 = vsub.f32 %v9970, %v10446
    %v10755 = vsub.f32 %v9971, %v10446
    %v10756 = vsub.f32 %v9972, %v10446
    %v10757 = vsub.f32 %v9973, %v10446
    %v10758 = vsub.f32 %v9974, %v10446
    %v10759 = vsub.f32 %v9975, %v10446
    %v10760 = vsub.f32 %v9976, %v10446
    %v10761 = vsub.f32 %v9977, %v10446
    %v10762 = vsub.f32 %v9978, %v10446
    %v10763 = vsub.f32 %v9979, %v10446
    %v10764 = vsub.f32 %v9980, %v10446
    %v10765 = vsub.f32 %v9981, %v10446
    %v10766 = vsub.f32 %v9982, %v10446
    %v10767 = vsub.f32 %v9983, %v10446
    %v10768 = vsub.f32 %v9984, %v10446
    %v10769 = vsub.f32 %v9985, %v10446
    %v10770 = vsub.f32 %v9986, %v10446
    %v10771 = vsub.f32 %v9987, %v10446
    %v10772 = vsub.f32 %v9988, %v10446
    %v10773 = vsub.f32 %v9989, %v10446
    %v10774 = vsub.f32 %v9990, %v10446
    %v10775 = vsub.f32 %v9991, %v10446
    %v10776 = vsub.f32 %v9992, %v10446
    %v10777 = vsub.f32 %v9993, %v10446
    %v10778 = vsub.f32 %v9994, %v10446
    %v10779 = vsub.f32 %v9995, %v10446
    %v10780 = vsub.f32 %v9996, %v10446
    %v10781 = vsub.f32 %v9997, %v10446
    %v10782 = vsub.f32 %v9998, %v10446
    %v10783 = vsub.f32 %v9999, %v10446
    %v10784 = vsub.f32 %v10000, %v10446
    %v10785 = vsub.f32 %v10001, %v10446
    %v10786 = vsub.f32 %v10002, %v10446
    %v10787 = vsub.f32 %v10003, %v10446
    %v10788 = vsub.f32 %v10004, %v10446
    %v10789 = vsub.f32 %v10005, %v10446
    %v10790 = vsub.f32 %v10006, %v10446
    %v10791 = vsub.f32 %v10007, %v10446
    %v10792 = vsub.f32 %v10008, %v10446
    %v10793 = vsub.f32 %v10009, %v10446
    %v10794 = vsub.f32 %v10010, %v10446
    %v10795 = vsub.f32 %v10011, %v10446
    %v10796 = vsub.f32 %v10012, %v10446
    %v10797 = vsub.f32 %v10013, %v10446
    %v10798 = vsub.f32 %v10014, %v10446
    %v10799 = vsub.f32 %v10015, %v10446
    %v10800 = vsub.f32 %v10016, %v10446
    %v10801 = vsub.f32 %v10017, %v10446
    %v10802 = vsub.f32 %v10018, %v10446
    %v10803 = vsub.f32 %v10019, %v10446
    %v10804 = vsub.f32 %v10020, %v10446
    %v10805 = vsub.f32 %v10021, %v10446
    %v10806 = vsub.f32 %v10022, %v10446
    %v10807 = vsub.f32 %v10023, %v10446
    %v10808 = vsub.f32 %v10024, %v10446
    %v10809 = vsub.f32 %v10025, %v10446
    %v10810 = vsub.f32 %v10026, %v10446
    %v10811 = vsub.f32 %v10027, %v10446
    %v10812 = vsub.f32 %v10028, %v10446
    %v10813 = vsub.f32 %v10029, %v10446
    %v10814 = vsub.f32 %v10030, %v10446
    %v10815 = vsub.f32 %v10031, %v10446
    %v10816 = vsub.f32 %v10032, %v10446
    %v10817 = vsub.f32 %v10033, %v10446
    %v10818 = vsub.f32 %v10034, %v10446
    %v10819 = vsub.f32 %v10035, %v10446
    %v10820 = vsub.f32 %v10036, %v10446
    %v10821 = vsub.f32 %v10037, %v10446
    %v10822 = vsub.f32 %v10038, %v10446
    %v10823 = vsub.f32 %v10039, %v10446
    %v10824 = vsub.f32 %v10040, %v10446
    %v10825 = vsub.f32 %v10041, %v10446
    %v10826 = vsub.f32 %v10042, %v10446
    %v10827 = vsub.f32 %v10043, %v10446
    %v10828 = vsub.f32 %v10044, %v10446
    %v10829 = vsub.f32 %v10045, %v10446
    %v10830 = vsub.f32 %v10046, %v10446
    %v10831 = vsub.f32 %v10047, %v10446
    %v10832 = vsub.f32 %v10048, %v10446
    %v10833 = vsub.f32 %v10049, %v10446
    %v10834 = vsub.f32 %v10050, %v10446
    %v10835 = vsub.f32 %v10051, %v10446
    %v10836 = vsub.f32 %v10052, %v10446
    %v10837 = vsub.f32 %v10053, %v10446
    %v10838 = vmul.f32 %v10447, 1.442695
    %v10839 = vpow.pop %v10838
    %v10840 = vmul.f32 %v10448, 1.442695
    %v10841 = vpow.pop %v10840
    %v10842 = vmul.f32 %v10449, 1.442695
    %v10843 = vpow.pop %v10842
    %v10844 = vmul.f32 %v10450, 1.442695
    %v10845 = vpow.pop %v10844
    %v10846 = vmul.f32 %v10451, 1.442695
    %v10847 = vpow.pop %v10846
    %v10848 = vmul.f32 %v10452, 1.442695
    %v10849 = vpow.pop %v10848
    %v10850 = vmul.f32 %v10453, 1.442695
    %v10851 = vpow.pop %v10850
    %v10852 = vmul.f32 %v10454, 1.442695
    %v10853 = vpow.pop %v10852
    %v10854 = vmul.f32 %v10455, 1.442695
    %v10855 = vpow.pop %v10854
    %v10856 = vmul.f32 %v10456, 1.442695
    %v10857 = vpow.pop %v10856
    %v10858 = vmul.f32 %v10457, 1.442695
    %v10859 = vpow.pop %v10858
    %v10860 = vmul.f32 %v10458, 1.442695
    %v10861 = vpow.pop %v10860
    %v10862 = vmul.f32 %v10459, 1.442695
    %v10863 = vpow.pop %v10862
    %v10864 = vmul.f32 %v10460, 1.442695
    %v10865 = vpow.pop %v10864
    %v10866 = vmul.f32 %v10461, 1.442695
    %v10867 = vpow.pop %v10866
    %v10868 = vmul.f32 %v10462, 1.442695
    %v10869 = vpow.pop %v10868
    %v10870 = vmul.f32 %v10463, 1.442695
    %v10871 = vpow.pop %v10870
    %v10872 = vmul.f32 %v10464, 1.442695
    %v10873 = vpow.pop %v10872
    %v10874 = vmul.f32 %v10465, 1.442695
    %v10875 = vpow.pop %v10874
    %v10876 = vmul.f32 %v10466, 1.442695
    %v10877 = vpow.pop %v10876
    %v10878 = vmul.f32 %v10467, 1.442695
    %v10879 = vpow.pop %v10878
    %v10880 = vmul.f32 %v10468, 1.442695
    %v10881 = vpow.pop %v10880
    %v10882 = vmul.f32 %v10469, 1.442695
    %v10883 = vpow.pop %v10882
    %v10884 = vmul.f32 %v10470, 1.442695
    %v10885 = vpow.pop %v10884
    %v10886 = vmul.f32 %v10471, 1.442695
    %v10887 = vpow.pop %v10886
    %v10888 = vmul.f32 %v10472, 1.442695
    %v10889 = vpow.pop %v10888
    %v10890 = vmul.f32 %v10473, 1.442695
    %v10891 = vpow.pop %v10890
    %v10892 = vmul.f32 %v10474, 1.442695
    %v10893 = vpow.pop %v10892
    %v10894 = vmul.f32 %v10475, 1.442695
    %v10895 = vpow.pop %v10894
    %v10896 = vmul.f32 %v10476, 1.442695
    %v10897 = vpow.pop %v10896
    %v10898 = vmul.f32 %v10477, 1.442695
    %v10899 = vpow.pop %v10898
    %v10900 = vmul.f32 %v10478, 1.442695
    %v10901 = vpow.pop %v10900
    %v10902 = vmul.f32 %v10479, 1.442695
    %v10903 = vpow.pop %v10902
    %v10904 = vmul.f32 %v10480, 1.442695
    %v10905 = vpow.pop %v10904
    %v10906 = vmul.f32 %v10481, 1.442695
    %v10907 = vpow.pop %v10906
    %v10908 = vmul.f32 %v10482, 1.442695
    %v10909 = vpow.pop %v10908
    %v10910 = vmul.f32 %v10483, 1.442695
    %v10911 = vpow.pop %v10910
    %v10912 = vmul.f32 %v10484, 1.442695
    %v10913 = vpow.pop %v10912
    %v10914 = vmul.f32 %v10485, 1.442695
    %v10915 = vpow.pop %v10914
    %v10916 = vmul.f32 %v10486, 1.442695
    %v10917 = vpow.pop %v10916
    %v10918 = vmul.f32 %v10487, 1.442695
    %v10919 = vpow.pop %v10918
    %v10920 = vmul.f32 %v10488, 1.442695
    %v10921 = vpow.pop %v10920
    %v10922 = vmul.f32 %v10489, 1.442695
    %v10923 = vpow.pop %v10922
    %v10924 = vmul.f32 %v10490, 1.442695
    %v10925 = vpow.pop %v10924
    %v10926 = vmul.f32 %v10491, 1.442695
    %v10927 = vpow.pop %v10926
    %v10928 = vmul.f32 %v10492, 1.442695
    %v10929 = vpow.pop %v10928
    %v10930 = vmul.f32 %v10493, 1.442695
    %v10931 = vpow.pop %v10930
    %v10932 = vmul.f32 %v10494, 1.442695
    %v10933 = vpow.pop %v10932
    %v10934 = vmul.f32 %v10495, 1.442695
    %v10935 = vpow.pop %v10934
    %v10936 = vmul.f32 %v10496, 1.442695
    %v10937 = vpow.pop %v10936
    %v10938 = vmul.f32 %v10497, 1.442695
    %v10939 = vpow.pop %v10938
    %v10940 = vmul.f32 %v10498, 1.442695
    %v10941 = vpow.pop %v10940
    %v10942 = vmul.f32 %v10499, 1.442695
    %v10943 = vpow.pop %v10942
    %v10944 = vmul.f32 %v10500, 1.442695
    %v10945 = vpow.pop %v10944
    %v10946 = vmul.f32 %v10501, 1.442695
    %v10947 = vpow.pop %v10946
    %v10948 = vmul.f32 %v10502, 1.442695
    %v10949 = vpow.pop %v10948
    %v10950 = vmul.f32 %v10503, 1.442695
    %v10951 = vpow.pop %v10950
    %v10952 = vmul.f32 %v10504, 1.442695
    %v10953 = vpow.pop %v10952
    %v10954 = vmul.f32 %v10505, 1.442695
    %v10955 = vpow.pop %v10954
    %v10956 = vmul.f32 %v10506, 1.442695
    %v10957 = vpow.pop %v10956
    %v10958 = vmul.f32 %v10507, 1.442695
    %v10959 = vpow.pop %v10958
    %v10960 = vmul.f32 %v10508, 1.442695
    %v10961 = vpow.pop %v10960
    %v10962 = vmul.f32 %v10509, 1.442695
    %v10963 = vpow.pop %v10962
    %v10964 = vmul.f32 %v10510, 1.442695
    %v10965 = vpow.pop %v10964
    %v10966 = vmul.f32 %v10511, 1.442695
    %v10967 = vpow.pop %v10966
    %v10968 = vmul.f32 %v10512, 1.442695
    %v10969 = vpow.pop %v10968
    %v10970 = vmul.f32 %v10513, 1.442695
    %v10971 = vpow.pop %v10970
    %v10972 = vmul.f32 %v10514, 1.442695
    %v10973 = vpow.pop %v10972
    %v10974 = vmul.f32 %v10515, 1.442695
    %v10975 = vpow.pop %v10974
    %v10976 = vmul.f32 %v10516, 1.442695
    %v10977 = vpow.pop %v10976
    %v10978 = vmul.f32 %v10517, 1.442695
    %v10979 = vpow.pop %v10978
    %v10980 = vmul.f32 %v10518, 1.442695
    %v10981 = vpow.pop %v10980
    %v10982 = vmul.f32 %v10519, 1.442695
    %v10983 = vpow.pop %v10982
    %v10984 = vmul.f32 %v10520, 1.442695
    %v10985 = vpow.pop %v10984
    %v10986 = vmul.f32 %v10521, 1.442695
    %v10987 = vpow.pop %v10986
    %v10988 = vmul.f32 %v10522, 1.442695
    %v10989 = vpow.pop %v10988
    %v10990 = vmul.f32 %v10523, 1.442695
    %v10991 = vpow.pop %v10990
    %v10992 = vmul.f32 %v10524, 1.442695
    %v10993 = vpow.pop %v10992
    %v10994 = vmul.f32 %v10525, 1.442695
    %v10995 = vpow.pop %v10994
    %v10996 = vmul.f32 %v10526, 1.442695
    %v10997 = vpow.pop %v10996
    %v10998 = vmul.f32 %v10527, 1.442695
    %v10999 = vpow.pop %v10998
    %v11000 = vmul.f32 %v10528, 1.442695
    %v11001 = vpow.pop %v11000
    %v11002 = vmul.f32 %v10529, 1.442695
    %v11003 = vpow.pop %v11002
    %v11004 = vmul.f32 %v10530, 1.442695
    %v11005 = vpow.pop %v11004
    %v11006 = vmul.f32 %v10531, 1.442695
    %v11007 = vpow.pop %v11006
    %v11008 = vmul.f32 %v10532, 1.442695
    %v11009 = vpow.pop %v11008
    %v11010 = vmul.f32 %v10533, 1.442695
    %v11011 = vpow.pop %v11010
    %v11012 = vmul.f32 %v10534, 1.442695
    %v11013 = vpow.pop %v11012
    %v11014 = vmul.f32 %v10535, 1.442695
    %v11015 = vpow.pop %v11014
    %v11016 = vmul.f32 %v10536, 1.442695
    %v11017 = vpow.pop %v11016
    %v11018 = vmul.f32 %v10537, 1.442695
    %v11019 = vpow.pop %v11018
    %v11020 = vmul.f32 %v10538, 1.442695
    %v11021 = vpow.pop %v11020
    %v11022 = vmul.f32 %v10539, 1.442695
    %v11023 = vpow.pop %v11022
    %v11024 = vmul.f32 %v10540, 1.442695
    %v11025 = vpow.pop %v11024
    %v11026 = vmul.f32 %v10541, 1.442695
    %v11027 = vpow.pop %v11026
    %v11028 = vmul.f32 %v10542, 1.442695
    %v11029 = vpow.pop %v11028
    %v11030 = vmul.f32 %v10543, 1.442695
    %v11031 = vpow.pop %v11030
    %v11032 = vmul.f32 %v10544, 1.442695
    %v11033 = vpow.pop %v11032
    %v11034 = vmul.f32 %v10545, 1.442695
    %v11035 = vpow.pop %v11034
    %v11036 = vmul.f32 %v10546, 1.442695
    %v11037 = vpow.pop %v11036
    %v11038 = vmul.f32 %v10547, 1.442695
    %v11039 = vpow.pop %v11038
    %v11040 = vmul.f32 %v10548, 1.442695
    %v11041 = vpow.pop %v11040
    %v11042 = vmul.f32 %v10549, 1.442695
    %v11043 = vpow.pop %v11042
    %v11044 = vmul.f32 %v10550, 1.442695
    %v11045 = vpow.pop %v11044
    %v11046 = vmul.f32 %v10551, 1.442695
    %v11047 = vpow.pop %v11046
    %v11048 = vmul.f32 %v10552, 1.442695
    %v11049 = vpow.pop %v11048
    %v11050 = vmul.f32 %v10553, 1.442695
    %v11051 = vpow.pop %v11050
    %v11052 = vmul.f32 %v10554, 1.442695
    %v11053 = vpow.pop %v11052
    %v11054 = vmul.f32 %v10555, 1.442695
    %v11055 = vpow.pop %v11054
    %v11056 = vmul.f32 %v10556, 1.442695
    %v11057 = vpow.pop %v11056
    %v11058 = vmul.f32 %v10557, 1.442695
    %v11059 = vpow.pop %v11058
    %v11060 = vmul.f32 %v10558, 1.442695
    %v11061 = vpow.pop %v11060
    %v11062 = vmul.f32 %v10559, 1.442695
    %v11063 = vpow.pop %v11062
    %v11064 = vmul.f32 %v10560, 1.442695
    %v11065 = vpow.pop %v11064
    %v11066 = vmul.f32 %v10561, 1.442695
    %v11067 = vpow.pop %v11066
    %v11068 = vmul.f32 %v10562, 1.442695
    %v11069 = vpow.pop %v11068
    %v11070 = vmul.f32 %v10563, 1.442695
    %v11071 = vpow.pop %v11070
    %v11072 = vmul.f32 %v10564, 1.442695
    %v11073 = vpow.pop %v11072
    %v11074 = vmul.f32 %v10565, 1.442695
    %v11075 = vpow.pop %v11074
    %v11076 = vmul.f32 %v10566, 1.442695
    %v11077 = vpow.pop %v11076
    %v11078 = vmul.f32 %v10567, 1.442695
    %v11079 = vpow.pop %v11078
    %v11080 = vmul.f32 %v10568, 1.442695
    %v11081 = vpow.pop %v11080
    %v11082 = vmul.f32 %v10569, 1.442695
    %v11083 = vpow.pop %v11082
    %v11084 = vmul.f32 %v10570, 1.442695
    %v11085 = vpow.pop %v11084
    %v11086 = vmul.f32 %v10571, 1.442695
    %v11087 = vpow.pop %v11086
    %v11088 = vmul.f32 %v10572, 1.442695
    %v11089 = vpow.pop %v11088
    %v11090 = vmul.f32 %v10573, 1.442695
    %v11091 = vpow.pop %v11090
    %v11092 = vmul.f32 %v10574, 1.442695
    %v11093 = vpow.pop %v11092
    %v11094 = vmul.f32 %v10575, 1.442695
    %v11095 = vpow.pop %v11094
    %v11096 = vmul.f32 %v10576, 1.442695
    %v11097 = vpow.pop %v11096
    %v11098 = vmul.f32 %v10577, 1.442695
    %v11099 = vpow.pop %v11098
    %v11100 = vmul.f32 %v10578, 1.442695
    %v11101 = vpow.pop %v11100
    %v11102 = vmul.f32 %v10579, 1.442695
    %v11103 = vpow.pop %v11102
    %v11104 = vmul.f32 %v10580, 1.442695
    %v11105 = vpow.pop %v11104
    %v11106 = vmul.f32 %v10581, 1.442695
    %v11107 = vpow.pop %v11106
    %v11108 = vmul.f32 %v10582, 1.442695
    %v11109 = vpow.pop %v11108
    %v11110 = vmul.f32 %v10583, 1.442695
    %v11111 = vpow.pop %v11110
    %v11112 = vmul.f32 %v10584, 1.442695
    %v11113 = vpow.pop %v11112
    %v11114 = vmul.f32 %v10585, 1.442695
    %v11115 = vpow.pop %v11114
    %v11116 = vmul.f32 %v10586, 1.442695
    %v11117 = vpow.pop %v11116
    %v11118 = vmul.f32 %v10587, 1.442695
    %v11119 = vpow.pop %v11118
    %v11120 = vmul.f32 %v10588, 1.442695
    %v11121 = vpow.pop %v11120
    %v11122 = vmul.f32 %v10589, 1.442695
    %v11123 = vpow.pop %v11122
    %v11124 = vmul.f32 %v10590, 1.442695
    %v11125 = vpow.pop %v11124
    %v11126 = vmul.f32 %v10591, 1.442695
    %v11127 = vpow.pop %v11126
    %v11128 = vmul.f32 %v10592, 1.442695
    %v11129 = vpow.pop %v11128
    %v11130 = vmul.f32 %v10593, 1.442695
    %v11131 = vpow.pop %v11130
    %v11132 = vmul.f32 %v10594, 1.442695
    %v11133 = vpow.pop %v11132
    %v11134 = vmul.f32 %v10595, 1.442695
    %v11135 = vpow.pop %v11134
    %v11136 = vmul.f32 %v10596, 1.442695
    %v11137 = vpow.pop %v11136
    %v11138 = vmul.f32 %v10597, 1.442695
    %v11139 = vpow.pop %v11138
    %v11140 = vmul.f32 %v10598, 1.442695
    %v11141 = vpow.pop %v11140
    %v11142 = vmul.f32 %v10599, 1.442695
    %v11143 = vpow.pop %v11142
    %v11144 = vmul.f32 %v10600, 1.442695
    %v11145 = vpow.pop %v11144
    %v11146 = vmul.f32 %v10601, 1.442695
    %v11147 = vpow.pop %v11146
    %v11148 = vmul.f32 %v10602, 1.442695
    %v11149 = vpow.pop %v11148
    %v11150 = vmul.f32 %v10603, 1.442695
    %v11151 = vpow.pop %v11150
    %v11152 = vmul.f32 %v10604, 1.442695
    %v11153 = vpow.pop %v11152
    %v11154 = vmul.f32 %v10605, 1.442695
    %v11155 = vpow.pop %v11154
    %v11156 = vmul.f32 %v10606, 1.442695
    %v11157 = vpow.pop %v11156
    %v11158 = vmul.f32 %v10607, 1.442695
    %v11159 = vpow.pop %v11158
    %v11160 = vmul.f32 %v10608, 1.442695
    %v11161 = vpow.pop %v11160
    %v11162 = vmul.f32 %v10609, 1.442695
    %v11163 = vpow.pop %v11162
    %v11164 = vmul.f32 %v10610, 1.442695
    %v11165 = vpow.pop %v11164
    %v11166 = vmul.f32 %v10611, 1.442695
    %v11167 = vpow.pop %v11166
    %v11168 = vmul.f32 %v10612, 1.442695
    %v11169 = vpow.pop %v11168
    %v11170 = vmul.f32 %v10613, 1.442695
    %v11171 = vpow.pop %v11170
    %v11172 = vmul.f32 %v10614, 1.442695
    %v11173 = vpow.pop %v11172
    %v11174 = vmul.f32 %v10615, 1.442695
    %v11175 = vpow.pop %v11174
    %v11176 = vmul.f32 %v10616, 1.442695
    %v11177 = vpow.pop %v11176
    %v11178 = vmul.f32 %v10617, 1.442695
    %v11179 = vpow.pop %v11178
    %v11180 = vmul.f32 %v10618, 1.442695
    %v11181 = vpow.pop %v11180
    %v11182 = vmul.f32 %v10619, 1.442695
    %v11183 = vpow.pop %v11182
    %v11184 = vmul.f32 %v10620, 1.442695
    %v11185 = vpow.pop %v11184
    %v11186 = vmul.f32 %v10621, 1.442695
    %v11187 = vpow.pop %v11186
    %v11188 = vmul.f32 %v10622, 1.442695
    %v11189 = vpow.pop %v11188
    %v11190 = vmul.f32 %v10623, 1.442695
    %v11191 = vpow.pop %v11190
    %v11192 = vmul.f32 %v10624, 1.442695
    %v11193 = vpow.pop %v11192
    %v11194 = vmul.f32 %v10625, 1.442695
    %v11195 = vpow.pop %v11194
    %v11196 = vmul.f32 %v10626, 1.442695
    %v11197 = vpow.pop %v11196
    %v11198 = vmul.f32 %v10627, 1.442695
    %v11199 = vpow.pop %v11198
    %v11200 = vmul.f32 %v10628, 1.442695
    %v11201 = vpow.pop %v11200
    %v11202 = vmul.f32 %v10629, 1.442695
    %v11203 = vpow.pop %v11202
    %v11204 = vmul.f32 %v10630, 1.442695
    %v11205 = vpow.pop %v11204
    %v11206 = vmul.f32 %v10631, 1.442695
    %v11207 = vpow.pop %v11206
    %v11208 = vmul.f32 %v10632, 1.442695
    %v11209 = vpow.pop %v11208
    %v11210 = vmul.f32 %v10633, 1.442695
    %v11211 = vpow.pop %v11210
    %v11212 = vmul.f32 %v10634, 1.442695
    %v11213 = vpow.pop %v11212
    %v11214 = vmul.f32 %v10635, 1.442695
    %v11215 = vpow.pop %v11214
    %v11216 = vmul.f32 %v10636, 1.442695
    %v11217 = vpow.pop %v11216
    %v11218 = vmul.f32 %v10637, 1.442695
    %v11219 = vpow.pop %v11218
    %v11220 = vmul.f32 %v10638, 1.442695
    %v11221 = vpow.pop %v11220
    %v11222 = vmul.f32 %v10639, 1.442695
    %v11223 = vpow.pop %v11222
    %v11224 = vmul.f32 %v10640, 1.442695
    %v11225 = vpow.pop %v11224
    %v11226 = vmul.f32 %v10641, 1.442695
    %v11227 = vpow.pop %v11226
    %v11228 = vmul.f32 %v10642, 1.442695
    %v11229 = vpow.pop %v11228
    %v11230 = vmul.f32 %v10643, 1.442695
    %v11231 = vpow.pop %v11230
    %v11232 = vmul.f32 %v10644, 1.442695
    %v11233 = vpow.pop %v11232
    %v11234 = vmul.f32 %v10645, 1.442695
    %v11235 = vpow.pop %v11234
    %v11236 = vmul.f32 %v10646, 1.442695
    %v11237 = vpow.pop %v11236
    %v11238 = vmul.f32 %v10647, 1.442695
    %v11239 = vpow.pop %v11238
    %v11240 = vmul.f32 %v10648, 1.442695
    %v11241 = vpow.pop %v11240
    %v11242 = vmul.f32 %v10649, 1.442695
    %v11243 = vpow.pop %v11242
    %v11244 = vmul.f32 %v10650, 1.442695
    %v11245 = vpow.pop %v11244
    %v11246 = vmul.f32 %v10651, 1.442695
    %v11247 = vpow.pop %v11246
    %v11248 = vmul.f32 %v10652, 1.442695
    %v11249 = vpow.pop %v11248
    %v11250 = vmul.f32 %v10653, 1.442695
    %v11251 = vpow.pop %v11250
    %v11252 = vmul.f32 %v10654, 1.442695
    %v11253 = vpow.pop %v11252
    %v11254 = vmul.f32 %v10655, 1.442695
    %v11255 = vpow.pop %v11254
    %v11256 = vmul.f32 %v10656, 1.442695
    %v11257 = vpow.pop %v11256
    %v11258 = vmul.f32 %v10657, 1.442695
    %v11259 = vpow.pop %v11258
    %v11260 = vmul.f32 %v10658, 1.442695
    %v11261 = vpow.pop %v11260
    %v11262 = vmul.f32 %v10659, 1.442695
    %v11263 = vpow.pop %v11262
    %v11264 = vmul.f32 %v10660, 1.442695
    %v11265 = vpow.pop %v11264
    %v11266 = vmul.f32 %v10661, 1.442695
    %v11267 = vpow.pop %v11266
    %v11268 = vmul.f32 %v10662, 1.442695
    %v11269 = vpow.pop %v11268
    %v11270 = vmul.f32 %v10663, 1.442695
    %v11271 = vpow.pop %v11270
    %v11272 = vmul.f32 %v10664, 1.442695
    %v11273 = vpow.pop %v11272
    %v11274 = vmul.f32 %v10665, 1.442695
    %v11275 = vpow.pop %v11274
    %v11276 = vmul.f32 %v10666, 1.442695
    %v11277 = vpow.pop %v11276
    %v11278 = vmul.f32 %v10667, 1.442695
    %v11279 = vpow.pop %v11278
    %v11280 = vmul.f32 %v10668, 1.442695
    %v11281 = vpow.pop %v11280
    %v11282 = vmul.f32 %v10669, 1.442695
    %v11283 = vpow.pop %v11282
    %v11284 = vmul.f32 %v10670, 1.442695
    %v11285 = vpow.pop %v11284
    %v11286 = vmul.f32 %v10671, 1.442695
    %v11287 = vpow.pop %v11286
    %v11288 = vmul.f32 %v10672, 1.442695
    %v11289 = vpow.pop %v11288
    %v11290 = vmul.f32 %v10673, 1.442695
    %v11291 = vpow.pop %v11290
    %v11292 = vmul.f32 %v10674, 1.442695
    %v11293 = vpow.pop %v11292
    %v11294 = vmul.f32 %v10675, 1.442695
    %v11295 = vpow.pop %v11294
    %v11296 = vmul.f32 %v10676, 1.442695
    %v11297 = vpow.pop %v11296
    %v11298 = vmul.f32 %v10677, 1.442695
    %v11299 = vpow.pop %v11298
    %v11300 = vmul.f32 %v10678, 1.442695
    %v11301 = vpow.pop %v11300
    %v11302 = vmul.f32 %v10679, 1.442695
    %v11303 = vpow.pop %v11302
    %v11304 = vmul.f32 %v10680, 1.442695
    %v11305 = vpow.pop %v11304
    %v11306 = vmul.f32 %v10681, 1.442695
    %v11307 = vpow.pop %v11306
    %v11308 = vmul.f32 %v10682, 1.442695
    %v11309 = vpow.pop %v11308
    %v11310 = vmul.f32 %v10683, 1.442695
    %v11311 = vpow.pop %v11310
    %v11312 = vmul.f32 %v10684, 1.442695
    %v11313 = vpow.pop %v11312
    %v11314 = vmul.f32 %v10685, 1.442695
    %v11315 = vpow.pop %v11314
    %v11316 = vmul.f32 %v10686, 1.442695
    %v11317 = vpow.pop %v11316
    %v11318 = vmul.f32 %v10687, 1.442695
    %v11319 = vpow.pop %v11318
    %v11320 = vmul.f32 %v10688, 1.442695
    %v11321 = vpow.pop %v11320
    %v11322 = vmul.f32 %v10689, 1.442695
    %v11323 = vpow.pop %v11322
    %v11324 = vmul.f32 %v10690, 1.442695
    %v11325 = vpow.pop %v11324
    %v11326 = vmul.f32 %v10691, 1.442695
    %v11327 = vpow.pop %v11326
    %v11328 = vmul.f32 %v10692, 1.442695
    %v11329 = vpow.pop %v11328
    %v11330 = vmul.f32 %v10693, 1.442695
    %v11331 = vpow.pop %v11330
    %v11332 = vmul.f32 %v10694, 1.442695
    %v11333 = vpow.pop %v11332
    %v11334 = vmul.f32 %v10695, 1.442695
    %v11335 = vpow.pop %v11334
    %v11336 = vmul.f32 %v10696, 1.442695
    %v11337 = vpow.pop %v11336
    %v11338 = vmul.f32 %v10697, 1.442695
    %v11339 = vpow.pop %v11338
    %v11340 = vmul.f32 %v10698, 1.442695
    %v11341 = vpow.pop %v11340
    %v11342 = vmul.f32 %v10699, 1.442695
    %v11343 = vpow.pop %v11342
    %v11344 = vmul.f32 %v10700, 1.442695
    %v11345 = vpow.pop %v11344
    %v11346 = vmul.f32 %v10701, 1.442695
    %v11347 = vpow.pop %v11346
    %v11348 = vmul.f32 %v10702, 1.442695
    %v11349 = vpow.pop %v11348
    %v11350 = vmul.f32 %v10703, 1.442695
    %v11351 = vpow.pop %v11350
    %v11352 = vmul.f32 %v10704, 1.442695
    %v11353 = vpow.pop %v11352
    %v11354 = vmul.f32 %v10705, 1.442695
    %v11355 = vpow.pop %v11354
    %v11356 = vmul.f32 %v10706, 1.442695
    %v11357 = vpow.pop %v11356
    %v11358 = vmul.f32 %v10707, 1.442695
    %v11359 = vpow.pop %v11358
    %v11360 = vmul.f32 %v10708, 1.442695
    %v11361 = vpow.pop %v11360
    %v11362 = vmul.f32 %v10709, 1.442695
    %v11363 = vpow.pop %v11362
    %v11364 = vmul.f32 %v10710, 1.442695
    %v11365 = vpow.pop %v11364
    %v11366 = vmul.f32 %v10711, 1.442695
    %v11367 = vpow.pop %v11366
    %v11368 = vmul.f32 %v10712, 1.442695
    %v11369 = vpow.pop %v11368
    %v11370 = vmul.f32 %v10713, 1.442695
    %v11371 = vpow.pop %v11370
    %v11372 = vmul.f32 %v10714, 1.442695
    %v11373 = vpow.pop %v11372
    %v11374 = vmul.f32 %v10715, 1.442695
    %v11375 = vpow.pop %v11374
    %v11376 = vmul.f32 %v10716, 1.442695
    %v11377 = vpow.pop %v11376
    %v11378 = vmul.f32 %v10717, 1.442695
    %v11379 = vpow.pop %v11378
    %v11380 = vmul.f32 %v10718, 1.442695
    %v11381 = vpow.pop %v11380
    %v11382 = vmul.f32 %v10719, 1.442695
    %v11383 = vpow.pop %v11382
    %v11384 = vmul.f32 %v10720, 1.442695
    %v11385 = vpow.pop %v11384
    %v11386 = vmul.f32 %v10721, 1.442695
    %v11387 = vpow.pop %v11386
    %v11388 = vmul.f32 %v10722, 1.442695
    %v11389 = vpow.pop %v11388
    %v11390 = vmul.f32 %v10723, 1.442695
    %v11391 = vpow.pop %v11390
    %v11392 = vmul.f32 %v10724, 1.442695
    %v11393 = vpow.pop %v11392
    %v11394 = vmul.f32 %v10725, 1.442695
    %v11395 = vpow.pop %v11394
    %v11396 = vmul.f32 %v10726, 1.442695
    %v11397 = vpow.pop %v11396
    %v11398 = vmul.f32 %v10727, 1.442695
    %v11399 = vpow.pop %v11398
    %v11400 = vmul.f32 %v10728, 1.442695
    %v11401 = vpow.pop %v11400
    %v11402 = vmul.f32 %v10729, 1.442695
    %v11403 = vpow.pop %v11402
    %v11404 = vmul.f32 %v10730, 1.442695
    %v11405 = vpow.pop %v11404
    %v11406 = vmul.f32 %v10731, 1.442695
    %v11407 = vpow.pop %v11406
    %v11408 = vmul.f32 %v10732, 1.442695
    %v11409 = vpow.pop %v11408
    %v11410 = vmul.f32 %v10733, 1.442695
    %v11411 = vpow.pop %v11410
    %v11412 = vmul.f32 %v10734, 1.442695
    %v11413 = vpow.pop %v11412
    %v11414 = vmul.f32 %v10735, 1.442695
    %v11415 = vpow.pop %v11414
    %v11416 = vmul.f32 %v10736, 1.442695
    %v11417 = vpow.pop %v11416
    %v11418 = vmul.f32 %v10737, 1.442695
    %v11419 = vpow.pop %v11418
    %v11420 = vmul.f32 %v10738, 1.442695
    %v11421 = vpow.pop %v11420
    %v11422 = vmul.f32 %v10739, 1.442695
    %v11423 = vpow.pop %v11422
    %v11424 = vmul.f32 %v10740, 1.442695
    %v11425 = vpow.pop %v11424
    %v11426 = vmul.f32 %v10741, 1.442695
    %v11427 = vpow.pop %v11426
    %v11428 = vmul.f32 %v10742, 1.442695
    %v11429 = vpow.pop %v11428
    %v11430 = vmul.f32 %v10743, 1.442695
    %v11431 = vpow.pop %v11430
    %v11432 = vmul.f32 %v10744, 1.442695
    %v11433 = vpow.pop %v11432
    %v11434 = vmul.f32 %v10745, 1.442695
    %v11435 = vpow.pop %v11434
    %v11436 = vmul.f32 %v10746, 1.442695
    %v11437 = vpow.pop %v11436
    %v11438 = vmul.f32 %v10747, 1.442695
    %v11439 = vpow.pop %v11438
    %v11440 = vmul.f32 %v10748, 1.442695
    %v11441 = vpow.pop %v11440
    %v11442 = vmul.f32 %v10749, 1.442695
    %v11443 = vpow.pop %v11442
    %v11444 = vmul.f32 %v10750, 1.442695
    %v11445 = vpow.pop %v11444
    %v11446 = vmul.f32 %v10751, 1.442695
    %v11447 = vpow.pop %v11446
    %v11448 = vmul.f32 %v10752, 1.442695
    %v11449 = vpow.pop %v11448
    %v11450 = vmul.f32 %v10753, 1.442695
    %v11451 = vpow.pop %v11450
    %v11452 = vmul.f32 %v10754, 1.442695
    %v11453 = vpow.pop %v11452
    %v11454 = vmul.f32 %v10755, 1.442695
    %v11455 = vpow.pop %v11454
    %v11456 = vmul.f32 %v10756, 1.442695
    %v11457 = vpow.pop %v11456
    %v11458 = vmul.f32 %v10757, 1.442695
    %v11459 = vpow.pop %v11458
    %v11460 = vmul.f32 %v10758, 1.442695
    %v11461 = vpow.pop %v11460
    %v11462 = vmul.f32 %v10759, 1.442695
    %v11463 = vpow.pop %v11462
    %v11464 = vmul.f32 %v10760, 1.442695
    %v11465 = vpow.pop %v11464
    %v11466 = vmul.f32 %v10761, 1.442695
    %v11467 = vpow.pop %v11466
    %v11468 = vmul.f32 %v10762, 1.442695
    %v11469 = vpow.pop %v11468
    %v11470 = vmul.f32 %v10763, 1.442695
    %v11471 = vpow.pop %v11470
    %v11472 = vmul.f32 %v10764, 1.442695
    %v11473 = vpow.pop %v11472
    %v11474 = vmul.f32 %v10765, 1.442695
    %v11475 = vpow.pop %v11474
    %v11476 = vmul.f32 %v10766, 1.442695
    %v11477 = vpow.pop %v11476
    %v11478 = vmul.f32 %v10767, 1.442695
    %v11479 = vpow.pop %v11478
    %v11480 = vmul.f32 %v10768, 1.442695
    %v11481 = vpow.pop %v11480
    %v11482 = vmul.f32 %v10769, 1.442695
    %v11483 = vpow.pop %v11482
    %v11484 = vmul.f32 %v10770, 1.442695
    %v11485 = vpow.pop %v11484
    %v11486 = vmul.f32 %v10771, 1.442695
    %v11487 = vpow.pop %v11486
    %v11488 = vmul.f32 %v10772, 1.442695
    %v11489 = vpow.pop %v11488
    %v11490 = vmul.f32 %v10773, 1.442695
    %v11491 = vpow.pop %v11490
    %v11492 = vmul.f32 %v10774, 1.442695
    %v11493 = vpow.pop %v11492
    %v11494 = vmul.f32 %v10775, 1.442695
    %v11495 = vpow.pop %v11494
    %v11496 = vmul.f32 %v10776, 1.442695
    %v11497 = vpow.pop %v11496
    %v11498 = vmul.f32 %v10777, 1.442695
    %v11499 = vpow.pop %v11498
    %v11500 = vmul.f32 %v10778, 1.442695
    %v11501 = vpow.pop %v11500
    %v11502 = vmul.f32 %v10779, 1.442695
    %v11503 = vpow.pop %v11502
    %v11504 = vmul.f32 %v10780, 1.442695
    %v11505 = vpow.pop %v11504
    %v11506 = vmul.f32 %v10781, 1.442695
    %v11507 = vpow.pop %v11506
    %v11508 = vmul.f32 %v10782, 1.442695
    %v11509 = vpow.pop %v11508
    %v11510 = vmul.f32 %v10783, 1.442695
    %v11511 = vpow.pop %v11510
    %v11512 = vmul.f32 %v10784, 1.442695
    %v11513 = vpow.pop %v11512
    %v11514 = vmul.f32 %v10785, 1.442695
    %v11515 = vpow.pop %v11514
    %v11516 = vmul.f32 %v10786, 1.442695
    %v11517 = vpow.pop %v11516
    %v11518 = vmul.f32 %v10787, 1.442695
    %v11519 = vpow.pop %v11518
    %v11520 = vmul.f32 %v10788, 1.442695
    %v11521 = vpow.pop %v11520
    %v11522 = vmul.f32 %v10789, 1.442695
    %v11523 = vpow.pop %v11522
    %v11524 = vmul.f32 %v10790, 1.442695
    %v11525 = vpow.pop %v11524
    %v11526 = vmul.f32 %v10791, 1.442695
    %v11527 = vpow.pop %v11526
    %v11528 = vmul.f32 %v10792, 1.442695
    %v11529 = vpow.pop %v11528
    %v11530 = vmul.f32 %v10793, 1.442695
    %v11531 = vpow.pop %v11530
    %v11532 = vmul.f32 %v10794, 1.442695
    %v11533 = vpow.pop %v11532
    %v11534 = vmul.f32 %v10795, 1.442695
    %v11535 = vpow.pop %v11534
    %v11536 = vmul.f32 %v10796, 1.442695
    %v11537 = vpow.pop %v11536
    %v11538 = vmul.f32 %v10797, 1.442695
    %v11539 = vpow.pop %v11538
    %v11540 = vmul.f32 %v10798, 1.442695
    %v11541 = vpow.pop %v11540
    %v11542 = vmul.f32 %v10799, 1.442695
    %v11543 = vpow.pop %v11542
    %v11544 = vmul.f32 %v10800, 1.442695
    %v11545 = vpow.pop %v11544
    %v11546 = vmul.f32 %v10801, 1.442695
    %v11547 = vpow.pop %v11546
    %v11548 = vmul.f32 %v10802, 1.442695
    %v11549 = vpow.pop %v11548
    %v11550 = vmul.f32 %v10803, 1.442695
    %v11551 = vpow.pop %v11550
    %v11552 = vmul.f32 %v10804, 1.442695
    %v11553 = vpow.pop %v11552
    %v11554 = vmul.f32 %v10805, 1.442695
    %v11555 = vpow.pop %v11554
    %v11556 = vmul.f32 %v10806, 1.442695
    %v11557 = vpow.pop %v11556
    %v11558 = vmul.f32 %v10807, 1.442695
    %v11559 = vpow.pop %v11558
    %v11560 = vmul.f32 %v10808, 1.442695
    %v11561 = vpow.pop %v11560
    %v11562 = vmul.f32 %v10809, 1.442695
    %v11563 = vpow.pop %v11562
    %v11564 = vmul.f32 %v10810, 1.442695
    %v11565 = vpow.pop %v11564
    %v11566 = vmul.f32 %v10811, 1.442695
    %v11567 = vpow.pop %v11566
    %v11568 = vmul.f32 %v10812, 1.442695
    %v11569 = vpow.pop %v11568
    %v11570 = vmul.f32 %v10813, 1.442695
    %v11571 = vpow.pop %v11570
    %v11572 = vmul.f32 %v10814, 1.442695
    %v11573 = vpow.pop %v11572
    %v11574 = vmul.f32 %v10815, 1.442695
    %v11575 = vpow.pop %v11574
    %v11576 = vmul.f32 %v10816, 1.442695
    %v11577 = vpow.pop %v11576
    %v11578 = vmul.f32 %v10817, 1.442695
    %v11579 = vpow.pop %v11578
    %v11580 = vmul.f32 %v10818, 1.442695
    %v11581 = vpow.pop %v11580
    %v11582 = vmul.f32 %v10819, 1.442695
    %v11583 = vpow.pop %v11582
    %v11584 = vmul.f32 %v10820, 1.442695
    %v11585 = vpow.pop %v11584
    %v11586 = vmul.f32 %v10821, 1.442695
    %v11587 = vpow.pop %v11586
    %v11588 = vmul.f32 %v10822, 1.442695
    %v11589 = vpow.pop %v11588
    %v11590 = vmul.f32 %v10823, 1.442695
    %v11591 = vpow.pop %v11590
    %v11592 = vmul.f32 %v10824, 1.442695
    %v11593 = vpow.pop %v11592
    %v11594 = vmul.f32 %v10825, 1.442695
    %v11595 = vpow.pop %v11594
    %v11596 = vmul.f32 %v10826, 1.442695
    %v11597 = vpow.pop %v11596
    %v11598 = vmul.f32 %v10827, 1.442695
    %v11599 = vpow.pop %v11598
    %v11600 = vmul.f32 %v10828, 1.442695
    %v11601 = vpow.pop %v11600
    %v11602 = vmul.f32 %v10829, 1.442695
    %v11603 = vpow.pop %v11602
    %v11604 = vmul.f32 %v10830, 1.442695
    %v11605 = vpow.pop %v11604
    %v11606 = vmul.f32 %v10831, 1.442695
    %v11607 = vpow.pop %v11606
    %v11608 = vmul.f32 %v10832, 1.442695
    %v11609 = vpow.pop %v11608
    %v11610 = vmul.f32 %v10833, 1.442695
    %v11611 = vpow.pop %v11610
    %v11612 = vmul.f32 %v10834, 1.442695
    %v11613 = vpow.pop %v11612
    %v11614 = vmul.f32 %v10835, 1.442695
    %v11615 = vpow.pop %v11614
    %v11616 = vmul.f32 %v10836, 1.442695
    %v11617 = vpow.pop %v11616
    %v11618 = vmul.f32 %v10837, 1.442695
    %v11619 = vpow.pop %v11618
    %v11620 = vadd.f32 %v10839, %v10841
    %v11621 = vadd.f32 %v11620, %v10843
    %v11622 = vadd.f32 %v11621, %v10845
    %v11623 = vadd.f32 %v11622, %v10847
    %v11624 = vadd.f32 %v11623, %v10849
    %v11625 = vadd.f32 %v11624, %v10851
    %v11626 = vadd.f32 %v11625, %v10853
    %v11627 = vadd.f32 %v11626, %v10855
    %v11628 = vadd.f32 %v11627, %v10857
    %v11629 = vadd.f32 %v11628, %v10859
    %v11630 = vadd.f32 %v11629, %v10861
    %v11631 = vadd.f32 %v11630, %v10863
    %v11632 = vadd.f32 %v11631, %v10865
    %v11633 = vadd.f32 %v11632, %v10867
    %v11634 = vadd.f32 %v11633, %v10869
    %v11635 = vadd.f32 %v11634, %v10871
    %v11636 = vadd.f32 %v11635, %v10873
    %v11637 = vadd.f32 %v11636, %v10875
    %v11638 = vadd.f32 %v11637, %v10877
    %v11639 = vadd.f32 %v11638, %v10879
    %v11640 = vadd.f32 %v11639, %v10881
    %v11641 = vadd.f32 %v11640, %v10883
    %v11642 = vadd.f32 %v11641, %v10885
    %v11643 = vadd.f32 %v11642, %v10887
    %v11644 = vadd.f32 %v11643, %v10889
    %v11645 = vadd.f32 %v11644, %v10891
    %v11646 = vadd.f32 %v11645, %v10893
    %v11647 = vadd.f32 %v11646, %v10895
    %v11648 = vadd.f32 %v11647, %v10897
    %v11649 = vadd.f32 %v11648, %v10899
    %v11650 = vadd.f32 %v11649, %v10901
    %v11651 = vadd.f32 %v11650, %v10903
    %v11652 = vadd.f32 %v11651, %v10905
    %v11653 = vadd.f32 %v11652, %v10907
    %v11654 = vadd.f32 %v11653, %v10909
    %v11655 = vadd.f32 %v11654, %v10911
    %v11656 = vadd.f32 %v11655, %v10913
    %v11657 = vadd.f32 %v11656, %v10915
    %v11658 = vadd.f32 %v11657, %v10917
    %v11659 = vadd.f32 %v11658, %v10919
    %v11660 = vadd.f32 %v11659, %v10921
    %v11661 = vadd.f32 %v11660, %v10923
    %v11662 = vadd.f32 %v11661, %v10925
    %v11663 = vadd.f32 %v11662, %v10927
    %v11664 = vadd.f32 %v11663, %v10929
    %v11665 = vadd.f32 %v11664, %v10931
    %v11666 = vadd.f32 %v11665, %v10933
    %v11667 = vadd.f32 %v11666, %v10935
    %v11668 = vadd.f32 %v11667, %v10937
    %v11669 = vadd.f32 %v11668, %v10939
    %v11670 = vadd.f32 %v11669, %v10941
    %v11671 = vadd.f32 %v11670, %v10943
    %v11672 = vadd.f32 %v11671, %v10945
    %v11673 = vadd.f32 %v11672, %v10947
    %v11674 = vadd.f32 %v11673, %v10949
    %v11675 = vadd.f32 %v11674, %v10951
    %v11676 = vadd.f32 %v11675, %v10953
    %v11677 = vadd.f32 %v11676, %v10955
    %v11678 = vadd.f32 %v11677, %v10957
    %v11679 = vadd.f32 %v11678, %v10959
    %v11680 = vadd.f32 %v11679, %v10961
    %v11681 = vadd.f32 %v11680, %v10963
    %v11682 = vadd.f32 %v11681, %v10965
    %v11683 = vadd.f32 %v11682, %v10967
    %v11684 = vadd.f32 %v11683, %v10969
    %v11685 = vadd.f32 %v11684, %v10971
    %v11686 = vadd.f32 %v11685, %v10973
    %v11687 = vadd.f32 %v11686, %v10975
    %v11688 = vadd.f32 %v11687, %v10977
    %v11689 = vadd.f32 %v11688, %v10979
    %v11690 = vadd.f32 %v11689, %v10981
    %v11691 = vadd.f32 %v11690, %v10983
    %v11692 = vadd.f32 %v11691, %v10985
    %v11693 = vadd.f32 %v11692, %v10987
    %v11694 = vadd.f32 %v11693, %v10989
    %v11695 = vadd.f32 %v11694, %v10991
    %v11696 = vadd.f32 %v11695, %v10993
    %v11697 = vadd.f32 %v11696, %v10995
    %v11698 = vadd.f32 %v11697, %v10997
    %v11699 = vadd.f32 %v11698, %v10999
    %v11700 = vadd.f32 %v11699, %v11001
    %v11701 = vadd.f32 %v11700, %v11003
    %v11702 = vadd.f32 %v11701, %v11005
    %v11703 = vadd.f32 %v11702, %v11007
    %v11704 = vadd.f32 %v11703, %v11009
    %v11705 = vadd.f32 %v11704, %v11011
    %v11706 = vadd.f32 %v11705, %v11013
    %v11707 = vadd.f32 %v11706, %v11015
    %v11708 = vadd.f32 %v11707, %v11017
    %v11709 = vadd.f32 %v11708, %v11019
    %v11710 = vadd.f32 %v11709, %v11021
    %v11711 = vadd.f32 %v11710, %v11023
    %v11712 = vadd.f32 %v11711, %v11025
    %v11713 = vadd.f32 %v11712, %v11027
    %v11714 = vadd.f32 %v11713, %v11029
    %v11715 = vadd.f32 %v11714, %v11031
    %v11716 = vadd.f32 %v11715, %v11033
    %v11717 = vadd.f32 %v11716, %v11035
    %v11718 = vadd.f32 %v11717, %v11037
    %v11719 = vadd.f32 %v11718, %v11039
    %v11720 = vadd.f32 %v11719, %v11041
    %v11721 = vadd.f32 %v11720, %v11043
    %v11722 = vadd.f32 %v11721, %v11045
    %v11723 = vadd.f32 %v11722, %v11047
    %v11724 = vadd.f32 %v11723, %v11049
    %v11725 = vadd.f32 %v11724, %v11051
    %v11726 = vadd.f32 %v11725, %v11053
    %v11727 = vadd.f32 %v11726, %v11055
    %v11728 = vadd.f32 %v11727, %v11057
    %v11729 = vadd.f32 %v11728, %v11059
    %v11730 = vadd.f32 %v11729, %v11061
    %v11731 = vadd.f32 %v11730, %v11063
    %v11732 = vadd.f32 %v11731, %v11065
    %v11733 = vadd.f32 %v11732, %v11067
    %v11734 = vadd.f32 %v11733, %v11069
    %v11735 = vadd.f32 %v11734, %v11071
    %v11736 = vadd.f32 %v11735, %v11073
    %v11737 = vadd.f32 %v11736, %v11075
    %v11738 = vadd.f32 %v11737, %v11077
    %v11739 = vadd.f32 %v11738, %v11079
    %v11740 = vadd.f32 %v11739, %v11081
    %v11741 = vadd.f32 %v11740, %v11083
    %v11742 = vadd.f32 %v11741, %v11085
    %v11743 = vadd.f32 %v11742, %v11087
    %v11744 = vadd.f32 %v11743, %v11089
    %v11745 = vadd.f32 %v11744, %v11091
    %v11746 = vadd.f32 %v11745, %v11093
    %v11747 = vadd.f32 %v11746, %v11095
    %v11748 = vadd.f32 %v11747, %v11097
    %v11749 = vadd.f32 %v11748, %v11099
    %v11750 = vadd.f32 %v11749, %v11101
    %v11751 = vadd.f32 %v11750, %v11103
    %v11752 = vadd.f32 %v11751, %v11105
    %v11753 = vadd.f32 %v11752, %v11107
    %v11754 = vadd.f32 %v11753, %v11109
    %v11755 = vadd.f32 %v11754, %v11111
    %v11756 = vadd.f32 %v11755, %v11113
    %v11757 = vadd.f32 %v11756, %v11115
    %v11758 = vadd.f32 %v11757, %v11117
    %v11759 = vadd.f32 %v11758, %v11119
    %v11760 = vadd.f32 %v11759, %v11121
    %v11761 = vadd.f32 %v11760, %v11123
    %v11762 = vadd.f32 %v11761, %v11125
    %v11763 = vadd.f32 %v11762, %v11127
    %v11764 = vadd.f32 %v11763, %v11129
    %v11765 = vadd.f32 %v11764, %v11131
    %v11766 = vadd.f32 %v11765, %v11133
    %v11767 = vadd.f32 %v11766, %v11135
    %v11768 = vadd.f32 %v11767, %v11137
    %v11769 = vadd.f32 %v11768, %v11139
    %v11770 = vadd.f32 %v11769, %v11141
    %v11771 = vadd.f32 %v11770, %v11143
    %v11772 = vadd.f32 %v11771, %v11145
    %v11773 = vadd.f32 %v11772, %v11147
    %v11774 = vadd.f32 %v11773, %v11149
    %v11775 = vadd.f32 %v11774, %v11151
    %v11776 = vadd.f32 %v11775, %v11153
    %v11777 = vadd.f32 %v11776, %v11155
    %v11778 = vadd.f32 %v11777, %v11157
    %v11779 = vadd.f32 %v11778, %v11159
    %v11780 = vadd.f32 %v11779, %v11161
    %v11781 = vadd.f32 %v11780, %v11163
    %v11782 = vadd.f32 %v11781, %v11165
    %v11783 = vadd.f32 %v11782, %v11167
    %v11784 = vadd.f32 %v11783, %v11169
    %v11785 = vadd.f32 %v11784, %v11171
    %v11786 = vadd.f32 %v11785, %v11173
    %v11787 = vadd.f32 %v11786, %v11175
    %v11788 = vadd.f32 %v11787, %v11177
    %v11789 = vadd.f32 %v11788, %v11179
    %v11790 = vadd.f32 %v11789, %v11181
    %v11791 = vadd.f32 %v11790, %v11183
    %v11792 = vadd.f32 %v11791, %v11185
    %v11793 = vadd.f32 %v11792, %v11187
    %v11794 = vadd.f32 %v11793, %v11189
    %v11795 = vadd.f32 %v11794, %v11191
    %v11796 = vadd.f32 %v11795, %v11193
    %v11797 = vadd.f32 %v11796, %v11195
    %v11798 = vadd.f32 %v11797, %v11197
    %v11799 = vadd.f32 %v11798, %v11199
    %v11800 = vadd.f32 %v11799, %v11201
    %v11801 = vadd.f32 %v11800, %v11203
    %v11802 = vadd.f32 %v11801, %v11205
    %v11803 = vadd.f32 %v11802, %v11207
    %v11804 = vadd.f32 %v11803, %v11209
    %v11805 = vadd.f32 %v11804, %v11211
    %v11806 = vadd.f32 %v11805, %v11213
    %v11807 = vadd.f32 %v11806, %v11215
    %v11808 = vadd.f32 %v11807, %v11217
    %v11809 = vadd.f32 %v11808, %v11219
    %v11810 = vadd.f32 %v11809, %v11221
    %v11811 = vadd.f32 %v11810, %v11223
    %v11812 = vadd.f32 %v11811, %v11225
    %v11813 = vadd.f32 %v11812, %v11227
    %v11814 = vadd.f32 %v11813, %v11229
    %v11815 = vadd.f32 %v11814, %v11231
    %v11816 = vadd.f32 %v11815, %v11233
    %v11817 = vadd.f32 %v11816, %v11235
    %v11818 = vadd.f32 %v11817, %v11237
    %v11819 = vadd.f32 %v11818, %v11239
    %v11820 = vadd.f32 %v11819, %v11241
    %v11821 = vadd.f32 %v11820, %v11243
    %v11822 = vadd.f32 %v11821, %v11245
    %v11823 = vadd.f32 %v11822, %v11247
    %v11824 = vadd.f32 %v11823, %v11249
    %v11825 = vadd.f32 %v11824, %v11251
    %v11826 = vadd.f32 %v11825, %v11253
    %v11827 = vadd.f32 %v11826, %v11255
    %v11828 = vadd.f32 %v11827, %v11257
    %v11829 = vadd.f32 %v11828, %v11259
    %v11830 = vadd.f32 %v11829, %v11261
    %v11831 = vadd.f32 %v11830, %v11263
    %v11832 = vadd.f32 %v11831, %v11265
    %v11833 = vadd.f32 %v11832, %v11267
    %v11834 = vadd.f32 %v11833, %v11269
    %v11835 = vadd.f32 %v11834, %v11271
    %v11836 = vadd.f32 %v11835, %v11273
    %v11837 = vadd.f32 %v11836, %v11275
    %v11838 = vadd.f32 %v11837, %v11277
    %v11839 = vadd.f32 %v11838, %v11279
    %v11840 = vadd.f32 %v11839, %v11281
    %v11841 = vadd.f32 %v11840, %v11283
    %v11842 = vadd.f32 %v11841, %v11285
    %v11843 = vadd.f32 %v11842, %v11287
    %v11844 = vadd.f32 %v11843, %v11289
    %v11845 = vadd.f32 %v11844, %v11291
    %v11846 = vadd.f32 %v11845, %v11293
    %v11847 = vadd.f32 %v11846, %v11295
    %v11848 = vadd.f32 %v11847, %v11297
    %v11849 = vadd.f32 %v11848, %v11299
    %v11850 = vadd.f32 %v11849, %v11301
    %v11851 = vadd.f32 %v11850, %v11303
    %v11852 = vadd.f32 %v11851, %v11305
    %v11853 = vadd.f32 %v11852, %v11307
    %v11854 = vadd.f32 %v11853, %v11309
    %v11855 = vadd.f32 %v11854, %v11311
    %v11856 = vadd.f32 %v11855, %v11313
    %v11857 = vadd.f32 %v11856, %v11315
    %v11858 = vadd.f32 %v11857, %v11317
    %v11859 = vadd.f32 %v11858, %v11319
    %v11860 = vadd.f32 %v11859, %v11321
    %v11861 = vadd.f32 %v11860, %v11323
    %v11862 = vadd.f32 %v11861, %v11325
    %v11863 = vadd.f32 %v11862, %v11327
    %v11864 = vadd.f32 %v11863, %v11329
    %v11865 = vadd.f32 %v11864, %v11331
    %v11866 = vadd.f32 %v11865, %v11333
    %v11867 = vadd.f32 %v11866, %v11335
    %v11868 = vadd.f32 %v11867, %v11337
    %v11869 = vadd.f32 %v11868, %v11339
    %v11870 = vadd.f32 %v11869, %v11341
    %v11871 = vadd.f32 %v11870, %v11343
    %v11872 = vadd.f32 %v11871, %v11345
    %v11873 = vadd.f32 %v11872, %v11347
    %v11874 = vadd.f32 %v11873, %v11349
    %v11875 = vadd.f32 %v11874, %v11351
    %v11876 = vadd.f32 %v11875, %v11353
    %v11877 = vadd.f32 %v11876, %v11355
    %v11878 = vadd.f32 %v11877, %v11357
    %v11879 = vadd.f32 %v11878, %v11359
    %v11880 = vadd.f32 %v11879, %v11361
    %v11881 = vadd.f32 %v11880, %v11363
    %v11882 = vadd.f32 %v11881, %v11365
    %v11883 = vadd.f32 %v11882, %v11367
    %v11884 = vadd.f32 %v11883, %v11369
    %v11885 = vadd.f32 %v11884, %v11371
    %v11886 = vadd.f32 %v11885, %v11373
    %v11887 = vadd.f32 %v11886, %v11375
    %v11888 = vadd.f32 %v11887, %v11377
    %v11889 = vadd.f32 %v11888, %v11379
    %v11890 = vadd.f32 %v11889, %v11381
    %v11891 = vadd.f32 %v11890, %v11383
    %v11892 = vadd.f32 %v11891, %v11385
    %v11893 = vadd.f32 %v11892, %v11387
    %v11894 = vadd.f32 %v11893, %v11389
    %v11895 = vadd.f32 %v11894, %v11391
    %v11896 = vadd.f32 %v11895, %v11393
    %v11897 = vadd.f32 %v11896, %v11395
    %v11898 = vadd.f32 %v11897, %v11397
    %v11899 = vadd.f32 %v11898, %v11399
    %v11900 = vadd.f32 %v11899, %v11401
    %v11901 = vadd.f32 %v11900, %v11403
    %v11902 = vadd.f32 %v11901, %v11405
    %v11903 = vadd.f32 %v11902, %v11407
    %v11904 = vadd.f32 %v11903, %v11409
    %v11905 = vadd.f32 %v11904, %v11411
    %v11906 = vadd.f32 %v11905, %v11413
    %v11907 = vadd.f32 %v11906, %v11415
    %v11908 = vadd.f32 %v11907, %v11417
    %v11909 = vadd.f32 %v11908, %v11419
    %v11910 = vadd.f32 %v11909, %v11421
    %v11911 = vadd.f32 %v11910, %v11423
    %v11912 = vadd.f32 %v11911, %v11425
    %v11913 = vadd.f32 %v11912, %v11427
    %v11914 = vadd.f32 %v11913, %v11429
    %v11915 = vadd.f32 %v11914, %v11431
    %v11916 = vadd.f32 %v11915, %v11433
    %v11917 = vadd.f32 %v11916, %v11435
    %v11918 = vadd.f32 %v11917, %v11437
    %v11919 = vadd.f32 %v11918, %v11439
    %v11920 = vadd.f32 %v11919, %v11441
    %v11921 = vadd.f32 %v11920, %v11443
    %v11922 = vadd.f32 %v11921, %v11445
    %v11923 = vadd.f32 %v11922, %v11447
    %v11924 = vadd.f32 %v11923, %v11449
    %v11925 = vadd.f32 %v11924, %v11451
    %v11926 = vadd.f32 %v11925, %v11453
    %v11927 = vadd.f32 %v11926, %v11455
    %v11928 = vadd.f32 %v11927, %v11457
    %v11929 = vadd.f32 %v11928, %v11459
    %v11930 = vadd.f32 %v11929, %v11461
    %v11931 = vadd.f32 %v11930, %v11463
    %v11932 = vadd.f32 %v11931, %v11465
    %v11933 = vadd.f32 %v11932, %v11467
    %v11934 = vadd.f32 %v11933, %v11469
    %v11935 = vadd.f32 %v11934, %v11471
    %v11936 = vadd.f32 %v11935, %v11473
    %v11937 = vadd.f32 %v11936, %v11475
    %v11938 = vadd.f32 %v11937, %v11477
    %v11939 = vadd.f32 %v11938, %v11479
    %v11940 = vadd.f32 %v11939, %v11481
    %v11941 = vadd.f32 %v11940, %v11483
    %v11942 = vadd.f32 %v11941, %v11485
    %v11943 = vadd.f32 %v11942, %v11487
    %v11944 = vadd.f32 %v11943, %v11489
    %v11945 = vadd.f32 %v11944, %v11491
    %v11946 = vadd.f32 %v11945, %v11493
    %v11947 = vadd.f32 %v11946, %v11495
    %v11948 = vadd.f32 %v11947, %v11497
    %v11949 = vadd.f32 %v11948, %v11499
    %v11950 = vadd.f32 %v11949, %v11501
    %v11951 = vadd.f32 %v11950, %v11503
    %v11952 = vadd.f32 %v11951, %v11505
    %v11953 = vadd.f32 %v11952, %v11507
    %v11954 = vadd.f32 %v11953, %v11509
    %v11955 = vadd.f32 %v11954, %v11511
    %v11956 = vadd.f32 %v11955, %v11513
    %v11957 = vadd.f32 %v11956, %v11515
    %v11958 = vadd.f32 %v11957, %v11517
    %v11959 = vadd.f32 %v11958, %v11519
    %v11960 = vadd.f32 %v11959, %v11521
    %v11961 = vadd.f32 %v11960, %v11523
    %v11962 = vadd.f32 %v11961, %v11525
    %v11963 = vadd.f32 %v11962, %v11527
    %v11964 = vadd.f32 %v11963, %v11529
    %v11965 = vadd.f32 %v11964, %v11531
    %v11966 = vadd.f32 %v11965, %v11533
    %v11967 = vadd.f32 %v11966, %v11535
    %v11968 = vadd.f32 %v11967, %v11537
    %v11969 = vadd.f32 %v11968, %v11539
    %v11970 = vadd.f32 %v11969, %v11541
    %v11971 = vadd.f32 %v11970, %v11543
    %v11972 = vadd.f32 %v11971, %v11545
    %v11973 = vadd.f32 %v11972, %v11547
    %v11974 = vadd.f32 %v11973, %v11549
    %v11975 = vadd.f32 %v11974, %v11551
    %v11976 = vadd.f32 %v11975, %v11553
    %v11977 = vadd.f32 %v11976, %v11555
    %v11978 = vadd.f32 %v11977, %v11557
    %v11979 = vadd.f32 %v11978, %v11559
    %v11980 = vadd.f32 %v11979, %v11561
    %v11981 = vadd.f32 %v11980, %v11563
    %v11982 = vadd.f32 %v11981, %v11565
    %v11983 = vadd.f32 %v11982, %v11567
    %v11984 = vadd.f32 %v11983, %v11569
    %v11985 = vadd.f32 %v11984, %v11571
    %v11986 = vadd.f32 %v11985, %v11573
    %v11987 = vadd.f32 %v11986, %v11575
    %v11988 = vadd.f32 %v11987, %v11577
    %v11989 = vadd.f32 %v11988, %v11579
    %v11990 = vadd.f32 %v11989, %v11581
    %v11991 = vadd.f32 %v11990, %v11583
    %v11992 = vadd.f32 %v11991, %v11585
    %v11993 = vadd.f32 %v11992, %v11587
    %v11994 = vadd.f32 %v11993, %v11589
    %v11995 = vadd.f32 %v11994, %v11591
    %v11996 = vadd.f32 %v11995, %v11593
    %v11997 = vadd.f32 %v11996, %v11595
    %v11998 = vadd.f32 %v11997, %v11597
    %v11999 = vadd.f32 %v11998, %v11599
    %v12000 = vadd.f32 %v11999, %v11601
    %v12001 = vadd.f32 %v12000, %v11603
    %v12002 = vadd.f32 %v12001, %v11605
    %v12003 = vadd.f32 %v12002, %v11607
    %v12004 = vadd.f32 %v12003, %v11609
    %v12005 = vadd.f32 %v12004, %v11611
    %v12006 = vadd.f32 %v12005, %v11613
    %v12007 = vadd.f32 %v12006, %v11615
    %v12008 = vadd.f32 %v12007, %v11617
    %v12009 = vsel %vm2395, %v11619, 0.0
    %v12010 = vadd.f32 %v12008, %v12009
    %12011 = vadd.xlane.f32.xlu0 %v12010
    %v12012 = vpop.xlane.xlu0 %12011
    %v12013 = vlog2.pop %v12012
    %v12014 = vmul.f32 %v12013, 0.6931472
    %v12015 = vadd.f32 %v10446, %v12014
    %v12016 = vsub.f32 %v9272, %v12015
    %v12017 = vsub.f32 %v9273, %v12015
    %v12018 = vsub.f32 %v9274, %v12015
    %v12019 = vsub.f32 %v9275, %v12015
    %v12020 = vsub.f32 %v9276, %v12015
    %v12021 = vsub.f32 %v9277, %v12015
    %v12022 = vsub.f32 %v9278, %v12015
    %v12023 = vsub.f32 %v9279, %v12015
    %v12024 = vsub.f32 %v9280, %v12015
    %v12025 = vsub.f32 %v9281, %v12015
    %v12026 = vsub.f32 %v9282, %v12015
    %v12027 = vsub.f32 %v9283, %v12015
    %v12028 = vsub.f32 %v9284, %v12015
    %v12029 = vsub.f32 %v9285, %v12015
    %v12030 = vsub.f32 %v9286, %v12015
    %v12031 = vsub.f32 %v9287, %v12015
    %v12032 = vsub.f32 %v9288, %v12015
    %v12033 = vsub.f32 %v9289, %v12015
    %v12034 = vsub.f32 %v9290, %v12015
    %v12035 = vsub.f32 %v9291, %v12015
    %v12036 = vsub.f32 %v9292, %v12015
    %v12037 = vsub.f32 %v9293, %v12015
    %v12038 = vsub.f32 %v9294, %v12015
    %v12039 = vsub.f32 %v9295, %v12015
    %v12040 = vsub.f32 %v9296, %v12015
    %v12041 = vsub.f32 %v9297, %v12015
    %v12042 = vsub.f32 %v9298, %v12015
    %v12043 = vsub.f32 %v9299, %v12015
    %v12044 = vsub.f32 %v9300, %v12015
    %v12045 = vsub.f32 %v9301, %v12015
    %v12046 = vsub.f32 %v9302, %v12015
    %v12047 = vsub.f32 %v9303, %v12015
    %v12048 = vsub.f32 %v9304, %v12015
    %v12049 = vsub.f32 %v9305, %v12015
    %v12050 = vsub.f32 %v9306, %v12015
    %v12051 = vsub.f32 %v9307, %v12015
    %v12052 = vsub.f32 %v9308, %v12015
    %v12053 = vsub.f32 %v9309, %v12015
    %v12054 = vsub.f32 %v9310, %v12015
    %v12055 = vsub.f32 %v9311, %v12015
    %v12056 = vsub.f32 %v9312, %v12015
    %v12057 = vsub.f32 %v9313, %v12015
    %v12058 = vsub.f32 %v9314, %v12015
    %v12059 = vsub.f32 %v9315, %v12015
    %v12060 = vsub.f32 %v9316, %v12015
    %v12061 = vsub.f32 %v9317, %v12015
    %v12062 = vsub.f32 %v9318, %v12015
    %v12063 = vsub.f32 %v9319, %v12015
    %v12064 = vsub.f32 %v9320, %v12015
    %v12065 = vsub.f32 %v9321, %v12015
    %v12066 = vsub.f32 %v9322, %v12015
    %v12067 = vsub.f32 %v9323, %v12015
    %v12068 = vsub.f32 %v9324, %v12015
    %v12069 = vsub.f32 %v9325, %v12015
    %v12070 = vsub.f32 %v9326, %v12015
    %v12071 = vsub.f32 %v9327, %v12015
    %v12072 = vsub.f32 %v9328, %v12015
    %v12073 = vsub.f32 %v9329, %v12015
    %v12074 = vsub.f32 %v9330, %v12015
    %v12075 = vsub.f32 %v9331, %v12015
    %v12076 = vsub.f32 %v9332, %v12015
    %v12077 = vsub.f32 %v9333, %v12015
    %v12078 = vsub.f32 %v9334, %v12015
    %v12079 = vsub.f32 %v9335, %v12015
    %v12080 = vsub.f32 %v9336, %v12015
    %v12081 = vsub.f32 %v9337, %v12015
    %v12082 = vsub.f32 %v9338, %v12015
    %v12083 = vsub.f32 %v9339, %v12015
    %v12084 = vsub.f32 %v9340, %v12015
    %v12085 = vsub.f32 %v9341, %v12015
    %v12086 = vsub.f32 %v9342, %v12015
    %v12087 = vsub.f32 %v9343, %v12015
    %v12088 = vsub.f32 %v9344, %v12015
    %v12089 = vsub.f32 %v9345, %v12015
    %v12090 = vsub.f32 %v9346, %v12015
    %v12091 = vsub.f32 %v9347, %v12015
    %v12092 = vsub.f32 %v9348, %v12015
    %v12093 = vsub.f32 %v9349, %v12015
    %v12094 = vsub.f32 %v9350, %v12015
    %v12095 = vsub.f32 %v9351, %v12015
    %v12096 = vsub.f32 %v9352, %v12015
    %v12097 = vsub.f32 %v9353, %v12015
    %v12098 = vsub.f32 %v9354, %v12015
    %v12099 = vsub.f32 %v9355, %v12015
    %v12100 = vsub.f32 %v9356, %v12015
    %v12101 = vsub.f32 %v9357, %v12015
    %v12102 = vsub.f32 %v9358, %v12015
    %v12103 = vsub.f32 %v9359, %v12015
    %v12104 = vsub.f32 %v9360, %v12015
    %v12105 = vsub.f32 %v9361, %v12015
    %v12106 = vsub.f32 %v9362, %v12015
    %v12107 = vsub.f32 %v9363, %v12015
    %v12108 = vsub.f32 %v9364, %v12015
    %v12109 = vsub.f32 %v9365, %v12015
    %v12110 = vsub.f32 %v9366, %v12015
    %v12111 = vsub.f32 %v9367, %v12015
    %v12112 = vsub.f32 %v9368, %v12015
    %v12113 = vsub.f32 %v9369, %v12015
    %v12114 = vsub.f32 %v9370, %v12015
    %v12115 = vsub.f32 %v9371, %v12015
    %v12116 = vsub.f32 %v9372, %v12015
    %v12117 = vsub.f32 %v9373, %v12015
    %v12118 = vsub.f32 %v9374, %v12015
    %v12119 = vsub.f32 %v9375, %v12015
    %v12120 = vsub.f32 %v9376, %v12015
    %v12121 = vsub.f32 %v9377, %v12015
    %v12122 = vsub.f32 %v9378, %v12015
    %v12123 = vsub.f32 %v9379, %v12015
    %v12124 = vsub.f32 %v9380, %v12015
    %v12125 = vsub.f32 %v9381, %v12015
    %v12126 = vsub.f32 %v9382, %v12015
    %v12127 = vsub.f32 %v9383, %v12015
    %v12128 = vsub.f32 %v9384, %v12015
    %v12129 = vsub.f32 %v9385, %v12015
    %v12130 = vsub.f32 %v9386, %v12015
    %v12131 = vsub.f32 %v9387, %v12015
    %v12132 = vsub.f32 %v9388, %v12015
    %v12133 = vsub.f32 %v9389, %v12015
    %v12134 = vsub.f32 %v9390, %v12015
    %v12135 = vsub.f32 %v9391, %v12015
    %v12136 = vsub.f32 %v9392, %v12015
    %v12137 = vsub.f32 %v9393, %v12015
    %v12138 = vsub.f32 %v9394, %v12015
    %v12139 = vsub.f32 %v9395, %v12015
    %v12140 = vsub.f32 %v9396, %v12015
    %v12141 = vsub.f32 %v9397, %v12015
    %v12142 = vsub.f32 %v9398, %v12015
    %v12143 = vsub.f32 %v9399, %v12015
    %v12144 = vsub.f32 %v9400, %v12015
    %v12145 = vsub.f32 %v9401, %v12015
    %v12146 = vsub.f32 %v9402, %v12015
    %v12147 = vsub.f32 %v9403, %v12015
    %v12148 = vsub.f32 %v9404, %v12015
    %v12149 = vsub.f32 %v9405, %v12015
    %v12150 = vsub.f32 %v9406, %v12015
    %v12151 = vsub.f32 %v9407, %v12015
    %v12152 = vsub.f32 %v9408, %v12015
    %v12153 = vsub.f32 %v9409, %v12015
    %v12154 = vsub.f32 %v9410, %v12015
    %v12155 = vsub.f32 %v9411, %v12015
    %v12156 = vsub.f32 %v9412, %v12015
    %v12157 = vsub.f32 %v9413, %v12015
    %v12158 = vsub.f32 %v9414, %v12015
    %v12159 = vsub.f32 %v9415, %v12015
    %v12160 = vsub.f32 %v9416, %v12015
    %v12161 = vsub.f32 %v9417, %v12015
    %v12162 = vsub.f32 %v9418, %v12015
    %v12163 = vsub.f32 %v9419, %v12015
    %v12164 = vsub.f32 %v9420, %v12015
    %v12165 = vsub.f32 %v9421, %v12015
    %v12166 = vsub.f32 %v9422, %v12015
    %v12167 = vsub.f32 %v9423, %v12015
    %v12168 = vsub.f32 %v9424, %v12015
    %v12169 = vsub.f32 %v9425, %v12015
    %v12170 = vsub.f32 %v9426, %v12015
    %v12171 = vsub.f32 %v9427, %v12015
    %v12172 = vsub.f32 %v9428, %v12015
    %v12173 = vsub.f32 %v9429, %v12015
    %v12174 = vsub.f32 %v9430, %v12015
    %v12175 = vsub.f32 %v9431, %v12015
    %v12176 = vsub.f32 %v9432, %v12015
    %v12177 = vsub.f32 %v9433, %v12015
    %v12178 = vsub.f32 %v9434, %v12015
    %v12179 = vsub.f32 %v9435, %v12015
    %v12180 = vsub.f32 %v9436, %v12015
    %v12181 = vsub.f32 %v9437, %v12015
    %v12182 = vsub.f32 %v9438, %v12015
    %v12183 = vsub.f32 %v9439, %v12015
    %v12184 = vsub.f32 %v9440, %v12015
    %v12185 = vsub.f32 %v9441, %v12015
    %v12186 = vsub.f32 %v9442, %v12015
    %v12187 = vsub.f32 %v9443, %v12015
    %v12188 = vsub.f32 %v9444, %v12015
    %v12189 = vsub.f32 %v9445, %v12015
    %v12190 = vsub.f32 %v9446, %v12015
    %v12191 = vsub.f32 %v9447, %v12015
    %v12192 = vsub.f32 %v9448, %v12015
    %v12193 = vsub.f32 %v9449, %v12015
    %v12194 = vsub.f32 %v9450, %v12015
    %v12195 = vsub.f32 %v9451, %v12015
    %v12196 = vsub.f32 %v9452, %v12015
    %v12197 = vsub.f32 %v9453, %v12015
    %v12198 = vsub.f32 %v9454, %v12015
    %v12199 = vsub.f32 %v9455, %v12015
    %v12200 = vsub.f32 %v9456, %v12015
    %v12201 = vsub.f32 %v9457, %v12015
    %v12202 = vsub.f32 %v9458, %v12015
    %v12203 = vsub.f32 %v9459, %v12015
    %v12204 = vsub.f32 %v9460, %v12015
    %v12205 = vsub.f32 %v9461, %v12015
    %v12206 = vsub.f32 %v9462, %v12015
    %v12207 = vsub.f32 %v9463, %v12015
    %v12208 = vsub.f32 %v9464, %v12015
    %v12209 = vsub.f32 %v9465, %v12015
    %v12210 = vsub.f32 %v9466, %v12015
    %v12211 = vsub.f32 %v9467, %v12015
    %v12212 = vsub.f32 %v9468, %v12015
    %v12213 = vsub.f32 %v9469, %v12015
    %v12214 = vsub.f32 %v9470, %v12015
    %v12215 = vsub.f32 %v9471, %v12015
    %v12216 = vsub.f32 %v9472, %v12015
    %v12217 = vsub.f32 %v9473, %v12015
    %v12218 = vsub.f32 %v9474, %v12015
    %v12219 = vsub.f32 %v9475, %v12015
    %v12220 = vsub.f32 %v9476, %v12015
    %v12221 = vsub.f32 %v9477, %v12015
    %v12222 = vsub.f32 %v9478, %v12015
    %v12223 = vsub.f32 %v9479, %v12015
    %v12224 = vsub.f32 %v9480, %v12015
    %v12225 = vsub.f32 %v9481, %v12015
    %v12226 = vsub.f32 %v9482, %v12015
    %v12227 = vsub.f32 %v9483, %v12015
    %v12228 = vsub.f32 %v9484, %v12015
    %v12229 = vsub.f32 %v9485, %v12015
    %v12230 = vsub.f32 %v9486, %v12015
    %v12231 = vsub.f32 %v9487, %v12015
    %v12232 = vsub.f32 %v9488, %v12015
    %v12233 = vsub.f32 %v9489, %v12015
    %v12234 = vsub.f32 %v9490, %v12015
    %v12235 = vsub.f32 %v9491, %v12015
    %v12236 = vsub.f32 %v9492, %v12015
    %v12237 = vsub.f32 %v9493, %v12015
    %v12238 = vsub.f32 %v9494, %v12015
    %v12239 = vsub.f32 %v9495, %v12015
    %v12240 = vsub.f32 %v9496, %v12015
    %v12241 = vsub.f32 %v9497, %v12015
    %v12242 = vsub.f32 %v9498, %v12015
    %v12243 = vsub.f32 %v9499, %v12015
    %v12244 = vsub.f32 %v9500, %v12015
    %v12245 = vsub.f32 %v9501, %v12015
    %v12246 = vsub.f32 %v9502, %v12015
    %v12247 = vsub.f32 %v9503, %v12015
    %v12248 = vsub.f32 %v9504, %v12015
    %v12249 = vsub.f32 %v9505, %v12015
    %v12250 = vsub.f32 %v9506, %v12015
    %v12251 = vsub.f32 %v9507, %v12015
    %v12252 = vsub.f32 %v9508, %v12015
    %v12253 = vsub.f32 %v9509, %v12015
    %v12254 = vsub.f32 %v9510, %v12015
    %v12255 = vsub.f32 %v9511, %v12015
    %v12256 = vsub.f32 %v9512, %v12015
    %v12257 = vsub.f32 %v9513, %v12015
    %v12258 = vsub.f32 %v9514, %v12015
    %v12259 = vsub.f32 %v9515, %v12015
    %v12260 = vsub.f32 %v9516, %v12015
    %v12261 = vsub.f32 %v9517, %v12015
    %v12262 = vsub.f32 %v9518, %v12015
    %v12263 = vsub.f32 %v9519, %v12015
    %v12264 = vsub.f32 %v9520, %v12015
    %v12265 = vsub.f32 %v9521, %v12015
    %v12266 = vsub.f32 %v9522, %v12015
    %v12267 = vsub.f32 %v9523, %v12015
    %v12268 = vsub.f32 %v9524, %v12015
    %v12269 = vsub.f32 %v9525, %v12015
    %v12270 = vsub.f32 %v9526, %v12015
    %v12271 = vsub.f32 %v9527, %v12015
    %v12272 = vsub.f32 %v9528, %v12015
    %v12273 = vsub.f32 %v9529, %v12015
    %v12274 = vsub.f32 %v9530, %v12015
    %v12275 = vsub.f32 %v9531, %v12015
    %v12276 = vsub.f32 %v9532, %v12015
    %v12277 = vsub.f32 %v9533, %v12015
    %v12278 = vsub.f32 %v9534, %v12015
    %v12279 = vsub.f32 %v9535, %v12015
    %v12280 = vsub.f32 %v9536, %v12015
    %v12281 = vsub.f32 %v9537, %v12015
    %v12282 = vsub.f32 %v9538, %v12015
    %v12283 = vsub.f32 %v9539, %v12015
    %v12284 = vsub.f32 %v9540, %v12015
    %v12285 = vsub.f32 %v9541, %v12015
    %v12286 = vsub.f32 %v9542, %v12015
    %v12287 = vsub.f32 %v9543, %v12015
    %v12288 = vsub.f32 %v9544, %v12015
    %v12289 = vsub.f32 %v9545, %v12015
    %v12290 = vsub.f32 %v9546, %v12015
    %v12291 = vsub.f32 %v9547, %v12015
    %v12292 = vsub.f32 %v9548, %v12015
    %v12293 = vsub.f32 %v9549, %v12015
    %v12294 = vsub.f32 %v9550, %v12015
    %v12295 = vsub.f32 %v9551, %v12015
    %v12296 = vsub.f32 %v9552, %v12015
    %v12297 = vsub.f32 %v9553, %v12015
    %v12298 = vsub.f32 %v9554, %v12015
    %v12299 = vsub.f32 %v9555, %v12015
    %v12300 = vsub.f32 %v9556, %v12015
    %v12301 = vsub.f32 %v9557, %v12015
    %v12302 = vsub.f32 %v9558, %v12015
    %v12303 = vsub.f32 %v9559, %v12015
    %v12304 = vsub.f32 %v9560, %v12015
    %v12305 = vsub.f32 %v9561, %v12015
    %v12306 = vsub.f32 %v9562, %v12015
    %v12307 = vsub.f32 %v9563, %v12015
    %v12308 = vsub.f32 %v9564, %v12015
    %v12309 = vsub.f32 %v9565, %v12015
    %v12310 = vsub.f32 %v9566, %v12015
    %v12311 = vsub.f32 %v9567, %v12015
    %v12312 = vsub.f32 %v9568, %v12015
    %v12313 = vsub.f32 %v9569, %v12015
    %v12314 = vsub.f32 %v9570, %v12015
    %v12315 = vsub.f32 %v9571, %v12015
    %v12316 = vsub.f32 %v9572, %v12015
    %v12317 = vsub.f32 %v9573, %v12015
    %v12318 = vsub.f32 %v9574, %v12015
    %v12319 = vsub.f32 %v9575, %v12015
    %v12320 = vsub.f32 %v9576, %v12015
    %v12321 = vsub.f32 %v9577, %v12015
    %v12322 = vsub.f32 %v9578, %v12015
    %v12323 = vsub.f32 %v9579, %v12015
    %v12324 = vsub.f32 %v9580, %v12015
    %v12325 = vsub.f32 %v9581, %v12015
    %v12326 = vsub.f32 %v9582, %v12015
    %v12327 = vsub.f32 %v9583, %v12015
    %v12328 = vsub.f32 %v9584, %v12015
    %v12329 = vsub.f32 %v9585, %v12015
    %v12330 = vsub.f32 %v9586, %v12015
    %v12331 = vsub.f32 %v9587, %v12015
    %v12332 = vsub.f32 %v9588, %v12015
    %v12333 = vsub.f32 %v9589, %v12015
    %v12334 = vsub.f32 %v9590, %v12015
    %v12335 = vsub.f32 %v9591, %v12015
    %v12336 = vsub.f32 %v9592, %v12015
    %v12337 = vsub.f32 %v9593, %v12015
    %v12338 = vsub.f32 %v9594, %v12015
    %v12339 = vsub.f32 %v9595, %v12015
    %v12340 = vsub.f32 %v9596, %v12015
    %v12341 = vsub.f32 %v9597, %v12015
    %v12342 = vsub.f32 %v9598, %v12015
    %v12343 = vsub.f32 %v9599, %v12015
    %v12344 = vsub.f32 %v9600, %v12015
    %v12345 = vsub.f32 %v9601, %v12015
    %v12346 = vsub.f32 %v9602, %v12015
    %v12347 = vsub.f32 %v9603, %v12015
    %v12348 = vsub.f32 %v9604, %v12015
    %v12349 = vsub.f32 %v9605, %v12015
    %v12350 = vsub.f32 %v9606, %v12015
    %v12351 = vsub.f32 %v9607, %v12015
    %v12352 = vsub.f32 %v9608, %v12015
    %v12353 = vsub.f32 %v9609, %v12015
    %v12354 = vsub.f32 %v9610, %v12015
    %v12355 = vsub.f32 %v9611, %v12015
    %v12356 = vsub.f32 %v9612, %v12015
    %v12357 = vsub.f32 %v9613, %v12015
    %v12358 = vsub.f32 %v9614, %v12015
    %v12359 = vsub.f32 %v9615, %v12015
    %v12360 = vsub.f32 %v9616, %v12015
    %v12361 = vsub.f32 %v9617, %v12015
    %v12362 = vsub.f32 %v9618, %v12015
    %v12363 = vsub.f32 %v9619, %v12015
    %v12364 = vsub.f32 %v9620, %v12015
    %v12365 = vsub.f32 %v9621, %v12015
    %v12366 = vsub.f32 %v9622, %v12015
    %v12367 = vsub.f32 %v9623, %v12015
    %v12368 = vsub.f32 %v9624, %v12015
    %v12369 = vsub.f32 %v9625, %v12015
    %v12370 = vsub.f32 %v9626, %v12015
    %v12371 = vsub.f32 %v9627, %v12015
    %v12372 = vsub.f32 %v9628, %v12015
    %v12373 = vsub.f32 %v9629, %v12015
    %v12374 = vsub.f32 %v9630, %v12015
    %v12375 = vsub.f32 %v9631, %v12015
    %v12376 = vsub.f32 %v9632, %v12015
    %v12377 = vsub.f32 %v9633, %v12015
    %v12378 = vsub.f32 %v9634, %v12015
    %v12379 = vsub.f32 %v9635, %v12015
    %v12380 = vsub.f32 %v9636, %v12015
    %v12381 = vsub.f32 %v9637, %v12015
    %v12382 = vsub.f32 %v9638, %v12015
    %v12383 = vsub.f32 %v9639, %v12015
    %v12384 = vsub.f32 %v9640, %v12015
    %v12385 = vsub.f32 %v9641, %v12015
    %v12386 = vsub.f32 %v9642, %v12015
    %v12387 = vsub.f32 %v9643, %v12015
    %v12388 = vsub.f32 %v9644, %v12015
    %v12389 = vsub.f32 %v9645, %v12015
    %v12390 = vsub.f32 %v9646, %v12015
    %v12391 = vsub.f32 %v9647, %v12015
    %v12392 = vsub.f32 %v9648, %v12015
    %v12393 = vsub.f32 %v9649, %v12015
    %v12394 = vsub.f32 %v9650, %v12015
    %v12395 = vsub.f32 %v9651, %v12015
    %v12396 = vsub.f32 %v9652, %v12015
    %v12397 = vsub.f32 %v9653, %v12015
    %v12398 = vsub.f32 %v9654, %v12015
    %v12399 = vsub.f32 %v9655, %v12015
    %v12400 = vsub.f32 %v9656, %v12015
    %v12401 = vsub.f32 %v9657, %v12015
    %v12402 = vsub.f32 %v9658, %v12015
    %v12403 = vsub.f32 %v9659, %v12015
    %v12404 = vsub.f32 %v9660, %v12015
    %v12405 = vsub.f32 %v9661, %v12015
    %v12406 = vsub.f32 %v9662, %v12015
    %12407 = vst [vmem:[#allocation8] sm:$0xff] %v12016
    %12408 = vst [vmem:[#allocation8 + $0x8] sm:$0xff] %v12017
    %12409 = vst [vmem:[#allocation8 + $0x10] sm:$0xff] %v12018
    %12410 = vst [vmem:[#allocation8 + $0x18] sm:$0xff] %v12019
    %12411 = vst [vmem:[#allocation8 + $0x20] sm:$0xff] %v12020
    %12412 = vst [vmem:[#allocation8 + $0x28] sm:$0xff] %v12021
    %12413 = vst [vmem:[#allocation8 + $0x30] sm:$0xff] %v12022
    %12414 = vst [vmem:[#allocation8 + $0x38] sm:$0xff] %v12023
    %12415 = vst [vmem:[#allocation8 + $0x40] sm:$0xff] %v12024
    %12416 = vst [vmem:[#allocation8 + $0x48] sm:$0xff] %v12025
    %12417 = vst [vmem:[#allocation8 + $0x50] sm:$0xff] %v12026
    %12418 = vst [vmem:[#allocation8 + $0x58] sm:$0xff] %v12027
    %12419 = vst [vmem:[#allocation8 + $0x60] sm:$0xff] %v12028
    %12420 = vst [vmem:[#allocation8 + $0x68] sm:$0xff] %v12029
    %12421 = vst [vmem:[#allocation8 + $0x70] sm:$0xff] %v12030
    %12422 = vst [vmem:[#allocation8 + $0x78] sm:$0xff] %v12031
    %12423 = vst [vmem:[#allocation8 + $0x80] sm:$0xff] %v12032
    %12424 = vst [vmem:[#allocation8 + $0x88] sm:$0xff] %v12033
    %12425 = vst [vmem:[#allocation8 + $0x90] sm:$0xff] %v12034
    %12426 = vst [vmem:[#allocation8 + $0x98] sm:$0xff] %v12035
    %12427 = vst [vmem:[#allocation8 + $0xa0] sm:$0xff] %v12036
    %12428 = vst [vmem:[#allocation8 + $0xa8] sm:$0xff] %v12037
    %12429 = vst [vmem:[#allocation8 + $0xb0] sm:$0xff] %v12038
    %12430 = vst [vmem:[#allocation8 + $0xb8] sm:$0xff] %v12039
    %12431 = vst [vmem:[#allocation8 + $0xc0] sm:$0xff] %v12040
    %12432 = vst [vmem:[#allocation8 + $0xc8] sm:$0xff] %v12041
    %12433 = vst [vmem:[#allocation8 + $0xd0] sm:$0xff] %v12042
    %12434 = vst [vmem:[#allocation8 + $0xd8] sm:$0xff] %v12043
    %12435 = vst [vmem:[#allocation8 + $0xe0] sm:$0xff] %v12044
    %12436 = vst [vmem:[#allocation8 + $0xe8] sm:$0xff] %v12045
    %12437 = vst [vmem:[#allocation8 + $0xf0] sm:$0xff] %v12046
    %12438 = vst [vmem:[#allocation8 + $0xf8] sm:$0xff] %v12047
    %12439 = vst [vmem:[#allocation8 + $0x100] sm:$0xff] %v12048
    %12440 = vst [vmem:[#allocation8 + $0x108] sm:$0xff] %v12049
    %12441 = vst [vmem:[#allocation8 + $0x110] sm:$0xff] %v12050
    %12442 = vst [vmem:[#allocation8 + $0x118] sm:$0xff] %v12051
    %12443 = vst [vmem:[#allocation8 + $0x120] sm:$0xff] %v12052
    %12444 = vst [vmem:[#allocation8 + $0x128] sm:$0xff] %v12053
    %12445 = vst [vmem:[#allocation8 + $0x130] sm:$0xff] %v12054
    %12446 = vst [vmem:[#allocation8 + $0x138] sm:$0xff] %v12055
    %12447 = vst [vmem:[#allocation8 + $0x140] sm:$0xff] %v12056
    %12448 = vst [vmem:[#allocation8 + $0x148] sm:$0xff] %v12057
    %12449 = vst [vmem:[#allocation8 + $0x150] sm:$0xff] %v12058
    %12450 = vst [vmem:[#allocation8 + $0x158] sm:$0xff] %v12059
    %12451 = vst [vmem:[#allocation8 + $0x160] sm:$0xff] %v12060
    %12452 = vst [vmem:[#allocation8 + $0x168] sm:$0xff] %v12061
    %12453 = vst [vmem:[#allocation8 + $0x170] sm:$0xff] %v12062
    %12454 = vst [vmem:[#allocation8 + $0x178] sm:$0xff] %v12063
    %12455 = vst [vmem:[#allocation8 + $0x180] sm:$0xff] %v12064
    %12456 = vst [vmem:[#allocation8 + $0x188] sm:$0xff] %v12065
    %12457 = vst [vmem:[#allocation8 + $0x190] sm:$0xff] %v12066
    %12458 = vst [vmem:[#allocation8 + $0x198] sm:$0xff] %v12067
    %12459 = vst [vmem:[#allocation8 + $0x1a0] sm:$0xff] %v12068
    %12460 = vst [vmem:[#allocation8 + $0x1a8] sm:$0xff] %v12069
    %12461 = vst [vmem:[#allocation8 + $0x1b0] sm:$0xff] %v12070
    %12462 = vst [vmem:[#allocation8 + $0x1b8] sm:$0xff] %v12071
    %12463 = vst [vmem:[#allocation8 + $0x1c0] sm:$0xff] %v12072
    %12464 = vst [vmem:[#allocation8 + $0x1c8] sm:$0xff] %v12073
    %12465 = vst [vmem:[#allocation8 + $0x1d0] sm:$0xff] %v12074
    %12466 = vst [vmem:[#allocation8 + $0x1d8] sm:$0xff] %v12075
    %12467 = vst [vmem:[#allocation8 + $0x1e0] sm:$0xff] %v12076
    %12468 = vst [vmem:[#allocation8 + $0x1e8] sm:$0xff] %v12077
    %12469 = vst [vmem:[#allocation8 + $0x1f0] sm:$0xff] %v12078
    %12470 = vst [vmem:[#allocation8 + $0x1f8] sm:$0xff] %v12079
    %12471 = vst [vmem:[#allocation8 + $0x200] sm:$0xff] %v12080
    %12472 = vst [vmem:[#allocation8 + $0x208] sm:$0xff] %v12081
    %12473 = vst [vmem:[#allocation8 + $0x210] sm:$0xff] %v12082
    %12474 = vst [vmem:[#allocation8 + $0x218] sm:$0xff] %v12083
    %12475 = vst [vmem:[#allocation8 + $0x220] sm:$0xff] %v12084
    %12476 = vst [vmem:[#allocation8 + $0x228] sm:$0xff] %v12085
    %12477 = vst [vmem:[#allocation8 + $0x230] sm:$0xff] %v12086
    %12478 = vst [vmem:[#allocation8 + $0x238] sm:$0xff] %v12087
    %12479 = vst [vmem:[#allocation8 + $0x240] sm:$0xff] %v12088
    %12480 = vst [vmem:[#allocation8 + $0x248] sm:$0xff] %v12089
    %12481 = vst [vmem:[#allocation8 + $0x250] sm:$0xff] %v12090
    %12482 = vst [vmem:[#allocation8 + $0x258] sm:$0xff] %v12091
    %12483 = vst [vmem:[#allocation8 + $0x260] sm:$0xff] %v12092
    %12484 = vst [vmem:[#allocation8 + $0x268] sm:$0xff] %v12093
    %12485 = vst [vmem:[#allocation8 + $0x270] sm:$0xff] %v12094
    %12486 = vst [vmem:[#allocation8 + $0x278] sm:$0xff] %v12095
    %12487 = vst [vmem:[#allocation8 + $0x280] sm:$0xff] %v12096
    %12488 = vst [vmem:[#allocation8 + $0x288] sm:$0xff] %v12097
    %12489 = vst [vmem:[#allocation8 + $0x290] sm:$0xff] %v12098
    %12490 = vst [vmem:[#allocation8 + $0x298] sm:$0xff] %v12099
    %12491 = vst [vmem:[#allocation8 + $0x2a0] sm:$0xff] %v12100
    %12492 = vst [vmem:[#allocation8 + $0x2a8] sm:$0xff] %v12101
    %12493 = vst [vmem:[#allocation8 + $0x2b0] sm:$0xff] %v12102
    %12494 = vst [vmem:[#allocation8 + $0x2b8] sm:$0xff] %v12103
    %12495 = vst [vmem:[#allocation8 + $0x2c0] sm:$0xff] %v12104
    %12496 = vst [vmem:[#allocation8 + $0x2c8] sm:$0xff] %v12105
    %12497 = vst [vmem:[#allocation8 + $0x2d0] sm:$0xff] %v12106
    %12498 = vst [vmem:[#allocation8 + $0x2d8] sm:$0xff] %v12107
    %12499 = vst [vmem:[#allocation8 + $0x2e0] sm:$0xff] %v12108
    %12500 = vst [vmem:[#allocation8 + $0x2e8] sm:$0xff] %v12109
    %12501 = vst [vmem:[#allocation8 + $0x2f0] sm:$0xff] %v12110
    %12502 = vst [vmem:[#allocation8 + $0x2f8] sm:$0xff] %v12111
    %12503 = vst [vmem:[#allocation8 + $0x300] sm:$0xff] %v12112
    %12504 = vst [vmem:[#allocation8 + $0x308] sm:$0xff] %v12113
    %12505 = vst [vmem:[#allocation8 + $0x310] sm:$0xff] %v12114
    %12506 = vst [vmem:[#allocation8 + $0x318] sm:$0xff] %v12115
    %12507 = vst [vmem:[#allocation8 + $0x320] sm:$0xff] %v12116
    %12508 = vst [vmem:[#allocation8 + $0x328] sm:$0xff] %v12117
    %12509 = vst [vmem:[#allocation8 + $0x330] sm:$0xff] %v12118
    %12510 = vst [vmem:[#allocation8 + $0x338] sm:$0xff] %v12119
    %12511 = vst [vmem:[#allocation8 + $0x340] sm:$0xff] %v12120
    %12512 = vst [vmem:[#allocation8 + $0x348] sm:$0xff] %v12121
    %12513 = vst [vmem:[#allocation8 + $0x350] sm:$0xff] %v12122
    %12514 = vst [vmem:[#allocation8 + $0x358] sm:$0xff] %v12123
    %12515 = vst [vmem:[#allocation8 + $0x360] sm:$0xff] %v12124
    %12516 = vst [vmem:[#allocation8 + $0x368] sm:$0xff] %v12125
    %12517 = vst [vmem:[#allocation8 + $0x370] sm:$0xff] %v12126
    %12518 = vst [vmem:[#allocation8 + $0x378] sm:$0xff] %v12127
    %12519 = vst [vmem:[#allocation8 + $0x380] sm:$0xff] %v12128
    %12520 = vst [vmem:[#allocation8 + $0x388] sm:$0xff] %v12129
    %12521 = vst [vmem:[#allocation8 + $0x390] sm:$0xff] %v12130
    %12522 = vst [vmem:[#allocation8 + $0x398] sm:$0xff] %v12131
    %12523 = vst [vmem:[#allocation8 + $0x3a0] sm:$0xff] %v12132
    %12524 = vst [vmem:[#allocation8 + $0x3a8] sm:$0xff] %v12133
    %12525 = vst [vmem:[#allocation8 + $0x3b0] sm:$0xff] %v12134
    %12526 = vst [vmem:[#allocation8 + $0x3b8] sm:$0xff] %v12135
    %12527 = vst [vmem:[#allocation8 + $0x3c0] sm:$0xff] %v12136
    %12528 = vst [vmem:[#allocation8 + $0x3c8] sm:$0xff] %v12137
    %12529 = vst [vmem:[#allocation8 + $0x3d0] sm:$0xff] %v12138
    %12530 = vst [vmem:[#allocation8 + $0x3d8] sm:$0xff] %v12139
    %12531 = vst [vmem:[#allocation8 + $0x3e0] sm:$0xff] %v12140
    %12532 = vst [vmem:[#allocation8 + $0x3e8] sm:$0xff] %v12141
    %12533 = vst [vmem:[#allocation8 + $0x3f0] sm:$0xff] %v12142
    %12534 = vst [vmem:[#allocation8 + $0x3f8] sm:$0xff] %v12143
    %12535 = vst [vmem:[#allocation8 + $0x400] sm:$0xff] %v12144
    %12536 = vst [vmem:[#allocation8 + $0x408] sm:$0xff] %v12145
    %12537 = vst [vmem:[#allocation8 + $0x410] sm:$0xff] %v12146
    %12538 = vst [vmem:[#allocation8 + $0x418] sm:$0xff] %v12147
    %12539 = vst [vmem:[#allocation8 + $0x420] sm:$0xff] %v12148
    %12540 = vst [vmem:[#allocation8 + $0x428] sm:$0xff] %v12149
    %12541 = vst [vmem:[#allocation8 + $0x430] sm:$0xff] %v12150
    %12542 = vst [vmem:[#allocation8 + $0x438] sm:$0xff] %v12151
    %12543 = vst [vmem:[#allocation8 + $0x440] sm:$0xff] %v12152
    %12544 = vst [vmem:[#allocation8 + $0x448] sm:$0xff] %v12153
    %12545 = vst [vmem:[#allocation8 + $0x450] sm:$0xff] %v12154
    %12546 = vst [vmem:[#allocation8 + $0x458] sm:$0xff] %v12155
    %12547 = vst [vmem:[#allocation8 + $0x460] sm:$0xff] %v12156
    %12548 = vst [vmem:[#allocation8 + $0x468] sm:$0xff] %v12157
    %12549 = vst [vmem:[#allocation8 + $0x470] sm:$0xff] %v12158
    %12550 = vst [vmem:[#allocation8 + $0x478] sm:$0xff] %v12159
    %12551 = vst [vmem:[#allocation8 + $0x480] sm:$0xff] %v12160
    %12552 = vst [vmem:[#allocation8 + $0x488] sm:$0xff] %v12161
    %12553 = vst [vmem:[#allocation8 + $0x490] sm:$0xff] %v12162
    %12554 = vst [vmem:[#allocation8 + $0x498] sm:$0xff] %v12163
    %12555 = vst [vmem:[#allocation8 + $0x4a0] sm:$0xff] %v12164
    %12556 = vst [vmem:[#allocation8 + $0x4a8] sm:$0xff] %v12165
    %12557 = vst [vmem:[#allocation8 + $0x4b0] sm:$0xff] %v12166
    %12558 = vst [vmem:[#allocation8 + $0x4b8] sm:$0xff] %v12167
    %12559 = vst [vmem:[#allocation8 + $0x4c0] sm:$0xff] %v12168
    %12560 = vst [vmem:[#allocation8 + $0x4c8] sm:$0xff] %v12169
    %12561 = vst [vmem:[#allocation8 + $0x4d0] sm:$0xff] %v12170
    %12562 = vst [vmem:[#allocation8 + $0x4d8] sm:$0xff] %v12171
    %12563 = vst [vmem:[#allocation8 + $0x4e0] sm:$0xff] %v12172
    %12564 = vst [vmem:[#allocation8 + $0x4e8] sm:$0xff] %v12173
    %12565 = vst [vmem:[#allocation8 + $0x4f0] sm:$0xff] %v12174
    %12566 = vst [vmem:[#allocation8 + $0x4f8] sm:$0xff] %v12175
    %12567 = vst [vmem:[#allocation8 + $0x500] sm:$0xff] %v12176
    %12568 = vst [vmem:[#allocation8 + $0x508] sm:$0xff] %v12177
    %12569 = vst [vmem:[#allocation8 + $0x510] sm:$0xff] %v12178
    %12570 = vst [vmem:[#allocation8 + $0x518] sm:$0xff] %v12179
    %12571 = vst [vmem:[#allocation8 + $0x520] sm:$0xff] %v12180
    %12572 = vst [vmem:[#allocation8 + $0x528] sm:$0xff] %v12181
    %12573 = vst [vmem:[#allocation8 + $0x530] sm:$0xff] %v12182
    %12574 = vst [vmem:[#allocation8 + $0x538] sm:$0xff] %v12183
    %12575 = vst [vmem:[#allocation8 + $0x540] sm:$0xff] %v12184
    %12576 = vst [vmem:[#allocation8 + $0x548] sm:$0xff] %v12185
    %12577 = vst [vmem:[#allocation8 + $0x550] sm:$0xff] %v12186
    %12578 = vst [vmem:[#allocation8 + $0x558] sm:$0xff] %v12187
    %12579 = vst [vmem:[#allocation8 + $0x560] sm:$0xff] %v12188
    %12580 = vst [vmem:[#allocation8 + $0x568] sm:$0xff] %v12189
    %12581 = vst [vmem:[#allocation8 + $0x570] sm:$0xff] %v12190
    %12582 = vst [vmem:[#allocation8 + $0x578] sm:$0xff] %v12191
    %12583 = vst [vmem:[#allocation8 + $0x580] sm:$0xff] %v12192
    %12584 = vst [vmem:[#allocation8 + $0x588] sm:$0xff] %v12193
    %12585 = vst [vmem:[#allocation8 + $0x590] sm:$0xff] %v12194
    %12586 = vst [vmem:[#allocation8 + $0x598] sm:$0xff] %v12195
    %12587 = vst [vmem:[#allocation8 + $0x5a0] sm:$0xff] %v12196
    %12588 = vst [vmem:[#allocation8 + $0x5a8] sm:$0xff] %v12197
    %12589 = vst [vmem:[#allocation8 + $0x5b0] sm:$0xff] %v12198
    %12590 = vst [vmem:[#allocation8 + $0x5b8] sm:$0xff] %v12199
    %12591 = vst [vmem:[#allocation8 + $0x5c0] sm:$0xff] %v12200
    %12592 = vst [vmem:[#allocation8 + $0x5c8] sm:$0xff] %v12201
    %12593 = vst [vmem:[#allocation8 + $0x5d0] sm:$0xff] %v12202
    %12594 = vst [vmem:[#allocation8 + $0x5d8] sm:$0xff] %v12203
    %12595 = vst [vmem:[#allocation8 + $0x5e0] sm:$0xff] %v12204
    %12596 = vst [vmem:[#allocation8 + $0x5e8] sm:$0xff] %v12205
    %12597 = vst [vmem:[#allocation8 + $0x5f0] sm:$0xff] %v12206
    %12598 = vst [vmem:[#allocation8 + $0x5f8] sm:$0xff] %v12207
    %12599 = vst [vmem:[#allocation8 + $0x600] sm:$0xff] %v12208
    %12600 = vst [vmem:[#allocation8 + $0x608] sm:$0xff] %v12209
    %12601 = vst [vmem:[#allocation8 + $0x610] sm:$0xff] %v12210
    %12602 = vst [vmem:[#allocation8 + $0x618] sm:$0xff] %v12211
    %12603 = vst [vmem:[#allocation8 + $0x620] sm:$0xff] %v12212
    %12604 = vst [vmem:[#allocation8 + $0x628] sm:$0xff] %v12213
    %12605 = vst [vmem:[#allocation8 + $0x630] sm:$0xff] %v12214
    %12606 = vst [vmem:[#allocation8 + $0x638] sm:$0xff] %v12215
    %12607 = vst [vmem:[#allocation8 + $0x640] sm:$0xff] %v12216
    %12608 = vst [vmem:[#allocation8 + $0x648] sm:$0xff] %v12217
    %12609 = vst [vmem:[#allocation8 + $0x650] sm:$0xff] %v12218
    %12610 = vst [vmem:[#allocation8 + $0x658] sm:$0xff] %v12219
    %12611 = vst [vmem:[#allocation8 + $0x660] sm:$0xff] %v12220
    %12612 = vst [vmem:[#allocation8 + $0x668] sm:$0xff] %v12221
    %12613 = vst [vmem:[#allocation8 + $0x670] sm:$0xff] %v12222
    %12614 = vst [vmem:[#allocation8 + $0x678] sm:$0xff] %v12223
    %12615 = vst [vmem:[#allocation8 + $0x680] sm:$0xff] %v12224
    %12616 = vst [vmem:[#allocation8 + $0x688] sm:$0xff] %v12225
    %12617 = vst [vmem:[#allocation8 + $0x690] sm:$0xff] %v12226
    %12618 = vst [vmem:[#allocation8 + $0x698] sm:$0xff] %v12227
    %12619 = vst [vmem:[#allocation8 + $0x6a0] sm:$0xff] %v12228
    %12620 = vst [vmem:[#allocation8 + $0x6a8] sm:$0xff] %v12229
    %12621 = vst [vmem:[#allocation8 + $0x6b0] sm:$0xff] %v12230
    %12622 = vst [vmem:[#allocation8 + $0x6b8] sm:$0xff] %v12231
    %12623 = vst [vmem:[#allocation8 + $0x6c0] sm:$0xff] %v12232
    %12624 = vst [vmem:[#allocation8 + $0x6c8] sm:$0xff] %v12233
    %12625 = vst [vmem:[#allocation8 + $0x6d0] sm:$0xff] %v12234
    %12626 = vst [vmem:[#allocation8 + $0x6d8] sm:$0xff] %v12235
    %12627 = vst [vmem:[#allocation8 + $0x6e0] sm:$0xff] %v12236
    %12628 = vst [vmem:[#allocation8 + $0x6e8] sm:$0xff] %v12237
    %12629 = vst [vmem:[#allocation8 + $0x6f0] sm:$0xff] %v12238
    %12630 = vst [vmem:[#allocation8 + $0x6f8] sm:$0xff] %v12239
    %12631 = vst [vmem:[#allocation8 + $0x700] sm:$0xff] %v12240
    %12632 = vst [vmem:[#allocation8 + $0x708] sm:$0xff] %v12241
    %12633 = vst [vmem:[#allocation8 + $0x710] sm:$0xff] %v12242
    %12634 = vst [vmem:[#allocation8 + $0x718] sm:$0xff] %v12243
    %12635 = vst [vmem:[#allocation8 + $0x720] sm:$0xff] %v12244
    %12636 = vst [vmem:[#allocation8 + $0x728] sm:$0xff] %v12245
    %12637 = vst [vmem:[#allocation8 + $0x730] sm:$0xff] %v12246
    %12638 = vst [vmem:[#allocation8 + $0x738] sm:$0xff] %v12247
    %12639 = vst [vmem:[#allocation8 + $0x740] sm:$0xff] %v12248
    %12640 = vst [vmem:[#allocation8 + $0x748] sm:$0xff] %v12249
    %12641 = vst [vmem:[#allocation8 + $0x750] sm:$0xff] %v12250
    %12642 = vst [vmem:[#allocation8 + $0x758] sm:$0xff] %v12251
    %12643 = vst [vmem:[#allocation8 + $0x760] sm:$0xff] %v12252
    %12644 = vst [vmem:[#allocation8 + $0x768] sm:$0xff] %v12253
    %12645 = vst [vmem:[#allocation8 + $0x770] sm:$0xff] %v12254
    %12646 = vst [vmem:[#allocation8 + $0x778] sm:$0xff] %v12255
    %12647 = vst [vmem:[#allocation8 + $0x780] sm:$0xff] %v12256
    %12648 = vst [vmem:[#allocation8 + $0x788] sm:$0xff] %v12257
    %12649 = vst [vmem:[#allocation8 + $0x790] sm:$0xff] %v12258
    %12650 = vst [vmem:[#allocation8 + $0x798] sm:$0xff] %v12259
    %12651 = vst [vmem:[#allocation8 + $0x7a0] sm:$0xff] %v12260
    %12652 = vst [vmem:[#allocation8 + $0x7a8] sm:$0xff] %v12261
    %12653 = vst [vmem:[#allocation8 + $0x7b0] sm:$0xff] %v12262
    %12654 = vst [vmem:[#allocation8 + $0x7b8] sm:$0xff] %v12263
    %12655 = vst [vmem:[#allocation8 + $0x7c0] sm:$0xff] %v12264
    %12656 = vst [vmem:[#allocation8 + $0x7c8] sm:$0xff] %v12265
    %12657 = vst [vmem:[#allocation8 + $0x7d0] sm:$0xff] %v12266
    %12658 = vst [vmem:[#allocation8 + $0x7d8] sm:$0xff] %v12267
    %12659 = vst [vmem:[#allocation8 + $0x7e0] sm:$0xff] %v12268
    %12660 = vst [vmem:[#allocation8 + $0x7e8] sm:$0xff] %v12269
    %12661 = vst [vmem:[#allocation8 + $0x7f0] sm:$0xff] %v12270
    %12662 = vst [vmem:[#allocation8 + $0x7f8] sm:$0xff] %v12271
    %12663 = vst [vmem:[#allocation8 + $0x800] sm:$0xff] %v12272
    %12664 = vst [vmem:[#allocation8 + $0x808] sm:$0xff] %v12273
    %12665 = vst [vmem:[#allocation8 + $0x810] sm:$0xff] %v12274
    %12666 = vst [vmem:[#allocation8 + $0x818] sm:$0xff] %v12275
    %12667 = vst [vmem:[#allocation8 + $0x820] sm:$0xff] %v12276
    %12668 = vst [vmem:[#allocation8 + $0x828] sm:$0xff] %v12277
    %12669 = vst [vmem:[#allocation8 + $0x830] sm:$0xff] %v12278
    %12670 = vst [vmem:[#allocation8 + $0x838] sm:$0xff] %v12279
    %12671 = vst [vmem:[#allocation8 + $0x840] sm:$0xff] %v12280
    %12672 = vst [vmem:[#allocation8 + $0x848] sm:$0xff] %v12281
    %12673 = vst [vmem:[#allocation8 + $0x850] sm:$0xff] %v12282
    %12674 = vst [vmem:[#allocation8 + $0x858] sm:$0xff] %v12283
    %12675 = vst [vmem:[#allocation8 + $0x860] sm:$0xff] %v12284
    %12676 = vst [vmem:[#allocation8 + $0x868] sm:$0xff] %v12285
    %12677 = vst [vmem:[#allocation8 + $0x870] sm:$0xff] %v12286
    %12678 = vst [vmem:[#allocation8 + $0x878] sm:$0xff] %v12287
    %12679 = vst [vmem:[#allocation8 + $0x880] sm:$0xff] %v12288
    %12680 = vst [vmem:[#allocation8 + $0x888] sm:$0xff] %v12289
    %12681 = vst [vmem:[#allocation8 + $0x890] sm:$0xff] %v12290
    %12682 = vst [vmem:[#allocation8 + $0x898] sm:$0xff] %v12291
    %12683 = vst [vmem:[#allocation8 + $0x8a0] sm:$0xff] %v12292
    %12684 = vst [vmem:[#allocation8 + $0x8a8] sm:$0xff] %v12293
    %12685 = vst [vmem:[#allocation8 + $0x8b0] sm:$0xff] %v12294
    %12686 = vst [vmem:[#allocation8 + $0x8b8] sm:$0xff] %v12295
    %12687 = vst [vmem:[#allocation8 + $0x8c0] sm:$0xff] %v12296
    %12688 = vst [vmem:[#allocation8 + $0x8c8] sm:$0xff] %v12297
    %12689 = vst [vmem:[#allocation8 + $0x8d0] sm:$0xff] %v12298
    %12690 = vst [vmem:[#allocation8 + $0x8d8] sm:$0xff] %v12299
    %12691 = vst [vmem:[#allocation8 + $0x8e0] sm:$0xff] %v12300
    %12692 = vst [vmem:[#allocation8 + $0x8e8] sm:$0xff] %v12301
    %12693 = vst [vmem:[#allocation8 + $0x8f0] sm:$0xff] %v12302
    %12694 = vst [vmem:[#allocation8 + $0x8f8] sm:$0xff] %v12303
    %12695 = vst [vmem:[#allocation8 + $0x900] sm:$0xff] %v12304
    %12696 = vst [vmem:[#allocation8 + $0x908] sm:$0xff] %v12305
    %12697 = vst [vmem:[#allocation8 + $0x910] sm:$0xff] %v12306
    %12698 = vst [vmem:[#allocation8 + $0x918] sm:$0xff] %v12307
    %12699 = vst [vmem:[#allocation8 + $0x920] sm:$0xff] %v12308
    %12700 = vst [vmem:[#allocation8 + $0x928] sm:$0xff] %v12309
    %12701 = vst [vmem:[#allocation8 + $0x930] sm:$0xff] %v12310
    %12702 = vst [vmem:[#allocation8 + $0x938] sm:$0xff] %v12311
    %12703 = vst [vmem:[#allocation8 + $0x940] sm:$0xff] %v12312
    %12704 = vst [vmem:[#allocation8 + $0x948] sm:$0xff] %v12313
    %12705 = vst [vmem:[#allocation8 + $0x950] sm:$0xff] %v12314
    %12706 = vst [vmem:[#allocation8 + $0x958] sm:$0xff] %v12315
    %12707 = vst [vmem:[#allocation8 + $0x960] sm:$0xff] %v12316
    %12708 = vst [vmem:[#allocation8 + $0x968] sm:$0xff] %v12317
    %12709 = vst [vmem:[#allocation8 + $0x970] sm:$0xff] %v12318
    %12710 = vst [vmem:[#allocation8 + $0x978] sm:$0xff] %v12319
    %12711 = vst [vmem:[#allocation8 + $0x980] sm:$0xff] %v12320
    %12712 = vst [vmem:[#allocation8 + $0x988] sm:$0xff] %v12321
    %12713 = vst [vmem:[#allocation8 + $0x990] sm:$0xff] %v12322
    %12714 = vst [vmem:[#allocation8 + $0x998] sm:$0xff] %v12323
    %12715 = vst [vmem:[#allocation8 + $0x9a0] sm:$0xff] %v12324
    %12716 = vst [vmem:[#allocation8 + $0x9a8] sm:$0xff] %v12325
    %12717 = vst [vmem:[#allocation8 + $0x9b0] sm:$0xff] %v12326
    %12718 = vst [vmem:[#allocation8 + $0x9b8] sm:$0xff] %v12327
    %12719 = vst [vmem:[#allocation8 + $0x9c0] sm:$0xff] %v12328
    %12720 = vst [vmem:[#allocation8 + $0x9c8] sm:$0xff] %v12329
    %12721 = vst [vmem:[#allocation8 + $0x9d0] sm:$0xff] %v12330
    %12722 = vst [vmem:[#allocation8 + $0x9d8] sm:$0xff] %v12331
    %12723 = vst [vmem:[#allocation8 + $0x9e0] sm:$0xff] %v12332
    %12724 = vst [vmem:[#allocation8 + $0x9e8] sm:$0xff] %v12333
    %12725 = vst [vmem:[#allocation8 + $0x9f0] sm:$0xff] %v12334
    %12726 = vst [vmem:[#allocation8 + $0x9f8] sm:$0xff] %v12335
    %12727 = vst [vmem:[#allocation8 + $0xa00] sm:$0xff] %v12336
    %12728 = vst [vmem:[#allocation8 + $0xa08] sm:$0xff] %v12337
    %12729 = vst [vmem:[#allocation8 + $0xa10] sm:$0xff] %v12338
    %12730 = vst [vmem:[#allocation8 + $0xa18] sm:$0xff] %v12339
    %12731 = vst [vmem:[#allocation8 + $0xa20] sm:$0xff] %v12340
    %12732 = vst [vmem:[#allocation8 + $0xa28] sm:$0xff] %v12341
    %12733 = vst [vmem:[#allocation8 + $0xa30] sm:$0xff] %v12342
    %12734 = vst [vmem:[#allocation8 + $0xa38] sm:$0xff] %v12343
    %12735 = vst [vmem:[#allocation8 + $0xa40] sm:$0xff] %v12344
    %12736 = vst [vmem:[#allocation8 + $0xa48] sm:$0xff] %v12345
    %12737 = vst [vmem:[#allocation8 + $0xa50] sm:$0xff] %v12346
    %12738 = vst [vmem:[#allocation8 + $0xa58] sm:$0xff] %v12347
    %12739 = vst [vmem:[#allocation8 + $0xa60] sm:$0xff] %v12348
    %12740 = vst [vmem:[#allocation8 + $0xa68] sm:$0xff] %v12349
    %12741 = vst [vmem:[#allocation8 + $0xa70] sm:$0xff] %v12350
    %12742 = vst [vmem:[#allocation8 + $0xa78] sm:$0xff] %v12351
    %12743 = vst [vmem:[#allocation8 + $0xa80] sm:$0xff] %v12352
    %12744 = vst [vmem:[#allocation8 + $0xa88] sm:$0xff] %v12353
    %12745 = vst [vmem:[#allocation8 + $0xa90] sm:$0xff] %v12354
    %12746 = vst [vmem:[#allocation8 + $0xa98] sm:$0xff] %v12355
    %12747 = vst [vmem:[#allocation8 + $0xaa0] sm:$0xff] %v12356
    %12748 = vst [vmem:[#allocation8 + $0xaa8] sm:$0xff] %v12357
    %12749 = vst [vmem:[#allocation8 + $0xab0] sm:$0xff] %v12358
    %12750 = vst [vmem:[#allocation8 + $0xab8] sm:$0xff] %v12359
    %12751 = vst [vmem:[#allocation8 + $0xac0] sm:$0xff] %v12360
    %12752 = vst [vmem:[#allocation8 + $0xac8] sm:$0xff] %v12361
    %12753 = vst [vmem:[#allocation8 + $0xad0] sm:$0xff] %v12362
    %12754 = vst [vmem:[#allocation8 + $0xad8] sm:$0xff] %v12363
    %12755 = vst [vmem:[#allocation8 + $0xae0] sm:$0xff] %v12364
    %12756 = vst [vmem:[#allocation8 + $0xae8] sm:$0xff] %v12365
    %12757 = vst [vmem:[#allocation8 + $0xaf0] sm:$0xff] %v12366
    %12758 = vst [vmem:[#allocation8 + $0xaf8] sm:$0xff] %v12367
    %12759 = vst [vmem:[#allocation8 + $0xb00] sm:$0xff] %v12368
    %12760 = vst [vmem:[#allocation8 + $0xb08] sm:$0xff] %v12369
    %12761 = vst [vmem:[#allocation8 + $0xb10] sm:$0xff] %v12370
    %12762 = vst [vmem:[#allocation8 + $0xb18] sm:$0xff] %v12371
    %12763 = vst [vmem:[#allocation8 + $0xb20] sm:$0xff] %v12372
    %12764 = vst [vmem:[#allocation8 + $0xb28] sm:$0xff] %v12373
    %12765 = vst [vmem:[#allocation8 + $0xb30] sm:$0xff] %v12374
    %12766 = vst [vmem:[#allocation8 + $0xb38] sm:$0xff] %v12375
    %12767 = vst [vmem:[#allocation8 + $0xb40] sm:$0xff] %v12376
    %12768 = vst [vmem:[#allocation8 + $0xb48] sm:$0xff] %v12377
    %12769 = vst [vmem:[#allocation8 + $0xb50] sm:$0xff] %v12378
    %12770 = vst [vmem:[#allocation8 + $0xb58] sm:$0xff] %v12379
    %12771 = vst [vmem:[#allocation8 + $0xb60] sm:$0xff] %v12380
    %12772 = vst [vmem:[#allocation8 + $0xb68] sm:$0xff] %v12381
    %12773 = vst [vmem:[#allocation8 + $0xb70] sm:$0xff] %v12382
    %12774 = vst [vmem:[#allocation8 + $0xb78] sm:$0xff] %v12383
    %12775 = vst [vmem:[#allocation8 + $0xb80] sm:$0xff] %v12384
    %12776 = vst [vmem:[#allocation8 + $0xb88] sm:$0xff] %v12385
    %12777 = vst [vmem:[#allocation8 + $0xb90] sm:$0xff] %v12386
    %12778 = vst [vmem:[#allocation8 + $0xb98] sm:$0xff] %v12387
    %12779 = vst [vmem:[#allocation8 + $0xba0] sm:$0xff] %v12388
    %12780 = vst [vmem:[#allocation8 + $0xba8] sm:$0xff] %v12389
    %12781 = vst [vmem:[#allocation8 + $0xbb0] sm:$0xff] %v12390
    %12782 = vst [vmem:[#allocation8 + $0xbb8] sm:$0xff] %v12391
    %12783 = vst [vmem:[#allocation8 + $0xbc0] sm:$0xff] %v12392
    %12784 = vst [vmem:[#allocation8 + $0xbc8] sm:$0xff] %v12393
    %12785 = vst [vmem:[#allocation8 + $0xbd0] sm:$0xff] %v12394
    %12786 = vst [vmem:[#allocation8 + $0xbd8] sm:$0xff] %v12395
    %12787 = vst [vmem:[#allocation8 + $0xbe0] sm:$0xff] %v12396
    %12788 = vst [vmem:[#allocation8 + $0xbe8] sm:$0xff] %v12397
    %12789 = vst [vmem:[#allocation8 + $0xbf0] sm:$0xff] %v12398
    %12790 = vst [vmem:[#allocation8 + $0xbf8] sm:$0xff] %v12399
    %12791 = vst [vmem:[#allocation8 + $0xc00] sm:$0xff] %v12400
    %12792 = vst [vmem:[#allocation8 + $0xc08] sm:$0xff] %v12401
    %12793 = vst [vmem:[#allocation8 + $0xc10] sm:$0xff] %v12402
    %12794 = vst [vmem:[#allocation8 + $0xc18] sm:$0xff] %v12403
    %12795 = vst [vmem:[#allocation8 + $0xc20] sm:$0xff] %v12404
    %12796 = vst [vmem:[#allocation8 + $0xc28] sm:$0xff] %v12405
    %12797 = vst.msk [vmem:[#allocation8 + $0xc30] sm:$0xff] %vm2395, %v12406
    // Predicated region
    $region26: #{tpu_custom_call.1} parent=1 // pred_check
      _
    $region27: #{tpu_custom_call.1} parent=1 // pred_check_branch
      %12799 = sbr.rel (0) target = $region29
    $region28: #{tpu_custom_call.1} parent=1 // pred_region
      %s12801 = ssub.s32 50048, 50048
      %12802 = vsyncadd [#allocation4], %s12801
      %s12804 = sshll.u32 [#allocation8], 4
      %s12805 = int_to_ptr.vmem [resolvable:$true] %s12804
      %12807 = dma.vmem_to_hbm [thread:$0]  %s12805, 50048, %s3, [#allocation4]
    $region29: #{tpu_custom_call.1} parent=1 // pred_fallthru
      _
    // Predicated region
    $region30: #{tpu_custom_call.1} parent=1 // pred_check
      _
    $region31: #{tpu_custom_call.1} parent=1 // pred_check_branch
      %12809 = sbr.rel (0) target = $region33
    $region32: #{tpu_custom_call.1} parent=1 // pred_region
      %12810 = dma.done [#allocation4], 50048
    $region33: #{tpu_custom_call.1} parent=1 // pred_fallthru
      _
    %12811 = vsyncpa [#allocation3], 1
    %12812 = vsyncpa [#allocation6], 1
    %12813 = vsyncpa [#allocation4], 1

</llo_original>
